<compile_context>
chip_gen: v5e
topology: v5e:2x2
jax: 0.10.0
libtpu: 0.0.40
codegen_flags: <defaults>
</compile_context>

<pallas_src>
import math
import functools

import numpy as np
import jax
import jax.numpy as jnp
from jax.experimental import pallas as pl
from jax.experimental.pallas import tpu as pltpu

# ---------------- configuration (small proxy, consistent with the module) -----
IMG_SIZE = 32
PATCH = 4
EMBED = 32                 # embed_dim (small proxy of 192)
DEPTH = 3                  # small proxy of depth=8
NUM_HEADS = 8
HEAD_DIM = EMBED // NUM_HEADS          # 4
NUM_CLASSES = 10
OUT_PAD = 128                          # lane-dense classifier store
WINDOW = 4
SHIFT = WINDOW // 2
GRID_HW = IMG_SIZE // PATCH            # 8 patches per side
NUM_PATCHES = GRID_HW * GRID_HW        # 64 tokens
PATCH_DIM = 3 * PATCH * PATCH          # 48
MAX_HIDDEN = EMBED * 8                 # widest FFN hidden (ffn_8)
LN_EPS = 1e-5
NEG_INF = -1e9
WIDE = NUM_HEADS * NUM_PATCHES         # 512 = heads-on-lanes width

_NT_DIMS = (((1,), (1,)), ((), ()))    # contract last dim of both -> A @ B^T


# --------------------------- static attention masks ----------------------------
def _make_window_mask(attn_choice):
    """Additive (N, N) mask: window / shifted_window attention over the 8x8 token
    grid equals masked full-sequence attention where token p attends to q iff
    both fall in the same 4x4 window of the (optionally rolled) grid."""
    shift = SHIFT if attn_choice == "shifted_window" else 0
    idx = np.arange(NUM_PATCHES)
    r, c = idx // GRID_HW, idx % GRID_HW
    rs, cs = (r - shift) % GRID_HW, (c - shift) % GRID_HW
    win = (rs // WINDOW) * (GRID_HW // WINDOW) + (cs // WINDOW)
    same = win[:, None] == win[None, :]
    return np.where(same, 0.0, NEG_INF).astype(np.float32)


def _make_head_block_mask():
    """(E, H*T) 0/1 mask: entry (c, h*T + t) is 1 iff feature c belongs to head h."""
    c = np.arange(EMBED)[:, None]
    j = np.arange(WIDE)[None, :]
    return ((c // HEAD_DIM) == (j // NUM_PATCHES)).astype(np.float32)


# ------------------------------ in-kernel helpers -------------------------------
def _layernorm(x, g, b):
    mu = jnp.mean(x, axis=-1, keepdims=True)
    var = jnp.mean(jnp.square(x - mu), axis=-1, keepdims=True)
    return (x - mu) * jax.lax.rsqrt(var + LN_EPS) * g + b


def _gelu(x):
    # exact GELU (torch nn.GELU default)
    return 0.5 * x * (1.0 + jax.lax.erf(x * (1.0 / math.sqrt(2.0))))


def _attention(xn, wqkv, bqkv, wo, bo, mask_ref, bd):
    """Merged-head masked MHA on a (T, E) slab.

    wqkv/bqkv already have 1/sqrt(head_dim) folded into the Q columns.
    bd is the static (E, H*T) 0/1 head-block mask."""
    E = EMBED
    qkv = jnp.dot(xn, wqkv, preferred_element_type=jnp.float32) + bqkv     # (T, 3E)
    q = qkv[:, :E]                                                         # (T, E), pre-scaled
    kT = jnp.transpose(qkv[:, E:2 * E])                                    # (E, T)
    vT = jnp.transpose(qkv[:, 2 * E:3 * E])                                # (E, T)

    # block-diagonal K^T: head h occupies rows [h*hd, (h+1)*hd) of lane block h
    kbdT = jnp.concatenate([kT] * NUM_HEADS, axis=1) * bd                  # (E, H*T)
    s = jnp.dot(q, kbdT, preferred_element_type=jnp.float32)               # (T, H*T)
    if mask_ref is not None:
        s = s + mask_ref[...]                                              # wide additive mask
    s = s - jnp.max(s, axis=-1, keepdims=True)                             # shared row max (safe)
    p = jnp.exp(s)                                                         # (T, H*T)

    # [block-diag V^T ; head indicator]: one matmul yields head-concat context
    # (unnormalized) AND each head's softmax denominator replicated over its lanes.
    vbdT = jnp.concatenate([vT] * NUM_HEADS, axis=1) * bd                  # (E, H*T)
    wide_v = jnp.concatenate([vbdT, bd], axis=0)                           # (2E, H*T)
    cs = jax.lax.dot_general(p, wide_v, _NT_DIMS,
                             preferred_element_type=jnp.float32)           # (T, 2E)
    ctx = cs[:, :E] * pl.reciprocal(cs[:, E:2 * E], approx=True)           # (T, E), head-major
    return jnp.dot(ctx, wo, preferred_element_type=jnp.float32) + bo


# ------------------------------ fused forward kernel ----------------------------
def _fused_forward_kernel(*refs, plan):
    out_ref = refs[-1]
    (patches_ref, convw_ref, pos_ref, bd_ref,
     vec32_ref, bqkv_ref, b1_ref) = refs[:7]
    idx = 7
    cell_refs = []
    for masked, _hidden in plan:
        n = 5 if masked else 4
        cell_refs.append(refs[idx:idx + n])
        idx += n
    head_w_ref, head_b_ref = refs[idx], refs[idx + 1]

    bd = bd_ref[...]                        # (E, H*T) static head-block mask
    vecs = vec32_ref[...]                   # (3 + 6*depth, E) packed small vectors
    bqkvs = bqkv_ref[...]                   # (depth, 3E)
    b1s = b1_ref[...]                       # (depth, MAX_HIDDEN)

    # Patch embed (Conv2d k=stride=patch == linear over flattened patches) + pos.
    x = jnp.dot(patches_ref[0], convw_ref[...],
                preferred_element_type=jnp.float32)
    x = x + vecs[0:1] + pos_ref[...]
    # input dropout: identity at inference

    for ci, ((masked, hidden), crefs) in enumerate(zip(plan, cell_refs)):
        if masked:
            mask_ref, wqkv_ref, wo_ref, w1_ref, w2_ref = crefs
        else:
            mask_ref = None
            wqkv_ref, wo_ref, w1_ref, w2_ref = crefs
        base = 1 + 6 * ci
        ln1_g, ln1_b = vecs[base:base + 1], vecs[base + 1:base + 2]
        bo = vecs[base + 2:base + 3]
        ln2_g, ln2_b = vecs[base + 3:base + 4], vecs[base + 4:base + 5]
        b2 = vecs[base + 5:base + 6]
        bqkv = bqkvs[ci:ci + 1]                       # (1, 3E), q-scale folded
        b1 = b1s[ci:ci + 1, :hidden]                  # (1, hidden)

        # pre-norm attention + residual (dropout = identity)
        xn = _layernorm(x, ln1_g, ln1_b)
        x = x + _attention(xn, wqkv_ref[...], bqkv, wo_ref[...], bo, mask_ref, bd)

        # pre-norm FFN + residual
        xn = _layernorm(x, ln2_g, ln2_b)
        h = _gelu(jnp.dot(xn, w1_ref[...], preferred_element_type=jnp.float32) + b1)
        x = x + jnp.dot(h, w2_ref[...], preferred_element_type=jnp.float32) + b2

    # final norm -> mean pool over tokens -> classification head (lane-padded)
    d = len(plan)
    xn = _layernorm(x, vecs[1 + 6 * d:2 + 6 * d], vecs[2 + 6 * d:3 + 6 * d])
    pooled = jnp.mean(xn, axis=0, keepdims=True)                           # (1, E)
    out_ref[0] = jnp.dot(pooled, head_w_ref[...],
                         preferred_element_type=jnp.float32) + head_b_ref[...]


# ------------------------------ wrapper / pallas_call ---------------------------
def _full_vmem_spec(arr):
    """Whole-array block, same block for every grid step (weights / masks)."""
    nd = arr.ndim
    return pl.BlockSpec(arr.shape, lambda b, _nd=nd: (0,) * _nd)


def forward(x_nchw, params, arch_config):
    assert len(arch_config) == DEPTH
    B = x_nchw.shape[0]

    # NCHW -> (B, num_patches, 3*patch*patch); flatten order matches Conv2d weights.
    patches = x_nchw.reshape(B, 3, GRID_HW, PATCH, GRID_HW, PATCH)
    patches = patches.transpose(0, 2, 4, 1, 3, 5).reshape(B, NUM_PATCHES, PATCH_DIM)
    conv_w_flat = params["conv_w"].reshape(EMBED, PATCH_DIM).T            # (48, E)
    pos = params["pos_embed"].reshape(NUM_PATCHES, EMBED)
    bd_mask = jnp.asarray(_make_head_block_mask())                        # (E, H*T)

    # Fold 1/sqrt(head_dim) into the Q columns of the in-projection.
    scale = 1.0 / math.sqrt(HEAD_DIM)
    qscale = jnp.concatenate([jnp.full((EMBED,), scale, jnp.float32),
                              jnp.ones((2 * EMBED,), jnp.float32)])

    # Pack small vectors: row 0 conv_b; rows 1+6i..6+6i per cell; last two = final LN.
    rows32 = [params["conv_b"].reshape(EMBED)]
    bqkv_rows, b1_rows, plan, cell_big = [], [], [], []
    for i, (attn_choice, ffn_choice) in enumerate(arch_config):
        cp = params["cells"][i]
        ap = cp["attn"][attn_choice]
        fp = cp["ffn"][ffn_choice]
        hidden = fp["w1"].shape[1]
        rows32 += [cp["ln1_g"].reshape(EMBED), cp["ln1_b"].reshape(EMBED),
                   ap["bo"].reshape(EMBED), cp["ln2_g"].reshape(EMBED),
                   cp["ln2_b"].reshape(EMBED), fp["b2"].reshape(EMBED)]
        bqkv_rows.append(ap["bqkv"].reshape(3 * EMBED) * qscale)
        b1_rows.append(jnp.pad(fp["b1"].reshape(hidden), (0, MAX_HIDDEN - hidden)))

        masked = attn_choice != "global"
        plan.append((masked, hidden))
        refs = []
        if masked:   # wide (T, H*T) additive mask = window mask tiled over heads
            refs.append(jnp.asarray(np.tile(_make_window_mask(attn_choice),
                                            (1, NUM_HEADS))))
        refs += [ap["wqkv"] * qscale[None, :], ap["wo"], fp["w1"], fp["w2"]]
        cell_big.append(refs)
    rows32 += [params["norm_g"].reshape(EMBED), params["norm_b"].reshape(EMBED)]

    vec32_slab = jnp.stack(rows32)                                        # (3+6D, E)
    bqkv_slab = jnp.stack(bqkv_rows)                                      # (D, 3E)
    b1_slab = jnp.stack(b1_rows)                                          # (D, MAX_HIDDEN)
    head_w = jnp.pad(params["head_w"], ((0, 0), (0, OUT_PAD - NUM_CLASSES)))
    head_b = jnp.pad(params["head_b"], ((0, 0), (0, OUT_PAD - NUM_CLASSES)))

    inputs = [patches, conv_w_flat, pos, bd_mask, vec32_slab, bqkv_slab, b1_slab]
    for refs in cell_big:
        inputs += refs
    inputs += [head_w, head_b]

    in_specs = [pl.BlockSpec((1, NUM_PATCHES, PATCH_DIM), lambda b: (b, 0, 0))]
    in_specs += [_full_vmem_spec(a) for a in inputs[1:]]

    kernel = functools.partial(_fused_forward_kernel, plan=tuple(plan))
    out = pl.pallas_call(
        kernel,
        out_shape=jax.ShapeDtypeStruct((B, 1, OUT_PAD), jnp.float32),
        grid=(B,),                     # one sample per grid step; v7x: one per TC
        in_specs=in_specs,
        out_specs=pl.BlockSpec((1, 1, OUT_PAD), lambda b: (b, 0, 0)),
        compiler_params=pltpu.CompilerParams(
            dimension_semantics=("parallel",),
            vmem_limit_bytes=32 * 1024 * 1024),
    )(*inputs)
    return out[:, 0, :NUM_CLASSES]


# ------------------------------- parameters -------------------------------------
def init_params(key):
    keys = iter(jax.random.split(key, 512))

    def nrm(shape, scale=0.02):
        return (scale * jax.random.normal(next(keys), shape)).astype(jnp.float32)

    def zeros(shape):
        return jnp.zeros(shape, jnp.float32)

    def ones(shape):
        return jnp.ones(shape, jnp.float32)

    params = {
        "conv_w": nrm((EMBED, 3, PATCH, PATCH)),
        "conv_b": zeros((1, EMBED)),
        "pos_embed": zeros((1, NUM_PATCHES, EMBED)),   # torch init is zeros
        "cells": [],
        "norm_g": ones((1, EMBED)),
        "norm_b": zeros((1, EMBED)),
        "head_w": nrm((EMBED, NUM_CLASSES)),
        "head_b": zeros((1, NUM_CLASSES)),
    }
    # NOTE: weights are stored (in, out) and used as x @ W (self-consistent here);
    # importing real PyTorch nn.Linear weights would require transposing them.
    for _ in range(DEPTH):
        cell = {
            "ln1_g": ones((1, EMBED)), "ln1_b": zeros((1, EMBED)),
            "ln2_g": ones((1, EMBED)), "ln2_b": zeros((1, EMBED)),
            "attn": {}, "ffn": {},
        }
        for name in ("global", "window", "shifted_window"):
            cell["attn"][name] = {
                "wqkv": nrm((EMBED, 3 * EMBED)),
                "bqkv": zeros((1, 3 * EMBED)),
                "wo": nrm((EMBED, EMBED)),
                "bo": zeros((1, EMBED)),
            }
        for name, f in (("ffn_2", 2), ("ffn_4", 4), ("ffn_8", 8)):
            cell["ffn"][name] = {
                "w1": nrm((EMBED, EMBED * f)),
                "b1": zeros((1, EMBED * f)),
                "w2": nrm((EMBED * f, EMBED)),
                "b2": zeros((1, EMBED)),
            }
        params["cells"].append(cell)
    return params


# ---------------------------------- main -----------------------------------------
if __name__ == "__main__":
    key = jax.random.PRNGKey(0)
    k_param, k_in = jax.random.split(key)
    params = init_params(k_param)
    x = jax.random.normal(k_in, (2, 3, IMG_SIZE, IMG_SIZE), dtype=jnp.float32)

    arch_config = [
        ("global", "ffn_2"),
        ("window", "ffn_4"),
        ("shifted_window", "ffn_8"),
    ]

    fwd = jax.jit(lambda xin, p: forward(xin, p, arch_config))
    logits = jax.block_until_ready(fwd(x, params))
    assert logits.shape == (2, NUM_CLASSES)
    assert bool(jnp.all(jnp.isfinite(logits)))
    print("KERNEL_OK")
</pallas_src>

<mosaic_0001>
module attributes {stable_mosaic.version = 11 : i64} {
  func.func @_fused_forward_kernel(%arg0: i32, %arg1: memref<1x64x48xf32, #tpu.memory_space<vmem>>, %arg2: memref<48x32xf32, #tpu.memory_space<vmem>>, %arg3: memref<64x32xf32, #tpu.memory_space<vmem>>, %arg4: memref<32x512xf32, #tpu.memory_space<vmem>>, %arg5: memref<21x32xf32, #tpu.memory_space<vmem>>, %arg6: memref<3x96xf32, #tpu.memory_space<vmem>>, %arg7: memref<3x256xf32, #tpu.memory_space<vmem>>, %arg8: memref<32x96xf32, #tpu.memory_space<vmem>>, %arg9: memref<32x32xf32, #tpu.memory_space<vmem>>, %arg10: memref<32x64xf32, #tpu.memory_space<vmem>>, %arg11: memref<64x32xf32, #tpu.memory_space<vmem>>, %arg12: memref<64x512xf32, #tpu.memory_space<vmem>>, %arg13: memref<32x96xf32, #tpu.memory_space<vmem>>, %arg14: memref<32x32xf32, #tpu.memory_space<vmem>>, %arg15: memref<32x128xf32, #tpu.memory_space<vmem>>, %arg16: memref<128x32xf32, #tpu.memory_space<vmem>>, %arg17: memref<64x512xf32, #tpu.memory_space<vmem>>, %arg18: memref<32x96xf32, #tpu.memory_space<vmem>>, %arg19: memref<32x32xf32, #tpu.memory_space<vmem>>, %arg20: memref<32x256xf32, #tpu.memory_space<vmem>>, %arg21: memref<256x32xf32, #tpu.memory_space<vmem>>, %arg22: memref<32x128xf32, #tpu.memory_space<vmem>>, %arg23: memref<1x128xf32, #tpu.memory_space<vmem>>, %arg24: memref<1x1x128xf32, #tpu.memory_space<vmem>>) attributes {dimension_semantics = [#tpu.dimension_semantics<parallel>], iteration_bounds = array<i64: 2>, scalar_prefetch = 0 : i64, scratch_operands = 0 : i64, tpu.core_type = #tpu.core_type<tc>, window_params = [{transform_indices = @transform_0, window_bounds = array<i64: 1, 64, 48>}, {pipeline_mode = #tpu.pipeline_mode<synchronous>, transform_indices = @transform_1, window_bounds = array<i64: 48, 32>}, {pipeline_mode = #tpu.pipeline_mode<synchronous>, transform_indices = @transform_2, window_bounds = array<i64: 64, 32>}, {pipeline_mode = #tpu.pipeline_mode<synchronous>, transform_indices = @transform_3, window_bounds = array<i64: 32, 512>}, {pipeline_mode = #tpu.pipeline_mode<synchronous>, transform_indices = @transform_4, window_bounds = array<i64: 21, 32>}, {pipeline_mode = #tpu.pipeline_mode<synchronous>, transform_indices = @transform_5, window_bounds = array<i64: 3, 96>}, {pipeline_mode = #tpu.pipeline_mode<synchronous>, transform_indices = @transform_6, window_bounds = array<i64: 3, 256>}, {pipeline_mode = #tpu.pipeline_mode<synchronous>, transform_indices = @transform_7, window_bounds = array<i64: 32, 96>}, {pipeline_mode = #tpu.pipeline_mode<synchronous>, transform_indices = @transform_8, window_bounds = array<i64: 32, 32>}, {pipeline_mode = #tpu.pipeline_mode<synchronous>, transform_indices = @transform_9, window_bounds = array<i64: 32, 64>}, {pipeline_mode = #tpu.pipeline_mode<synchronous>, transform_indices = @transform_10, window_bounds = array<i64: 64, 32>}, {pipeline_mode = #tpu.pipeline_mode<synchronous>, transform_indices = @transform_11, window_bounds = array<i64: 64, 512>}, {pipeline_mode = #tpu.pipeline_mode<synchronous>, transform_indices = @transform_12, window_bounds = array<i64: 32, 96>}, {pipeline_mode = #tpu.pipeline_mode<synchronous>, transform_indices = @transform_13, window_bounds = array<i64: 32, 32>}, {pipeline_mode = #tpu.pipeline_mode<synchronous>, transform_indices = @transform_14, window_bounds = array<i64: 32, 128>}, {pipeline_mode = #tpu.pipeline_mode<synchronous>, transform_indices = @transform_15, window_bounds = array<i64: 128, 32>}, {pipeline_mode = #tpu.pipeline_mode<synchronous>, transform_indices = @transform_16, window_bounds = array<i64: 64, 512>}, {pipeline_mode = #tpu.pipeline_mode<synchronous>, transform_indices = @transform_17, window_bounds = array<i64: 32, 96>}, {pipeline_mode = #tpu.pipeline_mode<synchronous>, transform_indices = @transform_18, window_bounds = array<i64: 32, 32>}, {pipeline_mode = #tpu.pipeline_mode<synchronous>, transform_indices = @transform_19, window_bounds = array<i64: 32, 256>}, {pipeline_mode = #tpu.pipeline_mode<synchronous>, transform_indices = @transform_20, window_bounds = array<i64: 256, 32>}, {pipeline_mode = #tpu.pipeline_mode<synchronous>, transform_indices = @transform_21, window_bounds = array<i64: 32, 128>}, {pipeline_mode = #tpu.pipeline_mode<synchronous>, transform_indices = @transform_22, window_bounds = array<i64: 1, 128>}, {transform_indices = @transform_23, window_bounds = array<i64: 1, 1, 128>}]} {
    %c0 = arith.constant 0 : index
    %c0_0 = arith.constant 0 : index
    %0 = vector.load %arg4[%c0, %c0_0] : memref<32x512xf32, #tpu.memory_space<vmem>>, vector<32x512xf32>
    %c0_1 = arith.constant 0 : index
    %c0_2 = arith.constant 0 : index
    %1 = vector.load %arg5[%c0_1, %c0_2] : memref<21x32xf32, #tpu.memory_space<vmem>>, vector<21x32xf32>
    %c0_3 = arith.constant 0 : index
    %c0_4 = arith.constant 0 : index
    %2 = vector.load %arg6[%c0_3, %c0_4] : memref<3x96xf32, #tpu.memory_space<vmem>>, vector<3x96xf32>
    %c0_5 = arith.constant 0 : index
    %c0_6 = arith.constant 0 : index
    %3 = vector.load %arg7[%c0_5, %c0_6] : memref<3x256xf32, #tpu.memory_space<vmem>>, vector<3x256xf32>
    %c0_7 = arith.constant 0 : index
    %c0_8 = arith.constant 0 : index
    %c0_9 = arith.constant 0 : index
    %4 = vector.load %arg1[%c0_7, %c0_8, %c0_9] : memref<1x64x48xf32, #tpu.memory_space<vmem>>, vector<1x64x48xf32>
    %5 = vector.shape_cast %4 : vector<1x64x48xf32> to vector<64x48xf32>
    %c0_10 = arith.constant 0 : index
    %c0_11 = arith.constant 0 : index
    %6 = vector.load %arg2[%c0_10, %c0_11] : memref<48x32xf32, #tpu.memory_space<vmem>>, vector<48x32xf32>
    %cst = arith.constant dense<0.000000e+00> : vector<64x32xf32>
    %7 = tpu.matmul %5, %6, %cst {dimension_numbers = #tpu.dot_dimension_numbers<[1], [0], [0], [1], [0, 0, 1, 1], [], []>} : vector<64x48xf32>, vector<48x32xf32>, vector<64x32xf32> -> vector<64x32xf32>
    %8 = vector.extract_strided_slice %1 {offsets = [0, 0], sizes = [1, 32], strides = [1, 1]} : vector<21x32xf32> to vector<1x32xf32>
    %9 = vector.broadcast %8 : vector<1x32xf32> to vector<64x32xf32>
    %10 = arith.addf %7, %9 : vector<64x32xf32>
    %c0_12 = arith.constant 0 : index
    %c0_13 = arith.constant 0 : index
    %11 = vector.load %arg3[%c0_12, %c0_13] : memref<64x32xf32, #tpu.memory_space<vmem>>, vector<64x32xf32>
    %12 = arith.addf %10, %11 : vector<64x32xf32>
    %13 = vector.extract_strided_slice %1 {offsets = [1, 0], sizes = [1, 32], strides = [1, 1]} : vector<21x32xf32> to vector<1x32xf32>
    %14 = vector.extract_strided_slice %1 {offsets = [2, 0], sizes = [1, 32], strides = [1, 1]} : vector<21x32xf32> to vector<1x32xf32>
    %15 = vector.extract_strided_slice %1 {offsets = [3, 0], sizes = [1, 32], strides = [1, 1]} : vector<21x32xf32> to vector<1x32xf32>
    %16 = vector.extract_strided_slice %1 {offsets = [4, 0], sizes = [1, 32], strides = [1, 1]} : vector<21x32xf32> to vector<1x32xf32>
    %17 = vector.extract_strided_slice %1 {offsets = [5, 0], sizes = [1, 32], strides = [1, 1]} : vector<21x32xf32> to vector<1x32xf32>
    %18 = vector.extract_strided_slice %1 {offsets = [6, 0], sizes = [1, 32], strides = [1, 1]} : vector<21x32xf32> to vector<1x32xf32>
    %19 = vector.extract_strided_slice %2 {offsets = [0, 0], sizes = [1, 96], strides = [1, 1]} : vector<3x96xf32> to vector<1x96xf32>
    %20 = vector.extract_strided_slice %3 {offsets = [0, 0], sizes = [1, 64], strides = [1, 1]} : vector<3x256xf32> to vector<1x64xf32>
    %cst_14 = arith.constant dense<0.000000e+00> : vector<64xf32>
    %21 = vector.multi_reduction <add>, %12, %cst_14 [1] : vector<64x32xf32> to vector<64xf32>
    %22 = vector.shape_cast %21 : vector<64xf32> to vector<64x1xf32>
    %cst_15 = arith.constant 3.200000e+01 : f32
    %23 = vector.broadcast %cst_15 : f32 to vector<64x1xf32>
    %24 = arith.divf %22, %23 : vector<64x1xf32>
    %25 = vector.broadcast %24 : vector<64x1xf32> to vector<64x32xf32>
    %26 = arith.subf %12, %25 : vector<64x32xf32>
    %27 = arith.mulf %26, %26 : vector<64x32xf32>
    %cst_16 = arith.constant dense<0.000000e+00> : vector<64xf32>
    %28 = vector.multi_reduction <add>, %27, %cst_16 [1] : vector<64x32xf32> to vector<64xf32>
    %29 = vector.shape_cast %28 : vector<64xf32> to vector<64x1xf32>
    %cst_17 = arith.constant 3.200000e+01 : f32
    %30 = vector.broadcast %cst_17 : f32 to vector<64x1xf32>
    %31 = arith.divf %29, %30 : vector<64x1xf32>
    %32 = vector.broadcast %24 : vector<64x1xf32> to vector<64x32xf32>
    %33 = arith.subf %12, %32 : vector<64x32xf32>
    %cst_18 = arith.constant 9.99999974E-6 : f32
    %34 = vector.broadcast %cst_18 : f32 to vector<64x1xf32>
    %35 = arith.addf %31, %34 : vector<64x1xf32>
    %36 = math.rsqrt %35 : vector<64x1xf32>
    %37 = vector.broadcast %36 : vector<64x1xf32> to vector<64x32xf32>
    %38 = arith.mulf %33, %37 : vector<64x32xf32>
    %39 = vector.broadcast %13 : vector<1x32xf32> to vector<64x32xf32>
    %40 = arith.mulf %38, %39 : vector<64x32xf32>
    %41 = vector.broadcast %14 : vector<1x32xf32> to vector<64x32xf32>
    %42 = arith.addf %40, %41 : vector<64x32xf32>
    %c0_19 = arith.constant 0 : index
    %c0_20 = arith.constant 0 : index
    %43 = vector.load %arg8[%c0_19, %c0_20] : memref<32x96xf32, #tpu.memory_space<vmem>>, vector<32x96xf32>
    %c0_21 = arith.constant 0 : index
    %c0_22 = arith.constant 0 : index
    %44 = vector.load %arg9[%c0_21, %c0_22] : memref<32x32xf32, #tpu.memory_space<vmem>>, vector<32x32xf32>
    %cst_23 = arith.constant dense<0.000000e+00> : vector<64x96xf32>
    %45 = tpu.matmul %42, %43, %cst_23 {dimension_numbers = #tpu.dot_dimension_numbers<[1], [0], [0], [1], [0, 0, 1, 1], [], []>} : vector<64x32xf32>, vector<32x96xf32>, vector<64x96xf32> -> vector<64x96xf32>
    %46 = vector.broadcast %19 : vector<1x96xf32> to vector<64x96xf32>
    %47 = arith.addf %45, %46 : vector<64x96xf32>
    %48 = vector.extract_strided_slice %47 {offsets = [0, 0], sizes = [64, 32], strides = [1, 1]} : vector<64x96xf32> to vector<64x32xf32>
    %49 = vector.extract_strided_slice %47 {offsets = [0, 32], sizes = [64, 32], strides = [1, 1]} : vector<64x96xf32> to vector<64x32xf32>
    %50 = tpu.transpose %49, [1, 0] : vector<64x32xf32> -> vector<32x64xf32>
    %51 = vector.extract_strided_slice %47 {offsets = [0, 64], sizes = [64, 32], strides = [1, 1]} : vector<64x96xf32> to vector<64x32xf32>
    %52 = tpu.transpose %51, [1, 0] : vector<64x32xf32> -> vector<32x64xf32>
    %53 = tpu.concatenate %50, %50, %50, %50, %50, %50, %50, %50 in 1 : vector<32x64xf32>, vector<32x64xf32>, vector<32x64xf32>, vector<32x64xf32>, vector<32x64xf32>, vector<32x64xf32>, vector<32x64xf32>, vector<32x64xf32> -> vector<32x512xf32>
    %54 = arith.mulf %53, %0 : vector<32x512xf32>
    %cst_24 = arith.constant dense<0.000000e+00> : vector<64x512xf32>
    %55 = tpu.matmul %48, %54, %cst_24 {dimension_numbers = #tpu.dot_dimension_numbers<[1], [0], [0], [1], [0, 0, 1, 1], [], []>} : vector<64x32xf32>, vector<32x512xf32>, vector<64x512xf32> -> vector<64x512xf32>
    %cst_25 = arith.constant dense<0xFF800000> : vector<64xf32>
    %56 = vector.multi_reduction <maximumf>, %55, %cst_25 [1] : vector<64x512xf32> to vector<64xf32>
    %57 = vector.shape_cast %56 : vector<64xf32> to vector<64x1xf32>
    %58 = vector.broadcast %57 : vector<64x1xf32> to vector<64x512xf32>
    %59 = arith.subf %55, %58 : vector<64x512xf32>
    %60 = math.exp %59 : vector<64x512xf32>
    %61 = tpu.concatenate %52, %52, %52, %52, %52, %52, %52, %52 in 1 : vector<32x64xf32>, vector<32x64xf32>, vector<32x64xf32>, vector<32x64xf32>, vector<32x64xf32>, vector<32x64xf32>, vector<32x64xf32>, vector<32x64xf32> -> vector<32x512xf32>
    %62 = arith.mulf %61, %0 : vector<32x512xf32>
    %63 = tpu.concatenate %62, %0 in 0 : vector<32x512xf32>, vector<32x512xf32> -> vector<64x512xf32>
    %cst_26 = arith.constant dense<0.000000e+00> : vector<64x64xf32>
    %64 = tpu.matmul %60, %63, %cst_26 {dimension_numbers = #tpu.dot_dimension_numbers<[1], [1], [0], [0], [0, 0, 1, 0], [], []>} : vector<64x512xf32>, vector<64x512xf32>, vector<64x64xf32> -> vector<64x64xf32>
    %65 = vector.extract_strided_slice %64 {offsets = [0, 0], sizes = [64, 32], strides = [1, 1]} : vector<64x64xf32> to vector<64x32xf32>
    %66 = vector.extract_strided_slice %64 {offsets = [0, 32], sizes = [64, 32], strides = [1, 1]} : vector<64x64xf32> to vector<64x32xf32>
    %67 = tpu.reciprocal %66 {approx = true} : vector<64x32xf32> -> vector<64x32xf32>
    %68 = arith.mulf %65, %67 : vector<64x32xf32>
    %cst_27 = arith.constant dense<0.000000e+00> : vector<64x32xf32>
    %69 = tpu.matmul %68, %44, %cst_27 {dimension_numbers = #tpu.dot_dimension_numbers<[1], [0], [0], [1], [0, 0, 1, 1], [], []>} : vector<64x32xf32>, vector<32x32xf32>, vector<64x32xf32> -> vector<64x32xf32>
    %70 = vector.broadcast %15 : vector<1x32xf32> to vector<64x32xf32>
    %71 = arith.addf %69, %70 : vector<64x32xf32>
    %72 = arith.addf %12, %71 : vector<64x32xf32>
    %cst_28 = arith.constant dense<0.000000e+00> : vector<64xf32>
    %73 = vector.multi_reduction <add>, %72, %cst_28 [1] : vector<64x32xf32> to vector<64xf32>
    %74 = vector.shape_cast %73 : vector<64xf32> to vector<64x1xf32>
    %cst_29 = arith.constant 3.200000e+01 : f32
    %75 = vector.broadcast %cst_29 : f32 to vector<64x1xf32>
    %76 = arith.divf %74, %75 : vector<64x1xf32>
    %77 = vector.broadcast %76 : vector<64x1xf32> to vector<64x32xf32>
    %78 = arith.subf %72, %77 : vector<64x32xf32>
    %79 = arith.mulf %78, %78 : vector<64x32xf32>
    %cst_30 = arith.constant dense<0.000000e+00> : vector<64xf32>
    %80 = vector.multi_reduction <add>, %79, %cst_30 [1] : vector<64x32xf32> to vector<64xf32>
    %81 = vector.shape_cast %80 : vector<64xf32> to vector<64x1xf32>
    %cst_31 = arith.constant 3.200000e+01 : f32
    %82 = vector.broadcast %cst_31 : f32 to vector<64x1xf32>
    %83 = arith.divf %81, %82 : vector<64x1xf32>
    %84 = vector.broadcast %76 : vector<64x1xf32> to vector<64x32xf32>
    %85 = arith.subf %72, %84 : vector<64x32xf32>
    %cst_32 = arith.constant 9.99999974E-6 : f32
    %86 = vector.broadcast %cst_32 : f32 to vector<64x1xf32>
    %87 = arith.addf %83, %86 : vector<64x1xf32>
    %88 = math.rsqrt %87 : vector<64x1xf32>
    %89 = vector.broadcast %88 : vector<64x1xf32> to vector<64x32xf32>
    %90 = arith.mulf %85, %89 : vector<64x32xf32>
    %91 = vector.broadcast %16 : vector<1x32xf32> to vector<64x32xf32>
    %92 = arith.mulf %90, %91 : vector<64x32xf32>
    %93 = vector.broadcast %17 : vector<1x32xf32> to vector<64x32xf32>
    %94 = arith.addf %92, %93 : vector<64x32xf32>
    %c0_33 = arith.constant 0 : index
    %c0_34 = arith.constant 0 : index
    %95 = vector.load %arg10[%c0_33, %c0_34] : memref<32x64xf32, #tpu.memory_space<vmem>>, vector<32x64xf32>
    %cst_35 = arith.constant dense<0.000000e+00> : vector<64x64xf32>
    %96 = tpu.matmul %94, %95, %cst_35 {dimension_numbers = #tpu.dot_dimension_numbers<[1], [0], [0], [1], [0, 0, 1, 1], [], []>} : vector<64x32xf32>, vector<32x64xf32>, vector<64x64xf32> -> vector<64x64xf32>
    %97 = vector.broadcast %20 : vector<1x64xf32> to vector<64x64xf32>
    %98 = arith.addf %96, %97 : vector<64x64xf32>
    %cst_36 = arith.constant 5.000000e-01 : f32
    %99 = vector.broadcast %cst_36 : f32 to vector<64x64xf32>
    %100 = arith.mulf %99, %98 : vector<64x64xf32>
    %cst_37 = arith.constant 0.707106769 : f32
    %101 = vector.broadcast %cst_37 : f32 to vector<64x64xf32>
    %102 = arith.mulf %98, %101 : vector<64x64xf32>
    %103 = math.erf %102 : vector<64x64xf32>
    %cst_38 = arith.constant 1.000000e+00 : f32
    %104 = vector.broadcast %cst_38 : f32 to vector<64x64xf32>
    %105 = arith.addf %104, %103 : vector<64x64xf32>
    %106 = arith.mulf %100, %105 : vector<64x64xf32>
    %c0_39 = arith.constant 0 : index
    %c0_40 = arith.constant 0 : index
    %107 = vector.load %arg11[%c0_39, %c0_40] : memref<64x32xf32, #tpu.memory_space<vmem>>, vector<64x32xf32>
    %cst_41 = arith.constant dense<0.000000e+00> : vector<64x32xf32>
    %108 = tpu.matmul %106, %107, %cst_41 {dimension_numbers = #tpu.dot_dimension_numbers<[1], [0], [0], [1], [0, 0, 1, 1], [], []>} : vector<64x64xf32>, vector<64x32xf32>, vector<64x32xf32> -> vector<64x32xf32>
    %109 = arith.addf %72, %108 : vector<64x32xf32>
    %110 = vector.broadcast %18 : vector<1x32xf32> to vector<64x32xf32>
    %111 = arith.addf %109, %110 : vector<64x32xf32>
    %112 = vector.extract_strided_slice %1 {offsets = [7, 0], sizes = [1, 32], strides = [1, 1]} : vector<21x32xf32> to vector<1x32xf32>
    %113 = vector.extract_strided_slice %1 {offsets = [8, 0], sizes = [1, 32], strides = [1, 1]} : vector<21x32xf32> to vector<1x32xf32>
    %114 = vector.extract_strided_slice %1 {offsets = [9, 0], sizes = [1, 32], strides = [1, 1]} : vector<21x32xf32> to vector<1x32xf32>
    %115 = vector.extract_strided_slice %1 {offsets = [10, 0], sizes = [1, 32], strides = [1, 1]} : vector<21x32xf32> to vector<1x32xf32>
    %116 = vector.extract_strided_slice %1 {offsets = [11, 0], sizes = [1, 32], strides = [1, 1]} : vector<21x32xf32> to vector<1x32xf32>
    %117 = vector.extract_strided_slice %1 {offsets = [12, 0], sizes = [1, 32], strides = [1, 1]} : vector<21x32xf32> to vector<1x32xf32>
    %118 = vector.extract_strided_slice %2 {offsets = [1, 0], sizes = [1, 96], strides = [1, 1]} : vector<3x96xf32> to vector<1x96xf32>
    %119 = vector.extract_strided_slice %3 {offsets = [1, 0], sizes = [1, 128], strides = [1, 1]} : vector<3x256xf32> to vector<1x128xf32>
    %cst_42 = arith.constant dense<0.000000e+00> : vector<64xf32>
    %120 = vector.multi_reduction <add>, %111, %cst_42 [1] : vector<64x32xf32> to vector<64xf32>
    %121 = vector.shape_cast %120 : vector<64xf32> to vector<64x1xf32>
    %cst_43 = arith.constant 3.200000e+01 : f32
    %122 = vector.broadcast %cst_43 : f32 to vector<64x1xf32>
    %123 = arith.divf %121, %122 : vector<64x1xf32>
    %124 = vector.broadcast %123 : vector<64x1xf32> to vector<64x32xf32>
    %125 = arith.subf %111, %124 : vector<64x32xf32>
    %126 = arith.mulf %125, %125 : vector<64x32xf32>
    %cst_44 = arith.constant dense<0.000000e+00> : vector<64xf32>
    %127 = vector.multi_reduction <add>, %126, %cst_44 [1] : vector<64x32xf32> to vector<64xf32>
    %128 = vector.shape_cast %127 : vector<64xf32> to vector<64x1xf32>
    %cst_45 = arith.constant 3.200000e+01 : f32
    %129 = vector.broadcast %cst_45 : f32 to vector<64x1xf32>
    %130 = arith.divf %128, %129 : vector<64x1xf32>
    %131 = vector.broadcast %123 : vector<64x1xf32> to vector<64x32xf32>
    %132 = arith.subf %111, %131 : vector<64x32xf32>
    %cst_46 = arith.constant 9.99999974E-6 : f32
    %133 = vector.broadcast %cst_46 : f32 to vector<64x1xf32>
    %134 = arith.addf %130, %133 : vector<64x1xf32>
    %135 = math.rsqrt %134 : vector<64x1xf32>
    %136 = vector.broadcast %135 : vector<64x1xf32> to vector<64x32xf32>
    %137 = arith.mulf %132, %136 : vector<64x32xf32>
    %138 = vector.broadcast %112 : vector<1x32xf32> to vector<64x32xf32>
    %139 = arith.mulf %137, %138 : vector<64x32xf32>
    %140 = vector.broadcast %113 : vector<1x32xf32> to vector<64x32xf32>
    %141 = arith.addf %139, %140 : vector<64x32xf32>
    %c0_47 = arith.constant 0 : index
    %c0_48 = arith.constant 0 : index
    %142 = vector.load %arg13[%c0_47, %c0_48] : memref<32x96xf32, #tpu.memory_space<vmem>>, vector<32x96xf32>
    %c0_49 = arith.constant 0 : index
    %c0_50 = arith.constant 0 : index
    %143 = vector.load %arg14[%c0_49, %c0_50] : memref<32x32xf32, #tpu.memory_space<vmem>>, vector<32x32xf32>
    %cst_51 = arith.constant dense<0.000000e+00> : vector<64x96xf32>
    %144 = tpu.matmul %141, %142, %cst_51 {dimension_numbers = #tpu.dot_dimension_numbers<[1], [0], [0], [1], [0, 0, 1, 1], [], []>} : vector<64x32xf32>, vector<32x96xf32>, vector<64x96xf32> -> vector<64x96xf32>
    %145 = vector.broadcast %118 : vector<1x96xf32> to vector<64x96xf32>
    %146 = arith.addf %144, %145 : vector<64x96xf32>
    %147 = vector.extract_strided_slice %146 {offsets = [0, 0], sizes = [64, 32], strides = [1, 1]} : vector<64x96xf32> to vector<64x32xf32>
    %148 = vector.extract_strided_slice %146 {offsets = [0, 32], sizes = [64, 32], strides = [1, 1]} : vector<64x96xf32> to vector<64x32xf32>
    %149 = tpu.transpose %148, [1, 0] : vector<64x32xf32> -> vector<32x64xf32>
    %150 = vector.extract_strided_slice %146 {offsets = [0, 64], sizes = [64, 32], strides = [1, 1]} : vector<64x96xf32> to vector<64x32xf32>
    %151 = tpu.transpose %150, [1, 0] : vector<64x32xf32> -> vector<32x64xf32>
    %152 = tpu.concatenate %149, %149, %149, %149, %149, %149, %149, %149 in 1 : vector<32x64xf32>, vector<32x64xf32>, vector<32x64xf32>, vector<32x64xf32>, vector<32x64xf32>, vector<32x64xf32>, vector<32x64xf32>, vector<32x64xf32> -> vector<32x512xf32>
    %153 = arith.mulf %152, %0 : vector<32x512xf32>
    %cst_52 = arith.constant dense<0.000000e+00> : vector<64x512xf32>
    %154 = tpu.matmul %147, %153, %cst_52 {dimension_numbers = #tpu.dot_dimension_numbers<[1], [0], [0], [1], [0, 0, 1, 1], [], []>} : vector<64x32xf32>, vector<32x512xf32>, vector<64x512xf32> -> vector<64x512xf32>
    %c0_53 = arith.constant 0 : index
    %c0_54 = arith.constant 0 : index
    %155 = vector.load %arg12[%c0_53, %c0_54] : memref<64x512xf32, #tpu.memory_space<vmem>>, vector<64x512xf32>
    %156 = arith.addf %154, %155 : vector<64x512xf32>
    %cst_55 = arith.constant dense<0xFF800000> : vector<64xf32>
    %157 = vector.multi_reduction <maximumf>, %156, %cst_55 [1] : vector<64x512xf32> to vector<64xf32>
    %158 = vector.shape_cast %157 : vector<64xf32> to vector<64x1xf32>
    %159 = vector.broadcast %158 : vector<64x1xf32> to vector<64x512xf32>
    %160 = arith.subf %156, %159 : vector<64x512xf32>
    %161 = math.exp %160 : vector<64x512xf32>
    %162 = tpu.concatenate %151, %151, %151, %151, %151, %151, %151, %151 in 1 : vector<32x64xf32>, vector<32x64xf32>, vector<32x64xf32>, vector<32x64xf32>, vector<32x64xf32>, vector<32x64xf32>, vector<32x64xf32>, vector<32x64xf32> -> vector<32x512xf32>
    %163 = arith.mulf %162, %0 : vector<32x512xf32>
    %164 = tpu.concatenate %163, %0 in 0 : vector<32x512xf32>, vector<32x512xf32> -> vector<64x512xf32>
    %cst_56 = arith.constant dense<0.000000e+00> : vector<64x64xf32>
    %165 = tpu.matmul %161, %164, %cst_56 {dimension_numbers = #tpu.dot_dimension_numbers<[1], [1], [0], [0], [0, 0, 1, 0], [], []>} : vector<64x512xf32>, vector<64x512xf32>, vector<64x64xf32> -> vector<64x64xf32>
    %166 = vector.extract_strided_slice %165 {offsets = [0, 0], sizes = [64, 32], strides = [1, 1]} : vector<64x64xf32> to vector<64x32xf32>
    %167 = vector.extract_strided_slice %165 {offsets = [0, 32], sizes = [64, 32], strides = [1, 1]} : vector<64x64xf32> to vector<64x32xf32>
    %168 = tpu.reciprocal %167 {approx = true} : vector<64x32xf32> -> vector<64x32xf32>
    %169 = arith.mulf %166, %168 : vector<64x32xf32>
    %cst_57 = arith.constant dense<0.000000e+00> : vector<64x32xf32>
    %170 = tpu.matmul %169, %143, %cst_57 {dimension_numbers = #tpu.dot_dimension_numbers<[1], [0], [0], [1], [0, 0, 1, 1], [], []>} : vector<64x32xf32>, vector<32x32xf32>, vector<64x32xf32> -> vector<64x32xf32>
    %171 = vector.broadcast %114 : vector<1x32xf32> to vector<64x32xf32>
    %172 = arith.addf %170, %171 : vector<64x32xf32>
    %173 = arith.addf %111, %172 : vector<64x32xf32>
    %cst_58 = arith.constant dense<0.000000e+00> : vector<64xf32>
    %174 = vector.multi_reduction <add>, %173, %cst_58 [1] : vector<64x32xf32> to vector<64xf32>
    %175 = vector.shape_cast %174 : vector<64xf32> to vector<64x1xf32>
    %cst_59 = arith.constant 3.200000e+01 : f32
    %176 = vector.broadcast %cst_59 : f32 to vector<64x1xf32>
    %177 = arith.divf %175, %176 : vector<64x1xf32>
    %178 = vector.broadcast %177 : vector<64x1xf32> to vector<64x32xf32>
    %179 = arith.subf %173, %178 : vector<64x32xf32>
    %180 = arith.mulf %179, %179 : vector<64x32xf32>
    %cst_60 = arith.constant dense<0.000000e+00> : vector<64xf32>
    %181 = vector.multi_reduction <add>, %180, %cst_60 [1] : vector<64x32xf32> to vector<64xf32>
    %182 = vector.shape_cast %181 : vector<64xf32> to vector<64x1xf32>
    %cst_61 = arith.constant 3.200000e+01 : f32
    %183 = vector.broadcast %cst_61 : f32 to vector<64x1xf32>
    %184 = arith.divf %182, %183 : vector<64x1xf32>
    %185 = vector.broadcast %177 : vector<64x1xf32> to vector<64x32xf32>
    %186 = arith.subf %173, %185 : vector<64x32xf32>
    %cst_62 = arith.constant 9.99999974E-6 : f32
    %187 = vector.broadcast %cst_62 : f32 to vector<64x1xf32>
    %188 = arith.addf %184, %187 : vector<64x1xf32>
    %189 = math.rsqrt %188 : vector<64x1xf32>
    %190 = vector.broadcast %189 : vector<64x1xf32> to vector<64x32xf32>
    %191 = arith.mulf %186, %190 : vector<64x32xf32>
    %192 = vector.broadcast %115 : vector<1x32xf32> to vector<64x32xf32>
    %193 = arith.mulf %191, %192 : vector<64x32xf32>
    %194 = vector.broadcast %116 : vector<1x32xf32> to vector<64x32xf32>
    %195 = arith.addf %193, %194 : vector<64x32xf32>
    %c0_63 = arith.constant 0 : index
    %c0_64 = arith.constant 0 : index
    %196 = vector.load %arg15[%c0_63, %c0_64] : memref<32x128xf32, #tpu.memory_space<vmem>>, vector<32x128xf32>
    %cst_65 = arith.constant dense<0.000000e+00> : vector<64x128xf32>
    %197 = tpu.matmul %195, %196, %cst_65 {dimension_numbers = #tpu.dot_dimension_numbers<[1], [0], [0], [1], [0, 0, 1, 1], [], []>} : vector<64x32xf32>, vector<32x128xf32>, vector<64x128xf32> -> vector<64x128xf32>
    %198 = vector.broadcast %119 : vector<1x128xf32> to vector<64x128xf32>
    %199 = arith.addf %197, %198 : vector<64x128xf32>
    %cst_66 = arith.constant 5.000000e-01 : f32
    %200 = vector.broadcast %cst_66 : f32 to vector<64x128xf32>
    %201 = arith.mulf %200, %199 : vector<64x128xf32>
    %cst_67 = arith.constant 0.707106769 : f32
    %202 = vector.broadcast %cst_67 : f32 to vector<64x128xf32>
    %203 = arith.mulf %199, %202 : vector<64x128xf32>
    %204 = math.erf %203 : vector<64x128xf32>
    %cst_68 = arith.constant 1.000000e+00 : f32
    %205 = vector.broadcast %cst_68 : f32 to vector<64x128xf32>
    %206 = arith.addf %205, %204 : vector<64x128xf32>
    %207 = arith.mulf %201, %206 : vector<64x128xf32>
    %c0_69 = arith.constant 0 : index
    %c0_70 = arith.constant 0 : index
    %208 = vector.load %arg16[%c0_69, %c0_70] : memref<128x32xf32, #tpu.memory_space<vmem>>, vector<128x32xf32>
    %cst_71 = arith.constant dense<0.000000e+00> : vector<64x32xf32>
    %209 = tpu.matmul %207, %208, %cst_71 {dimension_numbers = #tpu.dot_dimension_numbers<[1], [0], [0], [1], [0, 0, 1, 1], [], []>} : vector<64x128xf32>, vector<128x32xf32>, vector<64x32xf32> -> vector<64x32xf32>
    %210 = arith.addf %173, %209 : vector<64x32xf32>
    %211 = vector.broadcast %117 : vector<1x32xf32> to vector<64x32xf32>
    %212 = arith.addf %210, %211 : vector<64x32xf32>
    %213 = vector.extract_strided_slice %1 {offsets = [13, 0], sizes = [1, 32], strides = [1, 1]} : vector<21x32xf32> to vector<1x32xf32>
    %214 = vector.extract_strided_slice %1 {offsets = [14, 0], sizes = [1, 32], strides = [1, 1]} : vector<21x32xf32> to vector<1x32xf32>
    %215 = vector.extract_strided_slice %1 {offsets = [15, 0], sizes = [1, 32], strides = [1, 1]} : vector<21x32xf32> to vector<1x32xf32>
    %216 = vector.extract_strided_slice %1 {offsets = [16, 0], sizes = [1, 32], strides = [1, 1]} : vector<21x32xf32> to vector<1x32xf32>
    %217 = vector.extract_strided_slice %1 {offsets = [17, 0], sizes = [1, 32], strides = [1, 1]} : vector<21x32xf32> to vector<1x32xf32>
    %218 = vector.extract_strided_slice %1 {offsets = [18, 0], sizes = [1, 32], strides = [1, 1]} : vector<21x32xf32> to vector<1x32xf32>
    %219 = vector.extract_strided_slice %2 {offsets = [2, 0], sizes = [1, 96], strides = [1, 1]} : vector<3x96xf32> to vector<1x96xf32>
    %220 = vector.extract_strided_slice %3 {offsets = [2, 0], sizes = [1, 256], strides = [1, 1]} : vector<3x256xf32> to vector<1x256xf32>
    %cst_72 = arith.constant dense<0.000000e+00> : vector<64xf32>
    %221 = vector.multi_reduction <add>, %212, %cst_72 [1] : vector<64x32xf32> to vector<64xf32>
    %222 = vector.shape_cast %221 : vector<64xf32> to vector<64x1xf32>
    %cst_73 = arith.constant 3.200000e+01 : f32
    %223 = vector.broadcast %cst_73 : f32 to vector<64x1xf32>
    %224 = arith.divf %222, %223 : vector<64x1xf32>
    %225 = vector.broadcast %224 : vector<64x1xf32> to vector<64x32xf32>
    %226 = arith.subf %212, %225 : vector<64x32xf32>
    %227 = arith.mulf %226, %226 : vector<64x32xf32>
    %cst_74 = arith.constant dense<0.000000e+00> : vector<64xf32>
    %228 = vector.multi_reduction <add>, %227, %cst_74 [1] : vector<64x32xf32> to vector<64xf32>
    %229 = vector.shape_cast %228 : vector<64xf32> to vector<64x1xf32>
    %cst_75 = arith.constant 3.200000e+01 : f32
    %230 = vector.broadcast %cst_75 : f32 to vector<64x1xf32>
    %231 = arith.divf %229, %230 : vector<64x1xf32>
    %232 = vector.broadcast %224 : vector<64x1xf32> to vector<64x32xf32>
    %233 = arith.subf %212, %232 : vector<64x32xf32>
    %cst_76 = arith.constant 9.99999974E-6 : f32
    %234 = vector.broadcast %cst_76 : f32 to vector<64x1xf32>
    %235 = arith.addf %231, %234 : vector<64x1xf32>
    %236 = math.rsqrt %235 : vector<64x1xf32>
    %237 = vector.broadcast %236 : vector<64x1xf32> to vector<64x32xf32>
    %238 = arith.mulf %233, %237 : vector<64x32xf32>
    %239 = vector.broadcast %213 : vector<1x32xf32> to vector<64x32xf32>
    %240 = arith.mulf %238, %239 : vector<64x32xf32>
    %241 = vector.broadcast %214 : vector<1x32xf32> to vector<64x32xf32>
    %242 = arith.addf %240, %241 : vector<64x32xf32>
    %c0_77 = arith.constant 0 : index
    %c0_78 = arith.constant 0 : index
    %243 = vector.load %arg18[%c0_77, %c0_78] : memref<32x96xf32, #tpu.memory_space<vmem>>, vector<32x96xf32>
    %c0_79 = arith.constant 0 : index
    %c0_80 = arith.constant 0 : index
    %244 = vector.load %arg19[%c0_79, %c0_80] : memref<32x32xf32, #tpu.memory_space<vmem>>, vector<32x32xf32>
    %cst_81 = arith.constant dense<0.000000e+00> : vector<64x96xf32>
    %245 = tpu.matmul %242, %243, %cst_81 {dimension_numbers = #tpu.dot_dimension_numbers<[1], [0], [0], [1], [0, 0, 1, 1], [], []>} : vector<64x32xf32>, vector<32x96xf32>, vector<64x96xf32> -> vector<64x96xf32>
    %246 = vector.broadcast %219 : vector<1x96xf32> to vector<64x96xf32>
    %247 = arith.addf %245, %246 : vector<64x96xf32>
    %248 = vector.extract_strided_slice %247 {offsets = [0, 0], sizes = [64, 32], strides = [1, 1]} : vector<64x96xf32> to vector<64x32xf32>
    %249 = vector.extract_strided_slice %247 {offsets = [0, 32], sizes = [64, 32], strides = [1, 1]} : vector<64x96xf32> to vector<64x32xf32>
    %250 = tpu.transpose %249, [1, 0] : vector<64x32xf32> -> vector<32x64xf32>
    %251 = vector.extract_strided_slice %247 {offsets = [0, 64], sizes = [64, 32], strides = [1, 1]} : vector<64x96xf32> to vector<64x32xf32>
    %252 = tpu.transpose %251, [1, 0] : vector<64x32xf32> -> vector<32x64xf32>
    %253 = tpu.concatenate %250, %250, %250, %250, %250, %250, %250, %250 in 1 : vector<32x64xf32>, vector<32x64xf32>, vector<32x64xf32>, vector<32x64xf32>, vector<32x64xf32>, vector<32x64xf32>, vector<32x64xf32>, vector<32x64xf32> -> vector<32x512xf32>
    %254 = arith.mulf %253, %0 : vector<32x512xf32>
    %cst_82 = arith.constant dense<0.000000e+00> : vector<64x512xf32>
    %255 = tpu.matmul %248, %254, %cst_82 {dimension_numbers = #tpu.dot_dimension_numbers<[1], [0], [0], [1], [0, 0, 1, 1], [], []>} : vector<64x32xf32>, vector<32x512xf32>, vector<64x512xf32> -> vector<64x512xf32>
    %c0_83 = arith.constant 0 : index
    %c0_84 = arith.constant 0 : index
    %256 = vector.load %arg17[%c0_83, %c0_84] : memref<64x512xf32, #tpu.memory_space<vmem>>, vector<64x512xf32>
    %257 = arith.addf %255, %256 : vector<64x512xf32>
    %cst_85 = arith.constant dense<0xFF800000> : vector<64xf32>
    %258 = vector.multi_reduction <maximumf>, %257, %cst_85 [1] : vector<64x512xf32> to vector<64xf32>
    %259 = vector.shape_cast %258 : vector<64xf32> to vector<64x1xf32>
    %260 = vector.broadcast %259 : vector<64x1xf32> to vector<64x512xf32>
    %261 = arith.subf %257, %260 : vector<64x512xf32>
    %262 = math.exp %261 : vector<64x512xf32>
    %263 = tpu.concatenate %252, %252, %252, %252, %252, %252, %252, %252 in 1 : vector<32x64xf32>, vector<32x64xf32>, vector<32x64xf32>, vector<32x64xf32>, vector<32x64xf32>, vector<32x64xf32>, vector<32x64xf32>, vector<32x64xf32> -> vector<32x512xf32>
    %264 = arith.mulf %263, %0 : vector<32x512xf32>
    %265 = tpu.concatenate %264, %0 in 0 : vector<32x512xf32>, vector<32x512xf32> -> vector<64x512xf32>
    %cst_86 = arith.constant dense<0.000000e+00> : vector<64x64xf32>
    %266 = tpu.matmul %262, %265, %cst_86 {dimension_numbers = #tpu.dot_dimension_numbers<[1], [1], [0], [0], [0, 0, 1, 0], [], []>} : vector<64x512xf32>, vector<64x512xf32>, vector<64x64xf32> -> vector<64x64xf32>
    %267 = vector.extract_strided_slice %266 {offsets = [0, 0], sizes = [64, 32], strides = [1, 1]} : vector<64x64xf32> to vector<64x32xf32>
    %268 = vector.extract_strided_slice %266 {offsets = [0, 32], sizes = [64, 32], strides = [1, 1]} : vector<64x64xf32> to vector<64x32xf32>
    %269 = tpu.reciprocal %268 {approx = true} : vector<64x32xf32> -> vector<64x32xf32>
    %270 = arith.mulf %267, %269 : vector<64x32xf32>
    %cst_87 = arith.constant dense<0.000000e+00> : vector<64x32xf32>
    %271 = tpu.matmul %270, %244, %cst_87 {dimension_numbers = #tpu.dot_dimension_numbers<[1], [0], [0], [1], [0, 0, 1, 1], [], []>} : vector<64x32xf32>, vector<32x32xf32>, vector<64x32xf32> -> vector<64x32xf32>
    %272 = vector.broadcast %215 : vector<1x32xf32> to vector<64x32xf32>
    %273 = arith.addf %271, %272 : vector<64x32xf32>
    %274 = arith.addf %212, %273 : vector<64x32xf32>
    %cst_88 = arith.constant dense<0.000000e+00> : vector<64xf32>
    %275 = vector.multi_reduction <add>, %274, %cst_88 [1] : vector<64x32xf32> to vector<64xf32>
    %276 = vector.shape_cast %275 : vector<64xf32> to vector<64x1xf32>
    %cst_89 = arith.constant 3.200000e+01 : f32
    %277 = vector.broadcast %cst_89 : f32 to vector<64x1xf32>
    %278 = arith.divf %276, %277 : vector<64x1xf32>
    %279 = vector.broadcast %278 : vector<64x1xf32> to vector<64x32xf32>
    %280 = arith.subf %274, %279 : vector<64x32xf32>
    %281 = arith.mulf %280, %280 : vector<64x32xf32>
    %cst_90 = arith.constant dense<0.000000e+00> : vector<64xf32>
    %282 = vector.multi_reduction <add>, %281, %cst_90 [1] : vector<64x32xf32> to vector<64xf32>
    %283 = vector.shape_cast %282 : vector<64xf32> to vector<64x1xf32>
    %cst_91 = arith.constant 3.200000e+01 : f32
    %284 = vector.broadcast %cst_91 : f32 to vector<64x1xf32>
    %285 = arith.divf %283, %284 : vector<64x1xf32>
    %286 = vector.broadcast %278 : vector<64x1xf32> to vector<64x32xf32>
    %287 = arith.subf %274, %286 : vector<64x32xf32>
    %cst_92 = arith.constant 9.99999974E-6 : f32
    %288 = vector.broadcast %cst_92 : f32 to vector<64x1xf32>
    %289 = arith.addf %285, %288 : vector<64x1xf32>
    %290 = math.rsqrt %289 : vector<64x1xf32>
    %291 = vector.broadcast %290 : vector<64x1xf32> to vector<64x32xf32>
    %292 = arith.mulf %287, %291 : vector<64x32xf32>
    %293 = vector.broadcast %216 : vector<1x32xf32> to vector<64x32xf32>
    %294 = arith.mulf %292, %293 : vector<64x32xf32>
    %295 = vector.broadcast %217 : vector<1x32xf32> to vector<64x32xf32>
    %296 = arith.addf %294, %295 : vector<64x32xf32>
    %c0_93 = arith.constant 0 : index
    %c0_94 = arith.constant 0 : index
    %297 = vector.load %arg20[%c0_93, %c0_94] : memref<32x256xf32, #tpu.memory_space<vmem>>, vector<32x256xf32>
    %cst_95 = arith.constant dense<0.000000e+00> : vector<64x256xf32>
    %298 = tpu.matmul %296, %297, %cst_95 {dimension_numbers = #tpu.dot_dimension_numbers<[1], [0], [0], [1], [0, 0, 1, 1], [], []>} : vector<64x32xf32>, vector<32x256xf32>, vector<64x256xf32> -> vector<64x256xf32>
    %299 = vector.broadcast %220 : vector<1x256xf32> to vector<64x256xf32>
    %300 = arith.addf %298, %299 : vector<64x256xf32>
    %cst_96 = arith.constant 5.000000e-01 : f32
    %301 = vector.broadcast %cst_96 : f32 to vector<64x256xf32>
    %302 = arith.mulf %301, %300 : vector<64x256xf32>
    %cst_97 = arith.constant 0.707106769 : f32
    %303 = vector.broadcast %cst_97 : f32 to vector<64x256xf32>
    %304 = arith.mulf %300, %303 : vector<64x256xf32>
    %305 = math.erf %304 : vector<64x256xf32>
    %cst_98 = arith.constant 1.000000e+00 : f32
    %306 = vector.broadcast %cst_98 : f32 to vector<64x256xf32>
    %307 = arith.addf %306, %305 : vector<64x256xf32>
    %308 = arith.mulf %302, %307 : vector<64x256xf32>
    %c0_99 = arith.constant 0 : index
    %c0_100 = arith.constant 0 : index
    %309 = vector.load %arg21[%c0_99, %c0_100] : memref<256x32xf32, #tpu.memory_space<vmem>>, vector<256x32xf32>
    %cst_101 = arith.constant dense<0.000000e+00> : vector<64x32xf32>
    %310 = tpu.matmul %308, %309, %cst_101 {dimension_numbers = #tpu.dot_dimension_numbers<[1], [0], [0], [1], [0, 0, 1, 1], [], []>} : vector<64x256xf32>, vector<256x32xf32>, vector<64x32xf32> -> vector<64x32xf32>
    %311 = arith.addf %274, %310 : vector<64x32xf32>
    %312 = vector.broadcast %218 : vector<1x32xf32> to vector<64x32xf32>
    %313 = arith.addf %311, %312 : vector<64x32xf32>
    %314 = vector.extract_strided_slice %1 {offsets = [19, 0], sizes = [1, 32], strides = [1, 1]} : vector<21x32xf32> to vector<1x32xf32>
    %315 = vector.extract_strided_slice %1 {offsets = [20, 0], sizes = [1, 32], strides = [1, 1]} : vector<21x32xf32> to vector<1x32xf32>
    %cst_102 = arith.constant dense<0.000000e+00> : vector<64xf32>
    %316 = vector.multi_reduction <add>, %313, %cst_102 [1] : vector<64x32xf32> to vector<64xf32>
    %317 = vector.shape_cast %316 : vector<64xf32> to vector<64x1xf32>
    %cst_103 = arith.constant 3.200000e+01 : f32
    %318 = vector.broadcast %cst_103 : f32 to vector<64x1xf32>
    %319 = arith.divf %317, %318 : vector<64x1xf32>
    %320 = vector.broadcast %319 : vector<64x1xf32> to vector<64x32xf32>
    %321 = arith.subf %313, %320 : vector<64x32xf32>
    %322 = arith.mulf %321, %321 : vector<64x32xf32>
    %cst_104 = arith.constant dense<0.000000e+00> : vector<64xf32>
    %323 = vector.multi_reduction <add>, %322, %cst_104 [1] : vector<64x32xf32> to vector<64xf32>
    %324 = vector.shape_cast %323 : vector<64xf32> to vector<64x1xf32>
    %cst_105 = arith.constant 3.200000e+01 : f32
    %325 = vector.broadcast %cst_105 : f32 to vector<64x1xf32>
    %326 = arith.divf %324, %325 : vector<64x1xf32>
    %327 = vector.broadcast %319 : vector<64x1xf32> to vector<64x32xf32>
    %328 = arith.subf %313, %327 : vector<64x32xf32>
    %cst_106 = arith.constant 9.99999974E-6 : f32
    %329 = vector.broadcast %cst_106 : f32 to vector<64x1xf32>
    %330 = arith.addf %326, %329 : vector<64x1xf32>
    %331 = math.rsqrt %330 : vector<64x1xf32>
    %332 = vector.broadcast %331 : vector<64x1xf32> to vector<64x32xf32>
    %333 = arith.mulf %328, %332 : vector<64x32xf32>
    %334 = vector.broadcast %314 : vector<1x32xf32> to vector<64x32xf32>
    %335 = arith.mulf %333, %334 : vector<64x32xf32>
    %336 = vector.broadcast %315 : vector<1x32xf32> to vector<64x32xf32>
    %337 = arith.addf %335, %336 : vector<64x32xf32>
    %cst_107 = arith.constant dense<0.000000e+00> : vector<32xf32>
    %338 = vector.multi_reduction <add>, %337, %cst_107 [0] : vector<64x32xf32> to vector<32xf32>
    %339 = vector.shape_cast %338 : vector<32xf32> to vector<1x32xf32>
    %cst_108 = arith.constant 6.400000e+01 : f32
    %340 = vector.broadcast %cst_108 : f32 to vector<1x32xf32>
    %341 = arith.divf %339, %340 : vector<1x32xf32>
    %c0_109 = arith.constant 0 : index
    %c0_110 = arith.constant 0 : index
    %342 = vector.load %arg22[%c0_109, %c0_110] : memref<32x128xf32, #tpu.memory_space<vmem>>, vector<32x128xf32>
    %cst_111 = arith.constant dense<0.000000e+00> : vector<1x128xf32>
    %343 = tpu.matmul %341, %342, %cst_111 {dimension_numbers = #tpu.dot_dimension_numbers<[1], [0], [0], [1], [0, 0, 1, 1], [], []>} : vector<1x32xf32>, vector<32x128xf32>, vector<1x128xf32> -> vector<1x128xf32>
    %c0_112 = arith.constant 0 : index
    %c0_113 = arith.constant 0 : index
    %344 = vector.load %arg23[%c0_112, %c0_113] : memref<1x128xf32, #tpu.memory_space<vmem>>, vector<1x128xf32>
    %345 = arith.addf %343, %344 : vector<1x128xf32>
    %c0_114 = arith.constant 0 : index
    %c0_115 = arith.constant 0 : index
    %c0_116 = arith.constant 0 : index
    %346 = vector.load %arg24[%c0_114, %c0_115, %c0_116] : memref<1x1x128xf32, #tpu.memory_space<vmem>>, vector<1x1x128xf32>
    %347 = vector.shape_cast %346 : vector<1x1x128xf32> to vector<1x128xf32>
    %348 = vector.shape_cast %345 : vector<1x128xf32> to vector<1x1x128xf32>
    tpu.vector_store %arg24[%c0_114, %c0_115, %c0_116], %348 {strides = array<i32>} : memref<1x1x128xf32, #tpu.memory_space<vmem>>, vector<1x1x128xf32>,
    return
  }
  func.func @transform_0(%arg0: i32) -> (i32, i32, i32) {
    %c0_i32 = arith.constant 0 : i32
    %c0_i32_0 = arith.constant 0 : i32
    %c0_i32_1 = arith.constant 0 : i32
    return %arg0, %c0_i32, %c0_i32_0 : i32, i32, i32
  }
  func.func @transform_1(%arg0: i32) -> (i32, i32) {
    %c0_i32 = arith.constant 0 : i32
    %c0_i32_0 = arith.constant 0 : i32
    %c0_i32_1 = arith.constant 0 : i32
    return %c0_i32, %c0_i32_0 : i32, i32
  }
  func.func @transform_2(%arg0: i32) -> (i32, i32) {
    %c0_i32 = arith.constant 0 : i32
    %c0_i32_0 = arith.constant 0 : i32
    %c0_i32_1 = arith.constant 0 : i32
    return %c0_i32, %c0_i32_0 : i32, i32
  }
  func.func @transform_3(%arg0: i32) -> (i32, i32) {
    %c0_i32 = arith.constant 0 : i32
    %c0_i32_0 = arith.constant 0 : i32
    %c0_i32_1 = arith.constant 0 : i32
    return %c0_i32, %c0_i32_0 : i32, i32
  }
  func.func @transform_4(%arg0: i32) -> (i32, i32) {
    %c0_i32 = arith.constant 0 : i32
    %c0_i32_0 = arith.constant 0 : i32
    %c0_i32_1 = arith.constant 0 : i32
    return %c0_i32, %c0_i32_0 : i32, i32
  }
  func.func @transform_5(%arg0: i32) -> (i32, i32) {
    %c0_i32 = arith.constant 0 : i32
    %c0_i32_0 = arith.constant 0 : i32
    %c0_i32_1 = arith.constant 0 : i32
    return %c0_i32, %c0_i32_0 : i32, i32
  }
  func.func @transform_6(%arg0: i32) -> (i32, i32) {
    %c0_i32 = arith.constant 0 : i32
    %c0_i32_0 = arith.constant 0 : i32
    %c0_i32_1 = arith.constant 0 : i32
    return %c0_i32, %c0_i32_0 : i32, i32
  }
  func.func @transform_7(%arg0: i32) -> (i32, i32) {
    %c0_i32 = arith.constant 0 : i32
    %c0_i32_0 = arith.constant 0 : i32
    %c0_i32_1 = arith.constant 0 : i32
    return %c0_i32, %c0_i32_0 : i32, i32
  }
  func.func @transform_8(%arg0: i32) -> (i32, i32) {
    %c0_i32 = arith.constant 0 : i32
    %c0_i32_0 = arith.constant 0 : i32
    %c0_i32_1 = arith.constant 0 : i32
    return %c0_i32, %c0_i32_0 : i32, i32
  }
  func.func @transform_9(%arg0: i32) -> (i32, i32) {
    %c0_i32 = arith.constant 0 : i32
    %c0_i32_0 = arith.constant 0 : i32
    %c0_i32_1 = arith.constant 0 : i32
    return %c0_i32, %c0_i32_0 : i32, i32
  }
  func.func @transform_10(%arg0: i32) -> (i32, i32) {
    %c0_i32 = arith.constant 0 : i32
    %c0_i32_0 = arith.constant 0 : i32
    %c0_i32_1 = arith.constant 0 : i32
    return %c0_i32, %c0_i32_0 : i32, i32
  }
  func.func @transform_11(%arg0: i32) -> (i32, i32) {
    %c0_i32 = arith.constant 0 : i32
    %c0_i32_0 = arith.constant 0 : i32
    %c0_i32_1 = arith.constant 0 : i32
    return %c0_i32, %c0_i32_0 : i32, i32
  }
  func.func @transform_12(%arg0: i32) -> (i32, i32) {
    %c0_i32 = arith.constant 0 : i32
    %c0_i32_0 = arith.constant 0 : i32
    %c0_i32_1 = arith.constant 0 : i32
    return %c0_i32, %c0_i32_0 : i32, i32
  }
  func.func @transform_13(%arg0: i32) -> (i32, i32) {
    %c0_i32 = arith.constant 0 : i32
    %c0_i32_0 = arith.constant 0 : i32
    %c0_i32_1 = arith.constant 0 : i32
    return %c0_i32, %c0_i32_0 : i32, i32
  }
  func.func @transform_14(%arg0: i32) -> (i32, i32) {
    %c0_i32 = arith.constant 0 : i32
    %c0_i32_0 = arith.constant 0 : i32
    %c0_i32_1 = arith.constant 0 : i32
    return %c0_i32, %c0_i32_0 : i32, i32
  }
  func.func @transform_15(%arg0: i32) -> (i32, i32) {
    %c0_i32 = arith.constant 0 : i32
    %c0_i32_0 = arith.constant 0 : i32
    %c0_i32_1 = arith.constant 0 : i32
    return %c0_i32, %c0_i32_0 : i32, i32
  }
  func.func @transform_16(%arg0: i32) -> (i32, i32) {
    %c0_i32 = arith.constant 0 : i32
    %c0_i32_0 = arith.constant 0 : i32
    %c0_i32_1 = arith.constant 0 : i32
    return %c0_i32, %c0_i32_0 : i32, i32
  }
  func.func @transform_17(%arg0: i32) -> (i32, i32) {
    %c0_i32 = arith.constant 0 : i32
    %c0_i32_0 = arith.constant 0 : i32
    %c0_i32_1 = arith.constant 0 : i32
    return %c0_i32, %c0_i32_0 : i32, i32
  }
  func.func @transform_18(%arg0: i32) -> (i32, i32) {
    %c0_i32 = arith.constant 0 : i32
    %c0_i32_0 = arith.constant 0 : i32
    %c0_i32_1 = arith.constant 0 : i32
    return %c0_i32, %c0_i32_0 : i32, i32
  }
  func.func @transform_19(%arg0: i32) -> (i32, i32) {
    %c0_i32 = arith.constant 0 : i32
    %c0_i32_0 = arith.constant 0 : i32
    %c0_i32_1 = arith.constant 0 : i32
    return %c0_i32, %c0_i32_0 : i32, i32
  }
  func.func @transform_20(%arg0: i32) -> (i32, i32) {
    %c0_i32 = arith.constant 0 : i32
    %c0_i32_0 = arith.constant 0 : i32
    %c0_i32_1 = arith.constant 0 : i32
    return %c0_i32, %c0_i32_0 : i32, i32
  }
  func.func @transform_21(%arg0: i32) -> (i32, i32) {
    %c0_i32 = arith.constant 0 : i32
    %c0_i32_0 = arith.constant 0 : i32
    %c0_i32_1 = arith.constant 0 : i32
    return %c0_i32, %c0_i32_0 : i32, i32
  }
  func.func @transform_22(%arg0: i32) -> (i32, i32) {
    %c0_i32 = arith.constant 0 : i32
    %c0_i32_0 = arith.constant 0 : i32
    %c0_i32_1 = arith.constant 0 : i32
    return %c0_i32, %c0_i32_0 : i32, i32
  }
  func.func @transform_23(%arg0: i32) -> (i32, i32, i32) {
    %c0_i32 = arith.constant 0 : i32
    %c0_i32_0 = arith.constant 0 : i32
    %c0_i32_1 = arith.constant 0 : i32
    return %arg0, %c0_i32, %c0_i32_0 : i32, i32, i32
  }
}

</mosaic_0001>

<llo_original>
// kernel: _lambda_.1
$region0: #{_lambda_.1}
  #allocation0 [shape = 'u32[]', space=smem, size = 0x4, offset = 0x4, fixed_abs, tag = 'smem constant byte address 0x4 - core index']
  #allocation1 [shape = 'u32[72,128]{1,0:T(1,128)}', space=vmem, size = 0x9000, scoped, tag = 'internal scratch']
  %s0 = inlined_call_operand.vmem [shape: f32[2,64,48], index: 0, kind: input, shape index: {}]
  %s1 = inlined_call_operand.vmem [shape: f32[48,32], index: 1, kind: input, shape index: {}]
  %s2 = inlined_call_operand.vmem [shape: f32[64,32], index: 2, kind: input, shape index: {}]
  %s3 = inlined_call_operand.vmem [shape: f32[32,512], index: 3, kind: input, shape index: {}]
  %s4 = inlined_call_operand.vmem [shape: f32[21,32], index: 4, kind: input, shape index: {}]
  %s5 = inlined_call_operand.vmem [shape: f32[3,96], index: 5, kind: input, shape index: {}]
  %s6 = inlined_call_operand.vmem [shape: f32[3,256], index: 6, kind: input, shape index: {}]
  %s7 = inlined_call_operand.vmem [shape: f32[32,96], index: 7, kind: input, shape index: {}]
  %s8 = inlined_call_operand.vmem [shape: f32[32,32], index: 8, kind: input, shape index: {}]
  %s9 = inlined_call_operand.vmem [shape: f32[32,64], index: 9, kind: input, shape index: {}]
  %s10 = inlined_call_operand.vmem [shape: f32[64,32], index: 10, kind: input, shape index: {}]
  %s11 = inlined_call_operand.vmem [shape: f32[64,512], index: 11, kind: input, shape index: {}]
  %s12 = inlined_call_operand.vmem [shape: f32[32,96], index: 12, kind: input, shape index: {}]
  %s13 = inlined_call_operand.vmem [shape: f32[32,32], index: 13, kind: input, shape index: {}]
  %s14 = inlined_call_operand.vmem [shape: f32[32,128], index: 14, kind: input, shape index: {}]
  %s15 = inlined_call_operand.vmem [shape: f32[128,32], index: 15, kind: input, shape index: {}]
  %s16 = inlined_call_operand.vmem [shape: f32[64,512], index: 16, kind: input, shape index: {}]
  %s17 = inlined_call_operand.vmem [shape: f32[32,96], index: 17, kind: input, shape index: {}]
  %s18 = inlined_call_operand.vmem [shape: f32[32,32], index: 18, kind: input, shape index: {}]
  %s19 = inlined_call_operand.vmem [shape: f32[32,256], index: 19, kind: input, shape index: {}]
  %s20 = inlined_call_operand.vmem [shape: f32[256,32], index: 20, kind: input, shape index: {}]
  %s21 = inlined_call_operand.vmem [shape: f32[32,128], index: 21, kind: input, shape index: {}]
  %s22 = inlined_call_operand.vmem [shape: f32[1,128], index: 22, kind: input, shape index: {}]
  %s23 = inlined_call_operand.hbm [shape: f32[2,1,128], index: 23, kind: output, shape index: {}]
  %s24 = sld [smem:[#allocation0]]
  $region125: #{_lambda_.1} parent=0
    _
  %s26 = ssub.s32 1, %s24
  %s27 = scalar_select 0, %s26, %s24
  $region1: #{_lambda_.1} parent=0
    #allocation2 [shape = 'u8[1024]{0}', space=vmem, size = 0x400, scoped, tag = 'output window, operand 0']
    #allocation3 [shape = 's32[2]{0}', space=sflag, size = 0x8, scoped, tag = 'scoped memory for _lambda_.1']
    %28 = vsyncpa [#allocation3], 0
    %s29 = scalar_lea.sflag [#allocation3], 1
    %30 = vsyncpa %s29, 0
    loop: start=0, step=1, limit=4
    $region2: #{_lambda_.1} parent=1 // loop_pre_header
      _
    $region3: #{_lambda_.1} parent=1 // loop_header
      %s32 = sphi 0, %s36
      %p33 = scmp.ge.s32.totalorder %s32, 4
      %s42 = sphi 0, %s44
      %s45 = sphi 0, %s42
      %s46 = sphi 0, %s45
      %s62 = sphi 0, %s46
      %s66 = sphi 0, %s66
      %s68 = sphi 0, %s66
      %s69 = sphi 0, %s68
      %s83 = sphi 0, %s69
      %s87 = sphi 0, %s87
      %s89 = sphi 0, %s87
      %s90 = sphi 0, %s89
      %s104 = sphi 0, %s90
      %s108 = sphi 0, %s108
      %s110 = sphi 0, %s108
      %s111 = sphi 0, %s110
      %s125 = sphi 0, %s111
      %s129 = sphi 0, %s129
      %s131 = sphi 0, %s129
      %s132 = sphi 0, %s131
      %s146 = sphi 0, %s132
      %s150 = sphi 0, %s150
      %s152 = sphi 0, %s150
      %s153 = sphi 0, %s152
      %s167 = sphi 0, %s153
      %s171 = sphi 0, %s171
      %s173 = sphi 0, %s171
      %s174 = sphi 0, %s173
      %s188 = sphi 0, %s174
      %s192 = sphi 0, %s192
      %s194 = sphi 0, %s192
      %s195 = sphi 0, %s194
      %s209 = sphi 0, %s195
      %s213 = sphi 0, %s213
      %s215 = sphi 0, %s213
      %s216 = sphi 0, %s215
      %s230 = sphi 0, %s216
      %s234 = sphi 0, %s234
      %s236 = sphi 0, %s234
      %s237 = sphi 0, %s236
      %s251 = sphi 0, %s237
      %s255 = sphi 0, %s255
      %s257 = sphi 0, %s255
      %s258 = sphi 0, %s257
      %s272 = sphi 0, %s258
      %s276 = sphi 0, %s276
      %s278 = sphi 0, %s276
      %s279 = sphi 0, %s278
      %s293 = sphi 0, %s279
      %s297 = sphi 0, %s297
      %s299 = sphi 0, %s297
      %s300 = sphi 0, %s299
      %s314 = sphi 0, %s300
      %s318 = sphi 0, %s318
      %s320 = sphi 0, %s318
      %s321 = sphi 0, %s320
      %s335 = sphi 0, %s321
      %s339 = sphi 0, %s339
      %s341 = sphi 0, %s339
      %s342 = sphi 0, %s341
      %s356 = sphi 0, %s342
      %s360 = sphi 0, %s360
      %s362 = sphi 0, %s360
      %s363 = sphi 0, %s362
      %s377 = sphi 0, %s363
      %s381 = sphi 0, %s381
      %s383 = sphi 0, %s381
      %s384 = sphi 0, %s383
      %s398 = sphi 0, %s384
      %s402 = sphi 0, %s402
      %s404 = sphi 0, %s402
      %s405 = sphi 0, %s404
      %s419 = sphi 0, %s405
      %s423 = sphi 0, %s423
      %s425 = sphi 0, %s423
      %s426 = sphi 0, %s425
      %s440 = sphi 0, %s426
      %s444 = sphi 0, %s444
      %s446 = sphi 0, %s444
      %s447 = sphi 0, %s446
      %s461 = sphi 0, %s447
      %s465 = sphi 0, %s465
      %s467 = sphi 0, %s465
      %s468 = sphi 0, %s467
      %s482 = sphi 0, %s468
      %s486 = sphi 0, %s486
      %s488 = sphi 0, %s486
      %s489 = sphi 0, %s488
      %s503 = sphi 0, %s489
      %s507 = sphi 0, %s507
      %s509 = sphi 0, %s507
      %s510 = sphi 0, %s509
      %s524 = sphi 0, %s510
      %s530 = sphi 0, %s532
      %s533 = sphi 0, %s530
      %s534 = sphi 0, %s533
      %s550 = sphi 0, %s534
    $region4: #{_lambda_.1} parent=1 // loop_header_branch
      %35 = sbr.rel (%p33) target = $region8
    $region5: #{_lambda_.1} parent=1 // loop_body
      %s37 = ssub.s32 %s32, 1
      %s38 = ssub.s32 %s32, 2
      %s39 = sadd.s32 %s32, 1
      %s40 = ssub.s32 %s32, %s39
      %p41 = scmp.eq.s32.totalorder %s40, 0
      %s43 = sadd.s32 %s42, 1
      %s44 = scalar_select %p41, %s42, %s43
      %p47 = pneg %p41
      %p48 = scmp.eq.s32.totalorder %s32, 1
      %p49 = por %p47, %p48
      %p50 = scmp.ne.s32.totalorder %s42, %s45
      %p51 = scmp.eq.s32.totalorder %s32, 0
      %p52 = por %p50, %p51
      %p53 = scmp.ne.s32.totalorder %s42, %s45
      %p54 = scmp.eq.s32.totalorder %s37, 1
      %p55 = por %p53, %p54
      %p56 = scmp.ne.s32.totalorder %s45, %s46
      %p57 = scmp.eq.s32.totalorder %s37, 0
      %p58 = por %p56, %p57
      %p59 = scmp.ne.s32.totalorder %s45, %s46
      %p60 = scmp.eq.s32.totalorder %s38, 1
      %p61 = por %p59, %p60
      %p63 = scmp.ne.s32.totalorder %s46, %s62
      %p64 = scmp.eq.s32.totalorder %s38, 0
      %p65 = por %p63, %p64
      %s67 = sadd.s32 %s66, 1
      %p70 = scmp.eq.s32.totalorder %s32, 1
      %p71 = scmp.ne.s32.totalorder %s66, %s68
      %p72 = scmp.eq.s32.totalorder %s32, 0
      %p73 = por %p71, %p72
      %p74 = scmp.ne.s32.totalorder %s66, %s68
      %p75 = scmp.eq.s32.totalorder %s37, 1
      %p76 = por %p74, %p75
      %p77 = scmp.ne.s32.totalorder %s68, %s69
      %p78 = scmp.eq.s32.totalorder %s37, 0
      %p79 = por %p77, %p78
      %p80 = scmp.ne.s32.totalorder %s68, %s69
      %p81 = scmp.eq.s32.totalorder %s38, 1
      %p82 = por %p80, %p81
      %p84 = scmp.ne.s32.totalorder %s69, %s83
      %p85 = scmp.eq.s32.totalorder %s38, 0
      %p86 = por %p84, %p85
      %s88 = sadd.s32 %s87, 1
      %p91 = scmp.eq.s32.totalorder %s32, 1
      %p92 = scmp.ne.s32.totalorder %s87, %s89
      %p93 = scmp.eq.s32.totalorder %s32, 0
      %p94 = por %p92, %p93
      %p95 = scmp.ne.s32.totalorder %s87, %s89
      %p96 = scmp.eq.s32.totalorder %s37, 1
      %p97 = por %p95, %p96
      %p98 = scmp.ne.s32.totalorder %s89, %s90
      %p99 = scmp.eq.s32.totalorder %s37, 0
      %p100 = por %p98, %p99
      %p101 = scmp.ne.s32.totalorder %s89, %s90
      %p102 = scmp.eq.s32.totalorder %s38, 1
      %p103 = por %p101, %p102
      %p105 = scmp.ne.s32.totalorder %s90, %s104
      %p106 = scmp.eq.s32.totalorder %s38, 0
      %p107 = por %p105, %p106
      %s109 = sadd.s32 %s108, 1
      %p112 = scmp.eq.s32.totalorder %s32, 1
      %p113 = scmp.ne.s32.totalorder %s108, %s110
      %p114 = scmp.eq.s32.totalorder %s32, 0
      %p115 = por %p113, %p114
      %p116 = scmp.ne.s32.totalorder %s108, %s110
      %p117 = scmp.eq.s32.totalorder %s37, 1
      %p118 = por %p116, %p117
      %p119 = scmp.ne.s32.totalorder %s110, %s111
      %p120 = scmp.eq.s32.totalorder %s37, 0
      %p121 = por %p119, %p120
      %p122 = scmp.ne.s32.totalorder %s110, %s111
      %p123 = scmp.eq.s32.totalorder %s38, 1
      %p124 = por %p122, %p123
      %p126 = scmp.ne.s32.totalorder %s111, %s125
      %p127 = scmp.eq.s32.totalorder %s38, 0
      %p128 = por %p126, %p127
      %s130 = sadd.s32 %s129, 1
      %p133 = scmp.eq.s32.totalorder %s32, 1
      %p134 = scmp.ne.s32.totalorder %s129, %s131
      %p135 = scmp.eq.s32.totalorder %s32, 0
      %p136 = por %p134, %p135
      %p137 = scmp.ne.s32.totalorder %s129, %s131
      %p138 = scmp.eq.s32.totalorder %s37, 1
      %p139 = por %p137, %p138
      %p140 = scmp.ne.s32.totalorder %s131, %s132
      %p141 = scmp.eq.s32.totalorder %s37, 0
      %p142 = por %p140, %p141
      %p143 = scmp.ne.s32.totalorder %s131, %s132
      %p144 = scmp.eq.s32.totalorder %s38, 1
      %p145 = por %p143, %p144
      %p147 = scmp.ne.s32.totalorder %s132, %s146
      %p148 = scmp.eq.s32.totalorder %s38, 0
      %p149 = por %p147, %p148
      %s151 = sadd.s32 %s150, 1
      %p154 = scmp.eq.s32.totalorder %s32, 1
      %p155 = scmp.ne.s32.totalorder %s150, %s152
      %p156 = scmp.eq.s32.totalorder %s32, 0
      %p157 = por %p155, %p156
      %p158 = scmp.ne.s32.totalorder %s150, %s152
      %p159 = scmp.eq.s32.totalorder %s37, 1
      %p160 = por %p158, %p159
      %p161 = scmp.ne.s32.totalorder %s152, %s153
      %p162 = scmp.eq.s32.totalorder %s37, 0
      %p163 = por %p161, %p162
      %p164 = scmp.ne.s32.totalorder %s152, %s153
      %p165 = scmp.eq.s32.totalorder %s38, 1
      %p166 = por %p164, %p165
      %p168 = scmp.ne.s32.totalorder %s153, %s167
      %p169 = scmp.eq.s32.totalorder %s38, 0
      %p170 = por %p168, %p169
      %s172 = sadd.s32 %s171, 1
      %p175 = scmp.eq.s32.totalorder %s32, 1
      %p176 = scmp.ne.s32.totalorder %s171, %s173
      %p177 = scmp.eq.s32.totalorder %s32, 0
      %p178 = por %p176, %p177
      %p179 = scmp.ne.s32.totalorder %s171, %s173
      %p180 = scmp.eq.s32.totalorder %s37, 1
      %p181 = por %p179, %p180
      %p182 = scmp.ne.s32.totalorder %s173, %s174
      %p183 = scmp.eq.s32.totalorder %s37, 0
      %p184 = por %p182, %p183
      %p185 = scmp.ne.s32.totalorder %s173, %s174
      %p186 = scmp.eq.s32.totalorder %s38, 1
      %p187 = por %p185, %p186
      %p189 = scmp.ne.s32.totalorder %s174, %s188
      %p190 = scmp.eq.s32.totalorder %s38, 0
      %p191 = por %p189, %p190
      %s193 = sadd.s32 %s192, 1
      %p196 = scmp.eq.s32.totalorder %s32, 1
      %p197 = scmp.ne.s32.totalorder %s192, %s194
      %p198 = scmp.eq.s32.totalorder %s32, 0
      %p199 = por %p197, %p198
      %p200 = scmp.ne.s32.totalorder %s192, %s194
      %p201 = scmp.eq.s32.totalorder %s37, 1
      %p202 = por %p200, %p201
      %p203 = scmp.ne.s32.totalorder %s194, %s195
      %p204 = scmp.eq.s32.totalorder %s37, 0
      %p205 = por %p203, %p204
      %p206 = scmp.ne.s32.totalorder %s194, %s195
      %p207 = scmp.eq.s32.totalorder %s38, 1
      %p208 = por %p206, %p207
      %p210 = scmp.ne.s32.totalorder %s195, %s209
      %p211 = scmp.eq.s32.totalorder %s38, 0
      %p212 = por %p210, %p211
      %s214 = sadd.s32 %s213, 1
      %p217 = scmp.eq.s32.totalorder %s32, 1
      %p218 = scmp.ne.s32.totalorder %s213, %s215
      %p219 = scmp.eq.s32.totalorder %s32, 0
      %p220 = por %p218, %p219
      %p221 = scmp.ne.s32.totalorder %s213, %s215
      %p222 = scmp.eq.s32.totalorder %s37, 1
      %p223 = por %p221, %p222
      %p224 = scmp.ne.s32.totalorder %s215, %s216
      %p225 = scmp.eq.s32.totalorder %s37, 0
      %p226 = por %p224, %p225
      %p227 = scmp.ne.s32.totalorder %s215, %s216
      %p228 = scmp.eq.s32.totalorder %s38, 1
      %p229 = por %p227, %p228
      %p231 = scmp.ne.s32.totalorder %s216, %s230
      %p232 = scmp.eq.s32.totalorder %s38, 0
      %p233 = por %p231, %p232
      %s235 = sadd.s32 %s234, 1
      %p238 = scmp.eq.s32.totalorder %s32, 1
      %p239 = scmp.ne.s32.totalorder %s234, %s236
      %p240 = scmp.eq.s32.totalorder %s32, 0
      %p241 = por %p239, %p240
      %p242 = scmp.ne.s32.totalorder %s234, %s236
      %p243 = scmp.eq.s32.totalorder %s37, 1
      %p244 = por %p242, %p243
      %p245 = scmp.ne.s32.totalorder %s236, %s237
      %p246 = scmp.eq.s32.totalorder %s37, 0
      %p247 = por %p245, %p246
      %p248 = scmp.ne.s32.totalorder %s236, %s237
      %p249 = scmp.eq.s32.totalorder %s38, 1
      %p250 = por %p248, %p249
      %p252 = scmp.ne.s32.totalorder %s237, %s251
      %p253 = scmp.eq.s32.totalorder %s38, 0
      %p254 = por %p252, %p253
      %s256 = sadd.s32 %s255, 1
      %p259 = scmp.eq.s32.totalorder %s32, 1
      %p260 = scmp.ne.s32.totalorder %s255, %s257
      %p261 = scmp.eq.s32.totalorder %s32, 0
      %p262 = por %p260, %p261
      %p263 = scmp.ne.s32.totalorder %s255, %s257
      %p264 = scmp.eq.s32.totalorder %s37, 1
      %p265 = por %p263, %p264
      %p266 = scmp.ne.s32.totalorder %s257, %s258
      %p267 = scmp.eq.s32.totalorder %s37, 0
      %p268 = por %p266, %p267
      %p269 = scmp.ne.s32.totalorder %s257, %s258
      %p270 = scmp.eq.s32.totalorder %s38, 1
      %p271 = por %p269, %p270
      %p273 = scmp.ne.s32.totalorder %s258, %s272
      %p274 = scmp.eq.s32.totalorder %s38, 0
      %p275 = por %p273, %p274
      %s277 = sadd.s32 %s276, 1
      %p280 = scmp.eq.s32.totalorder %s32, 1
      %p281 = scmp.ne.s32.totalorder %s276, %s278
      %p282 = scmp.eq.s32.totalorder %s32, 0
      %p283 = por %p281, %p282
      %p284 = scmp.ne.s32.totalorder %s276, %s278
      %p285 = scmp.eq.s32.totalorder %s37, 1
      %p286 = por %p284, %p285
      %p287 = scmp.ne.s32.totalorder %s278, %s279
      %p288 = scmp.eq.s32.totalorder %s37, 0
      %p289 = por %p287, %p288
      %p290 = scmp.ne.s32.totalorder %s278, %s279
      %p291 = scmp.eq.s32.totalorder %s38, 1
      %p292 = por %p290, %p291
      %p294 = scmp.ne.s32.totalorder %s279, %s293
      %p295 = scmp.eq.s32.totalorder %s38, 0
      %p296 = por %p294, %p295
      %s298 = sadd.s32 %s297, 1
      %p301 = scmp.eq.s32.totalorder %s32, 1
      %p302 = scmp.ne.s32.totalorder %s297, %s299
      %p303 = scmp.eq.s32.totalorder %s32, 0
      %p304 = por %p302, %p303
      %p305 = scmp.ne.s32.totalorder %s297, %s299
      %p306 = scmp.eq.s32.totalorder %s37, 1
      %p307 = por %p305, %p306
      %p308 = scmp.ne.s32.totalorder %s299, %s300
      %p309 = scmp.eq.s32.totalorder %s37, 0
      %p310 = por %p308, %p309
      %p311 = scmp.ne.s32.totalorder %s299, %s300
      %p312 = scmp.eq.s32.totalorder %s38, 1
      %p313 = por %p311, %p312
      %p315 = scmp.ne.s32.totalorder %s300, %s314
      %p316 = scmp.eq.s32.totalorder %s38, 0
      %p317 = por %p315, %p316
      %s319 = sadd.s32 %s318, 1
      %p322 = scmp.eq.s32.totalorder %s32, 1
      %p323 = scmp.ne.s32.totalorder %s318, %s320
      %p324 = scmp.eq.s32.totalorder %s32, 0
      %p325 = por %p323, %p324
      %p326 = scmp.ne.s32.totalorder %s318, %s320
      %p327 = scmp.eq.s32.totalorder %s37, 1
      %p328 = por %p326, %p327
      %p329 = scmp.ne.s32.totalorder %s320, %s321
      %p330 = scmp.eq.s32.totalorder %s37, 0
      %p331 = por %p329, %p330
      %p332 = scmp.ne.s32.totalorder %s320, %s321
      %p333 = scmp.eq.s32.totalorder %s38, 1
      %p334 = por %p332, %p333
      %p336 = scmp.ne.s32.totalorder %s321, %s335
      %p337 = scmp.eq.s32.totalorder %s38, 0
      %p338 = por %p336, %p337
      %s340 = sadd.s32 %s339, 1
      %p343 = scmp.eq.s32.totalorder %s32, 1
      %p344 = scmp.ne.s32.totalorder %s339, %s341
      %p345 = scmp.eq.s32.totalorder %s32, 0
      %p346 = por %p344, %p345
      %p347 = scmp.ne.s32.totalorder %s339, %s341
      %p348 = scmp.eq.s32.totalorder %s37, 1
      %p349 = por %p347, %p348
      %p350 = scmp.ne.s32.totalorder %s341, %s342
      %p351 = scmp.eq.s32.totalorder %s37, 0
      %p352 = por %p350, %p351
      %p353 = scmp.ne.s32.totalorder %s341, %s342
      %p354 = scmp.eq.s32.totalorder %s38, 1
      %p355 = por %p353, %p354
      %p357 = scmp.ne.s32.totalorder %s342, %s356
      %p358 = scmp.eq.s32.totalorder %s38, 0
      %p359 = por %p357, %p358
      %s361 = sadd.s32 %s360, 1
      %p364 = scmp.eq.s32.totalorder %s32, 1
      %p365 = scmp.ne.s32.totalorder %s360, %s362
      %p366 = scmp.eq.s32.totalorder %s32, 0
      %p367 = por %p365, %p366
      %p368 = scmp.ne.s32.totalorder %s360, %s362
      %p369 = scmp.eq.s32.totalorder %s37, 1
      %p370 = por %p368, %p369
      %p371 = scmp.ne.s32.totalorder %s362, %s363
      %p372 = scmp.eq.s32.totalorder %s37, 0
      %p373 = por %p371, %p372
      %p374 = scmp.ne.s32.totalorder %s362, %s363
      %p375 = scmp.eq.s32.totalorder %s38, 1
      %p376 = por %p374, %p375
      %p378 = scmp.ne.s32.totalorder %s363, %s377
      %p379 = scmp.eq.s32.totalorder %s38, 0
      %p380 = por %p378, %p379
      %s382 = sadd.s32 %s381, 1
      %p385 = scmp.eq.s32.totalorder %s32, 1
      %p386 = scmp.ne.s32.totalorder %s381, %s383
      %p387 = scmp.eq.s32.totalorder %s32, 0
      %p388 = por %p386, %p387
      %p389 = scmp.ne.s32.totalorder %s381, %s383
      %p390 = scmp.eq.s32.totalorder %s37, 1
      %p391 = por %p389, %p390
      %p392 = scmp.ne.s32.totalorder %s383, %s384
      %p393 = scmp.eq.s32.totalorder %s37, 0
      %p394 = por %p392, %p393
      %p395 = scmp.ne.s32.totalorder %s383, %s384
      %p396 = scmp.eq.s32.totalorder %s38, 1
      %p397 = por %p395, %p396
      %p399 = scmp.ne.s32.totalorder %s384, %s398
      %p400 = scmp.eq.s32.totalorder %s38, 0
      %p401 = por %p399, %p400
      %s403 = sadd.s32 %s402, 1
      %p406 = scmp.eq.s32.totalorder %s32, 1
      %p407 = scmp.ne.s32.totalorder %s402, %s404
      %p408 = scmp.eq.s32.totalorder %s32, 0
      %p409 = por %p407, %p408
      %p410 = scmp.ne.s32.totalorder %s402, %s404
      %p411 = scmp.eq.s32.totalorder %s37, 1
      %p412 = por %p410, %p411
      %p413 = scmp.ne.s32.totalorder %s404, %s405
      %p414 = scmp.eq.s32.totalorder %s37, 0
      %p415 = por %p413, %p414
      %p416 = scmp.ne.s32.totalorder %s404, %s405
      %p417 = scmp.eq.s32.totalorder %s38, 1
      %p418 = por %p416, %p417
      %p420 = scmp.ne.s32.totalorder %s405, %s419
      %p421 = scmp.eq.s32.totalorder %s38, 0
      %p422 = por %p420, %p421
      %s424 = sadd.s32 %s423, 1
      %p427 = scmp.eq.s32.totalorder %s32, 1
      %p428 = scmp.ne.s32.totalorder %s423, %s425
      %p429 = scmp.eq.s32.totalorder %s32, 0
      %p430 = por %p428, %p429
      %p431 = scmp.ne.s32.totalorder %s423, %s425
      %p432 = scmp.eq.s32.totalorder %s37, 1
      %p433 = por %p431, %p432
      %p434 = scmp.ne.s32.totalorder %s425, %s426
      %p435 = scmp.eq.s32.totalorder %s37, 0
      %p436 = por %p434, %p435
      %p437 = scmp.ne.s32.totalorder %s425, %s426
      %p438 = scmp.eq.s32.totalorder %s38, 1
      %p439 = por %p437, %p438
      %p441 = scmp.ne.s32.totalorder %s426, %s440
      %p442 = scmp.eq.s32.totalorder %s38, 0
      %p443 = por %p441, %p442
      %s445 = sadd.s32 %s444, 1
      %p448 = scmp.eq.s32.totalorder %s32, 1
      %p449 = scmp.ne.s32.totalorder %s444, %s446
      %p450 = scmp.eq.s32.totalorder %s32, 0
      %p451 = por %p449, %p450
      %p452 = scmp.ne.s32.totalorder %s444, %s446
      %p453 = scmp.eq.s32.totalorder %s37, 1
      %p454 = por %p452, %p453
      %p455 = scmp.ne.s32.totalorder %s446, %s447
      %p456 = scmp.eq.s32.totalorder %s37, 0
      %p457 = por %p455, %p456
      %p458 = scmp.ne.s32.totalorder %s446, %s447
      %p459 = scmp.eq.s32.totalorder %s38, 1
      %p460 = por %p458, %p459
      %p462 = scmp.ne.s32.totalorder %s447, %s461
      %p463 = scmp.eq.s32.totalorder %s38, 0
      %p464 = por %p462, %p463
      %s466 = sadd.s32 %s465, 1
      %p469 = scmp.eq.s32.totalorder %s32, 1
      %p470 = scmp.ne.s32.totalorder %s465, %s467
      %p471 = scmp.eq.s32.totalorder %s32, 0
      %p472 = por %p470, %p471
      %p473 = scmp.ne.s32.totalorder %s465, %s467
      %p474 = scmp.eq.s32.totalorder %s37, 1
      %p475 = por %p473, %p474
      %p476 = scmp.ne.s32.totalorder %s467, %s468
      %p477 = scmp.eq.s32.totalorder %s37, 0
      %p478 = por %p476, %p477
      %p479 = scmp.ne.s32.totalorder %s467, %s468
      %p480 = scmp.eq.s32.totalorder %s38, 1
      %p481 = por %p479, %p480
      %p483 = scmp.ne.s32.totalorder %s468, %s482
      %p484 = scmp.eq.s32.totalorder %s38, 0
      %p485 = por %p483, %p484
      %s487 = sadd.s32 %s486, 1
      %p490 = scmp.eq.s32.totalorder %s32, 1
      %p491 = scmp.ne.s32.totalorder %s486, %s488
      %p492 = scmp.eq.s32.totalorder %s32, 0
      %p493 = por %p491, %p492
      %p494 = scmp.ne.s32.totalorder %s486, %s488
      %p495 = scmp.eq.s32.totalorder %s37, 1
      %p496 = por %p494, %p495
      %p497 = scmp.ne.s32.totalorder %s488, %s489
      %p498 = scmp.eq.s32.totalorder %s37, 0
      %p499 = por %p497, %p498
      %p500 = scmp.ne.s32.totalorder %s488, %s489
      %p501 = scmp.eq.s32.totalorder %s38, 1
      %p502 = por %p500, %p501
      %p504 = scmp.ne.s32.totalorder %s489, %s503
      %p505 = scmp.eq.s32.totalorder %s38, 0
      %p506 = por %p504, %p505
      %s508 = sadd.s32 %s507, 1
      %p511 = scmp.eq.s32.totalorder %s32, 1
      %p512 = scmp.ne.s32.totalorder %s507, %s509
      %p513 = scmp.eq.s32.totalorder %s32, 0
      %p514 = por %p512, %p513
      %p515 = scmp.ne.s32.totalorder %s507, %s509
      %p516 = scmp.eq.s32.totalorder %s37, 1
      %p517 = por %p515, %p516
      %p518 = scmp.ne.s32.totalorder %s509, %s510
      %p519 = scmp.eq.s32.totalorder %s37, 0
      %p520 = por %p518, %p519
      %p521 = scmp.ne.s32.totalorder %s509, %s510
      %p522 = scmp.eq.s32.totalorder %s38, 1
      %p523 = por %p521, %p522
      %p525 = scmp.ne.s32.totalorder %s510, %s524
      %p526 = scmp.eq.s32.totalorder %s38, 0
      %p527 = por %p525, %p526
      %s528 = ssub.s32 %s32, %s39
      %p529 = scmp.eq.s32.totalorder %s528, 0
      %s531 = sadd.s32 %s530, 1
      %s532 = scalar_select %p529, %s530, %s531
      %p535 = pneg %p529
      %p536 = scmp.eq.s32.totalorder %s32, 1
      %p537 = por %p535, %p536
      %p538 = scmp.ne.s32.totalorder %s530, %s533
      %p539 = scmp.eq.s32.totalorder %s32, 0
      %p540 = por %p538, %p539
      %p541 = scmp.ne.s32.totalorder %s530, %s533
      %p542 = scmp.eq.s32.totalorder %s37, 1
      %p543 = por %p541, %p542
      %p544 = scmp.ne.s32.totalorder %s533, %s534
      %p545 = scmp.eq.s32.totalorder %s37, 0
      %p546 = por %p544, %p545
      %p547 = scmp.ne.s32.totalorder %s533, %s534
      %p548 = scmp.eq.s32.totalorder %s38, 1
      %p549 = por %p547, %p548
      %p551 = scmp.ne.s32.totalorder %s534, %s550
      %p552 = scmp.eq.s32.totalorder %s38, 0
      %p553 = por %p551, %p552
      %p554 = scmp.le.s32.totalorder 1, %s32
      %p555 = scmp.lt.s32.totalorder %s32, 3
      %p556 = pnand %p554, %p555
      %p557 = pneg %p556
      // Predicated region
      $region9: #{_lambda_.1} parent=5 // pred_check
        _
      $region10: #{_lambda_.1} parent=5 // pred_check_branch
        %559 = sbr.rel (%p556) target = $region12
      $region11: #{_lambda_.1} parent=5 // pred_region
        %s560 = ssub.s32 %s32, 1
        // Predicated region
        $region13: #{_lambda_.1} parent=11 // pred_check
          %p561 = pneg %p79
        $region14: #{_lambda_.1} parent=11 // pred_check_branch
          %563 = sbr.rel (%p561) target = $region16
        $region15: #{_lambda_.1} parent=11 // pred_region
          _
        $region16: #{_lambda_.1} parent=11 // pred_fallthru
          _
        // Predicated region
        $region17: #{_lambda_.1} parent=11 // pred_check
          %p564 = pneg %p100
        $region18: #{_lambda_.1} parent=11 // pred_check_branch
          %566 = sbr.rel (%p564) target = $region20
        $region19: #{_lambda_.1} parent=11 // pred_region
          _
        $region20: #{_lambda_.1} parent=11 // pred_fallthru
          _
        // Predicated region
        $region21: #{_lambda_.1} parent=11 // pred_check
          %p567 = pneg %p121
        $region22: #{_lambda_.1} parent=11 // pred_check_branch
          %569 = sbr.rel (%p567) target = $region24
        $region23: #{_lambda_.1} parent=11 // pred_region
          _
        $region24: #{_lambda_.1} parent=11 // pred_fallthru
          _
        // Predicated region
        $region25: #{_lambda_.1} parent=11 // pred_check
          %p570 = pneg %p142
        $region26: #{_lambda_.1} parent=11 // pred_check_branch
          %572 = sbr.rel (%p570) target = $region28
        $region27: #{_lambda_.1} parent=11 // pred_region
          _
        $region28: #{_lambda_.1} parent=11 // pred_fallthru
          _
        // Predicated region
        $region29: #{_lambda_.1} parent=11 // pred_check
          %p573 = pneg %p163
        $region30: #{_lambda_.1} parent=11 // pred_check_branch
          %575 = sbr.rel (%p573) target = $region32
        $region31: #{_lambda_.1} parent=11 // pred_region
          _
        $region32: #{_lambda_.1} parent=11 // pred_fallthru
          _
        // Predicated region
        $region33: #{_lambda_.1} parent=11 // pred_check
          %p576 = pneg %p184
        $region34: #{_lambda_.1} parent=11 // pred_check_branch
          %578 = sbr.rel (%p576) target = $region36
        $region35: #{_lambda_.1} parent=11 // pred_region
          _
        $region36: #{_lambda_.1} parent=11 // pred_fallthru
          _
        // Predicated region
        $region37: #{_lambda_.1} parent=11 // pred_check
          %p579 = pneg %p205
        $region38: #{_lambda_.1} parent=11 // pred_check_branch
          %581 = sbr.rel (%p579) target = $region40
        $region39: #{_lambda_.1} parent=11 // pred_region
          _
        $region40: #{_lambda_.1} parent=11 // pred_fallthru
          _
        // Predicated region
        $region41: #{_lambda_.1} parent=11 // pred_check
          %p582 = pneg %p226
        $region42: #{_lambda_.1} parent=11 // pred_check_branch
          %584 = sbr.rel (%p582) target = $region44
        $region43: #{_lambda_.1} parent=11 // pred_region
          _
        $region44: #{_lambda_.1} parent=11 // pred_fallthru
          _
        // Predicated region
        $region45: #{_lambda_.1} parent=11 // pred_check
          %p585 = pneg %p247
        $region46: #{_lambda_.1} parent=11 // pred_check_branch
          %587 = sbr.rel (%p585) target = $region48
        $region47: #{_lambda_.1} parent=11 // pred_region
          _
        $region48: #{_lambda_.1} parent=11 // pred_fallthru
          _
        // Predicated region
        $region49: #{_lambda_.1} parent=11 // pred_check
          %p588 = pneg %p268
        $region50: #{_lambda_.1} parent=11 // pred_check_branch
          %590 = sbr.rel (%p588) target = $region52
        $region51: #{_lambda_.1} parent=11 // pred_region
          _
        $region52: #{_lambda_.1} parent=11 // pred_fallthru
          _
        // Predicated region
        $region53: #{_lambda_.1} parent=11 // pred_check
          %p591 = pneg %p289
        $region54: #{_lambda_.1} parent=11 // pred_check_branch
          %593 = sbr.rel (%p591) target = $region56
        $region55: #{_lambda_.1} parent=11 // pred_region
          _
        $region56: #{_lambda_.1} parent=11 // pred_fallthru
          _
        // Predicated region
        $region57: #{_lambda_.1} parent=11 // pred_check
          %p594 = pneg %p310
        $region58: #{_lambda_.1} parent=11 // pred_check_branch
          %596 = sbr.rel (%p594) target = $region60
        $region59: #{_lambda_.1} parent=11 // pred_region
          _
        $region60: #{_lambda_.1} parent=11 // pred_fallthru
          _
        // Predicated region
        $region61: #{_lambda_.1} parent=11 // pred_check
          %p597 = pneg %p331
        $region62: #{_lambda_.1} parent=11 // pred_check_branch
          %599 = sbr.rel (%p597) target = $region64
        $region63: #{_lambda_.1} parent=11 // pred_region
          _
        $region64: #{_lambda_.1} parent=11 // pred_fallthru
          _
        // Predicated region
        $region65: #{_lambda_.1} parent=11 // pred_check
          %p600 = pneg %p352
        $region66: #{_lambda_.1} parent=11 // pred_check_branch
          %602 = sbr.rel (%p600) target = $region68
        $region67: #{_lambda_.1} parent=11 // pred_region
          _
        $region68: #{_lambda_.1} parent=11 // pred_fallthru
          _
        // Predicated region
        $region69: #{_lambda_.1} parent=11 // pred_check
          %p603 = pneg %p373
        $region70: #{_lambda_.1} parent=11 // pred_check_branch
          %605 = sbr.rel (%p603) target = $region72
        $region71: #{_lambda_.1} parent=11 // pred_region
          _
        $region72: #{_lambda_.1} parent=11 // pred_fallthru
          _
        // Predicated region
        $region73: #{_lambda_.1} parent=11 // pred_check
          %p606 = pneg %p394
        $region74: #{_lambda_.1} parent=11 // pred_check_branch
          %608 = sbr.rel (%p606) target = $region76
        $region75: #{_lambda_.1} parent=11 // pred_region
          _
        $region76: #{_lambda_.1} parent=11 // pred_fallthru
          _
        // Predicated region
        $region77: #{_lambda_.1} parent=11 // pred_check
          %p609 = pneg %p415
        $region78: #{_lambda_.1} parent=11 // pred_check_branch
          %611 = sbr.rel (%p609) target = $region80
        $region79: #{_lambda_.1} parent=11 // pred_region
          _
        $region80: #{_lambda_.1} parent=11 // pred_fallthru
          _
        // Predicated region
        $region81: #{_lambda_.1} parent=11 // pred_check
          %p612 = pneg %p436
        $region82: #{_lambda_.1} parent=11 // pred_check_branch
          %614 = sbr.rel (%p612) target = $region84
        $region83: #{_lambda_.1} parent=11 // pred_region
          _
        $region84: #{_lambda_.1} parent=11 // pred_fallthru
          _
        // Predicated region
        $region85: #{_lambda_.1} parent=11 // pred_check
          %p615 = pneg %p457
        $region86: #{_lambda_.1} parent=11 // pred_check_branch
          %617 = sbr.rel (%p615) target = $region88
        $region87: #{_lambda_.1} parent=11 // pred_region
          _
        $region88: #{_lambda_.1} parent=11 // pred_fallthru
          _
        // Predicated region
        $region89: #{_lambda_.1} parent=11 // pred_check
          %p618 = pneg %p478
        $region90: #{_lambda_.1} parent=11 // pred_check_branch
          %620 = sbr.rel (%p618) target = $region92
        $region91: #{_lambda_.1} parent=11 // pred_region
          _
        $region92: #{_lambda_.1} parent=11 // pred_fallthru
          _
        // Predicated region
        $region93: #{_lambda_.1} parent=11 // pred_check
          %p621 = pneg %p499
        $region94: #{_lambda_.1} parent=11 // pred_check_branch
          %623 = sbr.rel (%p621) target = $region96
        $region95: #{_lambda_.1} parent=11 // pred_region
          _
        $region96: #{_lambda_.1} parent=11 // pred_fallthru
          _
        // Predicated region
        $region97: #{_lambda_.1} parent=11 // pred_check
          %p624 = pneg %p520
        $region98: #{_lambda_.1} parent=11 // pred_check_branch
          %626 = sbr.rel (%p624) target = $region100
        $region99: #{_lambda_.1} parent=11 // pred_region
          _
        $region100: #{_lambda_.1} parent=11 // pred_fallthru
          _
      $region12: #{_lambda_.1} parent=5 // pred_fallthru
        _
      %p627 = scmp.lt.s32.totalorder %s32, 2
      // Predicated region
      $region101: #{_lambda_.1} parent=5 // pred_check
        %p628 = pneg %p627
      $region102: #{_lambda_.1} parent=5 // pred_check_branch
        %630 = sbr.rel (%p628) target = $region104
      $region103: #{_lambda_.1} parent=5 // pred_region
        // Predicated region
        $region105: #{_lambda_.1} parent=103 // pred_check
          %p631 = pneg %p52
        $region106: #{_lambda_.1} parent=103 // pred_check_branch
          %633 = sbr.rel (%p631) target = $region108
        $region107: #{_lambda_.1} parent=103 // pred_region
          %p634 = scmp.lt.s32.totalorder %s32, 1
          %s635 = scalar_select %p634, %s32, 1
          %s636 = smul.addr %s635, 8
          %s637 = smul.addr %s636, 8
          %s638 = scalar_lea.vmem %s0, %s637
        $region108: #{_lambda_.1} parent=103 // pred_fallthru
          _
      $region104: #{_lambda_.1} parent=5 // pred_fallthru
        _
      %p639 = scmp.le.s32.totalorder 1, %s32
      %p640 = scmp.lt.s32.totalorder %s32, 3
      %p641 = pnand %p639, %p640
      %p642 = pneg %p641
      // Predicated region
      $region109: #{_lambda_.1} parent=5 // pred_check
        _
      $region110: #{_lambda_.1} parent=5 // pred_check_branch
        %644 = sbr.rel (%p641) target = $region112
      $region111: #{_lambda_.1} parent=5 // pred_region
        %s645 = ssub.s32 %s32, 1
        %p646 = scmp.lt.s32.totalorder %s37, 1
        %s647 = scalar_select %p646, %s37, 1
        %s648 = smul.addr %s647, 8
        %s649 = smul.addr %s648, 8
        %s650 = scalar_lea.vmem %s0, %s649
        %p651 = pneg %p58
        %p652 = pneg %p55
        %p653 = pneg %p79
        %p654 = pneg %p76
        %p655 = pneg %p100
        %p656 = pneg %p97
        %p657 = pneg %p121
        %p658 = pneg %p118
        %p659 = pneg %p142
        %p660 = pneg %p139
        %p661 = pneg %p163
        %p662 = pneg %p160
        %p663 = pneg %p184
        %p664 = pneg %p181
        %p665 = pneg %p205
        %p666 = pneg %p202
        %p667 = pneg %p226
        %p668 = pneg %p223
        %p669 = pneg %p247
        %p670 = pneg %p244
        %p671 = pneg %p268
        %p672 = pneg %p265
        %p673 = pneg %p289
        %p674 = pneg %p286
        %p675 = pneg %p310
        %p676 = pneg %p307
        %p677 = pneg %p331
        %p678 = pneg %p328
        %p679 = pneg %p352
        %p680 = pneg %p349
        %p681 = pneg %p373
        %p682 = pneg %p370
        %p683 = pneg %p394
        %p684 = pneg %p391
        %p685 = pneg %p415
        %p686 = pneg %p412
        %p687 = pneg %p436
        %p688 = pneg %p433
        %p689 = pneg %p457
        %p690 = pneg %p454
        %p691 = pneg %p478
        %p692 = pneg %p475
        %p693 = pneg %p499
        %p694 = pneg %p496
        %p695 = pneg %p520
        %p696 = pneg %p517
        %p697 = pneg %p546
        %p698 = pneg %p543
        %s699 = sand.u32 %s533, 1
        %s700 = scalar_lea.sflag [#allocation3], %s699
        %s701 = sand.u32 %s533, 1
        %s702 = scalar_lea.vmem [#allocation2], %s701
        %p703 = scmp.lt.s32.totalorder %s37, 1
        %s704 = scalar_select %p703, %s37, 1
        %s705 = smul.addr %s704, 8
        %s706 = smul.addr %s705, 8
        %s707 = scalar_lea.vmem %s0, %s706
        %v708 = vld [vmem:[%s3] sm:$0xff]
        %v709 = vld [vmem:[%s3 + $0x8] sm:$0xff]
        %v710 = vld [vmem:[%s3 + $0x10] sm:$0xff]
        %v711 = vld [vmem:[%s3 + $0x18] sm:$0xff]
        %v712 = vld [vmem:[%s3 + $0x20] sm:$0xff]
        %v713 = vld [vmem:[%s3 + $0x28] sm:$0xff]
        %v714 = vld [vmem:[%s3 + $0x30] sm:$0xff]
        %v715 = vld [vmem:[%s3 + $0x38] sm:$0xff]
        %v716 = vld [vmem:[%s3 + $0x40] sm:$0xff]
        %v717 = vld [vmem:[%s3 + $0x48] sm:$0xff]
        %v718 = vld [vmem:[%s3 + $0x50] sm:$0xff]
        %v719 = vld [vmem:[%s3 + $0x58] sm:$0xff]
        %v720 = vld [vmem:[%s3 + $0x60] sm:$0xff]
        %v721 = vld [vmem:[%s3 + $0x68] sm:$0xff]
        %v722 = vld [vmem:[%s3 + $0x70] sm:$0xff]
        %v723 = vld [vmem:[%s3 + $0x78] sm:$0xff]
        %v724 = vld [vmem:[%s4] sm:$0xff]
        %v725 = vld [vmem:[%s4 + $0x8] sm:$0xff]
        %v726 = vld [vmem:[%s4 + $0x10] sm:$0x1f]
        %v727 = vld [vmem:[%s5] sm:$0x7]
        %v728 = vld [vmem:[%s6] sm:$0x77]
        %v729 = vld [vmem:[%s707] sm:$0xff]
        %v730 = vld [vmem:[%s707 + $0x8] sm:$0xff]
        %v731 = vld [vmem:[%s707 + $0x10] sm:$0xff]
        %v732 = vld [vmem:[%s707 + $0x18] sm:$0xff]
        %v733 = vld [vmem:[%s707 + $0x20] sm:$0xff]
        %v734 = vld [vmem:[%s707 + $0x28] sm:$0xff]
        %v735 = vld [vmem:[%s707 + $0x30] sm:$0xff]
        %v736 = vld [vmem:[%s707 + $0x38] sm:$0xff]
        %v737 = vld [vmem:[%s1] sm:$0xff]
        %v738 = vld [vmem:[%s1 + $0x8] sm:$0xff]
        %v739 = vld [vmem:[%s1 + $0x10] sm:$0xff]
        %v740 = vld [vmem:[%s1 + $0x18] sm:$0xff]
        %v741 = vld [vmem:[%s1 + $0x20] sm:$0xff]
        %v742 = vld [vmem:[%s1 + $0x28] sm:$0xff]
        %v743 = vperm.slane %v724, 0
        %vm744 = vcmask 392192
        %v746 = vsel %vm744, %v729, 0
        %v749 = vsel %vm744, %v730, 0
        %v752 = vsel %vm744, %v731, 0
        %v755 = vsel %vm744, %v732, 0
        %v758 = vsel %vm744, %v733, 0
        %v761 = vsel %vm744, %v734, 0
        %v764 = vsel %vm744, %v735, 0
        %v767 = vsel %vm744, %v736, 0
        %769 = vmatpush.msra.mxu0 0.0
        %770 = vmatpush.msra.mxu0 0.0
        %771 = vmatpush.msra.mxu0 0.0
        %772 = vmatpush.msra.mxu0 0.0
        %773 = vmatpush.msra.mxu0 0.0
        %774 = vmatpush.msra.mxu0 0.0
        %775 = vmatpush.msra.mxu0 0.0
        %776 = vmatpush.msra.mxu0 0.0
        %777 = vmatpush.msra.mxu0 0.0
        %778 = vmatpush.msra.mxu0 0.0
        %779 = vmatpush.msra.mxu0 %v742
        %780 = vmatpush.msra.mxu0 %v741
        %781 = vmatpush.msra.mxu0 %v740
        %782 = vmatpush.msra.mxu0 %v739
        %783 = vmatpush.msra.mxu0 %v738
        %784 = vmatpush.msra.mxu0 %v737
        %785 = vmatmul.f32.gmra.mxu0 %v746
        %v786 = vpop.f32.mrf.mxu0
        %v787 = vadd.f32 %v743, %v786
        %788 = vmatmul.f32.gmra.mxu0 %v749
        %v789 = vpop.f32.mrf.mxu0
        %v790 = vadd.f32 %v743, %v789
        %791 = vmatmul.f32.gmra.mxu0 %v752
        %v792 = vpop.f32.mrf.mxu0
        %v793 = vadd.f32 %v743, %v792
        %794 = vmatmul.f32.gmra.mxu0 %v755
        %v795 = vpop.f32.mrf.mxu0
        %v796 = vadd.f32 %v743, %v795
        %797 = vmatmul.f32.gmra.mxu0 %v758
        %v798 = vpop.f32.mrf.mxu0
        %v799 = vadd.f32 %v743, %v798
        %800 = vmatmul.f32.gmra.mxu0 %v761
        %v801 = vpop.f32.mrf.mxu0
        %v802 = vadd.f32 %v743, %v801
        %803 = vmatmul.f32.gmra.mxu0 %v764
        %v804 = vpop.f32.mrf.mxu0
        %v805 = vadd.f32 %v743, %v804
        %806 = vmatmul.f32.gmra.mxu0 %v767
        %v807 = vpop.f32.mrf.mxu0
        %v808 = vadd.f32 %v743, %v807
        %809 = vdwg.mxu0
        %v810 = vld [vmem:[%s2] sm:$0xff]
        %v811 = vld [vmem:[%s2 + $0x8] sm:$0xff]
        %v812 = vld [vmem:[%s2 + $0x10] sm:$0xff]
        %v813 = vld [vmem:[%s2 + $0x18] sm:$0xff]
        %v814 = vld [vmem:[%s2 + $0x20] sm:$0xff]
        %v815 = vld [vmem:[%s2 + $0x28] sm:$0xff]
        %v816 = vld [vmem:[%s2 + $0x30] sm:$0xff]
        %v817 = vld [vmem:[%s2 + $0x38] sm:$0xff]
        %v818 = vadd.f32 %v787, %v810
        %v819 = vadd.f32 %v790, %v811
        %v820 = vadd.f32 %v793, %v812
        %v821 = vadd.f32 %v796, %v813
        %v822 = vadd.f32 %v799, %v814
        %v823 = vadd.f32 %v802, %v815
        %v824 = vadd.f32 %v805, %v816
        %v825 = vadd.f32 %v808, %v817
        %vm826 = vcmask 261120
        %v827 = vsel %vm826, %v818, 0.0
        %828 = vadd.xlane.f32.xlu0 %v827
        %v829 = vpop.xlane.xlu0 %828
        %v830 = vsel %vm826, %v819, 0.0
        %831 = vadd.xlane.f32.xlu0 %v830
        %v832 = vpop.xlane.xlu0 %831
        %v833 = vsel %vm826, %v820, 0.0
        %834 = vadd.xlane.f32.xlu0 %v833
        %v835 = vpop.xlane.xlu0 %834
        %v836 = vsel %vm826, %v821, 0.0
        %837 = vadd.xlane.f32.xlu0 %v836
        %v838 = vpop.xlane.xlu0 %837
        %v839 = vsel %vm826, %v822, 0.0
        %840 = vadd.xlane.f32.xlu0 %v839
        %v841 = vpop.xlane.xlu0 %840
        %v842 = vsel %vm826, %v823, 0.0
        %843 = vadd.xlane.f32.xlu0 %v842
        %v844 = vpop.xlane.xlu0 %843
        %v845 = vsel %vm826, %v824, 0.0
        %846 = vadd.xlane.f32.xlu0 %v845
        %v847 = vpop.xlane.xlu0 %846
        %v848 = vsel %vm826, %v825, 0.0
        %849 = vadd.xlane.f32.xlu0 %v848
        %v850 = vpop.xlane.xlu0 %849
        %v851 = vrcp.pop 32.0
        %v852 = vmul.f32 32.0, %v851
        %v853 = vsub.f32 1.0, %v852
        %v854 = vmul.f32 %v851, %v853
        %v855 = vadd.f32 %v851, %v854
        %vm856 = vweird.f32 %v851
        %v857 = vsel %vm856, %v851, %v855
        %v858 = vmul.f32 %v829, %v857
        %v859 = vmul.f32 %v832, %v857
        %v860 = vmul.f32 %v835, %v857
        %v861 = vmul.f32 %v838, %v857
        %v862 = vmul.f32 %v841, %v857
        %v863 = vmul.f32 %v844, %v857
        %v864 = vmul.f32 %v847, %v857
        %v865 = vmul.f32 %v850, %v857
        %v866 = vsub.f32 %v818, %v858
        %v867 = vsub.f32 %v819, %v859
        %v868 = vsub.f32 %v820, %v860
        %v869 = vsub.f32 %v821, %v861
        %v870 = vsub.f32 %v822, %v862
        %v871 = vsub.f32 %v823, %v863
        %v872 = vsub.f32 %v824, %v864
        %v873 = vsub.f32 %v825, %v865
        %v874 = vmul.f32 %v866, %v866
        %v875 = vmul.f32 %v867, %v867
        %v876 = vmul.f32 %v868, %v868
        %v877 = vmul.f32 %v869, %v869
        %v878 = vmul.f32 %v870, %v870
        %v879 = vmul.f32 %v871, %v871
        %v880 = vmul.f32 %v872, %v872
        %v881 = vmul.f32 %v873, %v873
        %v882 = vsel %vm826, %v874, 0.0
        %883 = vadd.xlane.f32.xlu0 %v882
        %v884 = vpop.xlane.xlu0 %883
        %v885 = vsel %vm826, %v875, 0.0
        %886 = vadd.xlane.f32.xlu0 %v885
        %v887 = vpop.xlane.xlu0 %886
        %v888 = vsel %vm826, %v876, 0.0
        %889 = vadd.xlane.f32.xlu0 %v888
        %v890 = vpop.xlane.xlu0 %889
        %v891 = vsel %vm826, %v877, 0.0
        %892 = vadd.xlane.f32.xlu0 %v891
        %v893 = vpop.xlane.xlu0 %892
        %v894 = vsel %vm826, %v878, 0.0
        %895 = vadd.xlane.f32.xlu0 %v894
        %v896 = vpop.xlane.xlu0 %895
        %v897 = vsel %vm826, %v879, 0.0
        %898 = vadd.xlane.f32.xlu0 %v897
        %v899 = vpop.xlane.xlu0 %898
        %v900 = vsel %vm826, %v880, 0.0
        %901 = vadd.xlane.f32.xlu0 %v900
        %v902 = vpop.xlane.xlu0 %901
        %v903 = vsel %vm826, %v881, 0.0
        %904 = vadd.xlane.f32.xlu0 %v903
        %v905 = vpop.xlane.xlu0 %904
        %v906 = vmul.f32 %v884, %v857
        %v907 = vmul.f32 %v887, %v857
        %v908 = vmul.f32 %v890, %v857
        %v909 = vmul.f32 %v893, %v857
        %v910 = vmul.f32 %v896, %v857
        %v911 = vmul.f32 %v899, %v857
        %v912 = vmul.f32 %v902, %v857
        %v913 = vmul.f32 %v905, %v857
        %v914 = vadd.f32 %v906, 1e-05
        %v915 = vadd.f32 %v907, 1e-05
        %v916 = vadd.f32 %v908, 1e-05
        %v917 = vadd.f32 %v909, 1e-05
        %v918 = vadd.f32 %v910, 1e-05
        %v919 = vadd.f32 %v911, 1e-05
        %v920 = vadd.f32 %v912, 1e-05
        %v921 = vadd.f32 %v913, 1e-05
        %v922 = vrsqrt.pop %v914
        %v923 = vmul.f32 %v922, %v914
        %v924 = vmul.f32 %v923, %v922
        %v925 = vmul.f32 0.5, %v924
        %v926 = vsub.f32 1.5, %v925
        %v927 = vmul.f32 %v922, %v926
        %vm928 = vweird.f32 %v914
        %vm929 = vweird.f32 %v922
        %vm930 = vmor %vm928, %vm929
        %v931 = vsel %vm930, %v922, %v927
        %v932 = vrsqrt.pop %v915
        %v933 = vmul.f32 %v932, %v915
        %v934 = vmul.f32 %v933, %v932
        %v935 = vmul.f32 0.5, %v934
        %v936 = vsub.f32 1.5, %v935
        %v937 = vmul.f32 %v932, %v936
        %vm938 = vweird.f32 %v915
        %vm939 = vweird.f32 %v932
        %vm940 = vmor %vm938, %vm939
        %v941 = vsel %vm940, %v932, %v937
        %v942 = vrsqrt.pop %v916
        %v943 = vmul.f32 %v942, %v916
        %v944 = vmul.f32 %v943, %v942
        %v945 = vmul.f32 0.5, %v944
        %v946 = vsub.f32 1.5, %v945
        %v947 = vmul.f32 %v942, %v946
        %vm948 = vweird.f32 %v916
        %vm949 = vweird.f32 %v942
        %vm950 = vmor %vm948, %vm949
        %v951 = vsel %vm950, %v942, %v947
        %v952 = vrsqrt.pop %v917
        %v953 = vmul.f32 %v952, %v917
        %v954 = vmul.f32 %v953, %v952
        %v955 = vmul.f32 0.5, %v954
        %v956 = vsub.f32 1.5, %v955
        %v957 = vmul.f32 %v952, %v956
        %vm958 = vweird.f32 %v917
        %vm959 = vweird.f32 %v952
        %vm960 = vmor %vm958, %vm959
        %v961 = vsel %vm960, %v952, %v957
        %v962 = vrsqrt.pop %v918
        %v963 = vmul.f32 %v962, %v918
        %v964 = vmul.f32 %v963, %v962
        %v965 = vmul.f32 0.5, %v964
        %v966 = vsub.f32 1.5, %v965
        %v967 = vmul.f32 %v962, %v966
        %vm968 = vweird.f32 %v918
        %vm969 = vweird.f32 %v962
        %vm970 = vmor %vm968, %vm969
        %v971 = vsel %vm970, %v962, %v967
        %v972 = vrsqrt.pop %v919
        %v973 = vmul.f32 %v972, %v919
        %v974 = vmul.f32 %v973, %v972
        %v975 = vmul.f32 0.5, %v974
        %v976 = vsub.f32 1.5, %v975
        %v977 = vmul.f32 %v972, %v976
        %vm978 = vweird.f32 %v919
        %vm979 = vweird.f32 %v972
        %vm980 = vmor %vm978, %vm979
        %v981 = vsel %vm980, %v972, %v977
        %v982 = vrsqrt.pop %v920
        %v983 = vmul.f32 %v982, %v920
        %v984 = vmul.f32 %v983, %v982
        %v985 = vmul.f32 0.5, %v984
        %v986 = vsub.f32 1.5, %v985
        %v987 = vmul.f32 %v982, %v986
        %vm988 = vweird.f32 %v920
        %vm989 = vweird.f32 %v982
        %vm990 = vmor %vm988, %vm989
        %v991 = vsel %vm990, %v982, %v987
        %v992 = vrsqrt.pop %v921
        %v993 = vmul.f32 %v992, %v921
        %v994 = vmul.f32 %v993, %v992
        %v995 = vmul.f32 0.5, %v994
        %v996 = vsub.f32 1.5, %v995
        %v997 = vmul.f32 %v992, %v996
        %vm998 = vweird.f32 %v921
        %vm999 = vweird.f32 %v992
        %vm1000 = vmor %vm998, %vm999
        %v1001 = vsel %vm1000, %v992, %v997
        %v1002 = vmul.f32 %v866, %v931
        %v1003 = vmul.f32 %v867, %v941
        %v1004 = vmul.f32 %v868, %v951
        %v1005 = vmul.f32 %v869, %v961
        %v1006 = vmul.f32 %v870, %v971
        %v1007 = vmul.f32 %v871, %v981
        %v1008 = vmul.f32 %v872, %v991
        %v1009 = vmul.f32 %v873, %v1001
        %v1010 = vperm.slane %v724, 1
        %v1011 = vmul.f32 %v1002, %v1010
        %v1012 = vmul.f32 %v1003, %v1010
        %v1013 = vmul.f32 %v1004, %v1010
        %v1014 = vmul.f32 %v1005, %v1010
        %v1015 = vmul.f32 %v1006, %v1010
        %v1016 = vmul.f32 %v1007, %v1010
        %v1017 = vmul.f32 %v1008, %v1010
        %v1018 = vmul.f32 %v1009, %v1010
        %v1019 = vperm.slane %v724, 2
        %v1020 = vadd.f32 %v1011, %v1019
        %v1021 = vadd.f32 %v1012, %v1019
        %v1022 = vadd.f32 %v1013, %v1019
        %v1023 = vadd.f32 %v1014, %v1019
        %v1024 = vadd.f32 %v1015, %v1019
        %v1025 = vadd.f32 %v1016, %v1019
        %v1026 = vadd.f32 %v1017, %v1019
        %v1027 = vadd.f32 %v1018, %v1019
        %v1028 = vld [vmem:[%s7] sm:$0xff]
        %v1029 = vld [vmem:[%s7 + $0x8] sm:$0xff]
        %v1030 = vld [vmem:[%s7 + $0x10] sm:$0xff]
        %v1031 = vld [vmem:[%s7 + $0x18] sm:$0xff]
        %v1032 = vld [vmem:[%s8] sm:$0xff]
        %v1033 = vld [vmem:[%s8 + $0x8] sm:$0xff]
        %v1034 = vld [vmem:[%s8 + $0x10] sm:$0xff]
        %v1035 = vld [vmem:[%s8 + $0x18] sm:$0xff]
        %v1036 = vperm.slane %v727, 0
        %v1038 = vsel %vm826, %v1020, 0
        %v1041 = vsel %vm826, %v1021, 0
        %v1044 = vsel %vm826, %v1022, 0
        %v1047 = vsel %vm826, %v1023, 0
        %v1050 = vsel %vm826, %v1024, 0
        %v1053 = vsel %vm826, %v1025, 0
        %v1056 = vsel %vm826, %v1026, 0
        %v1059 = vsel %vm826, %v1027, 0
        %1061 = vmatpush.msra.mxu0 0.0
        %1062 = vmatpush.msra.mxu0 0.0
        %1063 = vmatpush.msra.mxu0 0.0
        %1064 = vmatpush.msra.mxu0 0.0
        %1065 = vmatpush.msra.mxu0 0.0
        %1066 = vmatpush.msra.mxu0 0.0
        %1067 = vmatpush.msra.mxu0 0.0
        %1068 = vmatpush.msra.mxu0 0.0
        %1069 = vmatpush.msra.mxu0 0.0
        %1070 = vmatpush.msra.mxu0 0.0
        %1071 = vmatpush.msra.mxu0 0.0
        %1072 = vmatpush.msra.mxu0 0.0
        %1073 = vmatpush.msra.mxu0 %v1031
        %1074 = vmatpush.msra.mxu0 %v1030
        %1075 = vmatpush.msra.mxu0 %v1029
        %1076 = vmatpush.msra.mxu0 %v1028
        %1077 = vmatmul.f32.gmra.mxu0 %v1038
        %v1078 = vpop.f32.mrf.mxu0
        %v1079 = vadd.f32 %v1036, %v1078
        %1080 = vmatmul.f32.gmra.mxu0 %v1041
        %v1081 = vpop.f32.mrf.mxu0
        %v1082 = vadd.f32 %v1036, %v1081
        %1083 = vmatmul.f32.gmra.mxu0 %v1044
        %v1084 = vpop.f32.mrf.mxu0
        %v1085 = vadd.f32 %v1036, %v1084
        %1086 = vmatmul.f32.gmra.mxu0 %v1047
        %v1087 = vpop.f32.mrf.mxu0
        %v1088 = vadd.f32 %v1036, %v1087
        %1089 = vmatmul.f32.gmra.mxu0 %v1050
        %v1090 = vpop.f32.mrf.mxu0
        %v1091 = vadd.f32 %v1036, %v1090
        %1092 = vmatmul.f32.gmra.mxu0 %v1053
        %v1093 = vpop.f32.mrf.mxu0
        %v1094 = vadd.f32 %v1036, %v1093
        %1095 = vmatmul.f32.gmra.mxu0 %v1056
        %v1096 = vpop.f32.mrf.mxu0
        %v1097 = vadd.f32 %v1036, %v1096
        %1098 = vmatmul.f32.gmra.mxu0 %v1059
        %v1099 = vpop.f32.mrf.mxu0
        %v1100 = vadd.f32 %v1036, %v1099
        %1101 = vdwg.mxu0
        %1110 = vrot.lane.b32.xlu0 %v1079, 96
        %v1111 = vpop.permute.xlu0 %1110
        %1112 = vrot.lane.b32.xlu0 %v1082, 96
        %v1113 = vpop.permute.xlu0 %1112
        %1114 = vrot.lane.b32.xlu0 %v1085, 96
        %v1115 = vpop.permute.xlu0 %1114
        %1116 = vrot.lane.b32.xlu0 %v1088, 96
        %v1117 = vpop.permute.xlu0 %1116
        %1118 = vrot.lane.b32.xlu0 %v1091, 96
        %v1119 = vpop.permute.xlu0 %1118
        %1120 = vrot.lane.b32.xlu0 %v1094, 96
        %v1121 = vpop.permute.xlu0 %1120
        %1122 = vrot.lane.b32.xlu0 %v1097, 96
        %v1123 = vpop.permute.xlu0 %1122
        %1124 = vrot.lane.b32.xlu0 %v1100, 96
        %v1125 = vpop.permute.xlu0 %1124
        %1134 = vxpose.xlu0.b32.start [1/16] %v1111, 128
        %1135 = vxpose.xlu0.b32.cont [2/16] %v1113, 128
        %1136 = vxpose.xlu0.b32.cont [3/16] %v1115, 128
        %1137 = vxpose.xlu0.b32.cont [4/16] %v1117, 128
        %1138 = vxpose.xlu0.b32.cont [5/16] %v1119, 128
        %1139 = vxpose.xlu0.b32.cont [6/16] %v1121, 128
        %1140 = vxpose.xlu0.b32.cont [7/16] %v1123, 128
        %1141 = vxpose.xlu0.b32.cont [8/16] %v1125, 128
        %1142 = vxpose.xlu0.b32.cont [9/16] 0.0, 128
        %1143 = vxpose.xlu0.b32.cont [10/16] 0.0, 128
        %1144 = vxpose.xlu0.b32.cont [11/16] 0.0, 128
        %1145 = vxpose.xlu0.b32.cont [12/16] 0.0, 128
        %1146 = vxpose.xlu0.b32.cont [13/16] 0.0, 128
        %1147 = vxpose.xlu0.b32.cont [14/16] 0.0, 128
        %1148 = vxpose.xlu0.b32.cont [15/16] 0.0, 128
        %1149 = vxpose.xlu0.b32.end [16/16] 0.0, 128
        %v1150 = vpop.trf.xlu0
        %v1151 = vpop.trf.xlu0
        %v1152 = vpop.trf.xlu0
        %v1153 = vpop.trf.xlu0
        %v1154 = vpop.trf.xlu0
        %v1155 = vpop.trf.xlu0
        %v1156 = vpop.trf.xlu0
        %v1157 = vpop.trf.xlu0
        %v1158 = vpop.trf.xlu0
        %v1159 = vpop.trf.xlu0
        %v1160 = vpop.trf.xlu0
        %v1161 = vpop.trf.xlu0
        %v1162 = vpop.trf.xlu0
        %v1163 = vpop.trf.xlu0
        %v1164 = vpop.trf.xlu0
        %v1165 = vpop.trf.xlu0
        %1166 = vrot.lane.b32.xlu0 %v1079, 64
        %v1167 = vpop.permute.xlu0 %1166
        %1168 = vrot.lane.b32.xlu0 %v1082, 64
        %v1169 = vpop.permute.xlu0 %1168
        %1170 = vrot.lane.b32.xlu0 %v1085, 64
        %v1171 = vpop.permute.xlu0 %1170
        %1172 = vrot.lane.b32.xlu0 %v1088, 64
        %v1173 = vpop.permute.xlu0 %1172
        %1174 = vrot.lane.b32.xlu0 %v1091, 64
        %v1175 = vpop.permute.xlu0 %1174
        %1176 = vrot.lane.b32.xlu0 %v1094, 64
        %v1177 = vpop.permute.xlu0 %1176
        %1178 = vrot.lane.b32.xlu0 %v1097, 64
        %v1179 = vpop.permute.xlu0 %1178
        %1180 = vrot.lane.b32.xlu0 %v1100, 64
        %v1181 = vpop.permute.xlu0 %1180
        %1190 = vxpose.xlu0.b32.start [1/16] %v1167, 128
        %1191 = vxpose.xlu0.b32.cont [2/16] %v1169, 128
        %1192 = vxpose.xlu0.b32.cont [3/16] %v1171, 128
        %1193 = vxpose.xlu0.b32.cont [4/16] %v1173, 128
        %1194 = vxpose.xlu0.b32.cont [5/16] %v1175, 128
        %1195 = vxpose.xlu0.b32.cont [6/16] %v1177, 128
        %1196 = vxpose.xlu0.b32.cont [7/16] %v1179, 128
        %1197 = vxpose.xlu0.b32.cont [8/16] %v1181, 128
        %1198 = vxpose.xlu0.b32.cont [9/16] 0.0, 128
        %1199 = vxpose.xlu0.b32.cont [10/16] 0.0, 128
        %1200 = vxpose.xlu0.b32.cont [11/16] 0.0, 128
        %1201 = vxpose.xlu0.b32.cont [12/16] 0.0, 128
        %1202 = vxpose.xlu0.b32.cont [13/16] 0.0, 128
        %1203 = vxpose.xlu0.b32.cont [14/16] 0.0, 128
        %1204 = vxpose.xlu0.b32.cont [15/16] 0.0, 128
        %1205 = vxpose.xlu0.b32.end [16/16] 0.0, 128
        %v1206 = vpop.trf.xlu0
        %v1207 = vpop.trf.xlu0
        %v1208 = vpop.trf.xlu0
        %v1209 = vpop.trf.xlu0
        %v1210 = vpop.trf.xlu0
        %v1211 = vpop.trf.xlu0
        %v1212 = vpop.trf.xlu0
        %v1213 = vpop.trf.xlu0
        %v1214 = vpop.trf.xlu0
        %v1215 = vpop.trf.xlu0
        %v1216 = vpop.trf.xlu0
        %v1217 = vpop.trf.xlu0
        %v1218 = vpop.trf.xlu0
        %v1219 = vpop.trf.xlu0
        %v1220 = vpop.trf.xlu0
        %v1221 = vpop.trf.xlu0
        %1226 = vrot.lane.b32.xlu0 %v1150, 64
        %v1227 = vpop.permute.xlu0 %1226
        %1228 = vrot.lane.b32.xlu0 %v1151, 64
        %v1229 = vpop.permute.xlu0 %1228
        %1230 = vrot.lane.b32.xlu0 %v1152, 64
        %v1231 = vpop.permute.xlu0 %1230
        %1232 = vrot.lane.b32.xlu0 %v1153, 64
        %v1233 = vpop.permute.xlu0 %1232
        %vm1238 = vcmask 523264
        %v1239 = vsel %vm1238, %v1150, %v1227
        %v1240 = vsel %vm1238, %v1151, %v1229
        %v1241 = vsel %vm1238, %v1152, %v1231
        %v1242 = vsel %vm1238, %v1153, %v1233
        %v1243 = vmul.f32 %v1239, %v708
        %v1244 = vmul.f32 %v1239, %v709
        %v1245 = vmul.f32 %v1239, %v710
        %v1246 = vmul.f32 %v1239, %v711
        %v1247 = vmul.f32 %v1240, %v712
        %v1248 = vmul.f32 %v1240, %v713
        %v1249 = vmul.f32 %v1240, %v714
        %v1250 = vmul.f32 %v1240, %v715
        %v1251 = vmul.f32 %v1241, %v716
        %v1252 = vmul.f32 %v1241, %v717
        %v1253 = vmul.f32 %v1241, %v718
        %v1254 = vmul.f32 %v1241, %v719
        %v1255 = vmul.f32 %v1242, %v720
        %v1256 = vmul.f32 %v1242, %v721
        %v1257 = vmul.f32 %v1242, %v722
        %v1258 = vmul.f32 %v1242, %v723
        %v1259 = vsel %vm826, %v1079, 0
        %v1261 = vsel %vm826, %v1082, 0
        %v1263 = vsel %vm826, %v1085, 0
        %v1265 = vsel %vm826, %v1088, 0
        %v1267 = vsel %vm826, %v1091, 0
        %v1269 = vsel %vm826, %v1094, 0
        %v1271 = vsel %vm826, %v1097, 0
        %v1273 = vsel %vm826, %v1100, 0
        %1275 = vmatpush.msra.mxu0 0.0
        %1276 = vmatpush.msra.mxu0 0.0
        %1277 = vmatpush.msra.mxu0 0.0
        %1278 = vmatpush.msra.mxu0 0.0
        %1279 = vmatpush.msra.mxu0 0.0
        %1280 = vmatpush.msra.mxu0 0.0
        %1281 = vmatpush.msra.mxu0 0.0
        %1282 = vmatpush.msra.mxu0 0.0
        %1283 = vmatpush.msra.mxu0 0.0
        %1284 = vmatpush.msra.mxu0 0.0
        %1285 = vmatpush.msra.mxu0 0.0
        %1286 = vmatpush.msra.mxu0 0.0
        %1287 = vmatpush.msra.mxu0 %v1255
        %1288 = vmatpush.msra.mxu0 %v1251
        %1289 = vmatpush.msra.mxu0 %v1247
        %1290 = vmatpush.msra.mxu0 %v1243
        %1291 = vmatmul.f32.gmra.mxu0 %v1259
        %v1292 = vpop.f32.mrf.mxu0
        %v1293 = vadd.f32 0.0, %v1292
        %1294 = vmatmul.f32.gmra.mxu0 %v1261
        %v1295 = vpop.f32.mrf.mxu0
        %v1296 = vadd.f32 0.0, %v1295
        %1297 = vmatmul.f32.gmra.mxu0 %v1263
        %v1298 = vpop.f32.mrf.mxu0
        %v1299 = vadd.f32 0.0, %v1298
        %1300 = vmatmul.f32.gmra.mxu0 %v1265
        %v1301 = vpop.f32.mrf.mxu0
        %v1302 = vadd.f32 0.0, %v1301
        %1303 = vmatmul.f32.gmra.mxu0 %v1267
        %v1304 = vpop.f32.mrf.mxu0
        %v1305 = vadd.f32 0.0, %v1304
        %1306 = vmatmul.f32.gmra.mxu0 %v1269
        %v1307 = vpop.f32.mrf.mxu0
        %v1308 = vadd.f32 0.0, %v1307
        %1309 = vmatmul.f32.gmra.mxu0 %v1271
        %v1310 = vpop.f32.mrf.mxu0
        %v1311 = vadd.f32 0.0, %v1310
        %1312 = vmatmul.f32.gmra.mxu0 %v1273
        %v1313 = vpop.f32.mrf.mxu0
        %v1314 = vadd.f32 0.0, %v1313
        %1315 = vdwg.mxu0
        %1316 = vmatpush.msra.mxu0 0.0
        %1317 = vmatpush.msra.mxu0 0.0
        %1318 = vmatpush.msra.mxu0 0.0
        %1319 = vmatpush.msra.mxu0 0.0
        %1320 = vmatpush.msra.mxu0 0.0
        %1321 = vmatpush.msra.mxu0 0.0
        %1322 = vmatpush.msra.mxu0 0.0
        %1323 = vmatpush.msra.mxu0 0.0
        %1324 = vmatpush.msra.mxu0 0.0
        %1325 = vmatpush.msra.mxu0 0.0
        %1326 = vmatpush.msra.mxu0 0.0
        %1327 = vmatpush.msra.mxu0 0.0
        %1328 = vmatpush.msra.mxu0 %v1256
        %1329 = vmatpush.msra.mxu0 %v1252
        %1330 = vmatpush.msra.mxu0 %v1248
        %1331 = vmatpush.msra.mxu0 %v1244
        %1332 = vmatmul.f32.gmra.mxu0 %v1259
        %v1333 = vpop.f32.mrf.mxu0
        %v1334 = vadd.f32 0.0, %v1333
        %1335 = vmatmul.f32.gmra.mxu0 %v1261
        %v1336 = vpop.f32.mrf.mxu0
        %v1337 = vadd.f32 0.0, %v1336
        %1338 = vmatmul.f32.gmra.mxu0 %v1263
        %v1339 = vpop.f32.mrf.mxu0
        %v1340 = vadd.f32 0.0, %v1339
        %1341 = vmatmul.f32.gmra.mxu0 %v1265
        %v1342 = vpop.f32.mrf.mxu0
        %v1343 = vadd.f32 0.0, %v1342
        %1344 = vmatmul.f32.gmra.mxu0 %v1267
        %v1345 = vpop.f32.mrf.mxu0
        %v1346 = vadd.f32 0.0, %v1345
        %1347 = vmatmul.f32.gmra.mxu0 %v1269
        %v1348 = vpop.f32.mrf.mxu0
        %v1349 = vadd.f32 0.0, %v1348
        %1350 = vmatmul.f32.gmra.mxu0 %v1271
        %v1351 = vpop.f32.mrf.mxu0
        %v1352 = vadd.f32 0.0, %v1351
        %1353 = vmatmul.f32.gmra.mxu0 %v1273
        %v1354 = vpop.f32.mrf.mxu0
        %v1355 = vadd.f32 0.0, %v1354
        %1356 = vdwg.mxu0
        %1357 = vmatpush.msra.mxu0 0.0
        %1358 = vmatpush.msra.mxu0 0.0
        %1359 = vmatpush.msra.mxu0 0.0
        %1360 = vmatpush.msra.mxu0 0.0
        %1361 = vmatpush.msra.mxu0 0.0
        %1362 = vmatpush.msra.mxu0 0.0
        %1363 = vmatpush.msra.mxu0 0.0
        %1364 = vmatpush.msra.mxu0 0.0
        %1365 = vmatpush.msra.mxu0 0.0
        %1366 = vmatpush.msra.mxu0 0.0
        %1367 = vmatpush.msra.mxu0 0.0
        %1368 = vmatpush.msra.mxu0 0.0
        %1369 = vmatpush.msra.mxu0 %v1257
        %1370 = vmatpush.msra.mxu0 %v1253
        %1371 = vmatpush.msra.mxu0 %v1249
        %1372 = vmatpush.msra.mxu0 %v1245
        %1373 = vmatmul.f32.gmra.mxu0 %v1259
        %v1374 = vpop.f32.mrf.mxu0
        %v1375 = vadd.f32 0.0, %v1374
        %1376 = vmatmul.f32.gmra.mxu0 %v1261
        %v1377 = vpop.f32.mrf.mxu0
        %v1378 = vadd.f32 0.0, %v1377
        %1379 = vmatmul.f32.gmra.mxu0 %v1263
        %v1380 = vpop.f32.mrf.mxu0
        %v1381 = vadd.f32 0.0, %v1380
        %1382 = vmatmul.f32.gmra.mxu0 %v1265
        %v1383 = vpop.f32.mrf.mxu0
        %v1384 = vadd.f32 0.0, %v1383
        %1385 = vmatmul.f32.gmra.mxu0 %v1267
        %v1386 = vpop.f32.mrf.mxu0
        %v1387 = vadd.f32 0.0, %v1386
        %1388 = vmatmul.f32.gmra.mxu0 %v1269
        %v1389 = vpop.f32.mrf.mxu0
        %v1390 = vadd.f32 0.0, %v1389
        %1391 = vmatmul.f32.gmra.mxu0 %v1271
        %v1392 = vpop.f32.mrf.mxu0
        %v1393 = vadd.f32 0.0, %v1392
        %1394 = vmatmul.f32.gmra.mxu0 %v1273
        %v1395 = vpop.f32.mrf.mxu0
        %v1396 = vadd.f32 0.0, %v1395
        %1397 = vdwg.mxu0
        %1398 = vmatpush.msra.mxu0 0.0
        %1399 = vmatpush.msra.mxu0 0.0
        %1400 = vmatpush.msra.mxu0 0.0
        %1401 = vmatpush.msra.mxu0 0.0
        %1402 = vmatpush.msra.mxu0 0.0
        %1403 = vmatpush.msra.mxu0 0.0
        %1404 = vmatpush.msra.mxu0 0.0
        %1405 = vmatpush.msra.mxu0 0.0
        %1406 = vmatpush.msra.mxu0 0.0
        %1407 = vmatpush.msra.mxu0 0.0
        %1408 = vmatpush.msra.mxu0 0.0
        %1409 = vmatpush.msra.mxu0 0.0
        %1410 = vmatpush.msra.mxu0 %v1258
        %1411 = vmatpush.msra.mxu0 %v1254
        %1412 = vmatpush.msra.mxu0 %v1250
        %1413 = vmatpush.msra.mxu0 %v1246
        %1414 = vmatmul.f32.gmra.mxu0 %v1259
        %v1415 = vpop.f32.mrf.mxu0
        %v1416 = vadd.f32 0.0, %v1415
        %1417 = vmatmul.f32.gmra.mxu0 %v1261
        %v1418 = vpop.f32.mrf.mxu0
        %v1419 = vadd.f32 0.0, %v1418
        %1420 = vmatmul.f32.gmra.mxu0 %v1263
        %v1421 = vpop.f32.mrf.mxu0
        %v1422 = vadd.f32 0.0, %v1421
        %1423 = vmatmul.f32.gmra.mxu0 %v1265
        %v1424 = vpop.f32.mrf.mxu0
        %v1425 = vadd.f32 0.0, %v1424
        %1426 = vmatmul.f32.gmra.mxu0 %v1267
        %v1427 = vpop.f32.mrf.mxu0
        %v1428 = vadd.f32 0.0, %v1427
        %1429 = vmatmul.f32.gmra.mxu0 %v1269
        %v1430 = vpop.f32.mrf.mxu0
        %v1431 = vadd.f32 0.0, %v1430
        %1432 = vmatmul.f32.gmra.mxu0 %v1271
        %v1433 = vpop.f32.mrf.mxu0
        %v1434 = vadd.f32 0.0, %v1433
        %1435 = vmatmul.f32.gmra.mxu0 %v1273
        %v1436 = vpop.f32.mrf.mxu0
        %v1437 = vadd.f32 0.0, %v1436
        %1438 = vdwg.mxu0
        %v1439 = vmax.f32 %v1293, %v1334
        %v1440 = vmax.f32 %v1439, %v1375
        %v1441 = vmax.f32 %v1440, %v1416
        %1442 = vmax.xlane.f32.xlu0 %v1441
        %v1443 = vpop.xlane.xlu0 %1442
        %v1444 = vmax.f32 %v1296, %v1337
        %v1445 = vmax.f32 %v1444, %v1378
        %v1446 = vmax.f32 %v1445, %v1419
        %1447 = vmax.xlane.f32.xlu0 %v1446
        %v1448 = vpop.xlane.xlu0 %1447
        %v1449 = vmax.f32 %v1299, %v1340
        %v1450 = vmax.f32 %v1449, %v1381
        %v1451 = vmax.f32 %v1450, %v1422
        %1452 = vmax.xlane.f32.xlu0 %v1451
        %v1453 = vpop.xlane.xlu0 %1452
        %v1454 = vmax.f32 %v1302, %v1343
        %v1455 = vmax.f32 %v1454, %v1384
        %v1456 = vmax.f32 %v1455, %v1425
        %1457 = vmax.xlane.f32.xlu0 %v1456
        %v1458 = vpop.xlane.xlu0 %1457
        %v1459 = vmax.f32 %v1305, %v1346
        %v1460 = vmax.f32 %v1459, %v1387
        %v1461 = vmax.f32 %v1460, %v1428
        %1462 = vmax.xlane.f32.xlu0 %v1461
        %v1463 = vpop.xlane.xlu0 %1462
        %v1464 = vmax.f32 %v1308, %v1349
        %v1465 = vmax.f32 %v1464, %v1390
        %v1466 = vmax.f32 %v1465, %v1431
        %1467 = vmax.xlane.f32.xlu0 %v1466
        %v1468 = vpop.xlane.xlu0 %1467
        %v1469 = vmax.f32 %v1311, %v1352
        %v1470 = vmax.f32 %v1469, %v1393
        %v1471 = vmax.f32 %v1470, %v1434
        %1472 = vmax.xlane.f32.xlu0 %v1471
        %v1473 = vpop.xlane.xlu0 %1472
        %v1474 = vmax.f32 %v1314, %v1355
        %v1475 = vmax.f32 %v1474, %v1396
        %v1476 = vmax.f32 %v1475, %v1437
        %1477 = vmax.xlane.f32.xlu0 %v1476
        %v1478 = vpop.xlane.xlu0 %1477
        %v1479 = vsub.f32 %v1293, %v1443
        %v1480 = vsub.f32 %v1334, %v1443
        %v1481 = vsub.f32 %v1375, %v1443
        %v1482 = vsub.f32 %v1416, %v1443
        %v1483 = vsub.f32 %v1296, %v1448
        %v1484 = vsub.f32 %v1337, %v1448
        %v1485 = vsub.f32 %v1378, %v1448
        %v1486 = vsub.f32 %v1419, %v1448
        %v1487 = vsub.f32 %v1299, %v1453
        %v1488 = vsub.f32 %v1340, %v1453
        %v1489 = vsub.f32 %v1381, %v1453
        %v1490 = vsub.f32 %v1422, %v1453
        %v1491 = vsub.f32 %v1302, %v1458
        %v1492 = vsub.f32 %v1343, %v1458
        %v1493 = vsub.f32 %v1384, %v1458
        %v1494 = vsub.f32 %v1425, %v1458
        %v1495 = vsub.f32 %v1305, %v1463
        %v1496 = vsub.f32 %v1346, %v1463
        %v1497 = vsub.f32 %v1387, %v1463
        %v1498 = vsub.f32 %v1428, %v1463
        %v1499 = vsub.f32 %v1308, %v1468
        %v1500 = vsub.f32 %v1349, %v1468
        %v1501 = vsub.f32 %v1390, %v1468
        %v1502 = vsub.f32 %v1431, %v1468
        %v1503 = vsub.f32 %v1311, %v1473
        %v1504 = vsub.f32 %v1352, %v1473
        %v1505 = vsub.f32 %v1393, %v1473
        %v1506 = vsub.f32 %v1434, %v1473
        %v1507 = vsub.f32 %v1314, %v1478
        %v1508 = vsub.f32 %v1355, %v1478
        %v1509 = vsub.f32 %v1396, %v1478
        %v1510 = vsub.f32 %v1437, %v1478
        %v1511 = vmul.f32 %v1479, 1.442695
        %v1512 = vpow.pop %v1511
        %v1513 = vmul.f32 %v1480, 1.442695
        %v1514 = vpow.pop %v1513
        %v1515 = vmul.f32 %v1481, 1.442695
        %v1516 = vpow.pop %v1515
        %v1517 = vmul.f32 %v1482, 1.442695
        %v1518 = vpow.pop %v1517
        %v1519 = vmul.f32 %v1483, 1.442695
        %v1520 = vpow.pop %v1519
        %v1521 = vmul.f32 %v1484, 1.442695
        %v1522 = vpow.pop %v1521
        %v1523 = vmul.f32 %v1485, 1.442695
        %v1524 = vpow.pop %v1523
        %v1525 = vmul.f32 %v1486, 1.442695
        %v1526 = vpow.pop %v1525
        %v1527 = vmul.f32 %v1487, 1.442695
        %v1528 = vpow.pop %v1527
        %v1529 = vmul.f32 %v1488, 1.442695
        %v1530 = vpow.pop %v1529
        %v1531 = vmul.f32 %v1489, 1.442695
        %v1532 = vpow.pop %v1531
        %v1533 = vmul.f32 %v1490, 1.442695
        %v1534 = vpow.pop %v1533
        %v1535 = vmul.f32 %v1491, 1.442695
        %v1536 = vpow.pop %v1535
        %v1537 = vmul.f32 %v1492, 1.442695
        %v1538 = vpow.pop %v1537
        %v1539 = vmul.f32 %v1493, 1.442695
        %v1540 = vpow.pop %v1539
        %v1541 = vmul.f32 %v1494, 1.442695
        %v1542 = vpow.pop %v1541
        %v1543 = vmul.f32 %v1495, 1.442695
        %v1544 = vpow.pop %v1543
        %v1545 = vmul.f32 %v1496, 1.442695
        %v1546 = vpow.pop %v1545
        %v1547 = vmul.f32 %v1497, 1.442695
        %v1548 = vpow.pop %v1547
        %v1549 = vmul.f32 %v1498, 1.442695
        %v1550 = vpow.pop %v1549
        %v1551 = vmul.f32 %v1499, 1.442695
        %v1552 = vpow.pop %v1551
        %v1553 = vmul.f32 %v1500, 1.442695
        %v1554 = vpow.pop %v1553
        %v1555 = vmul.f32 %v1501, 1.442695
        %v1556 = vpow.pop %v1555
        %v1557 = vmul.f32 %v1502, 1.442695
        %v1558 = vpow.pop %v1557
        %v1559 = vmul.f32 %v1503, 1.442695
        %v1560 = vpow.pop %v1559
        %v1561 = vmul.f32 %v1504, 1.442695
        %v1562 = vpow.pop %v1561
        %v1563 = vmul.f32 %v1505, 1.442695
        %v1564 = vpow.pop %v1563
        %v1565 = vmul.f32 %v1506, 1.442695
        %v1566 = vpow.pop %v1565
        %v1567 = vmul.f32 %v1507, 1.442695
        %v1568 = vpow.pop %v1567
        %v1569 = vmul.f32 %v1508, 1.442695
        %v1570 = vpow.pop %v1569
        %v1571 = vmul.f32 %v1509, 1.442695
        %v1572 = vpow.pop %v1571
        %v1573 = vmul.f32 %v1510, 1.442695
        %v1574 = vpow.pop %v1573
        %1579 = vrot.lane.b32.xlu0 %v1206, 64
        %v1580 = vpop.permute.xlu0 %1579
        %1581 = vrot.lane.b32.xlu0 %v1207, 64
        %v1582 = vpop.permute.xlu0 %1581
        %1583 = vrot.lane.b32.xlu0 %v1208, 64
        %v1584 = vpop.permute.xlu0 %1583
        %1585 = vrot.lane.b32.xlu0 %v1209, 64
        %v1586 = vpop.permute.xlu0 %1585
        %v1591 = vsel %vm1238, %v1206, %v1580
        %v1592 = vsel %vm1238, %v1207, %v1582
        %v1593 = vsel %vm1238, %v1208, %v1584
        %v1594 = vsel %vm1238, %v1209, %v1586
        %v1595 = vmul.f32 %v1591, %v708
        %v1596 = vmul.f32 %v1591, %v709
        %v1597 = vmul.f32 %v1591, %v710
        %v1598 = vmul.f32 %v1591, %v711
        %v1599 = vmul.f32 %v1592, %v712
        %v1600 = vmul.f32 %v1592, %v713
        %v1601 = vmul.f32 %v1592, %v714
        %v1602 = vmul.f32 %v1592, %v715
        %v1603 = vmul.f32 %v1593, %v716
        %v1604 = vmul.f32 %v1593, %v717
        %v1605 = vmul.f32 %v1593, %v718
        %v1606 = vmul.f32 %v1593, %v719
        %v1607 = vmul.f32 %v1594, %v720
        %v1608 = vmul.f32 %v1594, %v721
        %v1609 = vmul.f32 %v1594, %v722
        %v1610 = vmul.f32 %v1594, %v723
        %1611 = vmatpush.xpose.msra.mxu0 0.0
        %1612 = vmatpush.xpose.msra.mxu0 0.0
        %1613 = vmatpush.xpose.msra.mxu0 0.0
        %1614 = vmatpush.xpose.msra.mxu0 0.0
        %1615 = vmatpush.xpose.msra.mxu0 0.0
        %1616 = vmatpush.xpose.msra.mxu0 0.0
        %1617 = vmatpush.xpose.msra.mxu0 0.0
        %1618 = vmatpush.xpose.msra.mxu0 0.0
        %1619 = vmatpush.xpose.msra.mxu0 %v720
        %1620 = vmatpush.xpose.msra.mxu0 %v716
        %1621 = vmatpush.xpose.msra.mxu0 %v712
        %1622 = vmatpush.xpose.msra.mxu0 %v708
        %1623 = vmatpush.xpose.msra.mxu0 %v1607
        %1624 = vmatpush.xpose.msra.mxu0 %v1603
        %1625 = vmatpush.xpose.msra.mxu0 %v1599
        %1626 = vmatpush.xpose.msra.mxu0 %v1595
        %1627 = vmatmul.f32.gmra.mxu0 %v1512
        %v1628 = vpop.f32.mrf.mxu0
        %v1629 = vadd.f32 0.0, %v1628
        %1630 = vmatmul.f32.gmra.mxu0 %v1520
        %v1631 = vpop.f32.mrf.mxu0
        %v1632 = vadd.f32 0.0, %v1631
        %1633 = vmatmul.f32.gmra.mxu0 %v1528
        %v1634 = vpop.f32.mrf.mxu0
        %v1635 = vadd.f32 0.0, %v1634
        %1636 = vmatmul.f32.gmra.mxu0 %v1536
        %v1637 = vpop.f32.mrf.mxu0
        %v1638 = vadd.f32 0.0, %v1637
        %1639 = vmatmul.f32.gmra.mxu0 %v1544
        %v1640 = vpop.f32.mrf.mxu0
        %v1641 = vadd.f32 0.0, %v1640
        %1642 = vmatmul.f32.gmra.mxu0 %v1552
        %v1643 = vpop.f32.mrf.mxu0
        %v1644 = vadd.f32 0.0, %v1643
        %1645 = vmatmul.f32.gmra.mxu0 %v1560
        %v1646 = vpop.f32.mrf.mxu0
        %v1647 = vadd.f32 0.0, %v1646
        %1648 = vmatmul.f32.gmra.mxu0 %v1568
        %v1649 = vpop.f32.mrf.mxu0
        %v1650 = vadd.f32 0.0, %v1649
        %1651 = vdwg.mxu0
        %1652 = vmatpush.xpose.msra.mxu0 0.0
        %1653 = vmatpush.xpose.msra.mxu0 0.0
        %1654 = vmatpush.xpose.msra.mxu0 0.0
        %1655 = vmatpush.xpose.msra.mxu0 0.0
        %1656 = vmatpush.xpose.msra.mxu0 0.0
        %1657 = vmatpush.xpose.msra.mxu0 0.0
        %1658 = vmatpush.xpose.msra.mxu0 0.0
        %1659 = vmatpush.xpose.msra.mxu0 0.0
        %1660 = vmatpush.xpose.msra.mxu0 %v721
        %1661 = vmatpush.xpose.msra.mxu0 %v717
        %1662 = vmatpush.xpose.msra.mxu0 %v713
        %1663 = vmatpush.xpose.msra.mxu0 %v709
        %1664 = vmatpush.xpose.msra.mxu0 %v1608
        %1665 = vmatpush.xpose.msra.mxu0 %v1604
        %1666 = vmatpush.xpose.msra.mxu0 %v1600
        %1667 = vmatpush.xpose.msra.mxu0 %v1596
        %1668 = vmatmul.f32.gmra.mxu0 %v1514
        %v1669 = vpop.f32.mrf.mxu0
        %v1670 = vadd.f32 %v1629, %v1669
        %1671 = vmatmul.f32.gmra.mxu0 %v1522
        %v1672 = vpop.f32.mrf.mxu0
        %v1673 = vadd.f32 %v1632, %v1672
        %1674 = vmatmul.f32.gmra.mxu0 %v1530
        %v1675 = vpop.f32.mrf.mxu0
        %v1676 = vadd.f32 %v1635, %v1675
        %1677 = vmatmul.f32.gmra.mxu0 %v1538
        %v1678 = vpop.f32.mrf.mxu0
        %v1679 = vadd.f32 %v1638, %v1678
        %1680 = vmatmul.f32.gmra.mxu0 %v1546
        %v1681 = vpop.f32.mrf.mxu0
        %v1682 = vadd.f32 %v1641, %v1681
        %1683 = vmatmul.f32.gmra.mxu0 %v1554
        %v1684 = vpop.f32.mrf.mxu0
        %v1685 = vadd.f32 %v1644, %v1684
        %1686 = vmatmul.f32.gmra.mxu0 %v1562
        %v1687 = vpop.f32.mrf.mxu0
        %v1688 = vadd.f32 %v1647, %v1687
        %1689 = vmatmul.f32.gmra.mxu0 %v1570
        %v1690 = vpop.f32.mrf.mxu0
        %v1691 = vadd.f32 %v1650, %v1690
        %1692 = vdwg.mxu0
        %1693 = vmatpush.xpose.msra.mxu0 0.0
        %1694 = vmatpush.xpose.msra.mxu0 0.0
        %1695 = vmatpush.xpose.msra.mxu0 0.0
        %1696 = vmatpush.xpose.msra.mxu0 0.0
        %1697 = vmatpush.xpose.msra.mxu0 0.0
        %1698 = vmatpush.xpose.msra.mxu0 0.0
        %1699 = vmatpush.xpose.msra.mxu0 0.0
        %1700 = vmatpush.xpose.msra.mxu0 0.0
        %1701 = vmatpush.xpose.msra.mxu0 %v722
        %1702 = vmatpush.xpose.msra.mxu0 %v718
        %1703 = vmatpush.xpose.msra.mxu0 %v714
        %1704 = vmatpush.xpose.msra.mxu0 %v710
        %1705 = vmatpush.xpose.msra.mxu0 %v1609
        %1706 = vmatpush.xpose.msra.mxu0 %v1605
        %1707 = vmatpush.xpose.msra.mxu0 %v1601
        %1708 = vmatpush.xpose.msra.mxu0 %v1597
        %1709 = vmatmul.f32.gmra.mxu0 %v1516
        %v1710 = vpop.f32.mrf.mxu0
        %v1711 = vadd.f32 %v1670, %v1710
        %1712 = vmatmul.f32.gmra.mxu0 %v1524
        %v1713 = vpop.f32.mrf.mxu0
        %v1714 = vadd.f32 %v1673, %v1713
        %1715 = vmatmul.f32.gmra.mxu0 %v1532
        %v1716 = vpop.f32.mrf.mxu0
        %v1717 = vadd.f32 %v1676, %v1716
        %1718 = vmatmul.f32.gmra.mxu0 %v1540
        %v1719 = vpop.f32.mrf.mxu0
        %v1720 = vadd.f32 %v1679, %v1719
        %1721 = vmatmul.f32.gmra.mxu0 %v1548
        %v1722 = vpop.f32.mrf.mxu0
        %v1723 = vadd.f32 %v1682, %v1722
        %1724 = vmatmul.f32.gmra.mxu0 %v1556
        %v1725 = vpop.f32.mrf.mxu0
        %v1726 = vadd.f32 %v1685, %v1725
        %1727 = vmatmul.f32.gmra.mxu0 %v1564
        %v1728 = vpop.f32.mrf.mxu0
        %v1729 = vadd.f32 %v1688, %v1728
        %1730 = vmatmul.f32.gmra.mxu0 %v1572
        %v1731 = vpop.f32.mrf.mxu0
        %v1732 = vadd.f32 %v1691, %v1731
        %1733 = vdwg.mxu0
        %1734 = vmatpush.xpose.msra.mxu0 0.0
        %1735 = vmatpush.xpose.msra.mxu0 0.0
        %1736 = vmatpush.xpose.msra.mxu0 0.0
        %1737 = vmatpush.xpose.msra.mxu0 0.0
        %1738 = vmatpush.xpose.msra.mxu0 0.0
        %1739 = vmatpush.xpose.msra.mxu0 0.0
        %1740 = vmatpush.xpose.msra.mxu0 0.0
        %1741 = vmatpush.xpose.msra.mxu0 0.0
        %1742 = vmatpush.xpose.msra.mxu0 %v723
        %1743 = vmatpush.xpose.msra.mxu0 %v719
        %1744 = vmatpush.xpose.msra.mxu0 %v715
        %1745 = vmatpush.xpose.msra.mxu0 %v711
        %1746 = vmatpush.xpose.msra.mxu0 %v1610
        %1747 = vmatpush.xpose.msra.mxu0 %v1606
        %1748 = vmatpush.xpose.msra.mxu0 %v1602
        %1749 = vmatpush.xpose.msra.mxu0 %v1598
        %1750 = vmatmul.f32.gmra.mxu0 %v1518
        %v1751 = vpop.f32.mrf.mxu0
        %v1752 = vadd.f32 %v1711, %v1751
        %1753 = vmatmul.f32.gmra.mxu0 %v1526
        %v1754 = vpop.f32.mrf.mxu0
        %v1755 = vadd.f32 %v1714, %v1754
        %1756 = vmatmul.f32.gmra.mxu0 %v1534
        %v1757 = vpop.f32.mrf.mxu0
        %v1758 = vadd.f32 %v1717, %v1757
        %1759 = vmatmul.f32.gmra.mxu0 %v1542
        %v1760 = vpop.f32.mrf.mxu0
        %v1761 = vadd.f32 %v1720, %v1760
        %1762 = vmatmul.f32.gmra.mxu0 %v1550
        %v1763 = vpop.f32.mrf.mxu0
        %v1764 = vadd.f32 %v1723, %v1763
        %1765 = vmatmul.f32.gmra.mxu0 %v1558
        %v1766 = vpop.f32.mrf.mxu0
        %v1767 = vadd.f32 %v1726, %v1766
        %1768 = vmatmul.f32.gmra.mxu0 %v1566
        %v1769 = vpop.f32.mrf.mxu0
        %v1770 = vadd.f32 %v1729, %v1769
        %1771 = vmatmul.f32.gmra.mxu0 %v1574
        %v1772 = vpop.f32.mrf.mxu0
        %v1773 = vadd.f32 %v1732, %v1772
        %1774 = vdwg.mxu0
        %v1775 = vrcp.pop %v1752
        %v1776 = vrcp.pop %v1755
        %v1777 = vrcp.pop %v1758
        %v1778 = vrcp.pop %v1761
        %v1779 = vrcp.pop %v1764
        %v1780 = vrcp.pop %v1767
        %v1781 = vrcp.pop %v1770
        %v1782 = vrcp.pop %v1773
        %1791 = vrot.lane.b32.xlu0 %v1775, 96
        %v1792 = vpop.permute.xlu0 %1791
        %1793 = vrot.lane.b32.xlu0 %v1776, 96
        %v1794 = vpop.permute.xlu0 %1793
        %1795 = vrot.lane.b32.xlu0 %v1777, 96
        %v1796 = vpop.permute.xlu0 %1795
        %1797 = vrot.lane.b32.xlu0 %v1778, 96
        %v1798 = vpop.permute.xlu0 %1797
        %1799 = vrot.lane.b32.xlu0 %v1779, 96
        %v1800 = vpop.permute.xlu0 %1799
        %1801 = vrot.lane.b32.xlu0 %v1780, 96
        %v1802 = vpop.permute.xlu0 %1801
        %1803 = vrot.lane.b32.xlu0 %v1781, 96
        %v1804 = vpop.permute.xlu0 %1803
        %1805 = vrot.lane.b32.xlu0 %v1782, 96
        %v1806 = vpop.permute.xlu0 %1805
        %v1815 = vmul.f32 %v1752, %v1792
        %v1816 = vmul.f32 %v1755, %v1794
        %v1817 = vmul.f32 %v1758, %v1796
        %v1818 = vmul.f32 %v1761, %v1798
        %v1819 = vmul.f32 %v1764, %v1800
        %v1820 = vmul.f32 %v1767, %v1802
        %v1821 = vmul.f32 %v1770, %v1804
        %v1822 = vmul.f32 %v1773, %v1806
        %v1823 = vperm.slane %v724, 3
        %v1825 = vsel %vm826, %v1815, 0
        %v1828 = vsel %vm826, %v1816, 0
        %v1831 = vsel %vm826, %v1817, 0
        %v1834 = vsel %vm826, %v1818, 0
        %v1837 = vsel %vm826, %v1819, 0
        %v1840 = vsel %vm826, %v1820, 0
        %v1843 = vsel %vm826, %v1821, 0
        %v1846 = vsel %vm826, %v1822, 0
        %1848 = vmatpush.msra.mxu0 0.0
        %1849 = vmatpush.msra.mxu0 0.0
        %1850 = vmatpush.msra.mxu0 0.0
        %1851 = vmatpush.msra.mxu0 0.0
        %1852 = vmatpush.msra.mxu0 0.0
        %1853 = vmatpush.msra.mxu0 0.0
        %1854 = vmatpush.msra.mxu0 0.0
        %1855 = vmatpush.msra.mxu0 0.0
        %1856 = vmatpush.msra.mxu0 0.0
        %1857 = vmatpush.msra.mxu0 0.0
        %1858 = vmatpush.msra.mxu0 0.0
        %1859 = vmatpush.msra.mxu0 0.0
        %1860 = vmatpush.msra.mxu0 %v1035
        %1861 = vmatpush.msra.mxu0 %v1034
        %1862 = vmatpush.msra.mxu0 %v1033
        %1863 = vmatpush.msra.mxu0 %v1032
        %1864 = vmatmul.f32.gmra.mxu0 %v1825
        %v1865 = vpop.f32.mrf.mxu0
        %v1866 = vadd.f32 %v1823, %v1865
        %1867 = vmatmul.f32.gmra.mxu0 %v1828
        %v1868 = vpop.f32.mrf.mxu0
        %v1869 = vadd.f32 %v1823, %v1868
        %1870 = vmatmul.f32.gmra.mxu0 %v1831
        %v1871 = vpop.f32.mrf.mxu0
        %v1872 = vadd.f32 %v1823, %v1871
        %1873 = vmatmul.f32.gmra.mxu0 %v1834
        %v1874 = vpop.f32.mrf.mxu0
        %v1875 = vadd.f32 %v1823, %v1874
        %1876 = vmatmul.f32.gmra.mxu0 %v1837
        %v1877 = vpop.f32.mrf.mxu0
        %v1878 = vadd.f32 %v1823, %v1877
        %1879 = vmatmul.f32.gmra.mxu0 %v1840
        %v1880 = vpop.f32.mrf.mxu0
        %v1881 = vadd.f32 %v1823, %v1880
        %1882 = vmatmul.f32.gmra.mxu0 %v1843
        %v1883 = vpop.f32.mrf.mxu0
        %v1884 = vadd.f32 %v1823, %v1883
        %1885 = vmatmul.f32.gmra.mxu0 %v1846
        %v1886 = vpop.f32.mrf.mxu0
        %v1887 = vadd.f32 %v1823, %v1886
        %1888 = vdwg.mxu0
        %v1889 = vadd.f32 %v818, %v1866
        %v1890 = vadd.f32 %v819, %v1869
        %v1891 = vadd.f32 %v820, %v1872
        %v1892 = vadd.f32 %v821, %v1875
        %v1893 = vadd.f32 %v822, %v1878
        %v1894 = vadd.f32 %v823, %v1881
        %v1895 = vadd.f32 %v824, %v1884
        %v1896 = vadd.f32 %v825, %v1887
        %v1897 = vsel %vm826, %v1889, 0.0
        %1898 = vadd.xlane.f32.xlu0 %v1897
        %v1899 = vpop.xlane.xlu0 %1898
        %v1900 = vsel %vm826, %v1890, 0.0
        %1901 = vadd.xlane.f32.xlu0 %v1900
        %v1902 = vpop.xlane.xlu0 %1901
        %v1903 = vsel %vm826, %v1891, 0.0
        %1904 = vadd.xlane.f32.xlu0 %v1903
        %v1905 = vpop.xlane.xlu0 %1904
        %v1906 = vsel %vm826, %v1892, 0.0
        %1907 = vadd.xlane.f32.xlu0 %v1906
        %v1908 = vpop.xlane.xlu0 %1907
        %v1909 = vsel %vm826, %v1893, 0.0
        %1910 = vadd.xlane.f32.xlu0 %v1909
        %v1911 = vpop.xlane.xlu0 %1910
        %v1912 = vsel %vm826, %v1894, 0.0
        %1913 = vadd.xlane.f32.xlu0 %v1912
        %v1914 = vpop.xlane.xlu0 %1913
        %v1915 = vsel %vm826, %v1895, 0.0
        %1916 = vadd.xlane.f32.xlu0 %v1915
        %v1917 = vpop.xlane.xlu0 %1916
        %v1918 = vsel %vm826, %v1896, 0.0
        %1919 = vadd.xlane.f32.xlu0 %v1918
        %v1920 = vpop.xlane.xlu0 %1919
        %v1921 = vmul.f32 %v1899, %v857
        %v1922 = vmul.f32 %v1902, %v857
        %v1923 = vmul.f32 %v1905, %v857
        %v1924 = vmul.f32 %v1908, %v857
        %v1925 = vmul.f32 %v1911, %v857
        %v1926 = vmul.f32 %v1914, %v857
        %v1927 = vmul.f32 %v1917, %v857
        %v1928 = vmul.f32 %v1920, %v857
        %v1929 = vsub.f32 %v1889, %v1921
        %v1930 = vsub.f32 %v1890, %v1922
        %v1931 = vsub.f32 %v1891, %v1923
        %v1932 = vsub.f32 %v1892, %v1924
        %v1933 = vsub.f32 %v1893, %v1925
        %v1934 = vsub.f32 %v1894, %v1926
        %v1935 = vsub.f32 %v1895, %v1927
        %v1936 = vsub.f32 %v1896, %v1928
        %v1937 = vmul.f32 %v1929, %v1929
        %v1938 = vmul.f32 %v1930, %v1930
        %v1939 = vmul.f32 %v1931, %v1931
        %v1940 = vmul.f32 %v1932, %v1932
        %v1941 = vmul.f32 %v1933, %v1933
        %v1942 = vmul.f32 %v1934, %v1934
        %v1943 = vmul.f32 %v1935, %v1935
        %v1944 = vmul.f32 %v1936, %v1936
        %v1945 = vsel %vm826, %v1937, 0.0
        %1946 = vadd.xlane.f32.xlu0 %v1945
        %v1947 = vpop.xlane.xlu0 %1946
        %v1948 = vsel %vm826, %v1938, 0.0
        %1949 = vadd.xlane.f32.xlu0 %v1948
        %v1950 = vpop.xlane.xlu0 %1949
        %v1951 = vsel %vm826, %v1939, 0.0
        %1952 = vadd.xlane.f32.xlu0 %v1951
        %v1953 = vpop.xlane.xlu0 %1952
        %v1954 = vsel %vm826, %v1940, 0.0
        %1955 = vadd.xlane.f32.xlu0 %v1954
        %v1956 = vpop.xlane.xlu0 %1955
        %v1957 = vsel %vm826, %v1941, 0.0
        %1958 = vadd.xlane.f32.xlu0 %v1957
        %v1959 = vpop.xlane.xlu0 %1958
        %v1960 = vsel %vm826, %v1942, 0.0
        %1961 = vadd.xlane.f32.xlu0 %v1960
        %v1962 = vpop.xlane.xlu0 %1961
        %v1963 = vsel %vm826, %v1943, 0.0
        %1964 = vadd.xlane.f32.xlu0 %v1963
        %v1965 = vpop.xlane.xlu0 %1964
        %v1966 = vsel %vm826, %v1944, 0.0
        %1967 = vadd.xlane.f32.xlu0 %v1966
        %v1968 = vpop.xlane.xlu0 %1967
        %v1969 = vmul.f32 %v1947, %v857
        %v1970 = vmul.f32 %v1950, %v857
        %v1971 = vmul.f32 %v1953, %v857
        %v1972 = vmul.f32 %v1956, %v857
        %v1973 = vmul.f32 %v1959, %v857
        %v1974 = vmul.f32 %v1962, %v857
        %v1975 = vmul.f32 %v1965, %v857
        %v1976 = vmul.f32 %v1968, %v857
        %v1977 = vadd.f32 %v1969, 1e-05
        %v1978 = vadd.f32 %v1970, 1e-05
        %v1979 = vadd.f32 %v1971, 1e-05
        %v1980 = vadd.f32 %v1972, 1e-05
        %v1981 = vadd.f32 %v1973, 1e-05
        %v1982 = vadd.f32 %v1974, 1e-05
        %v1983 = vadd.f32 %v1975, 1e-05
        %v1984 = vadd.f32 %v1976, 1e-05
        %v1985 = vrsqrt.pop %v1977
        %v1986 = vmul.f32 %v1985, %v1977
        %v1987 = vmul.f32 %v1986, %v1985
        %v1988 = vmul.f32 0.5, %v1987
        %v1989 = vsub.f32 1.5, %v1988
        %v1990 = vmul.f32 %v1985, %v1989
        %vm1991 = vweird.f32 %v1977
        %vm1992 = vweird.f32 %v1985
        %vm1993 = vmor %vm1991, %vm1992
        %v1994 = vsel %vm1993, %v1985, %v1990
        %v1995 = vrsqrt.pop %v1978
        %v1996 = vmul.f32 %v1995, %v1978
        %v1997 = vmul.f32 %v1996, %v1995
        %v1998 = vmul.f32 0.5, %v1997
        %v1999 = vsub.f32 1.5, %v1998
        %v2000 = vmul.f32 %v1995, %v1999
        %vm2001 = vweird.f32 %v1978
        %vm2002 = vweird.f32 %v1995
        %vm2003 = vmor %vm2001, %vm2002
        %v2004 = vsel %vm2003, %v1995, %v2000
        %v2005 = vrsqrt.pop %v1979
        %v2006 = vmul.f32 %v2005, %v1979
        %v2007 = vmul.f32 %v2006, %v2005
        %v2008 = vmul.f32 0.5, %v2007
        %v2009 = vsub.f32 1.5, %v2008
        %v2010 = vmul.f32 %v2005, %v2009
        %vm2011 = vweird.f32 %v1979
        %vm2012 = vweird.f32 %v2005
        %vm2013 = vmor %vm2011, %vm2012
        %v2014 = vsel %vm2013, %v2005, %v2010
        %v2015 = vrsqrt.pop %v1980
        %v2016 = vmul.f32 %v2015, %v1980
        %v2017 = vmul.f32 %v2016, %v2015
        %v2018 = vmul.f32 0.5, %v2017
        %v2019 = vsub.f32 1.5, %v2018
        %v2020 = vmul.f32 %v2015, %v2019
        %vm2021 = vweird.f32 %v1980
        %vm2022 = vweird.f32 %v2015
        %vm2023 = vmor %vm2021, %vm2022
        %v2024 = vsel %vm2023, %v2015, %v2020
        %v2025 = vrsqrt.pop %v1981
        %v2026 = vmul.f32 %v2025, %v1981
        %v2027 = vmul.f32 %v2026, %v2025
        %v2028 = vmul.f32 0.5, %v2027
        %v2029 = vsub.f32 1.5, %v2028
        %v2030 = vmul.f32 %v2025, %v2029
        %vm2031 = vweird.f32 %v1981
        %vm2032 = vweird.f32 %v2025
        %vm2033 = vmor %vm2031, %vm2032
        %v2034 = vsel %vm2033, %v2025, %v2030
        %v2035 = vrsqrt.pop %v1982
        %v2036 = vmul.f32 %v2035, %v1982
        %v2037 = vmul.f32 %v2036, %v2035
        %v2038 = vmul.f32 0.5, %v2037
        %v2039 = vsub.f32 1.5, %v2038
        %v2040 = vmul.f32 %v2035, %v2039
        %vm2041 = vweird.f32 %v1982
        %vm2042 = vweird.f32 %v2035
        %vm2043 = vmor %vm2041, %vm2042
        %v2044 = vsel %vm2043, %v2035, %v2040
        %v2045 = vrsqrt.pop %v1983
        %v2046 = vmul.f32 %v2045, %v1983
        %v2047 = vmul.f32 %v2046, %v2045
        %v2048 = vmul.f32 0.5, %v2047
        %v2049 = vsub.f32 1.5, %v2048
        %v2050 = vmul.f32 %v2045, %v2049
        %vm2051 = vweird.f32 %v1983
        %vm2052 = vweird.f32 %v2045
        %vm2053 = vmor %vm2051, %vm2052
        %v2054 = vsel %vm2053, %v2045, %v2050
        %v2055 = vrsqrt.pop %v1984
        %v2056 = vmul.f32 %v2055, %v1984
        %v2057 = vmul.f32 %v2056, %v2055
        %v2058 = vmul.f32 0.5, %v2057
        %v2059 = vsub.f32 1.5, %v2058
        %v2060 = vmul.f32 %v2055, %v2059
        %vm2061 = vweird.f32 %v1984
        %vm2062 = vweird.f32 %v2055
        %vm2063 = vmor %vm2061, %vm2062
        %v2064 = vsel %vm2063, %v2055, %v2060
        %v2065 = vmul.f32 %v1929, %v1994
        %v2066 = vmul.f32 %v1930, %v2004
        %v2067 = vmul.f32 %v1931, %v2014
        %v2068 = vmul.f32 %v1932, %v2024
        %v2069 = vmul.f32 %v1933, %v2034
        %v2070 = vmul.f32 %v1934, %v2044
        %v2071 = vmul.f32 %v1935, %v2054
        %v2072 = vmul.f32 %v1936, %v2064
        %v2073 = vperm.slane %v724, 4
        %v2074 = vmul.f32 %v2065, %v2073
        %v2075 = vmul.f32 %v2066, %v2073
        %v2076 = vmul.f32 %v2067, %v2073
        %v2077 = vmul.f32 %v2068, %v2073
        %v2078 = vmul.f32 %v2069, %v2073
        %v2079 = vmul.f32 %v2070, %v2073
        %v2080 = vmul.f32 %v2071, %v2073
        %v2081 = vmul.f32 %v2072, %v2073
        %v2082 = vperm.slane %v724, 5
        %v2083 = vadd.f32 %v2074, %v2082
        %v2084 = vadd.f32 %v2075, %v2082
        %v2085 = vadd.f32 %v2076, %v2082
        %v2086 = vadd.f32 %v2077, %v2082
        %v2087 = vadd.f32 %v2078, %v2082
        %v2088 = vadd.f32 %v2079, %v2082
        %v2089 = vadd.f32 %v2080, %v2082
        %v2090 = vadd.f32 %v2081, %v2082
        %v2091 = vld [vmem:[%s9] sm:$0xff]
        %v2092 = vld [vmem:[%s9 + $0x8] sm:$0xff]
        %v2093 = vld [vmem:[%s9 + $0x10] sm:$0xff]
        %v2094 = vld [vmem:[%s9 + $0x18] sm:$0xff]
        %v2095 = vperm.slane %v728, 0
        %v2097 = vsel %vm826, %v2083, 0
        %v2100 = vsel %vm826, %v2084, 0
        %v2103 = vsel %vm826, %v2085, 0
        %v2106 = vsel %vm826, %v2086, 0
        %v2109 = vsel %vm826, %v2087, 0
        %v2112 = vsel %vm826, %v2088, 0
        %v2115 = vsel %vm826, %v2089, 0
        %v2118 = vsel %vm826, %v2090, 0
        %2120 = vmatpush.msra.mxu0 0.0
        %2121 = vmatpush.msra.mxu0 0.0
        %2122 = vmatpush.msra.mxu0 0.0
        %2123 = vmatpush.msra.mxu0 0.0
        %2124 = vmatpush.msra.mxu0 0.0
        %2125 = vmatpush.msra.mxu0 0.0
        %2126 = vmatpush.msra.mxu0 0.0
        %2127 = vmatpush.msra.mxu0 0.0
        %2128 = vmatpush.msra.mxu0 0.0
        %2129 = vmatpush.msra.mxu0 0.0
        %2130 = vmatpush.msra.mxu0 0.0
        %2131 = vmatpush.msra.mxu0 0.0
        %2132 = vmatpush.msra.mxu0 %v2094
        %2133 = vmatpush.msra.mxu0 %v2093
        %2134 = vmatpush.msra.mxu0 %v2092
        %2135 = vmatpush.msra.mxu0 %v2091
        %2136 = vmatmul.f32.gmra.mxu0 %v2097
        %v2137 = vpop.f32.mrf.mxu0
        %v2138 = vadd.f32 %v2095, %v2137
        %2139 = vmatmul.f32.gmra.mxu0 %v2100
        %v2140 = vpop.f32.mrf.mxu0
        %v2141 = vadd.f32 %v2095, %v2140
        %2142 = vmatmul.f32.gmra.mxu0 %v2103
        %v2143 = vpop.f32.mrf.mxu0
        %v2144 = vadd.f32 %v2095, %v2143
        %2145 = vmatmul.f32.gmra.mxu0 %v2106
        %v2146 = vpop.f32.mrf.mxu0
        %v2147 = vadd.f32 %v2095, %v2146
        %2148 = vmatmul.f32.gmra.mxu0 %v2109
        %v2149 = vpop.f32.mrf.mxu0
        %v2150 = vadd.f32 %v2095, %v2149
        %2151 = vmatmul.f32.gmra.mxu0 %v2112
        %v2152 = vpop.f32.mrf.mxu0
        %v2153 = vadd.f32 %v2095, %v2152
        %2154 = vmatmul.f32.gmra.mxu0 %v2115
        %v2155 = vpop.f32.mrf.mxu0
        %v2156 = vadd.f32 %v2095, %v2155
        %2157 = vmatmul.f32.gmra.mxu0 %v2118
        %v2158 = vpop.f32.mrf.mxu0
        %v2159 = vadd.f32 %v2095, %v2158
        %2160 = vdwg.mxu0
        %v2161 = vmul.f32 %v2138, 0.5
        %v2162 = vmul.f32 %v2141, 0.5
        %v2163 = vmul.f32 %v2144, 0.5
        %v2164 = vmul.f32 %v2147, 0.5
        %v2165 = vmul.f32 %v2150, 0.5
        %v2166 = vmul.f32 %v2153, 0.5
        %v2167 = vmul.f32 %v2156, 0.5
        %v2168 = vmul.f32 %v2159, 0.5
        %v2169 = vmul.f32 %v2138, 0.70710677
        %v2170 = vmul.f32 %v2141, 0.70710677
        %v2171 = vmul.f32 %v2144, 0.70710677
        %v2172 = vmul.f32 %v2147, 0.70710677
        %v2173 = vmul.f32 %v2150, 0.70710677
        %v2174 = vmul.f32 %v2153, 0.70710677
        %v2175 = vmul.f32 %v2156, 0.70710677
        %v2176 = vmul.f32 %v2159, 0.70710677
        %v2177 = vmul.f32 %v2169, %v2169
        %v2178 = vmin.f32 16.0, %v2177
        %v2179 = vmul.f32 %v2178, 2.1237322e-06
        %v2180 = vadd.f32 %v2179, 0.00028619796
        %v2181 = vmul.f32 %v2178, %v2180
        %v2182 = vadd.f32 %v2181, 0.0036580483
        %v2183 = vmul.f32 %v2178, %v2182
        %v2184 = vadd.f32 %v2183, 0.05243302
        %v2185 = vmul.f32 %v2178, %v2184
        %v2186 = vadd.f32 %v2185, 0.18741608
        %v2187 = vmul.f32 %v2178, %v2186
        %v2188 = vadd.f32 %v2187, 1.1283791
        %v2189 = vmul.f32 %v2169, %v2188
        %v2190 = vmul.f32 %v2178, 3.8918573e-05
        %v2191 = vadd.f32 %v2190, 0.001143296
        %v2192 = vmul.f32 %v2178, %v2191
        %v2193 = vadd.f32 %v2192, 0.014752088
        %v2194 = vmul.f32 %v2178, %v2193
        %v2195 = vadd.f32 %v2194, 0.112945676
        %v2196 = vmul.f32 %v2178, %v2195
        %v2197 = vadd.f32 %v2196, 0.4994258
        %v2198 = vmul.f32 %v2178, %v2197
        %v2199 = vadd.f32 %v2198, 1.0
        %v2200 = vrcp.pop %v2199
        %v2201 = vmul.f32 %v2199, %v2200
        %v2202 = vsub.f32 1.0, %v2201
        %v2203 = vmul.f32 %v2200, %v2202
        %v2204 = vadd.f32 %v2200, %v2203
        %vm2205 = vweird.f32 %v2199
        %vm2206 = vweird.f32 %v2200
        %vm2207 = vmor %vm2205, %vm2206
        %v2208 = vsel %vm2207, %v2200, %v2204
        %v2209 = vand.u32 2147483647, %v2199
        %vm2210 = vcmp.eq.f32.partialorder %v2209, 8.507059e+37
        %v2211 = vand.u32 %v2199, 2147483648
        %v2212 = vor.u32 1.1754944e-38, %v2211
        %v2213 = vsel %vm2210, %v2212, %v2208
        %v2214 = vmul.f32 %v2189, %v2213
        %v2215 = vmin.f32 %v2214, 1.0
        %v2216 = vmax.f32 %v2215, -1.0
        %v2217 = vmul.f32 %v2170, %v2170
        %v2218 = vmin.f32 16.0, %v2217
        %v2219 = vmul.f32 %v2218, 2.1237322e-06
        %v2220 = vadd.f32 %v2219, 0.00028619796
        %v2221 = vmul.f32 %v2218, %v2220
        %v2222 = vadd.f32 %v2221, 0.0036580483
        %v2223 = vmul.f32 %v2218, %v2222
        %v2224 = vadd.f32 %v2223, 0.05243302
        %v2225 = vmul.f32 %v2218, %v2224
        %v2226 = vadd.f32 %v2225, 0.18741608
        %v2227 = vmul.f32 %v2218, %v2226
        %v2228 = vadd.f32 %v2227, 1.1283791
        %v2229 = vmul.f32 %v2170, %v2228
        %v2230 = vmul.f32 %v2218, 3.8918573e-05
        %v2231 = vadd.f32 %v2230, 0.001143296
        %v2232 = vmul.f32 %v2218, %v2231
        %v2233 = vadd.f32 %v2232, 0.014752088
        %v2234 = vmul.f32 %v2218, %v2233
        %v2235 = vadd.f32 %v2234, 0.112945676
        %v2236 = vmul.f32 %v2218, %v2235
        %v2237 = vadd.f32 %v2236, 0.4994258
        %v2238 = vmul.f32 %v2218, %v2237
        %v2239 = vadd.f32 %v2238, 1.0
        %v2240 = vrcp.pop %v2239
        %v2241 = vmul.f32 %v2239, %v2240
        %v2242 = vsub.f32 1.0, %v2241
        %v2243 = vmul.f32 %v2240, %v2242
        %v2244 = vadd.f32 %v2240, %v2243
        %vm2245 = vweird.f32 %v2239
        %vm2246 = vweird.f32 %v2240
        %vm2247 = vmor %vm2245, %vm2246
        %v2248 = vsel %vm2247, %v2240, %v2244
        %v2249 = vand.u32 2147483647, %v2239
        %vm2250 = vcmp.eq.f32.partialorder %v2249, 8.507059e+37
        %v2251 = vand.u32 %v2239, 2147483648
        %v2252 = vor.u32 1.1754944e-38, %v2251
        %v2253 = vsel %vm2250, %v2252, %v2248
        %v2254 = vmul.f32 %v2229, %v2253
        %v2255 = vmin.f32 %v2254, 1.0
        %v2256 = vmax.f32 %v2255, -1.0
        %v2257 = vmul.f32 %v2171, %v2171
        %v2258 = vmin.f32 16.0, %v2257
        %v2259 = vmul.f32 %v2258, 2.1237322e-06
        %v2260 = vadd.f32 %v2259, 0.00028619796
        %v2261 = vmul.f32 %v2258, %v2260
        %v2262 = vadd.f32 %v2261, 0.0036580483
        %v2263 = vmul.f32 %v2258, %v2262
        %v2264 = vadd.f32 %v2263, 0.05243302
        %v2265 = vmul.f32 %v2258, %v2264
        %v2266 = vadd.f32 %v2265, 0.18741608
        %v2267 = vmul.f32 %v2258, %v2266
        %v2268 = vadd.f32 %v2267, 1.1283791
        %v2269 = vmul.f32 %v2171, %v2268
        %v2270 = vmul.f32 %v2258, 3.8918573e-05
        %v2271 = vadd.f32 %v2270, 0.001143296
        %v2272 = vmul.f32 %v2258, %v2271
        %v2273 = vadd.f32 %v2272, 0.014752088
        %v2274 = vmul.f32 %v2258, %v2273
        %v2275 = vadd.f32 %v2274, 0.112945676
        %v2276 = vmul.f32 %v2258, %v2275
        %v2277 = vadd.f32 %v2276, 0.4994258
        %v2278 = vmul.f32 %v2258, %v2277
        %v2279 = vadd.f32 %v2278, 1.0
        %v2280 = vrcp.pop %v2279
        %v2281 = vmul.f32 %v2279, %v2280
        %v2282 = vsub.f32 1.0, %v2281
        %v2283 = vmul.f32 %v2280, %v2282
        %v2284 = vadd.f32 %v2280, %v2283
        %vm2285 = vweird.f32 %v2279
        %vm2286 = vweird.f32 %v2280
        %vm2287 = vmor %vm2285, %vm2286
        %v2288 = vsel %vm2287, %v2280, %v2284
        %v2289 = vand.u32 2147483647, %v2279
        %vm2290 = vcmp.eq.f32.partialorder %v2289, 8.507059e+37
        %v2291 = vand.u32 %v2279, 2147483648
        %v2292 = vor.u32 1.1754944e-38, %v2291
        %v2293 = vsel %vm2290, %v2292, %v2288
        %v2294 = vmul.f32 %v2269, %v2293
        %v2295 = vmin.f32 %v2294, 1.0
        %v2296 = vmax.f32 %v2295, -1.0
        %v2297 = vmul.f32 %v2172, %v2172
        %v2298 = vmin.f32 16.0, %v2297
        %v2299 = vmul.f32 %v2298, 2.1237322e-06
        %v2300 = vadd.f32 %v2299, 0.00028619796
        %v2301 = vmul.f32 %v2298, %v2300
        %v2302 = vadd.f32 %v2301, 0.0036580483
        %v2303 = vmul.f32 %v2298, %v2302
        %v2304 = vadd.f32 %v2303, 0.05243302
        %v2305 = vmul.f32 %v2298, %v2304
        %v2306 = vadd.f32 %v2305, 0.18741608
        %v2307 = vmul.f32 %v2298, %v2306
        %v2308 = vadd.f32 %v2307, 1.1283791
        %v2309 = vmul.f32 %v2172, %v2308
        %v2310 = vmul.f32 %v2298, 3.8918573e-05
        %v2311 = vadd.f32 %v2310, 0.001143296
        %v2312 = vmul.f32 %v2298, %v2311
        %v2313 = vadd.f32 %v2312, 0.014752088
        %v2314 = vmul.f32 %v2298, %v2313
        %v2315 = vadd.f32 %v2314, 0.112945676
        %v2316 = vmul.f32 %v2298, %v2315
        %v2317 = vadd.f32 %v2316, 0.4994258
        %v2318 = vmul.f32 %v2298, %v2317
        %v2319 = vadd.f32 %v2318, 1.0
        %v2320 = vrcp.pop %v2319
        %v2321 = vmul.f32 %v2319, %v2320
        %v2322 = vsub.f32 1.0, %v2321
        %v2323 = vmul.f32 %v2320, %v2322
        %v2324 = vadd.f32 %v2320, %v2323
        %vm2325 = vweird.f32 %v2319
        %vm2326 = vweird.f32 %v2320
        %vm2327 = vmor %vm2325, %vm2326
        %v2328 = vsel %vm2327, %v2320, %v2324
        %v2329 = vand.u32 2147483647, %v2319
        %vm2330 = vcmp.eq.f32.partialorder %v2329, 8.507059e+37
        %v2331 = vand.u32 %v2319, 2147483648
        %v2332 = vor.u32 1.1754944e-38, %v2331
        %v2333 = vsel %vm2330, %v2332, %v2328
        %v2334 = vmul.f32 %v2309, %v2333
        %v2335 = vmin.f32 %v2334, 1.0
        %v2336 = vmax.f32 %v2335, -1.0
        %v2337 = vmul.f32 %v2173, %v2173
        %v2338 = vmin.f32 16.0, %v2337
        %v2339 = vmul.f32 %v2338, 2.1237322e-06
        %v2340 = vadd.f32 %v2339, 0.00028619796
        %v2341 = vmul.f32 %v2338, %v2340
        %v2342 = vadd.f32 %v2341, 0.0036580483
        %v2343 = vmul.f32 %v2338, %v2342
        %v2344 = vadd.f32 %v2343, 0.05243302
        %v2345 = vmul.f32 %v2338, %v2344
        %v2346 = vadd.f32 %v2345, 0.18741608
        %v2347 = vmul.f32 %v2338, %v2346
        %v2348 = vadd.f32 %v2347, 1.1283791
        %v2349 = vmul.f32 %v2173, %v2348
        %v2350 = vmul.f32 %v2338, 3.8918573e-05
        %v2351 = vadd.f32 %v2350, 0.001143296
        %v2352 = vmul.f32 %v2338, %v2351
        %v2353 = vadd.f32 %v2352, 0.014752088
        %v2354 = vmul.f32 %v2338, %v2353
        %v2355 = vadd.f32 %v2354, 0.112945676
        %v2356 = vmul.f32 %v2338, %v2355
        %v2357 = vadd.f32 %v2356, 0.4994258
        %v2358 = vmul.f32 %v2338, %v2357
        %v2359 = vadd.f32 %v2358, 1.0
        %v2360 = vrcp.pop %v2359
        %v2361 = vmul.f32 %v2359, %v2360
        %v2362 = vsub.f32 1.0, %v2361
        %v2363 = vmul.f32 %v2360, %v2362
        %v2364 = vadd.f32 %v2360, %v2363
        %vm2365 = vweird.f32 %v2359
        %vm2366 = vweird.f32 %v2360
        %vm2367 = vmor %vm2365, %vm2366
        %v2368 = vsel %vm2367, %v2360, %v2364
        %v2369 = vand.u32 2147483647, %v2359
        %vm2370 = vcmp.eq.f32.partialorder %v2369, 8.507059e+37
        %v2371 = vand.u32 %v2359, 2147483648
        %v2372 = vor.u32 1.1754944e-38, %v2371
        %v2373 = vsel %vm2370, %v2372, %v2368
        %v2374 = vmul.f32 %v2349, %v2373
        %v2375 = vmin.f32 %v2374, 1.0
        %v2376 = vmax.f32 %v2375, -1.0
        %v2377 = vmul.f32 %v2174, %v2174
        %v2378 = vmin.f32 16.0, %v2377
        %v2379 = vmul.f32 %v2378, 2.1237322e-06
        %v2380 = vadd.f32 %v2379, 0.00028619796
        %v2381 = vmul.f32 %v2378, %v2380
        %v2382 = vadd.f32 %v2381, 0.0036580483
        %v2383 = vmul.f32 %v2378, %v2382
        %v2384 = vadd.f32 %v2383, 0.05243302
        %v2385 = vmul.f32 %v2378, %v2384
        %v2386 = vadd.f32 %v2385, 0.18741608
        %v2387 = vmul.f32 %v2378, %v2386
        %v2388 = vadd.f32 %v2387, 1.1283791
        %v2389 = vmul.f32 %v2174, %v2388
        %v2390 = vmul.f32 %v2378, 3.8918573e-05
        %v2391 = vadd.f32 %v2390, 0.001143296
        %v2392 = vmul.f32 %v2378, %v2391
        %v2393 = vadd.f32 %v2392, 0.014752088
        %v2394 = vmul.f32 %v2378, %v2393
        %v2395 = vadd.f32 %v2394, 0.112945676
        %v2396 = vmul.f32 %v2378, %v2395
        %v2397 = vadd.f32 %v2396, 0.4994258
        %v2398 = vmul.f32 %v2378, %v2397
        %v2399 = vadd.f32 %v2398, 1.0
        %v2400 = vrcp.pop %v2399
        %v2401 = vmul.f32 %v2399, %v2400
        %v2402 = vsub.f32 1.0, %v2401
        %v2403 = vmul.f32 %v2400, %v2402
        %v2404 = vadd.f32 %v2400, %v2403
        %vm2405 = vweird.f32 %v2399
        %vm2406 = vweird.f32 %v2400
        %vm2407 = vmor %vm2405, %vm2406
        %v2408 = vsel %vm2407, %v2400, %v2404
        %v2409 = vand.u32 2147483647, %v2399
        %vm2410 = vcmp.eq.f32.partialorder %v2409, 8.507059e+37
        %v2411 = vand.u32 %v2399, 2147483648
        %v2412 = vor.u32 1.1754944e-38, %v2411
        %v2413 = vsel %vm2410, %v2412, %v2408
        %v2414 = vmul.f32 %v2389, %v2413
        %v2415 = vmin.f32 %v2414, 1.0
        %v2416 = vmax.f32 %v2415, -1.0
        %v2417 = vmul.f32 %v2175, %v2175
        %v2418 = vmin.f32 16.0, %v2417
        %v2419 = vmul.f32 %v2418, 2.1237322e-06
        %v2420 = vadd.f32 %v2419, 0.00028619796
        %v2421 = vmul.f32 %v2418, %v2420
        %v2422 = vadd.f32 %v2421, 0.0036580483
        %v2423 = vmul.f32 %v2418, %v2422
        %v2424 = vadd.f32 %v2423, 0.05243302
        %v2425 = vmul.f32 %v2418, %v2424
        %v2426 = vadd.f32 %v2425, 0.18741608
        %v2427 = vmul.f32 %v2418, %v2426
        %v2428 = vadd.f32 %v2427, 1.1283791
        %v2429 = vmul.f32 %v2175, %v2428
        %v2430 = vmul.f32 %v2418, 3.8918573e-05
        %v2431 = vadd.f32 %v2430, 0.001143296
        %v2432 = vmul.f32 %v2418, %v2431
        %v2433 = vadd.f32 %v2432, 0.014752088
        %v2434 = vmul.f32 %v2418, %v2433
        %v2435 = vadd.f32 %v2434, 0.112945676
        %v2436 = vmul.f32 %v2418, %v2435
        %v2437 = vadd.f32 %v2436, 0.4994258
        %v2438 = vmul.f32 %v2418, %v2437
        %v2439 = vadd.f32 %v2438, 1.0
        %v2440 = vrcp.pop %v2439
        %v2441 = vmul.f32 %v2439, %v2440
        %v2442 = vsub.f32 1.0, %v2441
        %v2443 = vmul.f32 %v2440, %v2442
        %v2444 = vadd.f32 %v2440, %v2443
        %vm2445 = vweird.f32 %v2439
        %vm2446 = vweird.f32 %v2440
        %vm2447 = vmor %vm2445, %vm2446
        %v2448 = vsel %vm2447, %v2440, %v2444
        %v2449 = vand.u32 2147483647, %v2439
        %vm2450 = vcmp.eq.f32.partialorder %v2449, 8.507059e+37
        %v2451 = vand.u32 %v2439, 2147483648
        %v2452 = vor.u32 1.1754944e-38, %v2451
        %v2453 = vsel %vm2450, %v2452, %v2448
        %v2454 = vmul.f32 %v2429, %v2453
        %v2455 = vmin.f32 %v2454, 1.0
        %v2456 = vmax.f32 %v2455, -1.0
        %v2457 = vmul.f32 %v2176, %v2176
        %v2458 = vmin.f32 16.0, %v2457
        %v2459 = vmul.f32 %v2458, 2.1237322e-06
        %v2460 = vadd.f32 %v2459, 0.00028619796
        %v2461 = vmul.f32 %v2458, %v2460
        %v2462 = vadd.f32 %v2461, 0.0036580483
        %v2463 = vmul.f32 %v2458, %v2462
        %v2464 = vadd.f32 %v2463, 0.05243302
        %v2465 = vmul.f32 %v2458, %v2464
        %v2466 = vadd.f32 %v2465, 0.18741608
        %v2467 = vmul.f32 %v2458, %v2466
        %v2468 = vadd.f32 %v2467, 1.1283791
        %v2469 = vmul.f32 %v2176, %v2468
        %v2470 = vmul.f32 %v2458, 3.8918573e-05
        %v2471 = vadd.f32 %v2470, 0.001143296
        %v2472 = vmul.f32 %v2458, %v2471
        %v2473 = vadd.f32 %v2472, 0.014752088
        %v2474 = vmul.f32 %v2458, %v2473
        %v2475 = vadd.f32 %v2474, 0.112945676
        %v2476 = vmul.f32 %v2458, %v2475
        %v2477 = vadd.f32 %v2476, 0.4994258
        %v2478 = vmul.f32 %v2458, %v2477
        %v2479 = vadd.f32 %v2478, 1.0
        %v2480 = vrcp.pop %v2479
        %v2481 = vmul.f32 %v2479, %v2480
        %v2482 = vsub.f32 1.0, %v2481
        %v2483 = vmul.f32 %v2480, %v2482
        %v2484 = vadd.f32 %v2480, %v2483
        %vm2485 = vweird.f32 %v2479
        %vm2486 = vweird.f32 %v2480
        %vm2487 = vmor %vm2485, %vm2486
        %v2488 = vsel %vm2487, %v2480, %v2484
        %v2489 = vand.u32 2147483647, %v2479
        %vm2490 = vcmp.eq.f32.partialorder %v2489, 8.507059e+37
        %v2491 = vand.u32 %v2479, 2147483648
        %v2492 = vor.u32 1.1754944e-38, %v2491
        %v2493 = vsel %vm2490, %v2492, %v2488
        %v2494 = vmul.f32 %v2469, %v2493
        %v2495 = vmin.f32 %v2494, 1.0
        %v2496 = vmax.f32 %v2495, -1.0
        %v2497 = vadd.f32 %v2216, 1.0
        %v2498 = vadd.f32 %v2256, 1.0
        %v2499 = vadd.f32 %v2296, 1.0
        %v2500 = vadd.f32 %v2336, 1.0
        %v2501 = vadd.f32 %v2376, 1.0
        %v2502 = vadd.f32 %v2416, 1.0
        %v2503 = vadd.f32 %v2456, 1.0
        %v2504 = vadd.f32 %v2496, 1.0
        %v2505 = vmul.f32 %v2161, %v2497
        %v2506 = vmul.f32 %v2162, %v2498
        %v2507 = vmul.f32 %v2163, %v2499
        %v2508 = vmul.f32 %v2164, %v2500
        %v2509 = vmul.f32 %v2165, %v2501
        %v2510 = vmul.f32 %v2166, %v2502
        %v2511 = vmul.f32 %v2167, %v2503
        %v2512 = vmul.f32 %v2168, %v2504
        %v2513 = vld [vmem:[%s10] sm:$0xff]
        %v2514 = vld [vmem:[%s10 + $0x8] sm:$0xff]
        %v2515 = vld [vmem:[%s10 + $0x10] sm:$0xff]
        %v2516 = vld [vmem:[%s10 + $0x18] sm:$0xff]
        %v2517 = vld [vmem:[%s10 + $0x20] sm:$0xff]
        %v2518 = vld [vmem:[%s10 + $0x28] sm:$0xff]
        %v2519 = vld [vmem:[%s10 + $0x30] sm:$0xff]
        %v2520 = vld [vmem:[%s10 + $0x38] sm:$0xff]
        %v2522 = vsel %vm1238, %v2505, 0
        %v2525 = vsel %vm1238, %v2506, 0
        %v2528 = vsel %vm1238, %v2507, 0
        %v2531 = vsel %vm1238, %v2508, 0
        %v2534 = vsel %vm1238, %v2509, 0
        %v2537 = vsel %vm1238, %v2510, 0
        %v2540 = vsel %vm1238, %v2511, 0
        %v2543 = vsel %vm1238, %v2512, 0
        %2545 = vmatpush.msra.mxu0 0.0
        %2546 = vmatpush.msra.mxu0 0.0
        %2547 = vmatpush.msra.mxu0 0.0
        %2548 = vmatpush.msra.mxu0 0.0
        %2549 = vmatpush.msra.mxu0 0.0
        %2550 = vmatpush.msra.mxu0 0.0
        %2551 = vmatpush.msra.mxu0 0.0
        %2552 = vmatpush.msra.mxu0 0.0
        %2553 = vmatpush.msra.mxu0 %v2520
        %2554 = vmatpush.msra.mxu0 %v2519
        %2555 = vmatpush.msra.mxu0 %v2518
        %2556 = vmatpush.msra.mxu0 %v2517
        %2557 = vmatpush.msra.mxu0 %v2516
        %2558 = vmatpush.msra.mxu0 %v2515
        %2559 = vmatpush.msra.mxu0 %v2514
        %2560 = vmatpush.msra.mxu0 %v2513
        %2561 = vmatmul.f32.gmra.mxu0 %v2522
        %v2562 = vpop.f32.mrf.mxu0
        %v2563 = vadd.f32 0.0, %v2562
        %2564 = vmatmul.f32.gmra.mxu0 %v2525
        %v2565 = vpop.f32.mrf.mxu0
        %v2566 = vadd.f32 0.0, %v2565
        %2567 = vmatmul.f32.gmra.mxu0 %v2528
        %v2568 = vpop.f32.mrf.mxu0
        %v2569 = vadd.f32 0.0, %v2568
        %2570 = vmatmul.f32.gmra.mxu0 %v2531
        %v2571 = vpop.f32.mrf.mxu0
        %v2572 = vadd.f32 0.0, %v2571
        %2573 = vmatmul.f32.gmra.mxu0 %v2534
        %v2574 = vpop.f32.mrf.mxu0
        %v2575 = vadd.f32 0.0, %v2574
        %2576 = vmatmul.f32.gmra.mxu0 %v2537
        %v2577 = vpop.f32.mrf.mxu0
        %v2578 = vadd.f32 0.0, %v2577
        %2579 = vmatmul.f32.gmra.mxu0 %v2540
        %v2580 = vpop.f32.mrf.mxu0
        %v2581 = vadd.f32 0.0, %v2580
        %2582 = vmatmul.f32.gmra.mxu0 %v2543
        %v2583 = vpop.f32.mrf.mxu0
        %v2584 = vadd.f32 0.0, %v2583
        %2585 = vdwg.mxu0
        %v2586 = vadd.f32 %v1889, %v2563
        %v2587 = vadd.f32 %v1890, %v2566
        %v2588 = vadd.f32 %v1891, %v2569
        %v2589 = vadd.f32 %v1892, %v2572
        %v2590 = vadd.f32 %v1893, %v2575
        %v2591 = vadd.f32 %v1894, %v2578
        %v2592 = vadd.f32 %v1895, %v2581
        %v2593 = vadd.f32 %v1896, %v2584
        %v2594 = vperm.slane %v724, 6
        %v2595 = vadd.f32 %v2586, %v2594
        %v2596 = vadd.f32 %v2587, %v2594
        %v2597 = vadd.f32 %v2588, %v2594
        %v2598 = vadd.f32 %v2589, %v2594
        %v2599 = vadd.f32 %v2590, %v2594
        %v2600 = vadd.f32 %v2591, %v2594
        %v2601 = vadd.f32 %v2592, %v2594
        %v2602 = vadd.f32 %v2593, %v2594
        %v2603 = vsel %vm826, %v2595, 0.0
        %2604 = vadd.xlane.f32.xlu0 %v2603
        %v2605 = vpop.xlane.xlu0 %2604
        %v2606 = vsel %vm826, %v2596, 0.0
        %2607 = vadd.xlane.f32.xlu0 %v2606
        %v2608 = vpop.xlane.xlu0 %2607
        %v2609 = vsel %vm826, %v2597, 0.0
        %2610 = vadd.xlane.f32.xlu0 %v2609
        %v2611 = vpop.xlane.xlu0 %2610
        %v2612 = vsel %vm826, %v2598, 0.0
        %2613 = vadd.xlane.f32.xlu0 %v2612
        %v2614 = vpop.xlane.xlu0 %2613
        %v2615 = vsel %vm826, %v2599, 0.0
        %2616 = vadd.xlane.f32.xlu0 %v2615
        %v2617 = vpop.xlane.xlu0 %2616
        %v2618 = vsel %vm826, %v2600, 0.0
        %2619 = vadd.xlane.f32.xlu0 %v2618
        %v2620 = vpop.xlane.xlu0 %2619
        %v2621 = vsel %vm826, %v2601, 0.0
        %2622 = vadd.xlane.f32.xlu0 %v2621
        %v2623 = vpop.xlane.xlu0 %2622
        %v2624 = vsel %vm826, %v2602, 0.0
        %2625 = vadd.xlane.f32.xlu0 %v2624
        %v2626 = vpop.xlane.xlu0 %2625
        %v2627 = vmul.f32 %v2605, %v857
        %v2628 = vmul.f32 %v2608, %v857
        %v2629 = vmul.f32 %v2611, %v857
        %v2630 = vmul.f32 %v2614, %v857
        %v2631 = vmul.f32 %v2617, %v857
        %v2632 = vmul.f32 %v2620, %v857
        %v2633 = vmul.f32 %v2623, %v857
        %v2634 = vmul.f32 %v2626, %v857
        %v2635 = vsub.f32 %v2595, %v2627
        %v2636 = vsub.f32 %v2596, %v2628
        %v2637 = vsub.f32 %v2597, %v2629
        %v2638 = vsub.f32 %v2598, %v2630
        %v2639 = vsub.f32 %v2599, %v2631
        %v2640 = vsub.f32 %v2600, %v2632
        %v2641 = vsub.f32 %v2601, %v2633
        %v2642 = vsub.f32 %v2602, %v2634
        %v2643 = vmul.f32 %v2635, %v2635
        %v2644 = vmul.f32 %v2636, %v2636
        %v2645 = vmul.f32 %v2637, %v2637
        %v2646 = vmul.f32 %v2638, %v2638
        %v2647 = vmul.f32 %v2639, %v2639
        %v2648 = vmul.f32 %v2640, %v2640
        %v2649 = vmul.f32 %v2641, %v2641
        %v2650 = vmul.f32 %v2642, %v2642
        %v2651 = vsel %vm826, %v2643, 0.0
        %2652 = vadd.xlane.f32.xlu0 %v2651
        %v2653 = vpop.xlane.xlu0 %2652
        %v2654 = vsel %vm826, %v2644, 0.0
        %2655 = vadd.xlane.f32.xlu0 %v2654
        %v2656 = vpop.xlane.xlu0 %2655
        %v2657 = vsel %vm826, %v2645, 0.0
        %2658 = vadd.xlane.f32.xlu0 %v2657
        %v2659 = vpop.xlane.xlu0 %2658
        %v2660 = vsel %vm826, %v2646, 0.0
        %2661 = vadd.xlane.f32.xlu0 %v2660
        %v2662 = vpop.xlane.xlu0 %2661
        %v2663 = vsel %vm826, %v2647, 0.0
        %2664 = vadd.xlane.f32.xlu0 %v2663
        %v2665 = vpop.xlane.xlu0 %2664
        %v2666 = vsel %vm826, %v2648, 0.0
        %2667 = vadd.xlane.f32.xlu0 %v2666
        %v2668 = vpop.xlane.xlu0 %2667
        %v2669 = vsel %vm826, %v2649, 0.0
        %2670 = vadd.xlane.f32.xlu0 %v2669
        %v2671 = vpop.xlane.xlu0 %2670
        %v2672 = vsel %vm826, %v2650, 0.0
        %2673 = vadd.xlane.f32.xlu0 %v2672
        %v2674 = vpop.xlane.xlu0 %2673
        %v2675 = vmul.f32 %v2653, %v857
        %v2676 = vmul.f32 %v2656, %v857
        %v2677 = vmul.f32 %v2659, %v857
        %v2678 = vmul.f32 %v2662, %v857
        %v2679 = vmul.f32 %v2665, %v857
        %v2680 = vmul.f32 %v2668, %v857
        %v2681 = vmul.f32 %v2671, %v857
        %v2682 = vmul.f32 %v2674, %v857
        %v2683 = vadd.f32 %v2675, 1e-05
        %v2684 = vadd.f32 %v2676, 1e-05
        %v2685 = vadd.f32 %v2677, 1e-05
        %v2686 = vadd.f32 %v2678, 1e-05
        %v2687 = vadd.f32 %v2679, 1e-05
        %v2688 = vadd.f32 %v2680, 1e-05
        %v2689 = vadd.f32 %v2681, 1e-05
        %v2690 = vadd.f32 %v2682, 1e-05
        %v2691 = vrsqrt.pop %v2683
        %v2692 = vmul.f32 %v2691, %v2683
        %v2693 = vmul.f32 %v2692, %v2691
        %v2694 = vmul.f32 0.5, %v2693
        %v2695 = vsub.f32 1.5, %v2694
        %v2696 = vmul.f32 %v2691, %v2695
        %vm2697 = vweird.f32 %v2683
        %vm2698 = vweird.f32 %v2691
        %vm2699 = vmor %vm2697, %vm2698
        %v2700 = vsel %vm2699, %v2691, %v2696
        %v2701 = vrsqrt.pop %v2684
        %v2702 = vmul.f32 %v2701, %v2684
        %v2703 = vmul.f32 %v2702, %v2701
        %v2704 = vmul.f32 0.5, %v2703
        %v2705 = vsub.f32 1.5, %v2704
        %v2706 = vmul.f32 %v2701, %v2705
        %vm2707 = vweird.f32 %v2684
        %vm2708 = vweird.f32 %v2701
        %vm2709 = vmor %vm2707, %vm2708
        %v2710 = vsel %vm2709, %v2701, %v2706
        %v2711 = vrsqrt.pop %v2685
        %v2712 = vmul.f32 %v2711, %v2685
        %v2713 = vmul.f32 %v2712, %v2711
        %v2714 = vmul.f32 0.5, %v2713
        %v2715 = vsub.f32 1.5, %v2714
        %v2716 = vmul.f32 %v2711, %v2715
        %vm2717 = vweird.f32 %v2685
        %vm2718 = vweird.f32 %v2711
        %vm2719 = vmor %vm2717, %vm2718
        %v2720 = vsel %vm2719, %v2711, %v2716
        %v2721 = vrsqrt.pop %v2686
        %v2722 = vmul.f32 %v2721, %v2686
        %v2723 = vmul.f32 %v2722, %v2721
        %v2724 = vmul.f32 0.5, %v2723
        %v2725 = vsub.f32 1.5, %v2724
        %v2726 = vmul.f32 %v2721, %v2725
        %vm2727 = vweird.f32 %v2686
        %vm2728 = vweird.f32 %v2721
        %vm2729 = vmor %vm2727, %vm2728
        %v2730 = vsel %vm2729, %v2721, %v2726
        %v2731 = vrsqrt.pop %v2687
        %v2732 = vmul.f32 %v2731, %v2687
        %v2733 = vmul.f32 %v2732, %v2731
        %v2734 = vmul.f32 0.5, %v2733
        %v2735 = vsub.f32 1.5, %v2734
        %v2736 = vmul.f32 %v2731, %v2735
        %vm2737 = vweird.f32 %v2687
        %vm2738 = vweird.f32 %v2731
        %vm2739 = vmor %vm2737, %vm2738
        %v2740 = vsel %vm2739, %v2731, %v2736
        %v2741 = vrsqrt.pop %v2688
        %v2742 = vmul.f32 %v2741, %v2688
        %v2743 = vmul.f32 %v2742, %v2741
        %v2744 = vmul.f32 0.5, %v2743
        %v2745 = vsub.f32 1.5, %v2744
        %v2746 = vmul.f32 %v2741, %v2745
        %vm2747 = vweird.f32 %v2688
        %vm2748 = vweird.f32 %v2741
        %vm2749 = vmor %vm2747, %vm2748
        %v2750 = vsel %vm2749, %v2741, %v2746
        %v2751 = vrsqrt.pop %v2689
        %v2752 = vmul.f32 %v2751, %v2689
        %v2753 = vmul.f32 %v2752, %v2751
        %v2754 = vmul.f32 0.5, %v2753
        %v2755 = vsub.f32 1.5, %v2754
        %v2756 = vmul.f32 %v2751, %v2755
        %vm2757 = vweird.f32 %v2689
        %vm2758 = vweird.f32 %v2751
        %vm2759 = vmor %vm2757, %vm2758
        %v2760 = vsel %vm2759, %v2751, %v2756
        %v2761 = vrsqrt.pop %v2690
        %v2762 = vmul.f32 %v2761, %v2690
        %v2763 = vmul.f32 %v2762, %v2761
        %v2764 = vmul.f32 0.5, %v2763
        %v2765 = vsub.f32 1.5, %v2764
        %v2766 = vmul.f32 %v2761, %v2765
        %vm2767 = vweird.f32 %v2690
        %vm2768 = vweird.f32 %v2761
        %vm2769 = vmor %vm2767, %vm2768
        %v2770 = vsel %vm2769, %v2761, %v2766
        %v2771 = vmul.f32 %v2635, %v2700
        %v2772 = vmul.f32 %v2636, %v2710
        %v2773 = vmul.f32 %v2637, %v2720
        %v2774 = vmul.f32 %v2638, %v2730
        %v2775 = vmul.f32 %v2639, %v2740
        %v2776 = vmul.f32 %v2640, %v2750
        %v2777 = vmul.f32 %v2641, %v2760
        %v2778 = vmul.f32 %v2642, %v2770
        %v2779 = vperm.slane %v724, 7
        %v2780 = vmul.f32 %v2771, %v2779
        %v2781 = vmul.f32 %v2772, %v2779
        %v2782 = vmul.f32 %v2773, %v2779
        %v2783 = vmul.f32 %v2774, %v2779
        %v2784 = vmul.f32 %v2775, %v2779
        %v2785 = vmul.f32 %v2776, %v2779
        %v2786 = vmul.f32 %v2777, %v2779
        %v2787 = vmul.f32 %v2778, %v2779
        %v2788 = vperm.slane %v725, 0
        %v2789 = vadd.f32 %v2780, %v2788
        %v2790 = vadd.f32 %v2781, %v2788
        %v2791 = vadd.f32 %v2782, %v2788
        %v2792 = vadd.f32 %v2783, %v2788
        %v2793 = vadd.f32 %v2784, %v2788
        %v2794 = vadd.f32 %v2785, %v2788
        %v2795 = vadd.f32 %v2786, %v2788
        %v2796 = vadd.f32 %v2787, %v2788
        %v2797 = vld [vmem:[%s12] sm:$0xff]
        %v2798 = vld [vmem:[%s12 + $0x8] sm:$0xff]
        %v2799 = vld [vmem:[%s12 + $0x10] sm:$0xff]
        %v2800 = vld [vmem:[%s12 + $0x18] sm:$0xff]
        %v2801 = vld [vmem:[%s13] sm:$0xff]
        %v2802 = vld [vmem:[%s13 + $0x8] sm:$0xff]
        %v2803 = vld [vmem:[%s13 + $0x10] sm:$0xff]
        %v2804 = vld [vmem:[%s13 + $0x18] sm:$0xff]
        %v2805 = vperm.slane %v727, 1
        %v2807 = vsel %vm826, %v2789, 0
        %v2810 = vsel %vm826, %v2790, 0
        %v2813 = vsel %vm826, %v2791, 0
        %v2816 = vsel %vm826, %v2792, 0
        %v2819 = vsel %vm826, %v2793, 0
        %v2822 = vsel %vm826, %v2794, 0
        %v2825 = vsel %vm826, %v2795, 0
        %v2828 = vsel %vm826, %v2796, 0
        %2830 = vmatpush.msra.mxu0 0.0
        %2831 = vmatpush.msra.mxu0 0.0
        %2832 = vmatpush.msra.mxu0 0.0
        %2833 = vmatpush.msra.mxu0 0.0
        %2834 = vmatpush.msra.mxu0 0.0
        %2835 = vmatpush.msra.mxu0 0.0
        %2836 = vmatpush.msra.mxu0 0.0
        %2837 = vmatpush.msra.mxu0 0.0
        %2838 = vmatpush.msra.mxu0 0.0
        %2839 = vmatpush.msra.mxu0 0.0
        %2840 = vmatpush.msra.mxu0 0.0
        %2841 = vmatpush.msra.mxu0 0.0
        %2842 = vmatpush.msra.mxu0 %v2800
        %2843 = vmatpush.msra.mxu0 %v2799
        %2844 = vmatpush.msra.mxu0 %v2798
        %2845 = vmatpush.msra.mxu0 %v2797
        %2846 = vmatmul.f32.gmra.mxu0 %v2807
        %v2847 = vpop.f32.mrf.mxu0
        %v2848 = vadd.f32 %v2805, %v2847
        %2849 = vmatmul.f32.gmra.mxu0 %v2810
        %v2850 = vpop.f32.mrf.mxu0
        %v2851 = vadd.f32 %v2805, %v2850
        %2852 = vmatmul.f32.gmra.mxu0 %v2813
        %v2853 = vpop.f32.mrf.mxu0
        %v2854 = vadd.f32 %v2805, %v2853
        %2855 = vmatmul.f32.gmra.mxu0 %v2816
        %v2856 = vpop.f32.mrf.mxu0
        %v2857 = vadd.f32 %v2805, %v2856
        %2858 = vmatmul.f32.gmra.mxu0 %v2819
        %v2859 = vpop.f32.mrf.mxu0
        %v2860 = vadd.f32 %v2805, %v2859
        %2861 = vmatmul.f32.gmra.mxu0 %v2822
        %v2862 = vpop.f32.mrf.mxu0
        %v2863 = vadd.f32 %v2805, %v2862
        %2864 = vmatmul.f32.gmra.mxu0 %v2825
        %v2865 = vpop.f32.mrf.mxu0
        %v2866 = vadd.f32 %v2805, %v2865
        %2867 = vmatmul.f32.gmra.mxu0 %v2828
        %v2868 = vpop.f32.mrf.mxu0
        %v2869 = vadd.f32 %v2805, %v2868
        %2870 = vdwg.mxu0
        %2879 = vrot.lane.b32.xlu0 %v2848, 96
        %v2880 = vpop.permute.xlu0 %2879
        %2881 = vrot.lane.b32.xlu0 %v2851, 96
        %v2882 = vpop.permute.xlu0 %2881
        %2883 = vrot.lane.b32.xlu0 %v2854, 96
        %v2884 = vpop.permute.xlu0 %2883
        %2885 = vrot.lane.b32.xlu0 %v2857, 96
        %v2886 = vpop.permute.xlu0 %2885
        %2887 = vrot.lane.b32.xlu0 %v2860, 96
        %v2888 = vpop.permute.xlu0 %2887
        %2889 = vrot.lane.b32.xlu0 %v2863, 96
        %v2890 = vpop.permute.xlu0 %2889
        %2891 = vrot.lane.b32.xlu0 %v2866, 96
        %v2892 = vpop.permute.xlu0 %2891
        %2893 = vrot.lane.b32.xlu0 %v2869, 96
        %v2894 = vpop.permute.xlu0 %2893
        %2903 = vxpose.xlu0.b32.start [1/16] %v2880, 128
        %2904 = vxpose.xlu0.b32.cont [2/16] %v2882, 128
        %2905 = vxpose.xlu0.b32.cont [3/16] %v2884, 128
        %2906 = vxpose.xlu0.b32.cont [4/16] %v2886, 128
        %2907 = vxpose.xlu0.b32.cont [5/16] %v2888, 128
        %2908 = vxpose.xlu0.b32.cont [6/16] %v2890, 128
        %2909 = vxpose.xlu0.b32.cont [7/16] %v2892, 128
        %2910 = vxpose.xlu0.b32.cont [8/16] %v2894, 128
        %2911 = vxpose.xlu0.b32.cont [9/16] 0.0, 128
        %2912 = vxpose.xlu0.b32.cont [10/16] 0.0, 128
        %2913 = vxpose.xlu0.b32.cont [11/16] 0.0, 128
        %2914 = vxpose.xlu0.b32.cont [12/16] 0.0, 128
        %2915 = vxpose.xlu0.b32.cont [13/16] 0.0, 128
        %2916 = vxpose.xlu0.b32.cont [14/16] 0.0, 128
        %2917 = vxpose.xlu0.b32.cont [15/16] 0.0, 128
        %2918 = vxpose.xlu0.b32.end [16/16] 0.0, 128
        %v2919 = vpop.trf.xlu0
        %v2920 = vpop.trf.xlu0
        %v2921 = vpop.trf.xlu0
        %v2922 = vpop.trf.xlu0
        %v2923 = vpop.trf.xlu0
        %v2924 = vpop.trf.xlu0
        %v2925 = vpop.trf.xlu0
        %v2926 = vpop.trf.xlu0
        %v2927 = vpop.trf.xlu0
        %v2928 = vpop.trf.xlu0
        %v2929 = vpop.trf.xlu0
        %v2930 = vpop.trf.xlu0
        %v2931 = vpop.trf.xlu0
        %v2932 = vpop.trf.xlu0
        %v2933 = vpop.trf.xlu0
        %v2934 = vpop.trf.xlu0
        %2935 = vrot.lane.b32.xlu0 %v2848, 64
        %v2936 = vpop.permute.xlu0 %2935
        %2937 = vrot.lane.b32.xlu0 %v2851, 64
        %v2938 = vpop.permute.xlu0 %2937
        %2939 = vrot.lane.b32.xlu0 %v2854, 64
        %v2940 = vpop.permute.xlu0 %2939
        %2941 = vrot.lane.b32.xlu0 %v2857, 64
        %v2942 = vpop.permute.xlu0 %2941
        %2943 = vrot.lane.b32.xlu0 %v2860, 64
        %v2944 = vpop.permute.xlu0 %2943
        %2945 = vrot.lane.b32.xlu0 %v2863, 64
        %v2946 = vpop.permute.xlu0 %2945
        %2947 = vrot.lane.b32.xlu0 %v2866, 64
        %v2948 = vpop.permute.xlu0 %2947
        %2949 = vrot.lane.b32.xlu0 %v2869, 64
        %v2950 = vpop.permute.xlu0 %2949
        %2959 = vxpose.xlu0.b32.start [1/16] %v2936, 128
        %2960 = vxpose.xlu0.b32.cont [2/16] %v2938, 128
        %2961 = vxpose.xlu0.b32.cont [3/16] %v2940, 128
        %2962 = vxpose.xlu0.b32.cont [4/16] %v2942, 128
        %2963 = vxpose.xlu0.b32.cont [5/16] %v2944, 128
        %2964 = vxpose.xlu0.b32.cont [6/16] %v2946, 128
        %2965 = vxpose.xlu0.b32.cont [7/16] %v2948, 128
        %2966 = vxpose.xlu0.b32.cont [8/16] %v2950, 128
        %2967 = vxpose.xlu0.b32.cont [9/16] 0.0, 128
        %2968 = vxpose.xlu0.b32.cont [10/16] 0.0, 128
        %2969 = vxpose.xlu0.b32.cont [11/16] 0.0, 128
        %2970 = vxpose.xlu0.b32.cont [12/16] 0.0, 128
        %2971 = vxpose.xlu0.b32.cont [13/16] 0.0, 128
        %2972 = vxpose.xlu0.b32.cont [14/16] 0.0, 128
        %2973 = vxpose.xlu0.b32.cont [15/16] 0.0, 128
        %2974 = vxpose.xlu0.b32.end [16/16] 0.0, 128
        %v2975 = vpop.trf.xlu0
        %v2976 = vpop.trf.xlu0
        %v2977 = vpop.trf.xlu0
        %v2978 = vpop.trf.xlu0
        %v2979 = vpop.trf.xlu0
        %v2980 = vpop.trf.xlu0
        %v2981 = vpop.trf.xlu0
        %v2982 = vpop.trf.xlu0
        %v2983 = vpop.trf.xlu0
        %v2984 = vpop.trf.xlu0
        %v2985 = vpop.trf.xlu0
        %v2986 = vpop.trf.xlu0
        %v2987 = vpop.trf.xlu0
        %v2988 = vpop.trf.xlu0
        %v2989 = vpop.trf.xlu0
        %v2990 = vpop.trf.xlu0
        %2995 = vrot.lane.b32.xlu0 %v2919, 64
        %v2996 = vpop.permute.xlu0 %2995
        %2997 = vrot.lane.b32.xlu0 %v2920, 64
        %v2998 = vpop.permute.xlu0 %2997
        %2999 = vrot.lane.b32.xlu0 %v2921, 64
        %v3000 = vpop.permute.xlu0 %2999
        %3001 = vrot.lane.b32.xlu0 %v2922, 64
        %v3002 = vpop.permute.xlu0 %3001
        %v3007 = vsel %vm1238, %v2919, %v2996
        %v3008 = vsel %vm1238, %v2920, %v2998
        %v3009 = vsel %vm1238, %v2921, %v3000
        %v3010 = vsel %vm1238, %v2922, %v3002
        %v3011 = vmul.f32 %v3007, %v708
        %v3012 = vmul.f32 %v3007, %v709
        %v3013 = vmul.f32 %v3007, %v710
        %v3014 = vmul.f32 %v3007, %v711
        %v3015 = vmul.f32 %v3008, %v712
        %v3016 = vmul.f32 %v3008, %v713
        %v3017 = vmul.f32 %v3008, %v714
        %v3018 = vmul.f32 %v3008, %v715
        %v3019 = vmul.f32 %v3009, %v716
        %v3020 = vmul.f32 %v3009, %v717
        %v3021 = vmul.f32 %v3009, %v718
        %v3022 = vmul.f32 %v3009, %v719
        %v3023 = vmul.f32 %v3010, %v720
        %v3024 = vmul.f32 %v3010, %v721
        %v3025 = vmul.f32 %v3010, %v722
        %v3026 = vmul.f32 %v3010, %v723
        %v3027 = vld [vmem:[%s11] sm:$0xff]
        %v3028 = vld [vmem:[%s11 + $0x8] sm:$0xff]
        %v3029 = vld [vmem:[%s11 + $0x10] sm:$0xff]
        %v3030 = vld [vmem:[%s11 + $0x18] sm:$0xff]
        %v3031 = vld [vmem:[%s11 + $0x20] sm:$0xff]
        %v3032 = vld [vmem:[%s11 + $0x28] sm:$0xff]
        %v3033 = vld [vmem:[%s11 + $0x30] sm:$0xff]
        %v3034 = vld [vmem:[%s11 + $0x38] sm:$0xff]
        %v3035 = vld [vmem:[%s11 + $0x40] sm:$0xff]
        %v3036 = vld [vmem:[%s11 + $0x48] sm:$0xff]
        %v3037 = vld [vmem:[%s11 + $0x50] sm:$0xff]
        %v3038 = vld [vmem:[%s11 + $0x58] sm:$0xff]
        %v3039 = vld [vmem:[%s11 + $0x60] sm:$0xff]
        %v3040 = vld [vmem:[%s11 + $0x68] sm:$0xff]
        %v3041 = vld [vmem:[%s11 + $0x70] sm:$0xff]
        %v3042 = vld [vmem:[%s11 + $0x78] sm:$0xff]
        %v3043 = vld [vmem:[%s11 + $0x80] sm:$0xff]
        %v3044 = vld [vmem:[%s11 + $0x88] sm:$0xff]
        %v3045 = vld [vmem:[%s11 + $0x90] sm:$0xff]
        %v3046 = vld [vmem:[%s11 + $0x98] sm:$0xff]
        %v3047 = vld [vmem:[%s11 + $0xa0] sm:$0xff]
        %v3048 = vld [vmem:[%s11 + $0xa8] sm:$0xff]
        %v3049 = vld [vmem:[%s11 + $0xb0] sm:$0xff]
        %v3050 = vld [vmem:[%s11 + $0xb8] sm:$0xff]
        %v3051 = vld [vmem:[%s11 + $0xc0] sm:$0xff]
        %v3052 = vld [vmem:[%s11 + $0xc8] sm:$0xff]
        %v3053 = vld [vmem:[%s11 + $0xd0] sm:$0xff]
        %v3054 = vld [vmem:[%s11 + $0xd8] sm:$0xff]
        %v3055 = vld [vmem:[%s11 + $0xe0] sm:$0xff]
        %v3056 = vld [vmem:[%s11 + $0xe8] sm:$0xff]
        %v3057 = vld [vmem:[%s11 + $0xf0] sm:$0xff]
        %v3058 = vld [vmem:[%s11 + $0xf8] sm:$0xff]
        %v3059 = vsel %vm826, %v2848, 0
        %v3061 = vsel %vm826, %v2851, 0
        %v3063 = vsel %vm826, %v2854, 0
        %v3065 = vsel %vm826, %v2857, 0
        %v3067 = vsel %vm826, %v2860, 0
        %v3069 = vsel %vm826, %v2863, 0
        %v3071 = vsel %vm826, %v2866, 0
        %v3073 = vsel %vm826, %v2869, 0
        %3075 = vmatpush.msra.mxu0 0.0
        %3076 = vmatpush.msra.mxu0 0.0
        %3077 = vmatpush.msra.mxu0 0.0
        %3078 = vmatpush.msra.mxu0 0.0
        %3079 = vmatpush.msra.mxu0 0.0
        %3080 = vmatpush.msra.mxu0 0.0
        %3081 = vmatpush.msra.mxu0 0.0
        %3082 = vmatpush.msra.mxu0 0.0
        %3083 = vmatpush.msra.mxu0 0.0
        %3084 = vmatpush.msra.mxu0 0.0
        %3085 = vmatpush.msra.mxu0 0.0
        %3086 = vmatpush.msra.mxu0 0.0
        %3087 = vmatpush.msra.mxu0 %v3023
        %3088 = vmatpush.msra.mxu0 %v3019
        %3089 = vmatpush.msra.mxu0 %v3015
        %3090 = vmatpush.msra.mxu0 %v3011
        %3091 = vmatmul.f32.gmra.mxu0 %v3059
        %v3092 = vpop.f32.mrf.mxu0
        %v3093 = vadd.f32 %v3027, %v3092
        %3094 = vmatmul.f32.gmra.mxu0 %v3061
        %v3095 = vpop.f32.mrf.mxu0
        %v3096 = vadd.f32 %v3031, %v3095
        %3097 = vmatmul.f32.gmra.mxu0 %v3063
        %v3098 = vpop.f32.mrf.mxu0
        %v3099 = vadd.f32 %v3035, %v3098
        %3100 = vmatmul.f32.gmra.mxu0 %v3065
        %v3101 = vpop.f32.mrf.mxu0
        %v3102 = vadd.f32 %v3039, %v3101
        %3103 = vmatmul.f32.gmra.mxu0 %v3067
        %v3104 = vpop.f32.mrf.mxu0
        %v3105 = vadd.f32 %v3043, %v3104
        %3106 = vmatmul.f32.gmra.mxu0 %v3069
        %v3107 = vpop.f32.mrf.mxu0
        %v3108 = vadd.f32 %v3047, %v3107
        %3109 = vmatmul.f32.gmra.mxu0 %v3071
        %v3110 = vpop.f32.mrf.mxu0
        %v3111 = vadd.f32 %v3051, %v3110
        %3112 = vmatmul.f32.gmra.mxu0 %v3073
        %v3113 = vpop.f32.mrf.mxu0
        %v3114 = vadd.f32 %v3055, %v3113
        %3115 = vdwg.mxu0
        %3116 = vmatpush.msra.mxu0 0.0
        %3117 = vmatpush.msra.mxu0 0.0
        %3118 = vmatpush.msra.mxu0 0.0
        %3119 = vmatpush.msra.mxu0 0.0
        %3120 = vmatpush.msra.mxu0 0.0
        %3121 = vmatpush.msra.mxu0 0.0
        %3122 = vmatpush.msra.mxu0 0.0
        %3123 = vmatpush.msra.mxu0 0.0
        %3124 = vmatpush.msra.mxu0 0.0
        %3125 = vmatpush.msra.mxu0 0.0
        %3126 = vmatpush.msra.mxu0 0.0
        %3127 = vmatpush.msra.mxu0 0.0
        %3128 = vmatpush.msra.mxu0 %v3024
        %3129 = vmatpush.msra.mxu0 %v3020
        %3130 = vmatpush.msra.mxu0 %v3016
        %3131 = vmatpush.msra.mxu0 %v3012
        %3132 = vmatmul.f32.gmra.mxu0 %v3059
        %v3133 = vpop.f32.mrf.mxu0
        %v3134 = vadd.f32 %v3028, %v3133
        %3135 = vmatmul.f32.gmra.mxu0 %v3061
        %v3136 = vpop.f32.mrf.mxu0
        %v3137 = vadd.f32 %v3032, %v3136
        %3138 = vmatmul.f32.gmra.mxu0 %v3063
        %v3139 = vpop.f32.mrf.mxu0
        %v3140 = vadd.f32 %v3036, %v3139
        %3141 = vmatmul.f32.gmra.mxu0 %v3065
        %v3142 = vpop.f32.mrf.mxu0
        %v3143 = vadd.f32 %v3040, %v3142
        %3144 = vmatmul.f32.gmra.mxu0 %v3067
        %v3145 = vpop.f32.mrf.mxu0
        %v3146 = vadd.f32 %v3044, %v3145
        %3147 = vmatmul.f32.gmra.mxu0 %v3069
        %v3148 = vpop.f32.mrf.mxu0
        %v3149 = vadd.f32 %v3048, %v3148
        %3150 = vmatmul.f32.gmra.mxu0 %v3071
        %v3151 = vpop.f32.mrf.mxu0
        %v3152 = vadd.f32 %v3052, %v3151
        %3153 = vmatmul.f32.gmra.mxu0 %v3073
        %v3154 = vpop.f32.mrf.mxu0
        %v3155 = vadd.f32 %v3056, %v3154
        %3156 = vdwg.mxu0
        %3157 = vmatpush.msra.mxu0 0.0
        %3158 = vmatpush.msra.mxu0 0.0
        %3159 = vmatpush.msra.mxu0 0.0
        %3160 = vmatpush.msra.mxu0 0.0
        %3161 = vmatpush.msra.mxu0 0.0
        %3162 = vmatpush.msra.mxu0 0.0
        %3163 = vmatpush.msra.mxu0 0.0
        %3164 = vmatpush.msra.mxu0 0.0
        %3165 = vmatpush.msra.mxu0 0.0
        %3166 = vmatpush.msra.mxu0 0.0
        %3167 = vmatpush.msra.mxu0 0.0
        %3168 = vmatpush.msra.mxu0 0.0
        %3169 = vmatpush.msra.mxu0 %v3025
        %3170 = vmatpush.msra.mxu0 %v3021
        %3171 = vmatpush.msra.mxu0 %v3017
        %3172 = vmatpush.msra.mxu0 %v3013
        %3173 = vmatmul.f32.gmra.mxu0 %v3059
        %v3174 = vpop.f32.mrf.mxu0
        %v3175 = vadd.f32 %v3029, %v3174
        %3176 = vmatmul.f32.gmra.mxu0 %v3061
        %v3177 = vpop.f32.mrf.mxu0
        %v3178 = vadd.f32 %v3033, %v3177
        %3179 = vmatmul.f32.gmra.mxu0 %v3063
        %v3180 = vpop.f32.mrf.mxu0
        %v3181 = vadd.f32 %v3037, %v3180
        %3182 = vmatmul.f32.gmra.mxu0 %v3065
        %v3183 = vpop.f32.mrf.mxu0
        %v3184 = vadd.f32 %v3041, %v3183
        %3185 = vmatmul.f32.gmra.mxu0 %v3067
        %v3186 = vpop.f32.mrf.mxu0
        %v3187 = vadd.f32 %v3045, %v3186
        %3188 = vmatmul.f32.gmra.mxu0 %v3069
        %v3189 = vpop.f32.mrf.mxu0
        %v3190 = vadd.f32 %v3049, %v3189
        %3191 = vmatmul.f32.gmra.mxu0 %v3071
        %v3192 = vpop.f32.mrf.mxu0
        %v3193 = vadd.f32 %v3053, %v3192
        %3194 = vmatmul.f32.gmra.mxu0 %v3073
        %v3195 = vpop.f32.mrf.mxu0
        %v3196 = vadd.f32 %v3057, %v3195
        %3197 = vdwg.mxu0
        %3198 = vmatpush.msra.mxu0 0.0
        %3199 = vmatpush.msra.mxu0 0.0
        %3200 = vmatpush.msra.mxu0 0.0
        %3201 = vmatpush.msra.mxu0 0.0
        %3202 = vmatpush.msra.mxu0 0.0
        %3203 = vmatpush.msra.mxu0 0.0
        %3204 = vmatpush.msra.mxu0 0.0
        %3205 = vmatpush.msra.mxu0 0.0
        %3206 = vmatpush.msra.mxu0 0.0
        %3207 = vmatpush.msra.mxu0 0.0
        %3208 = vmatpush.msra.mxu0 0.0
        %3209 = vmatpush.msra.mxu0 0.0
        %3210 = vmatpush.msra.mxu0 %v3026
        %3211 = vmatpush.msra.mxu0 %v3022
        %3212 = vmatpush.msra.mxu0 %v3018
        %3213 = vmatpush.msra.mxu0 %v3014
        %3214 = vmatmul.f32.gmra.mxu0 %v3059
        %v3215 = vpop.f32.mrf.mxu0
        %v3216 = vadd.f32 %v3030, %v3215
        %3217 = vmatmul.f32.gmra.mxu0 %v3061
        %v3218 = vpop.f32.mrf.mxu0
        %v3219 = vadd.f32 %v3034, %v3218
        %3220 = vmatmul.f32.gmra.mxu0 %v3063
        %v3221 = vpop.f32.mrf.mxu0
        %v3222 = vadd.f32 %v3038, %v3221
        %3223 = vmatmul.f32.gmra.mxu0 %v3065
        %v3224 = vpop.f32.mrf.mxu0
        %v3225 = vadd.f32 %v3042, %v3224
        %3226 = vmatmul.f32.gmra.mxu0 %v3067
        %v3227 = vpop.f32.mrf.mxu0
        %v3228 = vadd.f32 %v3046, %v3227
        %3229 = vmatmul.f32.gmra.mxu0 %v3069
        %v3230 = vpop.f32.mrf.mxu0
        %v3231 = vadd.f32 %v3050, %v3230
        %3232 = vmatmul.f32.gmra.mxu0 %v3071
        %v3233 = vpop.f32.mrf.mxu0
        %v3234 = vadd.f32 %v3054, %v3233
        %3235 = vmatmul.f32.gmra.mxu0 %v3073
        %v3236 = vpop.f32.mrf.mxu0
        %v3237 = vadd.f32 %v3058, %v3236
        %3238 = vdwg.mxu0
        %v3239 = vmax.f32 %v3093, %v3134
        %v3240 = vmax.f32 %v3239, %v3175
        %v3241 = vmax.f32 %v3240, %v3216
        %3242 = vmax.xlane.f32.xlu0 %v3241
        %v3243 = vpop.xlane.xlu0 %3242
        %v3244 = vmax.f32 %v3096, %v3137
        %v3245 = vmax.f32 %v3244, %v3178
        %v3246 = vmax.f32 %v3245, %v3219
        %3247 = vmax.xlane.f32.xlu0 %v3246
        %v3248 = vpop.xlane.xlu0 %3247
        %v3249 = vmax.f32 %v3099, %v3140
        %v3250 = vmax.f32 %v3249, %v3181
        %v3251 = vmax.f32 %v3250, %v3222
        %3252 = vmax.xlane.f32.xlu0 %v3251
        %v3253 = vpop.xlane.xlu0 %3252
        %v3254 = vmax.f32 %v3102, %v3143
        %v3255 = vmax.f32 %v3254, %v3184
        %v3256 = vmax.f32 %v3255, %v3225
        %3257 = vmax.xlane.f32.xlu0 %v3256
        %v3258 = vpop.xlane.xlu0 %3257
        %v3259 = vmax.f32 %v3105, %v3146
        %v3260 = vmax.f32 %v3259, %v3187
        %v3261 = vmax.f32 %v3260, %v3228
        %3262 = vmax.xlane.f32.xlu0 %v3261
        %v3263 = vpop.xlane.xlu0 %3262
        %v3264 = vmax.f32 %v3108, %v3149
        %v3265 = vmax.f32 %v3264, %v3190
        %v3266 = vmax.f32 %v3265, %v3231
        %3267 = vmax.xlane.f32.xlu0 %v3266
        %v3268 = vpop.xlane.xlu0 %3267
        %v3269 = vmax.f32 %v3111, %v3152
        %v3270 = vmax.f32 %v3269, %v3193
        %v3271 = vmax.f32 %v3270, %v3234
        %3272 = vmax.xlane.f32.xlu0 %v3271
        %v3273 = vpop.xlane.xlu0 %3272
        %v3274 = vmax.f32 %v3114, %v3155
        %v3275 = vmax.f32 %v3274, %v3196
        %v3276 = vmax.f32 %v3275, %v3237
        %3277 = vmax.xlane.f32.xlu0 %v3276
        %v3278 = vpop.xlane.xlu0 %3277
        %v3279 = vsub.f32 %v3093, %v3243
        %v3280 = vsub.f32 %v3134, %v3243
        %v3281 = vsub.f32 %v3175, %v3243
        %v3282 = vsub.f32 %v3216, %v3243
        %v3283 = vsub.f32 %v3096, %v3248
        %v3284 = vsub.f32 %v3137, %v3248
        %v3285 = vsub.f32 %v3178, %v3248
        %v3286 = vsub.f32 %v3219, %v3248
        %v3287 = vsub.f32 %v3099, %v3253
        %v3288 = vsub.f32 %v3140, %v3253
        %v3289 = vsub.f32 %v3181, %v3253
        %v3290 = vsub.f32 %v3222, %v3253
        %v3291 = vsub.f32 %v3102, %v3258
        %v3292 = vsub.f32 %v3143, %v3258
        %v3293 = vsub.f32 %v3184, %v3258
        %v3294 = vsub.f32 %v3225, %v3258
        %v3295 = vsub.f32 %v3105, %v3263
        %v3296 = vsub.f32 %v3146, %v3263
        %v3297 = vsub.f32 %v3187, %v3263
        %v3298 = vsub.f32 %v3228, %v3263
        %v3299 = vsub.f32 %v3108, %v3268
        %v3300 = vsub.f32 %v3149, %v3268
        %v3301 = vsub.f32 %v3190, %v3268
        %v3302 = vsub.f32 %v3231, %v3268
        %v3303 = vsub.f32 %v3111, %v3273
        %v3304 = vsub.f32 %v3152, %v3273
        %v3305 = vsub.f32 %v3193, %v3273
        %v3306 = vsub.f32 %v3234, %v3273
        %v3307 = vsub.f32 %v3114, %v3278
        %v3308 = vsub.f32 %v3155, %v3278
        %v3309 = vsub.f32 %v3196, %v3278
        %v3310 = vsub.f32 %v3237, %v3278
        %v3311 = vmul.f32 %v3279, 1.442695
        %v3312 = vpow.pop %v3311
        %v3313 = vmul.f32 %v3280, 1.442695
        %v3314 = vpow.pop %v3313
        %v3315 = vmul.f32 %v3281, 1.442695
        %v3316 = vpow.pop %v3315
        %v3317 = vmul.f32 %v3282, 1.442695
        %v3318 = vpow.pop %v3317
        %v3319 = vmul.f32 %v3283, 1.442695
        %v3320 = vpow.pop %v3319
        %v3321 = vmul.f32 %v3284, 1.442695
        %v3322 = vpow.pop %v3321
        %v3323 = vmul.f32 %v3285, 1.442695
        %v3324 = vpow.pop %v3323
        %v3325 = vmul.f32 %v3286, 1.442695
        %v3326 = vpow.pop %v3325
        %v3327 = vmul.f32 %v3287, 1.442695
        %v3328 = vpow.pop %v3327
        %v3329 = vmul.f32 %v3288, 1.442695
        %v3330 = vpow.pop %v3329
        %v3331 = vmul.f32 %v3289, 1.442695
        %v3332 = vpow.pop %v3331
        %v3333 = vmul.f32 %v3290, 1.442695
        %v3334 = vpow.pop %v3333
        %v3335 = vmul.f32 %v3291, 1.442695
        %v3336 = vpow.pop %v3335
        %v3337 = vmul.f32 %v3292, 1.442695
        %v3338 = vpow.pop %v3337
        %v3339 = vmul.f32 %v3293, 1.442695
        %v3340 = vpow.pop %v3339
        %v3341 = vmul.f32 %v3294, 1.442695
        %v3342 = vpow.pop %v3341
        %v3343 = vmul.f32 %v3295, 1.442695
        %v3344 = vpow.pop %v3343
        %v3345 = vmul.f32 %v3296, 1.442695
        %v3346 = vpow.pop %v3345
        %v3347 = vmul.f32 %v3297, 1.442695
        %v3348 = vpow.pop %v3347
        %v3349 = vmul.f32 %v3298, 1.442695
        %v3350 = vpow.pop %v3349
        %v3351 = vmul.f32 %v3299, 1.442695
        %v3352 = vpow.pop %v3351
        %v3353 = vmul.f32 %v3300, 1.442695
        %v3354 = vpow.pop %v3353
        %v3355 = vmul.f32 %v3301, 1.442695
        %v3356 = vpow.pop %v3355
        %v3357 = vmul.f32 %v3302, 1.442695
        %v3358 = vpow.pop %v3357
        %v3359 = vmul.f32 %v3303, 1.442695
        %v3360 = vpow.pop %v3359
        %v3361 = vmul.f32 %v3304, 1.442695
        %v3362 = vpow.pop %v3361
        %v3363 = vmul.f32 %v3305, 1.442695
        %v3364 = vpow.pop %v3363
        %v3365 = vmul.f32 %v3306, 1.442695
        %v3366 = vpow.pop %v3365
        %v3367 = vmul.f32 %v3307, 1.442695
        %v3368 = vpow.pop %v3367
        %v3369 = vmul.f32 %v3308, 1.442695
        %v3370 = vpow.pop %v3369
        %v3371 = vmul.f32 %v3309, 1.442695
        %v3372 = vpow.pop %v3371
        %v3373 = vmul.f32 %v3310, 1.442695
        %v3374 = vpow.pop %v3373
        %3379 = vrot.lane.b32.xlu0 %v2975, 64
        %v3380 = vpop.permute.xlu0 %3379
        %3381 = vrot.lane.b32.xlu0 %v2976, 64
        %v3382 = vpop.permute.xlu0 %3381
        %3383 = vrot.lane.b32.xlu0 %v2977, 64
        %v3384 = vpop.permute.xlu0 %3383
        %3385 = vrot.lane.b32.xlu0 %v2978, 64
        %v3386 = vpop.permute.xlu0 %3385
        %v3391 = vsel %vm1238, %v2975, %v3380
        %v3392 = vsel %vm1238, %v2976, %v3382
        %v3393 = vsel %vm1238, %v2977, %v3384
        %v3394 = vsel %vm1238, %v2978, %v3386
        %v3395 = vmul.f32 %v3391, %v708
        %v3396 = vmul.f32 %v3391, %v709
        %v3397 = vmul.f32 %v3391, %v710
        %v3398 = vmul.f32 %v3391, %v711
        %v3399 = vmul.f32 %v3392, %v712
        %v3400 = vmul.f32 %v3392, %v713
        %v3401 = vmul.f32 %v3392, %v714
        %v3402 = vmul.f32 %v3392, %v715
        %v3403 = vmul.f32 %v3393, %v716
        %v3404 = vmul.f32 %v3393, %v717
        %v3405 = vmul.f32 %v3393, %v718
        %v3406 = vmul.f32 %v3393, %v719
        %v3407 = vmul.f32 %v3394, %v720
        %v3408 = vmul.f32 %v3394, %v721
        %v3409 = vmul.f32 %v3394, %v722
        %v3410 = vmul.f32 %v3394, %v723
        %3411 = vmatpush.xpose.msra.mxu0 0.0
        %3412 = vmatpush.xpose.msra.mxu0 0.0
        %3413 = vmatpush.xpose.msra.mxu0 0.0
        %3414 = vmatpush.xpose.msra.mxu0 0.0
        %3415 = vmatpush.xpose.msra.mxu0 0.0
        %3416 = vmatpush.xpose.msra.mxu0 0.0
        %3417 = vmatpush.xpose.msra.mxu0 0.0
        %3418 = vmatpush.xpose.msra.mxu0 0.0
        %3419 = vmatpush.xpose.msra.mxu0 %v720
        %3420 = vmatpush.xpose.msra.mxu0 %v716
        %3421 = vmatpush.xpose.msra.mxu0 %v712
        %3422 = vmatpush.xpose.msra.mxu0 %v708
        %3423 = vmatpush.xpose.msra.mxu0 %v3407
        %3424 = vmatpush.xpose.msra.mxu0 %v3403
        %3425 = vmatpush.xpose.msra.mxu0 %v3399
        %3426 = vmatpush.xpose.msra.mxu0 %v3395
        %3427 = vmatmul.f32.gmra.mxu0 %v3312
        %v3428 = vpop.f32.mrf.mxu0
        %v3429 = vadd.f32 0.0, %v3428
        %3430 = vmatmul.f32.gmra.mxu0 %v3320
        %v3431 = vpop.f32.mrf.mxu0
        %v3432 = vadd.f32 0.0, %v3431
        %3433 = vmatmul.f32.gmra.mxu0 %v3328
        %v3434 = vpop.f32.mrf.mxu0
        %v3435 = vadd.f32 0.0, %v3434
        %3436 = vmatmul.f32.gmra.mxu0 %v3336
        %v3437 = vpop.f32.mrf.mxu0
        %v3438 = vadd.f32 0.0, %v3437
        %3439 = vmatmul.f32.gmra.mxu0 %v3344
        %v3440 = vpop.f32.mrf.mxu0
        %v3441 = vadd.f32 0.0, %v3440
        %3442 = vmatmul.f32.gmra.mxu0 %v3352
        %v3443 = vpop.f32.mrf.mxu0
        %v3444 = vadd.f32 0.0, %v3443
        %3445 = vmatmul.f32.gmra.mxu0 %v3360
        %v3446 = vpop.f32.mrf.mxu0
        %v3447 = vadd.f32 0.0, %v3446
        %3448 = vmatmul.f32.gmra.mxu0 %v3368
        %v3449 = vpop.f32.mrf.mxu0
        %v3450 = vadd.f32 0.0, %v3449
        %3451 = vdwg.mxu0
        %3452 = vmatpush.xpose.msra.mxu0 0.0
        %3453 = vmatpush.xpose.msra.mxu0 0.0
        %3454 = vmatpush.xpose.msra.mxu0 0.0
        %3455 = vmatpush.xpose.msra.mxu0 0.0
        %3456 = vmatpush.xpose.msra.mxu0 0.0
        %3457 = vmatpush.xpose.msra.mxu0 0.0
        %3458 = vmatpush.xpose.msra.mxu0 0.0
        %3459 = vmatpush.xpose.msra.mxu0 0.0
        %3460 = vmatpush.xpose.msra.mxu0 %v721
        %3461 = vmatpush.xpose.msra.mxu0 %v717
        %3462 = vmatpush.xpose.msra.mxu0 %v713
        %3463 = vmatpush.xpose.msra.mxu0 %v709
        %3464 = vmatpush.xpose.msra.mxu0 %v3408
        %3465 = vmatpush.xpose.msra.mxu0 %v3404
        %3466 = vmatpush.xpose.msra.mxu0 %v3400
        %3467 = vmatpush.xpose.msra.mxu0 %v3396
        %3468 = vmatmul.f32.gmra.mxu0 %v3314
        %v3469 = vpop.f32.mrf.mxu0
        %v3470 = vadd.f32 %v3429, %v3469
        %3471 = vmatmul.f32.gmra.mxu0 %v3322
        %v3472 = vpop.f32.mrf.mxu0
        %v3473 = vadd.f32 %v3432, %v3472
        %3474 = vmatmul.f32.gmra.mxu0 %v3330
        %v3475 = vpop.f32.mrf.mxu0
        %v3476 = vadd.f32 %v3435, %v3475
        %3477 = vmatmul.f32.gmra.mxu0 %v3338
        %v3478 = vpop.f32.mrf.mxu0
        %v3479 = vadd.f32 %v3438, %v3478
        %3480 = vmatmul.f32.gmra.mxu0 %v3346
        %v3481 = vpop.f32.mrf.mxu0
        %v3482 = vadd.f32 %v3441, %v3481
        %3483 = vmatmul.f32.gmra.mxu0 %v3354
        %v3484 = vpop.f32.mrf.mxu0
        %v3485 = vadd.f32 %v3444, %v3484
        %3486 = vmatmul.f32.gmra.mxu0 %v3362
        %v3487 = vpop.f32.mrf.mxu0
        %v3488 = vadd.f32 %v3447, %v3487
        %3489 = vmatmul.f32.gmra.mxu0 %v3370
        %v3490 = vpop.f32.mrf.mxu0
        %v3491 = vadd.f32 %v3450, %v3490
        %3492 = vdwg.mxu0
        %3493 = vmatpush.xpose.msra.mxu0 0.0
        %3494 = vmatpush.xpose.msra.mxu0 0.0
        %3495 = vmatpush.xpose.msra.mxu0 0.0
        %3496 = vmatpush.xpose.msra.mxu0 0.0
        %3497 = vmatpush.xpose.msra.mxu0 0.0
        %3498 = vmatpush.xpose.msra.mxu0 0.0
        %3499 = vmatpush.xpose.msra.mxu0 0.0
        %3500 = vmatpush.xpose.msra.mxu0 0.0
        %3501 = vmatpush.xpose.msra.mxu0 %v722
        %3502 = vmatpush.xpose.msra.mxu0 %v718
        %3503 = vmatpush.xpose.msra.mxu0 %v714
        %3504 = vmatpush.xpose.msra.mxu0 %v710
        %3505 = vmatpush.xpose.msra.mxu0 %v3409
        %3506 = vmatpush.xpose.msra.mxu0 %v3405
        %3507 = vmatpush.xpose.msra.mxu0 %v3401
        %3508 = vmatpush.xpose.msra.mxu0 %v3397
        %3509 = vmatmul.f32.gmra.mxu0 %v3316
        %v3510 = vpop.f32.mrf.mxu0
        %v3511 = vadd.f32 %v3470, %v3510
        %3512 = vmatmul.f32.gmra.mxu0 %v3324
        %v3513 = vpop.f32.mrf.mxu0
        %v3514 = vadd.f32 %v3473, %v3513
        %3515 = vmatmul.f32.gmra.mxu0 %v3332
        %v3516 = vpop.f32.mrf.mxu0
        %v3517 = vadd.f32 %v3476, %v3516
        %3518 = vmatmul.f32.gmra.mxu0 %v3340
        %v3519 = vpop.f32.mrf.mxu0
        %v3520 = vadd.f32 %v3479, %v3519
        %3521 = vmatmul.f32.gmra.mxu0 %v3348
        %v3522 = vpop.f32.mrf.mxu0
        %v3523 = vadd.f32 %v3482, %v3522
        %3524 = vmatmul.f32.gmra.mxu0 %v3356
        %v3525 = vpop.f32.mrf.mxu0
        %v3526 = vadd.f32 %v3485, %v3525
        %3527 = vmatmul.f32.gmra.mxu0 %v3364
        %v3528 = vpop.f32.mrf.mxu0
        %v3529 = vadd.f32 %v3488, %v3528
        %3530 = vmatmul.f32.gmra.mxu0 %v3372
        %v3531 = vpop.f32.mrf.mxu0
        %v3532 = vadd.f32 %v3491, %v3531
        %3533 = vdwg.mxu0
        %3534 = vmatpush.xpose.msra.mxu0 0.0
        %3535 = vmatpush.xpose.msra.mxu0 0.0
        %3536 = vmatpush.xpose.msra.mxu0 0.0
        %3537 = vmatpush.xpose.msra.mxu0 0.0
        %3538 = vmatpush.xpose.msra.mxu0 0.0
        %3539 = vmatpush.xpose.msra.mxu0 0.0
        %3540 = vmatpush.xpose.msra.mxu0 0.0
        %3541 = vmatpush.xpose.msra.mxu0 0.0
        %3542 = vmatpush.xpose.msra.mxu0 %v723
        %3543 = vmatpush.xpose.msra.mxu0 %v719
        %3544 = vmatpush.xpose.msra.mxu0 %v715
        %3545 = vmatpush.xpose.msra.mxu0 %v711
        %3546 = vmatpush.xpose.msra.mxu0 %v3410
        %3547 = vmatpush.xpose.msra.mxu0 %v3406
        %3548 = vmatpush.xpose.msra.mxu0 %v3402
        %3549 = vmatpush.xpose.msra.mxu0 %v3398
        %3550 = vmatmul.f32.gmra.mxu0 %v3318
        %v3551 = vpop.f32.mrf.mxu0
        %v3552 = vadd.f32 %v3511, %v3551
        %3553 = vmatmul.f32.gmra.mxu0 %v3326
        %v3554 = vpop.f32.mrf.mxu0
        %v3555 = vadd.f32 %v3514, %v3554
        %3556 = vmatmul.f32.gmra.mxu0 %v3334
        %v3557 = vpop.f32.mrf.mxu0
        %v3558 = vadd.f32 %v3517, %v3557
        %3559 = vmatmul.f32.gmra.mxu0 %v3342
        %v3560 = vpop.f32.mrf.mxu0
        %v3561 = vadd.f32 %v3520, %v3560
        %3562 = vmatmul.f32.gmra.mxu0 %v3350
        %v3563 = vpop.f32.mrf.mxu0
        %v3564 = vadd.f32 %v3523, %v3563
        %3565 = vmatmul.f32.gmra.mxu0 %v3358
        %v3566 = vpop.f32.mrf.mxu0
        %v3567 = vadd.f32 %v3526, %v3566
        %3568 = vmatmul.f32.gmra.mxu0 %v3366
        %v3569 = vpop.f32.mrf.mxu0
        %v3570 = vadd.f32 %v3529, %v3569
        %3571 = vmatmul.f32.gmra.mxu0 %v3374
        %v3572 = vpop.f32.mrf.mxu0
        %v3573 = vadd.f32 %v3532, %v3572
        %3574 = vdwg.mxu0
        %v3575 = vrcp.pop %v3552
        %v3576 = vrcp.pop %v3555
        %v3577 = vrcp.pop %v3558
        %v3578 = vrcp.pop %v3561
        %v3579 = vrcp.pop %v3564
        %v3580 = vrcp.pop %v3567
        %v3581 = vrcp.pop %v3570
        %v3582 = vrcp.pop %v3573
        %3591 = vrot.lane.b32.xlu0 %v3575, 96
        %v3592 = vpop.permute.xlu0 %3591
        %3593 = vrot.lane.b32.xlu0 %v3576, 96
        %v3594 = vpop.permute.xlu0 %3593
        %3595 = vrot.lane.b32.xlu0 %v3577, 96
        %v3596 = vpop.permute.xlu0 %3595
        %3597 = vrot.lane.b32.xlu0 %v3578, 96
        %v3598 = vpop.permute.xlu0 %3597
        %3599 = vrot.lane.b32.xlu0 %v3579, 96
        %v3600 = vpop.permute.xlu0 %3599
        %3601 = vrot.lane.b32.xlu0 %v3580, 96
        %v3602 = vpop.permute.xlu0 %3601
        %3603 = vrot.lane.b32.xlu0 %v3581, 96
        %v3604 = vpop.permute.xlu0 %3603
        %3605 = vrot.lane.b32.xlu0 %v3582, 96
        %v3606 = vpop.permute.xlu0 %3605
        %v3615 = vmul.f32 %v3552, %v3592
        %v3616 = vmul.f32 %v3555, %v3594
        %v3617 = vmul.f32 %v3558, %v3596
        %v3618 = vmul.f32 %v3561, %v3598
        %v3619 = vmul.f32 %v3564, %v3600
        %v3620 = vmul.f32 %v3567, %v3602
        %v3621 = vmul.f32 %v3570, %v3604
        %v3622 = vmul.f32 %v3573, %v3606
        %v3623 = vperm.slane %v725, 1
        %v3625 = vsel %vm826, %v3615, 0
        %v3628 = vsel %vm826, %v3616, 0
        %v3631 = vsel %vm826, %v3617, 0
        %v3634 = vsel %vm826, %v3618, 0
        %v3637 = vsel %vm826, %v3619, 0
        %v3640 = vsel %vm826, %v3620, 0
        %v3643 = vsel %vm826, %v3621, 0
        %v3646 = vsel %vm826, %v3622, 0
        %3648 = vmatpush.msra.mxu0 0.0
        %3649 = vmatpush.msra.mxu0 0.0
        %3650 = vmatpush.msra.mxu0 0.0
        %3651 = vmatpush.msra.mxu0 0.0
        %3652 = vmatpush.msra.mxu0 0.0
        %3653 = vmatpush.msra.mxu0 0.0
        %3654 = vmatpush.msra.mxu0 0.0
        %3655 = vmatpush.msra.mxu0 0.0
        %3656 = vmatpush.msra.mxu0 0.0
        %3657 = vmatpush.msra.mxu0 0.0
        %3658 = vmatpush.msra.mxu0 0.0
        %3659 = vmatpush.msra.mxu0 0.0
        %3660 = vmatpush.msra.mxu0 %v2804
        %3661 = vmatpush.msra.mxu0 %v2803
        %3662 = vmatpush.msra.mxu0 %v2802
        %3663 = vmatpush.msra.mxu0 %v2801
        %3664 = vmatmul.f32.gmra.mxu0 %v3625
        %v3665 = vpop.f32.mrf.mxu0
        %v3666 = vadd.f32 %v3623, %v3665
        %3667 = vmatmul.f32.gmra.mxu0 %v3628
        %v3668 = vpop.f32.mrf.mxu0
        %v3669 = vadd.f32 %v3623, %v3668
        %3670 = vmatmul.f32.gmra.mxu0 %v3631
        %v3671 = vpop.f32.mrf.mxu0
        %v3672 = vadd.f32 %v3623, %v3671
        %3673 = vmatmul.f32.gmra.mxu0 %v3634
        %v3674 = vpop.f32.mrf.mxu0
        %v3675 = vadd.f32 %v3623, %v3674
        %3676 = vmatmul.f32.gmra.mxu0 %v3637
        %v3677 = vpop.f32.mrf.mxu0
        %v3678 = vadd.f32 %v3623, %v3677
        %3679 = vmatmul.f32.gmra.mxu0 %v3640
        %v3680 = vpop.f32.mrf.mxu0
        %v3681 = vadd.f32 %v3623, %v3680
        %3682 = vmatmul.f32.gmra.mxu0 %v3643
        %v3683 = vpop.f32.mrf.mxu0
        %v3684 = vadd.f32 %v3623, %v3683
        %3685 = vmatmul.f32.gmra.mxu0 %v3646
        %v3686 = vpop.f32.mrf.mxu0
        %v3687 = vadd.f32 %v3623, %v3686
        %3688 = vdwg.mxu0
        %v3689 = vadd.f32 %v2595, %v3666
        %v3690 = vadd.f32 %v2596, %v3669
        %v3691 = vadd.f32 %v2597, %v3672
        %v3692 = vadd.f32 %v2598, %v3675
        %v3693 = vadd.f32 %v2599, %v3678
        %v3694 = vadd.f32 %v2600, %v3681
        %v3695 = vadd.f32 %v2601, %v3684
        %v3696 = vadd.f32 %v2602, %v3687
        %v3697 = vsel %vm826, %v3689, 0.0
        %3698 = vadd.xlane.f32.xlu0 %v3697
        %v3699 = vpop.xlane.xlu0 %3698
        %v3700 = vsel %vm826, %v3690, 0.0
        %3701 = vadd.xlane.f32.xlu0 %v3700
        %v3702 = vpop.xlane.xlu0 %3701
        %v3703 = vsel %vm826, %v3691, 0.0
        %3704 = vadd.xlane.f32.xlu0 %v3703
        %v3705 = vpop.xlane.xlu0 %3704
        %v3706 = vsel %vm826, %v3692, 0.0
        %3707 = vadd.xlane.f32.xlu0 %v3706
        %v3708 = vpop.xlane.xlu0 %3707
        %v3709 = vsel %vm826, %v3693, 0.0
        %3710 = vadd.xlane.f32.xlu0 %v3709
        %v3711 = vpop.xlane.xlu0 %3710
        %v3712 = vsel %vm826, %v3694, 0.0
        %3713 = vadd.xlane.f32.xlu0 %v3712
        %v3714 = vpop.xlane.xlu0 %3713
        %v3715 = vsel %vm826, %v3695, 0.0
        %3716 = vadd.xlane.f32.xlu0 %v3715
        %v3717 = vpop.xlane.xlu0 %3716
        %v3718 = vsel %vm826, %v3696, 0.0
        %3719 = vadd.xlane.f32.xlu0 %v3718
        %v3720 = vpop.xlane.xlu0 %3719
        %v3721 = vmul.f32 %v3699, %v857
        %v3722 = vmul.f32 %v3702, %v857
        %v3723 = vmul.f32 %v3705, %v857
        %v3724 = vmul.f32 %v3708, %v857
        %v3725 = vmul.f32 %v3711, %v857
        %v3726 = vmul.f32 %v3714, %v857
        %v3727 = vmul.f32 %v3717, %v857
        %v3728 = vmul.f32 %v3720, %v857
        %v3729 = vsub.f32 %v3689, %v3721
        %v3730 = vsub.f32 %v3690, %v3722
        %v3731 = vsub.f32 %v3691, %v3723
        %v3732 = vsub.f32 %v3692, %v3724
        %v3733 = vsub.f32 %v3693, %v3725
        %v3734 = vsub.f32 %v3694, %v3726
        %v3735 = vsub.f32 %v3695, %v3727
        %v3736 = vsub.f32 %v3696, %v3728
        %v3737 = vmul.f32 %v3729, %v3729
        %v3738 = vmul.f32 %v3730, %v3730
        %v3739 = vmul.f32 %v3731, %v3731
        %v3740 = vmul.f32 %v3732, %v3732
        %v3741 = vmul.f32 %v3733, %v3733
        %v3742 = vmul.f32 %v3734, %v3734
        %v3743 = vmul.f32 %v3735, %v3735
        %v3744 = vmul.f32 %v3736, %v3736
        %v3745 = vsel %vm826, %v3737, 0.0
        %3746 = vadd.xlane.f32.xlu0 %v3745
        %v3747 = vpop.xlane.xlu0 %3746
        %v3748 = vsel %vm826, %v3738, 0.0
        %3749 = vadd.xlane.f32.xlu0 %v3748
        %v3750 = vpop.xlane.xlu0 %3749
        %v3751 = vsel %vm826, %v3739, 0.0
        %3752 = vadd.xlane.f32.xlu0 %v3751
        %v3753 = vpop.xlane.xlu0 %3752
        %v3754 = vsel %vm826, %v3740, 0.0
        %3755 = vadd.xlane.f32.xlu0 %v3754
        %v3756 = vpop.xlane.xlu0 %3755
        %v3757 = vsel %vm826, %v3741, 0.0
        %3758 = vadd.xlane.f32.xlu0 %v3757
        %v3759 = vpop.xlane.xlu0 %3758
        %v3760 = vsel %vm826, %v3742, 0.0
        %3761 = vadd.xlane.f32.xlu0 %v3760
        %v3762 = vpop.xlane.xlu0 %3761
        %v3763 = vsel %vm826, %v3743, 0.0
        %3764 = vadd.xlane.f32.xlu0 %v3763
        %v3765 = vpop.xlane.xlu0 %3764
        %v3766 = vsel %vm826, %v3744, 0.0
        %3767 = vadd.xlane.f32.xlu0 %v3766
        %v3768 = vpop.xlane.xlu0 %3767
        %v3769 = vmul.f32 %v3747, %v857
        %v3770 = vmul.f32 %v3750, %v857
        %v3771 = vmul.f32 %v3753, %v857
        %v3772 = vmul.f32 %v3756, %v857
        %v3773 = vmul.f32 %v3759, %v857
        %v3774 = vmul.f32 %v3762, %v857
        %v3775 = vmul.f32 %v3765, %v857
        %v3776 = vmul.f32 %v3768, %v857
        %v3777 = vadd.f32 %v3769, 1e-05
        %v3778 = vadd.f32 %v3770, 1e-05
        %v3779 = vadd.f32 %v3771, 1e-05
        %v3780 = vadd.f32 %v3772, 1e-05
        %v3781 = vadd.f32 %v3773, 1e-05
        %v3782 = vadd.f32 %v3774, 1e-05
        %v3783 = vadd.f32 %v3775, 1e-05
        %v3784 = vadd.f32 %v3776, 1e-05
        %v3785 = vrsqrt.pop %v3777
        %v3786 = vmul.f32 %v3785, %v3777
        %v3787 = vmul.f32 %v3786, %v3785
        %v3788 = vmul.f32 0.5, %v3787
        %v3789 = vsub.f32 1.5, %v3788
        %v3790 = vmul.f32 %v3785, %v3789
        %vm3791 = vweird.f32 %v3777
        %vm3792 = vweird.f32 %v3785
        %vm3793 = vmor %vm3791, %vm3792
        %v3794 = vsel %vm3793, %v3785, %v3790
        %v3795 = vrsqrt.pop %v3778
        %v3796 = vmul.f32 %v3795, %v3778
        %v3797 = vmul.f32 %v3796, %v3795
        %v3798 = vmul.f32 0.5, %v3797
        %v3799 = vsub.f32 1.5, %v3798
        %v3800 = vmul.f32 %v3795, %v3799
        %vm3801 = vweird.f32 %v3778
        %vm3802 = vweird.f32 %v3795
        %vm3803 = vmor %vm3801, %vm3802
        %v3804 = vsel %vm3803, %v3795, %v3800
        %v3805 = vrsqrt.pop %v3779
        %v3806 = vmul.f32 %v3805, %v3779
        %v3807 = vmul.f32 %v3806, %v3805
        %v3808 = vmul.f32 0.5, %v3807
        %v3809 = vsub.f32 1.5, %v3808
        %v3810 = vmul.f32 %v3805, %v3809
        %vm3811 = vweird.f32 %v3779
        %vm3812 = vweird.f32 %v3805
        %vm3813 = vmor %vm3811, %vm3812
        %v3814 = vsel %vm3813, %v3805, %v3810
        %v3815 = vrsqrt.pop %v3780
        %v3816 = vmul.f32 %v3815, %v3780
        %v3817 = vmul.f32 %v3816, %v3815
        %v3818 = vmul.f32 0.5, %v3817
        %v3819 = vsub.f32 1.5, %v3818
        %v3820 = vmul.f32 %v3815, %v3819
        %vm3821 = vweird.f32 %v3780
        %vm3822 = vweird.f32 %v3815
        %vm3823 = vmor %vm3821, %vm3822
        %v3824 = vsel %vm3823, %v3815, %v3820
        %v3825 = vrsqrt.pop %v3781
        %v3826 = vmul.f32 %v3825, %v3781
        %v3827 = vmul.f32 %v3826, %v3825
        %v3828 = vmul.f32 0.5, %v3827
        %v3829 = vsub.f32 1.5, %v3828
        %v3830 = vmul.f32 %v3825, %v3829
        %vm3831 = vweird.f32 %v3781
        %vm3832 = vweird.f32 %v3825
        %vm3833 = vmor %vm3831, %vm3832
        %v3834 = vsel %vm3833, %v3825, %v3830
        %v3835 = vrsqrt.pop %v3782
        %v3836 = vmul.f32 %v3835, %v3782
        %v3837 = vmul.f32 %v3836, %v3835
        %v3838 = vmul.f32 0.5, %v3837
        %v3839 = vsub.f32 1.5, %v3838
        %v3840 = vmul.f32 %v3835, %v3839
        %vm3841 = vweird.f32 %v3782
        %vm3842 = vweird.f32 %v3835
        %vm3843 = vmor %vm3841, %vm3842
        %v3844 = vsel %vm3843, %v3835, %v3840
        %v3845 = vrsqrt.pop %v3783
        %v3846 = vmul.f32 %v3845, %v3783
        %v3847 = vmul.f32 %v3846, %v3845
        %v3848 = vmul.f32 0.5, %v3847
        %v3849 = vsub.f32 1.5, %v3848
        %v3850 = vmul.f32 %v3845, %v3849
        %vm3851 = vweird.f32 %v3783
        %vm3852 = vweird.f32 %v3845
        %vm3853 = vmor %vm3851, %vm3852
        %v3854 = vsel %vm3853, %v3845, %v3850
        %v3855 = vrsqrt.pop %v3784
        %v3856 = vmul.f32 %v3855, %v3784
        %v3857 = vmul.f32 %v3856, %v3855
        %v3858 = vmul.f32 0.5, %v3857
        %v3859 = vsub.f32 1.5, %v3858
        %v3860 = vmul.f32 %v3855, %v3859
        %vm3861 = vweird.f32 %v3784
        %vm3862 = vweird.f32 %v3855
        %vm3863 = vmor %vm3861, %vm3862
        %v3864 = vsel %vm3863, %v3855, %v3860
        %v3865 = vmul.f32 %v3729, %v3794
        %v3866 = vmul.f32 %v3730, %v3804
        %v3867 = vmul.f32 %v3731, %v3814
        %v3868 = vmul.f32 %v3732, %v3824
        %v3869 = vmul.f32 %v3733, %v3834
        %v3870 = vmul.f32 %v3734, %v3844
        %v3871 = vmul.f32 %v3735, %v3854
        %v3872 = vmul.f32 %v3736, %v3864
        %v3873 = vperm.slane %v725, 2
        %v3874 = vmul.f32 %v3865, %v3873
        %v3875 = vmul.f32 %v3866, %v3873
        %v3876 = vmul.f32 %v3867, %v3873
        %v3877 = vmul.f32 %v3868, %v3873
        %v3878 = vmul.f32 %v3869, %v3873
        %v3879 = vmul.f32 %v3870, %v3873
        %v3880 = vmul.f32 %v3871, %v3873
        %v3881 = vmul.f32 %v3872, %v3873
        %v3882 = vperm.slane %v725, 3
        %v3883 = vadd.f32 %v3874, %v3882
        %v3884 = vadd.f32 %v3875, %v3882
        %v3885 = vadd.f32 %v3876, %v3882
        %v3886 = vadd.f32 %v3877, %v3882
        %v3887 = vadd.f32 %v3878, %v3882
        %v3888 = vadd.f32 %v3879, %v3882
        %v3889 = vadd.f32 %v3880, %v3882
        %v3890 = vadd.f32 %v3881, %v3882
        %v3891 = vld [vmem:[%s14] sm:$0xff]
        %v3892 = vld [vmem:[%s14 + $0x8] sm:$0xff]
        %v3893 = vld [vmem:[%s14 + $0x10] sm:$0xff]
        %v3894 = vld [vmem:[%s14 + $0x18] sm:$0xff]
        %v3895 = vperm.slane %v728, 1
        %v3897 = vsel %vm826, %v3883, 0
        %v3900 = vsel %vm826, %v3884, 0
        %v3903 = vsel %vm826, %v3885, 0
        %v3906 = vsel %vm826, %v3886, 0
        %v3909 = vsel %vm826, %v3887, 0
        %v3912 = vsel %vm826, %v3888, 0
        %v3915 = vsel %vm826, %v3889, 0
        %v3918 = vsel %vm826, %v3890, 0
        %3920 = vmatpush.msra.mxu0 0.0
        %3921 = vmatpush.msra.mxu0 0.0
        %3922 = vmatpush.msra.mxu0 0.0
        %3923 = vmatpush.msra.mxu0 0.0
        %3924 = vmatpush.msra.mxu0 0.0
        %3925 = vmatpush.msra.mxu0 0.0
        %3926 = vmatpush.msra.mxu0 0.0
        %3927 = vmatpush.msra.mxu0 0.0
        %3928 = vmatpush.msra.mxu0 0.0
        %3929 = vmatpush.msra.mxu0 0.0
        %3930 = vmatpush.msra.mxu0 0.0
        %3931 = vmatpush.msra.mxu0 0.0
        %3932 = vmatpush.msra.mxu0 %v3894
        %3933 = vmatpush.msra.mxu0 %v3893
        %3934 = vmatpush.msra.mxu0 %v3892
        %3935 = vmatpush.msra.mxu0 %v3891
        %3936 = vmatmul.f32.gmra.mxu0 %v3897
        %v3937 = vpop.f32.mrf.mxu0
        %v3938 = vadd.f32 %v3895, %v3937
        %3939 = vmatmul.f32.gmra.mxu0 %v3900
        %v3940 = vpop.f32.mrf.mxu0
        %v3941 = vadd.f32 %v3895, %v3940
        %3942 = vmatmul.f32.gmra.mxu0 %v3903
        %v3943 = vpop.f32.mrf.mxu0
        %v3944 = vadd.f32 %v3895, %v3943
        %3945 = vmatmul.f32.gmra.mxu0 %v3906
        %v3946 = vpop.f32.mrf.mxu0
        %v3947 = vadd.f32 %v3895, %v3946
        %3948 = vmatmul.f32.gmra.mxu0 %v3909
        %v3949 = vpop.f32.mrf.mxu0
        %v3950 = vadd.f32 %v3895, %v3949
        %3951 = vmatmul.f32.gmra.mxu0 %v3912
        %v3952 = vpop.f32.mrf.mxu0
        %v3953 = vadd.f32 %v3895, %v3952
        %3954 = vmatmul.f32.gmra.mxu0 %v3915
        %v3955 = vpop.f32.mrf.mxu0
        %v3956 = vadd.f32 %v3895, %v3955
        %3957 = vmatmul.f32.gmra.mxu0 %v3918
        %v3958 = vpop.f32.mrf.mxu0
        %v3959 = vadd.f32 %v3895, %v3958
        %3960 = vdwg.mxu0
        %v3961 = vmul.f32 %v3938, 0.5
        %v3962 = vmul.f32 %v3941, 0.5
        %v3963 = vmul.f32 %v3944, 0.5
        %v3964 = vmul.f32 %v3947, 0.5
        %v3965 = vmul.f32 %v3950, 0.5
        %v3966 = vmul.f32 %v3953, 0.5
        %v3967 = vmul.f32 %v3956, 0.5
        %v3968 = vmul.f32 %v3959, 0.5
        %v3969 = vmul.f32 %v3938, 0.70710677
        %v3970 = vmul.f32 %v3941, 0.70710677
        %v3971 = vmul.f32 %v3944, 0.70710677
        %v3972 = vmul.f32 %v3947, 0.70710677
        %v3973 = vmul.f32 %v3950, 0.70710677
        %v3974 = vmul.f32 %v3953, 0.70710677
        %v3975 = vmul.f32 %v3956, 0.70710677
        %v3976 = vmul.f32 %v3959, 0.70710677
        %v3977 = vmul.f32 %v3969, %v3969
        %v3978 = vmin.f32 16.0, %v3977
        %v3979 = vmul.f32 %v3978, 2.1237322e-06
        %v3980 = vadd.f32 %v3979, 0.00028619796
        %v3981 = vmul.f32 %v3978, %v3980
        %v3982 = vadd.f32 %v3981, 0.0036580483
        %v3983 = vmul.f32 %v3978, %v3982
        %v3984 = vadd.f32 %v3983, 0.05243302
        %v3985 = vmul.f32 %v3978, %v3984
        %v3986 = vadd.f32 %v3985, 0.18741608
        %v3987 = vmul.f32 %v3978, %v3986
        %v3988 = vadd.f32 %v3987, 1.1283791
        %v3989 = vmul.f32 %v3969, %v3988
        %v3990 = vmul.f32 %v3978, 3.8918573e-05
        %v3991 = vadd.f32 %v3990, 0.001143296
        %v3992 = vmul.f32 %v3978, %v3991
        %v3993 = vadd.f32 %v3992, 0.014752088
        %v3994 = vmul.f32 %v3978, %v3993
        %v3995 = vadd.f32 %v3994, 0.112945676
        %v3996 = vmul.f32 %v3978, %v3995
        %v3997 = vadd.f32 %v3996, 0.4994258
        %v3998 = vmul.f32 %v3978, %v3997
        %v3999 = vadd.f32 %v3998, 1.0
        %v4000 = vrcp.pop %v3999
        %v4001 = vmul.f32 %v3999, %v4000
        %v4002 = vsub.f32 1.0, %v4001
        %v4003 = vmul.f32 %v4000, %v4002
        %v4004 = vadd.f32 %v4000, %v4003
        %vm4005 = vweird.f32 %v3999
        %vm4006 = vweird.f32 %v4000
        %vm4007 = vmor %vm4005, %vm4006
        %v4008 = vsel %vm4007, %v4000, %v4004
        %v4009 = vand.u32 2147483647, %v3999
        %vm4010 = vcmp.eq.f32.partialorder %v4009, 8.507059e+37
        %v4011 = vand.u32 %v3999, 2147483648
        %v4012 = vor.u32 1.1754944e-38, %v4011
        %v4013 = vsel %vm4010, %v4012, %v4008
        %v4014 = vmul.f32 %v3989, %v4013
        %v4015 = vmin.f32 %v4014, 1.0
        %v4016 = vmax.f32 %v4015, -1.0
        %v4017 = vmul.f32 %v3970, %v3970
        %v4018 = vmin.f32 16.0, %v4017
        %v4019 = vmul.f32 %v4018, 2.1237322e-06
        %v4020 = vadd.f32 %v4019, 0.00028619796
        %v4021 = vmul.f32 %v4018, %v4020
        %v4022 = vadd.f32 %v4021, 0.0036580483
        %v4023 = vmul.f32 %v4018, %v4022
        %v4024 = vadd.f32 %v4023, 0.05243302
        %v4025 = vmul.f32 %v4018, %v4024
        %v4026 = vadd.f32 %v4025, 0.18741608
        %v4027 = vmul.f32 %v4018, %v4026
        %v4028 = vadd.f32 %v4027, 1.1283791
        %v4029 = vmul.f32 %v3970, %v4028
        %v4030 = vmul.f32 %v4018, 3.8918573e-05
        %v4031 = vadd.f32 %v4030, 0.001143296
        %v4032 = vmul.f32 %v4018, %v4031
        %v4033 = vadd.f32 %v4032, 0.014752088
        %v4034 = vmul.f32 %v4018, %v4033
        %v4035 = vadd.f32 %v4034, 0.112945676
        %v4036 = vmul.f32 %v4018, %v4035
        %v4037 = vadd.f32 %v4036, 0.4994258
        %v4038 = vmul.f32 %v4018, %v4037
        %v4039 = vadd.f32 %v4038, 1.0
        %v4040 = vrcp.pop %v4039
        %v4041 = vmul.f32 %v4039, %v4040
        %v4042 = vsub.f32 1.0, %v4041
        %v4043 = vmul.f32 %v4040, %v4042
        %v4044 = vadd.f32 %v4040, %v4043
        %vm4045 = vweird.f32 %v4039
        %vm4046 = vweird.f32 %v4040
        %vm4047 = vmor %vm4045, %vm4046
        %v4048 = vsel %vm4047, %v4040, %v4044
        %v4049 = vand.u32 2147483647, %v4039
        %vm4050 = vcmp.eq.f32.partialorder %v4049, 8.507059e+37
        %v4051 = vand.u32 %v4039, 2147483648
        %v4052 = vor.u32 1.1754944e-38, %v4051
        %v4053 = vsel %vm4050, %v4052, %v4048
        %v4054 = vmul.f32 %v4029, %v4053
        %v4055 = vmin.f32 %v4054, 1.0
        %v4056 = vmax.f32 %v4055, -1.0
        %v4057 = vmul.f32 %v3971, %v3971
        %v4058 = vmin.f32 16.0, %v4057
        %v4059 = vmul.f32 %v4058, 2.1237322e-06
        %v4060 = vadd.f32 %v4059, 0.00028619796
        %v4061 = vmul.f32 %v4058, %v4060
        %v4062 = vadd.f32 %v4061, 0.0036580483
        %v4063 = vmul.f32 %v4058, %v4062
        %v4064 = vadd.f32 %v4063, 0.05243302
        %v4065 = vmul.f32 %v4058, %v4064
        %v4066 = vadd.f32 %v4065, 0.18741608
        %v4067 = vmul.f32 %v4058, %v4066
        %v4068 = vadd.f32 %v4067, 1.1283791
        %v4069 = vmul.f32 %v3971, %v4068
        %v4070 = vmul.f32 %v4058, 3.8918573e-05
        %v4071 = vadd.f32 %v4070, 0.001143296
        %v4072 = vmul.f32 %v4058, %v4071
        %v4073 = vadd.f32 %v4072, 0.014752088
        %v4074 = vmul.f32 %v4058, %v4073
        %v4075 = vadd.f32 %v4074, 0.112945676
        %v4076 = vmul.f32 %v4058, %v4075
        %v4077 = vadd.f32 %v4076, 0.4994258
        %v4078 = vmul.f32 %v4058, %v4077
        %v4079 = vadd.f32 %v4078, 1.0
        %v4080 = vrcp.pop %v4079
        %v4081 = vmul.f32 %v4079, %v4080
        %v4082 = vsub.f32 1.0, %v4081
        %v4083 = vmul.f32 %v4080, %v4082
        %v4084 = vadd.f32 %v4080, %v4083
        %vm4085 = vweird.f32 %v4079
        %vm4086 = vweird.f32 %v4080
        %vm4087 = vmor %vm4085, %vm4086
        %v4088 = vsel %vm4087, %v4080, %v4084
        %v4089 = vand.u32 2147483647, %v4079
        %vm4090 = vcmp.eq.f32.partialorder %v4089, 8.507059e+37
        %v4091 = vand.u32 %v4079, 2147483648
        %v4092 = vor.u32 1.1754944e-38, %v4091
        %v4093 = vsel %vm4090, %v4092, %v4088
        %v4094 = vmul.f32 %v4069, %v4093
        %v4095 = vmin.f32 %v4094, 1.0
        %v4096 = vmax.f32 %v4095, -1.0
        %v4097 = vmul.f32 %v3972, %v3972
        %v4098 = vmin.f32 16.0, %v4097
        %v4099 = vmul.f32 %v4098, 2.1237322e-06
        %v4100 = vadd.f32 %v4099, 0.00028619796
        %v4101 = vmul.f32 %v4098, %v4100
        %v4102 = vadd.f32 %v4101, 0.0036580483
        %v4103 = vmul.f32 %v4098, %v4102
        %v4104 = vadd.f32 %v4103, 0.05243302
        %v4105 = vmul.f32 %v4098, %v4104
        %v4106 = vadd.f32 %v4105, 0.18741608
        %v4107 = vmul.f32 %v4098, %v4106
        %v4108 = vadd.f32 %v4107, 1.1283791
        %v4109 = vmul.f32 %v3972, %v4108
        %v4110 = vmul.f32 %v4098, 3.8918573e-05
        %v4111 = vadd.f32 %v4110, 0.001143296
        %v4112 = vmul.f32 %v4098, %v4111
        %v4113 = vadd.f32 %v4112, 0.014752088
        %v4114 = vmul.f32 %v4098, %v4113
        %v4115 = vadd.f32 %v4114, 0.112945676
        %v4116 = vmul.f32 %v4098, %v4115
        %v4117 = vadd.f32 %v4116, 0.4994258
        %v4118 = vmul.f32 %v4098, %v4117
        %v4119 = vadd.f32 %v4118, 1.0
        %v4120 = vrcp.pop %v4119
        %v4121 = vmul.f32 %v4119, %v4120
        %v4122 = vsub.f32 1.0, %v4121
        %v4123 = vmul.f32 %v4120, %v4122
        %v4124 = vadd.f32 %v4120, %v4123
        %vm4125 = vweird.f32 %v4119
        %vm4126 = vweird.f32 %v4120
        %vm4127 = vmor %vm4125, %vm4126
        %v4128 = vsel %vm4127, %v4120, %v4124
        %v4129 = vand.u32 2147483647, %v4119
        %vm4130 = vcmp.eq.f32.partialorder %v4129, 8.507059e+37
        %v4131 = vand.u32 %v4119, 2147483648
        %v4132 = vor.u32 1.1754944e-38, %v4131
        %v4133 = vsel %vm4130, %v4132, %v4128
        %v4134 = vmul.f32 %v4109, %v4133
        %v4135 = vmin.f32 %v4134, 1.0
        %v4136 = vmax.f32 %v4135, -1.0
        %v4137 = vmul.f32 %v3973, %v3973
        %v4138 = vmin.f32 16.0, %v4137
        %v4139 = vmul.f32 %v4138, 2.1237322e-06
        %v4140 = vadd.f32 %v4139, 0.00028619796
        %v4141 = vmul.f32 %v4138, %v4140
        %v4142 = vadd.f32 %v4141, 0.0036580483
        %v4143 = vmul.f32 %v4138, %v4142
        %v4144 = vadd.f32 %v4143, 0.05243302
        %v4145 = vmul.f32 %v4138, %v4144
        %v4146 = vadd.f32 %v4145, 0.18741608
        %v4147 = vmul.f32 %v4138, %v4146
        %v4148 = vadd.f32 %v4147, 1.1283791
        %v4149 = vmul.f32 %v3973, %v4148
        %v4150 = vmul.f32 %v4138, 3.8918573e-05
        %v4151 = vadd.f32 %v4150, 0.001143296
        %v4152 = vmul.f32 %v4138, %v4151
        %v4153 = vadd.f32 %v4152, 0.014752088
        %v4154 = vmul.f32 %v4138, %v4153
        %v4155 = vadd.f32 %v4154, 0.112945676
        %v4156 = vmul.f32 %v4138, %v4155
        %v4157 = vadd.f32 %v4156, 0.4994258
        %v4158 = vmul.f32 %v4138, %v4157
        %v4159 = vadd.f32 %v4158, 1.0
        %v4160 = vrcp.pop %v4159
        %v4161 = vmul.f32 %v4159, %v4160
        %v4162 = vsub.f32 1.0, %v4161
        %v4163 = vmul.f32 %v4160, %v4162
        %v4164 = vadd.f32 %v4160, %v4163
        %vm4165 = vweird.f32 %v4159
        %vm4166 = vweird.f32 %v4160
        %vm4167 = vmor %vm4165, %vm4166
        %v4168 = vsel %vm4167, %v4160, %v4164
        %v4169 = vand.u32 2147483647, %v4159
        %vm4170 = vcmp.eq.f32.partialorder %v4169, 8.507059e+37
        %v4171 = vand.u32 %v4159, 2147483648
        %v4172 = vor.u32 1.1754944e-38, %v4171
        %v4173 = vsel %vm4170, %v4172, %v4168
        %v4174 = vmul.f32 %v4149, %v4173
        %v4175 = vmin.f32 %v4174, 1.0
        %v4176 = vmax.f32 %v4175, -1.0
        %v4177 = vmul.f32 %v3974, %v3974
        %v4178 = vmin.f32 16.0, %v4177
        %v4179 = vmul.f32 %v4178, 2.1237322e-06
        %v4180 = vadd.f32 %v4179, 0.00028619796
        %v4181 = vmul.f32 %v4178, %v4180
        %v4182 = vadd.f32 %v4181, 0.0036580483
        %v4183 = vmul.f32 %v4178, %v4182
        %v4184 = vadd.f32 %v4183, 0.05243302
        %v4185 = vmul.f32 %v4178, %v4184
        %v4186 = vadd.f32 %v4185, 0.18741608
        %v4187 = vmul.f32 %v4178, %v4186
        %v4188 = vadd.f32 %v4187, 1.1283791
        %v4189 = vmul.f32 %v3974, %v4188
        %v4190 = vmul.f32 %v4178, 3.8918573e-05
        %v4191 = vadd.f32 %v4190, 0.001143296
        %v4192 = vmul.f32 %v4178, %v4191
        %v4193 = vadd.f32 %v4192, 0.014752088
        %v4194 = vmul.f32 %v4178, %v4193
        %v4195 = vadd.f32 %v4194, 0.112945676
        %v4196 = vmul.f32 %v4178, %v4195
        %v4197 = vadd.f32 %v4196, 0.4994258
        %v4198 = vmul.f32 %v4178, %v4197
        %v4199 = vadd.f32 %v4198, 1.0
        %v4200 = vrcp.pop %v4199
        %v4201 = vmul.f32 %v4199, %v4200
        %v4202 = vsub.f32 1.0, %v4201
        %v4203 = vmul.f32 %v4200, %v4202
        %v4204 = vadd.f32 %v4200, %v4203
        %vm4205 = vweird.f32 %v4199
        %vm4206 = vweird.f32 %v4200
        %vm4207 = vmor %vm4205, %vm4206
        %v4208 = vsel %vm4207, %v4200, %v4204
        %v4209 = vand.u32 2147483647, %v4199
        %vm4210 = vcmp.eq.f32.partialorder %v4209, 8.507059e+37
        %v4211 = vand.u32 %v4199, 2147483648
        %v4212 = vor.u32 1.1754944e-38, %v4211
        %v4213 = vsel %vm4210, %v4212, %v4208
        %v4214 = vmul.f32 %v4189, %v4213
        %v4215 = vmin.f32 %v4214, 1.0
        %v4216 = vmax.f32 %v4215, -1.0
        %v4217 = vmul.f32 %v3975, %v3975
        %v4218 = vmin.f32 16.0, %v4217
        %v4219 = vmul.f32 %v4218, 2.1237322e-06
        %v4220 = vadd.f32 %v4219, 0.00028619796
        %v4221 = vmul.f32 %v4218, %v4220
        %v4222 = vadd.f32 %v4221, 0.0036580483
        %v4223 = vmul.f32 %v4218, %v4222
        %v4224 = vadd.f32 %v4223, 0.05243302
        %v4225 = vmul.f32 %v4218, %v4224
        %v4226 = vadd.f32 %v4225, 0.18741608
        %v4227 = vmul.f32 %v4218, %v4226
        %v4228 = vadd.f32 %v4227, 1.1283791
        %v4229 = vmul.f32 %v3975, %v4228
        %v4230 = vmul.f32 %v4218, 3.8918573e-05
        %v4231 = vadd.f32 %v4230, 0.001143296
        %v4232 = vmul.f32 %v4218, %v4231
        %v4233 = vadd.f32 %v4232, 0.014752088
        %v4234 = vmul.f32 %v4218, %v4233
        %v4235 = vadd.f32 %v4234, 0.112945676
        %v4236 = vmul.f32 %v4218, %v4235
        %v4237 = vadd.f32 %v4236, 0.4994258
        %v4238 = vmul.f32 %v4218, %v4237
        %v4239 = vadd.f32 %v4238, 1.0
        %v4240 = vrcp.pop %v4239
        %v4241 = vmul.f32 %v4239, %v4240
        %v4242 = vsub.f32 1.0, %v4241
        %v4243 = vmul.f32 %v4240, %v4242
        %v4244 = vadd.f32 %v4240, %v4243
        %vm4245 = vweird.f32 %v4239
        %vm4246 = vweird.f32 %v4240
        %vm4247 = vmor %vm4245, %vm4246
        %v4248 = vsel %vm4247, %v4240, %v4244
        %v4249 = vand.u32 2147483647, %v4239
        %vm4250 = vcmp.eq.f32.partialorder %v4249, 8.507059e+37
        %v4251 = vand.u32 %v4239, 2147483648
        %v4252 = vor.u32 1.1754944e-38, %v4251
        %v4253 = vsel %vm4250, %v4252, %v4248
        %v4254 = vmul.f32 %v4229, %v4253
        %v4255 = vmin.f32 %v4254, 1.0
        %v4256 = vmax.f32 %v4255, -1.0
        %v4257 = vmul.f32 %v3976, %v3976
        %v4258 = vmin.f32 16.0, %v4257
        %v4259 = vmul.f32 %v4258, 2.1237322e-06
        %v4260 = vadd.f32 %v4259, 0.00028619796
        %v4261 = vmul.f32 %v4258, %v4260
        %v4262 = vadd.f32 %v4261, 0.0036580483
        %v4263 = vmul.f32 %v4258, %v4262
        %v4264 = vadd.f32 %v4263, 0.05243302
        %v4265 = vmul.f32 %v4258, %v4264
        %v4266 = vadd.f32 %v4265, 0.18741608
        %v4267 = vmul.f32 %v4258, %v4266
        %v4268 = vadd.f32 %v4267, 1.1283791
        %v4269 = vmul.f32 %v3976, %v4268
        %v4270 = vmul.f32 %v4258, 3.8918573e-05
        %v4271 = vadd.f32 %v4270, 0.001143296
        %v4272 = vmul.f32 %v4258, %v4271
        %v4273 = vadd.f32 %v4272, 0.014752088
        %v4274 = vmul.f32 %v4258, %v4273
        %v4275 = vadd.f32 %v4274, 0.112945676
        %v4276 = vmul.f32 %v4258, %v4275
        %v4277 = vadd.f32 %v4276, 0.4994258
        %v4278 = vmul.f32 %v4258, %v4277
        %v4279 = vadd.f32 %v4278, 1.0
        %v4280 = vrcp.pop %v4279
        %v4281 = vmul.f32 %v4279, %v4280
        %v4282 = vsub.f32 1.0, %v4281
        %v4283 = vmul.f32 %v4280, %v4282
        %v4284 = vadd.f32 %v4280, %v4283
        %vm4285 = vweird.f32 %v4279
        %vm4286 = vweird.f32 %v4280
        %vm4287 = vmor %vm4285, %vm4286
        %v4288 = vsel %vm4287, %v4280, %v4284
        %v4289 = vand.u32 2147483647, %v4279
        %vm4290 = vcmp.eq.f32.partialorder %v4289, 8.507059e+37
        %v4291 = vand.u32 %v4279, 2147483648
        %v4292 = vor.u32 1.1754944e-38, %v4291
        %v4293 = vsel %vm4290, %v4292, %v4288
        %v4294 = vmul.f32 %v4269, %v4293
        %v4295 = vmin.f32 %v4294, 1.0
        %v4296 = vmax.f32 %v4295, -1.0
        %v4297 = vadd.f32 %v4016, 1.0
        %v4298 = vadd.f32 %v4056, 1.0
        %v4299 = vadd.f32 %v4096, 1.0
        %v4300 = vadd.f32 %v4136, 1.0
        %v4301 = vadd.f32 %v4176, 1.0
        %v4302 = vadd.f32 %v4216, 1.0
        %v4303 = vadd.f32 %v4256, 1.0
        %v4304 = vadd.f32 %v4296, 1.0
        %v4305 = vmul.f32 %v3961, %v4297
        %v4306 = vmul.f32 %v3962, %v4298
        %v4307 = vmul.f32 %v3963, %v4299
        %v4308 = vmul.f32 %v3964, %v4300
        %v4309 = vmul.f32 %v3965, %v4301
        %v4310 = vmul.f32 %v3966, %v4302
        %v4311 = vmul.f32 %v3967, %v4303
        %v4312 = vmul.f32 %v3968, %v4304
        %v4313 = vld [vmem:[%s15] sm:$0xff]
        %v4314 = vld [vmem:[%s15 + $0x8] sm:$0xff]
        %v4315 = vld [vmem:[%s15 + $0x10] sm:$0xff]
        %v4316 = vld [vmem:[%s15 + $0x18] sm:$0xff]
        %v4317 = vld [vmem:[%s15 + $0x20] sm:$0xff]
        %v4318 = vld [vmem:[%s15 + $0x28] sm:$0xff]
        %v4319 = vld [vmem:[%s15 + $0x30] sm:$0xff]
        %v4320 = vld [vmem:[%s15 + $0x38] sm:$0xff]
        %v4321 = vld [vmem:[%s15 + $0x40] sm:$0xff]
        %v4322 = vld [vmem:[%s15 + $0x48] sm:$0xff]
        %v4323 = vld [vmem:[%s15 + $0x50] sm:$0xff]
        %v4324 = vld [vmem:[%s15 + $0x58] sm:$0xff]
        %v4325 = vld [vmem:[%s15 + $0x60] sm:$0xff]
        %v4326 = vld [vmem:[%s15 + $0x68] sm:$0xff]
        %v4327 = vld [vmem:[%s15 + $0x70] sm:$0xff]
        %v4328 = vld [vmem:[%s15 + $0x78] sm:$0xff]
        %4329 = vmatpush.msra.mxu0 %v4328
        %4330 = vmatpush.msra.mxu0 %v4327
        %4331 = vmatpush.msra.mxu0 %v4326
        %4332 = vmatpush.msra.mxu0 %v4325
        %4333 = vmatpush.msra.mxu0 %v4324
        %4334 = vmatpush.msra.mxu0 %v4323
        %4335 = vmatpush.msra.mxu0 %v4322
        %4336 = vmatpush.msra.mxu0 %v4321
        %4337 = vmatpush.msra.mxu0 %v4320
        %4338 = vmatpush.msra.mxu0 %v4319
        %4339 = vmatpush.msra.mxu0 %v4318
        %4340 = vmatpush.msra.mxu0 %v4317
        %4341 = vmatpush.msra.mxu0 %v4316
        %4342 = vmatpush.msra.mxu0 %v4315
        %4343 = vmatpush.msra.mxu0 %v4314
        %4344 = vmatpush.msra.mxu0 %v4313
        %4345 = vmatmul.f32.gmra.mxu0 %v4305
        %v4346 = vpop.f32.mrf.mxu0
        %v4347 = vadd.f32 0.0, %v4346
        %4348 = vmatmul.f32.gmra.mxu0 %v4306
        %v4349 = vpop.f32.mrf.mxu0
        %v4350 = vadd.f32 0.0, %v4349
        %4351 = vmatmul.f32.gmra.mxu0 %v4307
        %v4352 = vpop.f32.mrf.mxu0
        %v4353 = vadd.f32 0.0, %v4352
        %4354 = vmatmul.f32.gmra.mxu0 %v4308
        %v4355 = vpop.f32.mrf.mxu0
        %v4356 = vadd.f32 0.0, %v4355
        %4357 = vmatmul.f32.gmra.mxu0 %v4309
        %v4358 = vpop.f32.mrf.mxu0
        %v4359 = vadd.f32 0.0, %v4358
        %4360 = vmatmul.f32.gmra.mxu0 %v4310
        %v4361 = vpop.f32.mrf.mxu0
        %v4362 = vadd.f32 0.0, %v4361
        %4363 = vmatmul.f32.gmra.mxu0 %v4311
        %v4364 = vpop.f32.mrf.mxu0
        %v4365 = vadd.f32 0.0, %v4364
        %4366 = vmatmul.f32.gmra.mxu0 %v4312
        %v4367 = vpop.f32.mrf.mxu0
        %v4368 = vadd.f32 0.0, %v4367
        %4369 = vdwg.mxu0
        %v4370 = vadd.f32 %v3689, %v4347
        %v4371 = vadd.f32 %v3690, %v4350
        %v4372 = vadd.f32 %v3691, %v4353
        %v4373 = vadd.f32 %v3692, %v4356
        %v4374 = vadd.f32 %v3693, %v4359
        %v4375 = vadd.f32 %v3694, %v4362
        %v4376 = vadd.f32 %v3695, %v4365
        %v4377 = vadd.f32 %v3696, %v4368
        %v4378 = vperm.slane %v725, 4
        %v4379 = vadd.f32 %v4370, %v4378
        %v4380 = vadd.f32 %v4371, %v4378
        %v4381 = vadd.f32 %v4372, %v4378
        %v4382 = vadd.f32 %v4373, %v4378
        %v4383 = vadd.f32 %v4374, %v4378
        %v4384 = vadd.f32 %v4375, %v4378
        %v4385 = vadd.f32 %v4376, %v4378
        %v4386 = vadd.f32 %v4377, %v4378
        %v4387 = vsel %vm826, %v4379, 0.0
        %4388 = vadd.xlane.f32.xlu0 %v4387
        %v4389 = vpop.xlane.xlu0 %4388
        %v4390 = vsel %vm826, %v4380, 0.0
        %4391 = vadd.xlane.f32.xlu0 %v4390
        %v4392 = vpop.xlane.xlu0 %4391
        %v4393 = vsel %vm826, %v4381, 0.0
        %4394 = vadd.xlane.f32.xlu0 %v4393
        %v4395 = vpop.xlane.xlu0 %4394
        %v4396 = vsel %vm826, %v4382, 0.0
        %4397 = vadd.xlane.f32.xlu0 %v4396
        %v4398 = vpop.xlane.xlu0 %4397
        %v4399 = vsel %vm826, %v4383, 0.0
        %4400 = vadd.xlane.f32.xlu0 %v4399
        %v4401 = vpop.xlane.xlu0 %4400
        %v4402 = vsel %vm826, %v4384, 0.0
        %4403 = vadd.xlane.f32.xlu0 %v4402
        %v4404 = vpop.xlane.xlu0 %4403
        %v4405 = vsel %vm826, %v4385, 0.0
        %4406 = vadd.xlane.f32.xlu0 %v4405
        %v4407 = vpop.xlane.xlu0 %4406
        %v4408 = vsel %vm826, %v4386, 0.0
        %4409 = vadd.xlane.f32.xlu0 %v4408
        %v4410 = vpop.xlane.xlu0 %4409
        %v4411 = vmul.f32 %v4389, %v857
        %v4412 = vmul.f32 %v4392, %v857
        %v4413 = vmul.f32 %v4395, %v857
        %v4414 = vmul.f32 %v4398, %v857
        %v4415 = vmul.f32 %v4401, %v857
        %v4416 = vmul.f32 %v4404, %v857
        %v4417 = vmul.f32 %v4407, %v857
        %v4418 = vmul.f32 %v4410, %v857
        %v4419 = vsub.f32 %v4379, %v4411
        %v4420 = vsub.f32 %v4380, %v4412
        %v4421 = vsub.f32 %v4381, %v4413
        %v4422 = vsub.f32 %v4382, %v4414
        %v4423 = vsub.f32 %v4383, %v4415
        %v4424 = vsub.f32 %v4384, %v4416
        %v4425 = vsub.f32 %v4385, %v4417
        %v4426 = vsub.f32 %v4386, %v4418
        %v4427 = vmul.f32 %v4419, %v4419
        %v4428 = vmul.f32 %v4420, %v4420
        %v4429 = vmul.f32 %v4421, %v4421
        %v4430 = vmul.f32 %v4422, %v4422
        %v4431 = vmul.f32 %v4423, %v4423
        %v4432 = vmul.f32 %v4424, %v4424
        %v4433 = vmul.f32 %v4425, %v4425
        %v4434 = vmul.f32 %v4426, %v4426
        %v4435 = vsel %vm826, %v4427, 0.0
        %4436 = vadd.xlane.f32.xlu0 %v4435
        %v4437 = vpop.xlane.xlu0 %4436
        %v4438 = vsel %vm826, %v4428, 0.0
        %4439 = vadd.xlane.f32.xlu0 %v4438
        %v4440 = vpop.xlane.xlu0 %4439
        %v4441 = vsel %vm826, %v4429, 0.0
        %4442 = vadd.xlane.f32.xlu0 %v4441
        %v4443 = vpop.xlane.xlu0 %4442
        %v4444 = vsel %vm826, %v4430, 0.0
        %4445 = vadd.xlane.f32.xlu0 %v4444
        %v4446 = vpop.xlane.xlu0 %4445
        %v4447 = vsel %vm826, %v4431, 0.0
        %4448 = vadd.xlane.f32.xlu0 %v4447
        %v4449 = vpop.xlane.xlu0 %4448
        %v4450 = vsel %vm826, %v4432, 0.0
        %4451 = vadd.xlane.f32.xlu0 %v4450
        %v4452 = vpop.xlane.xlu0 %4451
        %v4453 = vsel %vm826, %v4433, 0.0
        %4454 = vadd.xlane.f32.xlu0 %v4453
        %v4455 = vpop.xlane.xlu0 %4454
        %v4456 = vsel %vm826, %v4434, 0.0
        %4457 = vadd.xlane.f32.xlu0 %v4456
        %v4458 = vpop.xlane.xlu0 %4457
        %v4459 = vmul.f32 %v4437, %v857
        %v4460 = vmul.f32 %v4440, %v857
        %v4461 = vmul.f32 %v4443, %v857
        %v4462 = vmul.f32 %v4446, %v857
        %v4463 = vmul.f32 %v4449, %v857
        %v4464 = vmul.f32 %v4452, %v857
        %v4465 = vmul.f32 %v4455, %v857
        %v4466 = vmul.f32 %v4458, %v857
        %v4467 = vadd.f32 %v4459, 1e-05
        %v4468 = vadd.f32 %v4460, 1e-05
        %v4469 = vadd.f32 %v4461, 1e-05
        %v4470 = vadd.f32 %v4462, 1e-05
        %v4471 = vadd.f32 %v4463, 1e-05
        %v4472 = vadd.f32 %v4464, 1e-05
        %v4473 = vadd.f32 %v4465, 1e-05
        %v4474 = vadd.f32 %v4466, 1e-05
        %v4475 = vrsqrt.pop %v4467
        %v4476 = vmul.f32 %v4475, %v4467
        %v4477 = vmul.f32 %v4476, %v4475
        %v4478 = vmul.f32 0.5, %v4477
        %v4479 = vsub.f32 1.5, %v4478
        %v4480 = vmul.f32 %v4475, %v4479
        %vm4481 = vweird.f32 %v4467
        %vm4482 = vweird.f32 %v4475
        %vm4483 = vmor %vm4481, %vm4482
        %v4484 = vsel %vm4483, %v4475, %v4480
        %v4485 = vrsqrt.pop %v4468
        %v4486 = vmul.f32 %v4485, %v4468
        %v4487 = vmul.f32 %v4486, %v4485
        %v4488 = vmul.f32 0.5, %v4487
        %v4489 = vsub.f32 1.5, %v4488
        %v4490 = vmul.f32 %v4485, %v4489
        %vm4491 = vweird.f32 %v4468
        %vm4492 = vweird.f32 %v4485
        %vm4493 = vmor %vm4491, %vm4492
        %v4494 = vsel %vm4493, %v4485, %v4490
        %v4495 = vrsqrt.pop %v4469
        %v4496 = vmul.f32 %v4495, %v4469
        %v4497 = vmul.f32 %v4496, %v4495
        %v4498 = vmul.f32 0.5, %v4497
        %v4499 = vsub.f32 1.5, %v4498
        %v4500 = vmul.f32 %v4495, %v4499
        %vm4501 = vweird.f32 %v4469
        %vm4502 = vweird.f32 %v4495
        %vm4503 = vmor %vm4501, %vm4502
        %v4504 = vsel %vm4503, %v4495, %v4500
        %v4505 = vrsqrt.pop %v4470
        %v4506 = vmul.f32 %v4505, %v4470
        %v4507 = vmul.f32 %v4506, %v4505
        %v4508 = vmul.f32 0.5, %v4507
        %v4509 = vsub.f32 1.5, %v4508
        %v4510 = vmul.f32 %v4505, %v4509
        %vm4511 = vweird.f32 %v4470
        %vm4512 = vweird.f32 %v4505
        %vm4513 = vmor %vm4511, %vm4512
        %v4514 = vsel %vm4513, %v4505, %v4510
        %v4515 = vrsqrt.pop %v4471
        %v4516 = vmul.f32 %v4515, %v4471
        %v4517 = vmul.f32 %v4516, %v4515
        %v4518 = vmul.f32 0.5, %v4517
        %v4519 = vsub.f32 1.5, %v4518
        %v4520 = vmul.f32 %v4515, %v4519
        %vm4521 = vweird.f32 %v4471
        %vm4522 = vweird.f32 %v4515
        %vm4523 = vmor %vm4521, %vm4522
        %v4524 = vsel %vm4523, %v4515, %v4520
        %v4525 = vrsqrt.pop %v4472
        %v4526 = vmul.f32 %v4525, %v4472
        %v4527 = vmul.f32 %v4526, %v4525
        %v4528 = vmul.f32 0.5, %v4527
        %v4529 = vsub.f32 1.5, %v4528
        %v4530 = vmul.f32 %v4525, %v4529
        %vm4531 = vweird.f32 %v4472
        %vm4532 = vweird.f32 %v4525
        %vm4533 = vmor %vm4531, %vm4532
        %v4534 = vsel %vm4533, %v4525, %v4530
        %v4535 = vrsqrt.pop %v4473
        %v4536 = vmul.f32 %v4535, %v4473
        %v4537 = vmul.f32 %v4536, %v4535
        %v4538 = vmul.f32 0.5, %v4537
        %v4539 = vsub.f32 1.5, %v4538
        %v4540 = vmul.f32 %v4535, %v4539
        %vm4541 = vweird.f32 %v4473
        %vm4542 = vweird.f32 %v4535
        %vm4543 = vmor %vm4541, %vm4542
        %v4544 = vsel %vm4543, %v4535, %v4540
        %v4545 = vrsqrt.pop %v4474
        %v4546 = vmul.f32 %v4545, %v4474
        %v4547 = vmul.f32 %v4546, %v4545
        %v4548 = vmul.f32 0.5, %v4547
        %v4549 = vsub.f32 1.5, %v4548
        %v4550 = vmul.f32 %v4545, %v4549
        %vm4551 = vweird.f32 %v4474
        %vm4552 = vweird.f32 %v4545
        %vm4553 = vmor %vm4551, %vm4552
        %v4554 = vsel %vm4553, %v4545, %v4550
        %v4555 = vmul.f32 %v4419, %v4484
        %v4556 = vmul.f32 %v4420, %v4494
        %v4557 = vmul.f32 %v4421, %v4504
        %v4558 = vmul.f32 %v4422, %v4514
        %v4559 = vmul.f32 %v4423, %v4524
        %v4560 = vmul.f32 %v4424, %v4534
        %v4561 = vmul.f32 %v4425, %v4544
        %v4562 = vmul.f32 %v4426, %v4554
        %v4563 = vperm.slane %v725, 5
        %v4564 = vmul.f32 %v4555, %v4563
        %v4565 = vmul.f32 %v4556, %v4563
        %v4566 = vmul.f32 %v4557, %v4563
        %v4567 = vmul.f32 %v4558, %v4563
        %v4568 = vmul.f32 %v4559, %v4563
        %v4569 = vmul.f32 %v4560, %v4563
        %v4570 = vmul.f32 %v4561, %v4563
        %v4571 = vmul.f32 %v4562, %v4563
        %v4572 = vperm.slane %v725, 6
        %v4573 = vadd.f32 %v4564, %v4572
        %v4574 = vadd.f32 %v4565, %v4572
        %v4575 = vadd.f32 %v4566, %v4572
        %v4576 = vadd.f32 %v4567, %v4572
        %v4577 = vadd.f32 %v4568, %v4572
        %v4578 = vadd.f32 %v4569, %v4572
        %v4579 = vadd.f32 %v4570, %v4572
        %v4580 = vadd.f32 %v4571, %v4572
        %v4581 = vld [vmem:[%s17] sm:$0xff]
        %v4582 = vld [vmem:[%s17 + $0x8] sm:$0xff]
        %v4583 = vld [vmem:[%s17 + $0x10] sm:$0xff]
        %v4584 = vld [vmem:[%s17 + $0x18] sm:$0xff]
        %v4585 = vld [vmem:[%s18] sm:$0xff]
        %v4586 = vld [vmem:[%s18 + $0x8] sm:$0xff]
        %v4587 = vld [vmem:[%s18 + $0x10] sm:$0xff]
        %v4588 = vld [vmem:[%s18 + $0x18] sm:$0xff]
        %v4589 = vperm.slane %v727, 2
        %v4591 = vsel %vm826, %v4573, 0
        %v4594 = vsel %vm826, %v4574, 0
        %v4597 = vsel %vm826, %v4575, 0
        %v4600 = vsel %vm826, %v4576, 0
        %v4603 = vsel %vm826, %v4577, 0
        %v4606 = vsel %vm826, %v4578, 0
        %v4609 = vsel %vm826, %v4579, 0
        %v4612 = vsel %vm826, %v4580, 0
        %4614 = vmatpush.msra.mxu0 0.0
        %4615 = vmatpush.msra.mxu0 0.0
        %4616 = vmatpush.msra.mxu0 0.0
        %4617 = vmatpush.msra.mxu0 0.0
        %4618 = vmatpush.msra.mxu0 0.0
        %4619 = vmatpush.msra.mxu0 0.0
        %4620 = vmatpush.msra.mxu0 0.0
        %4621 = vmatpush.msra.mxu0 0.0
        %4622 = vmatpush.msra.mxu0 0.0
        %4623 = vmatpush.msra.mxu0 0.0
        %4624 = vmatpush.msra.mxu0 0.0
        %4625 = vmatpush.msra.mxu0 0.0
        %4626 = vmatpush.msra.mxu0 %v4584
        %4627 = vmatpush.msra.mxu0 %v4583
        %4628 = vmatpush.msra.mxu0 %v4582
        %4629 = vmatpush.msra.mxu0 %v4581
        %4630 = vmatmul.f32.gmra.mxu0 %v4591
        %v4631 = vpop.f32.mrf.mxu0
        %v4632 = vadd.f32 %v4589, %v4631
        %4633 = vmatmul.f32.gmra.mxu0 %v4594
        %v4634 = vpop.f32.mrf.mxu0
        %v4635 = vadd.f32 %v4589, %v4634
        %4636 = vmatmul.f32.gmra.mxu0 %v4597
        %v4637 = vpop.f32.mrf.mxu0
        %v4638 = vadd.f32 %v4589, %v4637
        %4639 = vmatmul.f32.gmra.mxu0 %v4600
        %v4640 = vpop.f32.mrf.mxu0
        %v4641 = vadd.f32 %v4589, %v4640
        %4642 = vmatmul.f32.gmra.mxu0 %v4603
        %v4643 = vpop.f32.mrf.mxu0
        %v4644 = vadd.f32 %v4589, %v4643
        %4645 = vmatmul.f32.gmra.mxu0 %v4606
        %v4646 = vpop.f32.mrf.mxu0
        %v4647 = vadd.f32 %v4589, %v4646
        %4648 = vmatmul.f32.gmra.mxu0 %v4609
        %v4649 = vpop.f32.mrf.mxu0
        %v4650 = vadd.f32 %v4589, %v4649
        %4651 = vmatmul.f32.gmra.mxu0 %v4612
        %v4652 = vpop.f32.mrf.mxu0
        %v4653 = vadd.f32 %v4589, %v4652
        %4654 = vdwg.mxu0
        %4663 = vrot.lane.b32.xlu0 %v4632, 96
        %v4664 = vpop.permute.xlu0 %4663
        %4665 = vrot.lane.b32.xlu0 %v4635, 96
        %v4666 = vpop.permute.xlu0 %4665
        %4667 = vrot.lane.b32.xlu0 %v4638, 96
        %v4668 = vpop.permute.xlu0 %4667
        %4669 = vrot.lane.b32.xlu0 %v4641, 96
        %v4670 = vpop.permute.xlu0 %4669
        %4671 = vrot.lane.b32.xlu0 %v4644, 96
        %v4672 = vpop.permute.xlu0 %4671
        %4673 = vrot.lane.b32.xlu0 %v4647, 96
        %v4674 = vpop.permute.xlu0 %4673
        %4675 = vrot.lane.b32.xlu0 %v4650, 96
        %v4676 = vpop.permute.xlu0 %4675
        %4677 = vrot.lane.b32.xlu0 %v4653, 96
        %v4678 = vpop.permute.xlu0 %4677
        %4687 = vxpose.xlu0.b32.start [1/16] %v4664, 128
        %4688 = vxpose.xlu0.b32.cont [2/16] %v4666, 128
        %4689 = vxpose.xlu0.b32.cont [3/16] %v4668, 128
        %4690 = vxpose.xlu0.b32.cont [4/16] %v4670, 128
        %4691 = vxpose.xlu0.b32.cont [5/16] %v4672, 128
        %4692 = vxpose.xlu0.b32.cont [6/16] %v4674, 128
        %4693 = vxpose.xlu0.b32.cont [7/16] %v4676, 128
        %4694 = vxpose.xlu0.b32.cont [8/16] %v4678, 128
        %4695 = vxpose.xlu0.b32.cont [9/16] 0.0, 128
        %4696 = vxpose.xlu0.b32.cont [10/16] 0.0, 128
        %4697 = vxpose.xlu0.b32.cont [11/16] 0.0, 128
        %4698 = vxpose.xlu0.b32.cont [12/16] 0.0, 128
        %4699 = vxpose.xlu0.b32.cont [13/16] 0.0, 128
        %4700 = vxpose.xlu0.b32.cont [14/16] 0.0, 128
        %4701 = vxpose.xlu0.b32.cont [15/16] 0.0, 128
        %4702 = vxpose.xlu0.b32.end [16/16] 0.0, 128
        %v4703 = vpop.trf.xlu0
        %v4704 = vpop.trf.xlu0
        %v4705 = vpop.trf.xlu0
        %v4706 = vpop.trf.xlu0
        %v4707 = vpop.trf.xlu0
        %v4708 = vpop.trf.xlu0
        %v4709 = vpop.trf.xlu0
        %v4710 = vpop.trf.xlu0
        %v4711 = vpop.trf.xlu0
        %v4712 = vpop.trf.xlu0
        %v4713 = vpop.trf.xlu0
        %v4714 = vpop.trf.xlu0
        %v4715 = vpop.trf.xlu0
        %v4716 = vpop.trf.xlu0
        %v4717 = vpop.trf.xlu0
        %v4718 = vpop.trf.xlu0
        %4719 = vrot.lane.b32.xlu0 %v4632, 64
        %v4720 = vpop.permute.xlu0 %4719
        %4721 = vrot.lane.b32.xlu0 %v4635, 64
        %v4722 = vpop.permute.xlu0 %4721
        %4723 = vrot.lane.b32.xlu0 %v4638, 64
        %v4724 = vpop.permute.xlu0 %4723
        %4725 = vrot.lane.b32.xlu0 %v4641, 64
        %v4726 = vpop.permute.xlu0 %4725
        %4727 = vrot.lane.b32.xlu0 %v4644, 64
        %v4728 = vpop.permute.xlu0 %4727
        %4729 = vrot.lane.b32.xlu0 %v4647, 64
        %v4730 = vpop.permute.xlu0 %4729
        %4731 = vrot.lane.b32.xlu0 %v4650, 64
        %v4732 = vpop.permute.xlu0 %4731
        %4733 = vrot.lane.b32.xlu0 %v4653, 64
        %v4734 = vpop.permute.xlu0 %4733
        %4743 = vxpose.xlu0.b32.start [1/16] %v4720, 128
        %4744 = vxpose.xlu0.b32.cont [2/16] %v4722, 128
        %4745 = vxpose.xlu0.b32.cont [3/16] %v4724, 128
        %4746 = vxpose.xlu0.b32.cont [4/16] %v4726, 128
        %4747 = vxpose.xlu0.b32.cont [5/16] %v4728, 128
        %4748 = vxpose.xlu0.b32.cont [6/16] %v4730, 128
        %4749 = vxpose.xlu0.b32.cont [7/16] %v4732, 128
        %4750 = vxpose.xlu0.b32.cont [8/16] %v4734, 128
        %4751 = vxpose.xlu0.b32.cont [9/16] 0.0, 128
        %4752 = vxpose.xlu0.b32.cont [10/16] 0.0, 128
        %4753 = vxpose.xlu0.b32.cont [11/16] 0.0, 128
        %4754 = vxpose.xlu0.b32.cont [12/16] 0.0, 128
        %4755 = vxpose.xlu0.b32.cont [13/16] 0.0, 128
        %4756 = vxpose.xlu0.b32.cont [14/16] 0.0, 128
        %4757 = vxpose.xlu0.b32.cont [15/16] 0.0, 128
        %4758 = vxpose.xlu0.b32.end [16/16] 0.0, 128
        %v4759 = vpop.trf.xlu0
        %v4760 = vpop.trf.xlu0
        %v4761 = vpop.trf.xlu0
        %v4762 = vpop.trf.xlu0
        %v4763 = vpop.trf.xlu0
        %v4764 = vpop.trf.xlu0
        %v4765 = vpop.trf.xlu0
        %v4766 = vpop.trf.xlu0
        %v4767 = vpop.trf.xlu0
        %v4768 = vpop.trf.xlu0
        %v4769 = vpop.trf.xlu0
        %v4770 = vpop.trf.xlu0
        %v4771 = vpop.trf.xlu0
        %v4772 = vpop.trf.xlu0
        %v4773 = vpop.trf.xlu0
        %v4774 = vpop.trf.xlu0
        %4779 = vrot.lane.b32.xlu0 %v4703, 64
        %v4780 = vpop.permute.xlu0 %4779
        %4781 = vrot.lane.b32.xlu0 %v4704, 64
        %v4782 = vpop.permute.xlu0 %4781
        %4783 = vrot.lane.b32.xlu0 %v4705, 64
        %v4784 = vpop.permute.xlu0 %4783
        %4785 = vrot.lane.b32.xlu0 %v4706, 64
        %v4786 = vpop.permute.xlu0 %4785
        %v4791 = vsel %vm1238, %v4703, %v4780
        %v4792 = vsel %vm1238, %v4704, %v4782
        %v4793 = vsel %vm1238, %v4705, %v4784
        %v4794 = vsel %vm1238, %v4706, %v4786
        %v4795 = vmul.f32 %v4791, %v708
        %v4796 = vmul.f32 %v4791, %v709
        %v4797 = vmul.f32 %v4791, %v710
        %v4798 = vmul.f32 %v4791, %v711
        %v4799 = vmul.f32 %v4792, %v712
        %v4800 = vmul.f32 %v4792, %v713
        %v4801 = vmul.f32 %v4792, %v714
        %v4802 = vmul.f32 %v4792, %v715
        %v4803 = vmul.f32 %v4793, %v716
        %v4804 = vmul.f32 %v4793, %v717
        %v4805 = vmul.f32 %v4793, %v718
        %v4806 = vmul.f32 %v4793, %v719
        %v4807 = vmul.f32 %v4794, %v720
        %v4808 = vmul.f32 %v4794, %v721
        %v4809 = vmul.f32 %v4794, %v722
        %v4810 = vmul.f32 %v4794, %v723
        %v4811 = vld [vmem:[%s16] sm:$0xff]
        %v4812 = vld [vmem:[%s16 + $0x8] sm:$0xff]
        %v4813 = vld [vmem:[%s16 + $0x10] sm:$0xff]
        %v4814 = vld [vmem:[%s16 + $0x18] sm:$0xff]
        %v4815 = vld [vmem:[%s16 + $0x20] sm:$0xff]
        %v4816 = vld [vmem:[%s16 + $0x28] sm:$0xff]
        %v4817 = vld [vmem:[%s16 + $0x30] sm:$0xff]
        %v4818 = vld [vmem:[%s16 + $0x38] sm:$0xff]
        %v4819 = vld [vmem:[%s16 + $0x40] sm:$0xff]
        %v4820 = vld [vmem:[%s16 + $0x48] sm:$0xff]
        %v4821 = vld [vmem:[%s16 + $0x50] sm:$0xff]
        %v4822 = vld [vmem:[%s16 + $0x58] sm:$0xff]
        %v4823 = vld [vmem:[%s16 + $0x60] sm:$0xff]
        %v4824 = vld [vmem:[%s16 + $0x68] sm:$0xff]
        %v4825 = vld [vmem:[%s16 + $0x70] sm:$0xff]
        %v4826 = vld [vmem:[%s16 + $0x78] sm:$0xff]
        %v4827 = vld [vmem:[%s16 + $0x80] sm:$0xff]
        %v4828 = vld [vmem:[%s16 + $0x88] sm:$0xff]
        %v4829 = vld [vmem:[%s16 + $0x90] sm:$0xff]
        %v4830 = vld [vmem:[%s16 + $0x98] sm:$0xff]
        %v4831 = vld [vmem:[%s16 + $0xa0] sm:$0xff]
        %v4832 = vld [vmem:[%s16 + $0xa8] sm:$0xff]
        %v4833 = vld [vmem:[%s16 + $0xb0] sm:$0xff]
        %v4834 = vld [vmem:[%s16 + $0xb8] sm:$0xff]
        %v4835 = vld [vmem:[%s16 + $0xc0] sm:$0xff]
        %v4836 = vld [vmem:[%s16 + $0xc8] sm:$0xff]
        %v4837 = vld [vmem:[%s16 + $0xd0] sm:$0xff]
        %v4838 = vld [vmem:[%s16 + $0xd8] sm:$0xff]
        %v4839 = vld [vmem:[%s16 + $0xe0] sm:$0xff]
        %v4840 = vld [vmem:[%s16 + $0xe8] sm:$0xff]
        %v4841 = vld [vmem:[%s16 + $0xf0] sm:$0xff]
        %v4842 = vld [vmem:[%s16 + $0xf8] sm:$0xff]
        %v4843 = vsel %vm826, %v4632, 0
        %v4845 = vsel %vm826, %v4635, 0
        %v4847 = vsel %vm826, %v4638, 0
        %v4849 = vsel %vm826, %v4641, 0
        %v4851 = vsel %vm826, %v4644, 0
        %v4853 = vsel %vm826, %v4647, 0
        %v4855 = vsel %vm826, %v4650, 0
        %v4857 = vsel %vm826, %v4653, 0
        %4859 = vmatpush.msra.mxu0 0.0
        %4860 = vmatpush.msra.mxu0 0.0
        %4861 = vmatpush.msra.mxu0 0.0
        %4862 = vmatpush.msra.mxu0 0.0
        %4863 = vmatpush.msra.mxu0 0.0
        %4864 = vmatpush.msra.mxu0 0.0
        %4865 = vmatpush.msra.mxu0 0.0
        %4866 = vmatpush.msra.mxu0 0.0
        %4867 = vmatpush.msra.mxu0 0.0
        %4868 = vmatpush.msra.mxu0 0.0
        %4869 = vmatpush.msra.mxu0 0.0
        %4870 = vmatpush.msra.mxu0 0.0
        %4871 = vmatpush.msra.mxu0 %v4807
        %4872 = vmatpush.msra.mxu0 %v4803
        %4873 = vmatpush.msra.mxu0 %v4799
        %4874 = vmatpush.msra.mxu0 %v4795
        %4875 = vmatmul.f32.gmra.mxu0 %v4843
        %v4876 = vpop.f32.mrf.mxu0
        %v4877 = vadd.f32 %v4811, %v4876
        %4878 = vmatmul.f32.gmra.mxu0 %v4845
        %v4879 = vpop.f32.mrf.mxu0
        %v4880 = vadd.f32 %v4815, %v4879
        %4881 = vmatmul.f32.gmra.mxu0 %v4847
        %v4882 = vpop.f32.mrf.mxu0
        %v4883 = vadd.f32 %v4819, %v4882
        %4884 = vmatmul.f32.gmra.mxu0 %v4849
        %v4885 = vpop.f32.mrf.mxu0
        %v4886 = vadd.f32 %v4823, %v4885
        %4887 = vmatmul.f32.gmra.mxu0 %v4851
        %v4888 = vpop.f32.mrf.mxu0
        %v4889 = vadd.f32 %v4827, %v4888
        %4890 = vmatmul.f32.gmra.mxu0 %v4853
        %v4891 = vpop.f32.mrf.mxu0
        %v4892 = vadd.f32 %v4831, %v4891
        %4893 = vmatmul.f32.gmra.mxu0 %v4855
        %v4894 = vpop.f32.mrf.mxu0
        %v4895 = vadd.f32 %v4835, %v4894
        %4896 = vmatmul.f32.gmra.mxu0 %v4857
        %v4897 = vpop.f32.mrf.mxu0
        %v4898 = vadd.f32 %v4839, %v4897
        %4899 = vdwg.mxu0
        %4900 = vmatpush.msra.mxu0 0.0
        %4901 = vmatpush.msra.mxu0 0.0
        %4902 = vmatpush.msra.mxu0 0.0
        %4903 = vmatpush.msra.mxu0 0.0
        %4904 = vmatpush.msra.mxu0 0.0
        %4905 = vmatpush.msra.mxu0 0.0
        %4906 = vmatpush.msra.mxu0 0.0
        %4907 = vmatpush.msra.mxu0 0.0
        %4908 = vmatpush.msra.mxu0 0.0
        %4909 = vmatpush.msra.mxu0 0.0
        %4910 = vmatpush.msra.mxu0 0.0
        %4911 = vmatpush.msra.mxu0 0.0
        %4912 = vmatpush.msra.mxu0 %v4808
        %4913 = vmatpush.msra.mxu0 %v4804
        %4914 = vmatpush.msra.mxu0 %v4800
        %4915 = vmatpush.msra.mxu0 %v4796
        %4916 = vmatmul.f32.gmra.mxu0 %v4843
        %v4917 = vpop.f32.mrf.mxu0
        %v4918 = vadd.f32 %v4812, %v4917
        %4919 = vmatmul.f32.gmra.mxu0 %v4845
        %v4920 = vpop.f32.mrf.mxu0
        %v4921 = vadd.f32 %v4816, %v4920
        %4922 = vmatmul.f32.gmra.mxu0 %v4847
        %v4923 = vpop.f32.mrf.mxu0
        %v4924 = vadd.f32 %v4820, %v4923
        %4925 = vmatmul.f32.gmra.mxu0 %v4849
        %v4926 = vpop.f32.mrf.mxu0
        %v4927 = vadd.f32 %v4824, %v4926
        %4928 = vmatmul.f32.gmra.mxu0 %v4851
        %v4929 = vpop.f32.mrf.mxu0
        %v4930 = vadd.f32 %v4828, %v4929
        %4931 = vmatmul.f32.gmra.mxu0 %v4853
        %v4932 = vpop.f32.mrf.mxu0
        %v4933 = vadd.f32 %v4832, %v4932
        %4934 = vmatmul.f32.gmra.mxu0 %v4855
        %v4935 = vpop.f32.mrf.mxu0
        %v4936 = vadd.f32 %v4836, %v4935
        %4937 = vmatmul.f32.gmra.mxu0 %v4857
        %v4938 = vpop.f32.mrf.mxu0
        %v4939 = vadd.f32 %v4840, %v4938
        %4940 = vdwg.mxu0
        %4941 = vmatpush.msra.mxu0 0.0
        %4942 = vmatpush.msra.mxu0 0.0
        %4943 = vmatpush.msra.mxu0 0.0
        %4944 = vmatpush.msra.mxu0 0.0
        %4945 = vmatpush.msra.mxu0 0.0
        %4946 = vmatpush.msra.mxu0 0.0
        %4947 = vmatpush.msra.mxu0 0.0
        %4948 = vmatpush.msra.mxu0 0.0
        %4949 = vmatpush.msra.mxu0 0.0
        %4950 = vmatpush.msra.mxu0 0.0
        %4951 = vmatpush.msra.mxu0 0.0
        %4952 = vmatpush.msra.mxu0 0.0
        %4953 = vmatpush.msra.mxu0 %v4809
        %4954 = vmatpush.msra.mxu0 %v4805
        %4955 = vmatpush.msra.mxu0 %v4801
        %4956 = vmatpush.msra.mxu0 %v4797
        %4957 = vmatmul.f32.gmra.mxu0 %v4843
        %v4958 = vpop.f32.mrf.mxu0
        %v4959 = vadd.f32 %v4813, %v4958
        %4960 = vmatmul.f32.gmra.mxu0 %v4845
        %v4961 = vpop.f32.mrf.mxu0
        %v4962 = vadd.f32 %v4817, %v4961
        %4963 = vmatmul.f32.gmra.mxu0 %v4847
        %v4964 = vpop.f32.mrf.mxu0
        %v4965 = vadd.f32 %v4821, %v4964
        %4966 = vmatmul.f32.gmra.mxu0 %v4849
        %v4967 = vpop.f32.mrf.mxu0
        %v4968 = vadd.f32 %v4825, %v4967
        %4969 = vmatmul.f32.gmra.mxu0 %v4851
        %v4970 = vpop.f32.mrf.mxu0
        %v4971 = vadd.f32 %v4829, %v4970
        %4972 = vmatmul.f32.gmra.mxu0 %v4853
        %v4973 = vpop.f32.mrf.mxu0
        %v4974 = vadd.f32 %v4833, %v4973
        %4975 = vmatmul.f32.gmra.mxu0 %v4855
        %v4976 = vpop.f32.mrf.mxu0
        %v4977 = vadd.f32 %v4837, %v4976
        %4978 = vmatmul.f32.gmra.mxu0 %v4857
        %v4979 = vpop.f32.mrf.mxu0
        %v4980 = vadd.f32 %v4841, %v4979
        %4981 = vdwg.mxu0
        %4982 = vmatpush.msra.mxu0 0.0
        %4983 = vmatpush.msra.mxu0 0.0
        %4984 = vmatpush.msra.mxu0 0.0
        %4985 = vmatpush.msra.mxu0 0.0
        %4986 = vmatpush.msra.mxu0 0.0
        %4987 = vmatpush.msra.mxu0 0.0
        %4988 = vmatpush.msra.mxu0 0.0
        %4989 = vmatpush.msra.mxu0 0.0
        %4990 = vmatpush.msra.mxu0 0.0
        %4991 = vmatpush.msra.mxu0 0.0
        %4992 = vmatpush.msra.mxu0 0.0
        %4993 = vmatpush.msra.mxu0 0.0
        %4994 = vmatpush.msra.mxu0 %v4810
        %4995 = vmatpush.msra.mxu0 %v4806
        %4996 = vmatpush.msra.mxu0 %v4802
        %4997 = vmatpush.msra.mxu0 %v4798
        %4998 = vmatmul.f32.gmra.mxu0 %v4843
        %v4999 = vpop.f32.mrf.mxu0
        %v5000 = vadd.f32 %v4814, %v4999
        %5001 = vmatmul.f32.gmra.mxu0 %v4845
        %v5002 = vpop.f32.mrf.mxu0
        %v5003 = vadd.f32 %v4818, %v5002
        %5004 = vmatmul.f32.gmra.mxu0 %v4847
        %v5005 = vpop.f32.mrf.mxu0
        %v5006 = vadd.f32 %v4822, %v5005
        %5007 = vmatmul.f32.gmra.mxu0 %v4849
        %v5008 = vpop.f32.mrf.mxu0
        %v5009 = vadd.f32 %v4826, %v5008
        %5010 = vmatmul.f32.gmra.mxu0 %v4851
        %v5011 = vpop.f32.mrf.mxu0
        %v5012 = vadd.f32 %v4830, %v5011
        %5013 = vmatmul.f32.gmra.mxu0 %v4853
        %v5014 = vpop.f32.mrf.mxu0
        %v5015 = vadd.f32 %v4834, %v5014
        %5016 = vmatmul.f32.gmra.mxu0 %v4855
        %v5017 = vpop.f32.mrf.mxu0
        %v5018 = vadd.f32 %v4838, %v5017
        %5019 = vmatmul.f32.gmra.mxu0 %v4857
        %v5020 = vpop.f32.mrf.mxu0
        %v5021 = vadd.f32 %v4842, %v5020
        %5022 = vdwg.mxu0
        %v5023 = vmax.f32 %v4877, %v4918
        %v5024 = vmax.f32 %v5023, %v4959
        %v5025 = vmax.f32 %v5024, %v5000
        %5026 = vmax.xlane.f32.xlu0 %v5025
        %v5027 = vpop.xlane.xlu0 %5026
        %v5028 = vmax.f32 %v4880, %v4921
        %v5029 = vmax.f32 %v5028, %v4962
        %v5030 = vmax.f32 %v5029, %v5003
        %5031 = vmax.xlane.f32.xlu0 %v5030
        %v5032 = vpop.xlane.xlu0 %5031
        %v5033 = vmax.f32 %v4883, %v4924
        %v5034 = vmax.f32 %v5033, %v4965
        %v5035 = vmax.f32 %v5034, %v5006
        %5036 = vmax.xlane.f32.xlu0 %v5035
        %v5037 = vpop.xlane.xlu0 %5036
        %v5038 = vmax.f32 %v4886, %v4927
        %v5039 = vmax.f32 %v5038, %v4968
        %v5040 = vmax.f32 %v5039, %v5009
        %5041 = vmax.xlane.f32.xlu0 %v5040
        %v5042 = vpop.xlane.xlu0 %5041
        %v5043 = vmax.f32 %v4889, %v4930
        %v5044 = vmax.f32 %v5043, %v4971
        %v5045 = vmax.f32 %v5044, %v5012
        %5046 = vmax.xlane.f32.xlu0 %v5045
        %v5047 = vpop.xlane.xlu0 %5046
        %v5048 = vmax.f32 %v4892, %v4933
        %v5049 = vmax.f32 %v5048, %v4974
        %v5050 = vmax.f32 %v5049, %v5015
        %5051 = vmax.xlane.f32.xlu0 %v5050
        %v5052 = vpop.xlane.xlu0 %5051
        %v5053 = vmax.f32 %v4895, %v4936
        %v5054 = vmax.f32 %v5053, %v4977
        %v5055 = vmax.f32 %v5054, %v5018
        %5056 = vmax.xlane.f32.xlu0 %v5055
        %v5057 = vpop.xlane.xlu0 %5056
        %v5058 = vmax.f32 %v4898, %v4939
        %v5059 = vmax.f32 %v5058, %v4980
        %v5060 = vmax.f32 %v5059, %v5021
        %5061 = vmax.xlane.f32.xlu0 %v5060
        %v5062 = vpop.xlane.xlu0 %5061
        %v5063 = vsub.f32 %v4877, %v5027
        %v5064 = vsub.f32 %v4918, %v5027
        %v5065 = vsub.f32 %v4959, %v5027
        %v5066 = vsub.f32 %v5000, %v5027
        %v5067 = vsub.f32 %v4880, %v5032
        %v5068 = vsub.f32 %v4921, %v5032
        %v5069 = vsub.f32 %v4962, %v5032
        %v5070 = vsub.f32 %v5003, %v5032
        %v5071 = vsub.f32 %v4883, %v5037
        %v5072 = vsub.f32 %v4924, %v5037
        %v5073 = vsub.f32 %v4965, %v5037
        %v5074 = vsub.f32 %v5006, %v5037
        %v5075 = vsub.f32 %v4886, %v5042
        %v5076 = vsub.f32 %v4927, %v5042
        %v5077 = vsub.f32 %v4968, %v5042
        %v5078 = vsub.f32 %v5009, %v5042
        %v5079 = vsub.f32 %v4889, %v5047
        %v5080 = vsub.f32 %v4930, %v5047
        %v5081 = vsub.f32 %v4971, %v5047
        %v5082 = vsub.f32 %v5012, %v5047
        %v5083 = vsub.f32 %v4892, %v5052
        %v5084 = vsub.f32 %v4933, %v5052
        %v5085 = vsub.f32 %v4974, %v5052
        %v5086 = vsub.f32 %v5015, %v5052
        %v5087 = vsub.f32 %v4895, %v5057
        %v5088 = vsub.f32 %v4936, %v5057
        %v5089 = vsub.f32 %v4977, %v5057
        %v5090 = vsub.f32 %v5018, %v5057
        %v5091 = vsub.f32 %v4898, %v5062
        %v5092 = vsub.f32 %v4939, %v5062
        %v5093 = vsub.f32 %v4980, %v5062
        %v5094 = vsub.f32 %v5021, %v5062
        %v5095 = vmul.f32 %v5063, 1.442695
        %v5096 = vpow.pop %v5095
        %v5097 = vmul.f32 %v5064, 1.442695
        %v5098 = vpow.pop %v5097
        %v5099 = vmul.f32 %v5065, 1.442695
        %v5100 = vpow.pop %v5099
        %v5101 = vmul.f32 %v5066, 1.442695
        %v5102 = vpow.pop %v5101
        %v5103 = vmul.f32 %v5067, 1.442695
        %v5104 = vpow.pop %v5103
        %v5105 = vmul.f32 %v5068, 1.442695
        %v5106 = vpow.pop %v5105
        %v5107 = vmul.f32 %v5069, 1.442695
        %v5108 = vpow.pop %v5107
        %v5109 = vmul.f32 %v5070, 1.442695
        %v5110 = vpow.pop %v5109
        %v5111 = vmul.f32 %v5071, 1.442695
        %v5112 = vpow.pop %v5111
        %v5113 = vmul.f32 %v5072, 1.442695
        %v5114 = vpow.pop %v5113
        %v5115 = vmul.f32 %v5073, 1.442695
        %v5116 = vpow.pop %v5115
        %v5117 = vmul.f32 %v5074, 1.442695
        %v5118 = vpow.pop %v5117
        %v5119 = vmul.f32 %v5075, 1.442695
        %v5120 = vpow.pop %v5119
        %v5121 = vmul.f32 %v5076, 1.442695
        %v5122 = vpow.pop %v5121
        %v5123 = vmul.f32 %v5077, 1.442695
        %v5124 = vpow.pop %v5123
        %v5125 = vmul.f32 %v5078, 1.442695
        %v5126 = vpow.pop %v5125
        %v5127 = vmul.f32 %v5079, 1.442695
        %v5128 = vpow.pop %v5127
        %v5129 = vmul.f32 %v5080, 1.442695
        %v5130 = vpow.pop %v5129
        %v5131 = vmul.f32 %v5081, 1.442695
        %v5132 = vpow.pop %v5131
        %v5133 = vmul.f32 %v5082, 1.442695
        %v5134 = vpow.pop %v5133
        %v5135 = vmul.f32 %v5083, 1.442695
        %v5136 = vpow.pop %v5135
        %v5137 = vmul.f32 %v5084, 1.442695
        %v5138 = vpow.pop %v5137
        %v5139 = vmul.f32 %v5085, 1.442695
        %v5140 = vpow.pop %v5139
        %v5141 = vmul.f32 %v5086, 1.442695
        %v5142 = vpow.pop %v5141
        %v5143 = vmul.f32 %v5087, 1.442695
        %v5144 = vpow.pop %v5143
        %v5145 = vmul.f32 %v5088, 1.442695
        %v5146 = vpow.pop %v5145
        %v5147 = vmul.f32 %v5089, 1.442695
        %v5148 = vpow.pop %v5147
        %v5149 = vmul.f32 %v5090, 1.442695
        %v5150 = vpow.pop %v5149
        %v5151 = vmul.f32 %v5091, 1.442695
        %v5152 = vpow.pop %v5151
        %v5153 = vmul.f32 %v5092, 1.442695
        %v5154 = vpow.pop %v5153
        %v5155 = vmul.f32 %v5093, 1.442695
        %v5156 = vpow.pop %v5155
        %v5157 = vmul.f32 %v5094, 1.442695
        %v5158 = vpow.pop %v5157
        %5163 = vrot.lane.b32.xlu0 %v4759, 64
        %v5164 = vpop.permute.xlu0 %5163
        %5165 = vrot.lane.b32.xlu0 %v4760, 64
        %v5166 = vpop.permute.xlu0 %5165
        %5167 = vrot.lane.b32.xlu0 %v4761, 64
        %v5168 = vpop.permute.xlu0 %5167
        %5169 = vrot.lane.b32.xlu0 %v4762, 64
        %v5170 = vpop.permute.xlu0 %5169
        %v5175 = vsel %vm1238, %v4759, %v5164
        %v5176 = vsel %vm1238, %v4760, %v5166
        %v5177 = vsel %vm1238, %v4761, %v5168
        %v5178 = vsel %vm1238, %v4762, %v5170
        %v5179 = vmul.f32 %v5175, %v708
        %v5180 = vmul.f32 %v5175, %v709
        %v5181 = vmul.f32 %v5175, %v710
        %v5182 = vmul.f32 %v5175, %v711
        %v5183 = vmul.f32 %v5176, %v712
        %v5184 = vmul.f32 %v5176, %v713
        %v5185 = vmul.f32 %v5176, %v714
        %v5186 = vmul.f32 %v5176, %v715
        %v5187 = vmul.f32 %v5177, %v716
        %v5188 = vmul.f32 %v5177, %v717
        %v5189 = vmul.f32 %v5177, %v718
        %v5190 = vmul.f32 %v5177, %v719
        %v5191 = vmul.f32 %v5178, %v720
        %v5192 = vmul.f32 %v5178, %v721
        %v5193 = vmul.f32 %v5178, %v722
        %v5194 = vmul.f32 %v5178, %v723
        %5195 = vmatpush.xpose.msra.mxu0 0.0
        %5196 = vmatpush.xpose.msra.mxu0 0.0
        %5197 = vmatpush.xpose.msra.mxu0 0.0
        %5198 = vmatpush.xpose.msra.mxu0 0.0
        %5199 = vmatpush.xpose.msra.mxu0 0.0
        %5200 = vmatpush.xpose.msra.mxu0 0.0
        %5201 = vmatpush.xpose.msra.mxu0 0.0
        %5202 = vmatpush.xpose.msra.mxu0 0.0
        %5203 = vmatpush.xpose.msra.mxu0 %v720
        %5204 = vmatpush.xpose.msra.mxu0 %v716
        %5205 = vmatpush.xpose.msra.mxu0 %v712
        %5206 = vmatpush.xpose.msra.mxu0 %v708
        %5207 = vmatpush.xpose.msra.mxu0 %v5191
        %5208 = vmatpush.xpose.msra.mxu0 %v5187
        %5209 = vmatpush.xpose.msra.mxu0 %v5183
        %5210 = vmatpush.xpose.msra.mxu0 %v5179
        %5211 = vmatmul.f32.gmra.mxu0 %v5096
        %v5212 = vpop.f32.mrf.mxu0
        %v5213 = vadd.f32 0.0, %v5212
        %5214 = vmatmul.f32.gmra.mxu0 %v5104
        %v5215 = vpop.f32.mrf.mxu0
        %v5216 = vadd.f32 0.0, %v5215
        %5217 = vmatmul.f32.gmra.mxu0 %v5112
        %v5218 = vpop.f32.mrf.mxu0
        %v5219 = vadd.f32 0.0, %v5218
        %5220 = vmatmul.f32.gmra.mxu0 %v5120
        %v5221 = vpop.f32.mrf.mxu0
        %v5222 = vadd.f32 0.0, %v5221
        %5223 = vmatmul.f32.gmra.mxu0 %v5128
        %v5224 = vpop.f32.mrf.mxu0
        %v5225 = vadd.f32 0.0, %v5224
        %5226 = vmatmul.f32.gmra.mxu0 %v5136
        %v5227 = vpop.f32.mrf.mxu0
        %v5228 = vadd.f32 0.0, %v5227
        %5229 = vmatmul.f32.gmra.mxu0 %v5144
        %v5230 = vpop.f32.mrf.mxu0
        %v5231 = vadd.f32 0.0, %v5230
        %5232 = vmatmul.f32.gmra.mxu0 %v5152
        %v5233 = vpop.f32.mrf.mxu0
        %v5234 = vadd.f32 0.0, %v5233
        %5235 = vdwg.mxu0
        %5236 = vmatpush.xpose.msra.mxu0 0.0
        %5237 = vmatpush.xpose.msra.mxu0 0.0
        %5238 = vmatpush.xpose.msra.mxu0 0.0
        %5239 = vmatpush.xpose.msra.mxu0 0.0
        %5240 = vmatpush.xpose.msra.mxu0 0.0
        %5241 = vmatpush.xpose.msra.mxu0 0.0
        %5242 = vmatpush.xpose.msra.mxu0 0.0
        %5243 = vmatpush.xpose.msra.mxu0 0.0
        %5244 = vmatpush.xpose.msra.mxu0 %v721
        %5245 = vmatpush.xpose.msra.mxu0 %v717
        %5246 = vmatpush.xpose.msra.mxu0 %v713
        %5247 = vmatpush.xpose.msra.mxu0 %v709
        %5248 = vmatpush.xpose.msra.mxu0 %v5192
        %5249 = vmatpush.xpose.msra.mxu0 %v5188
        %5250 = vmatpush.xpose.msra.mxu0 %v5184
        %5251 = vmatpush.xpose.msra.mxu0 %v5180
        %5252 = vmatmul.f32.gmra.mxu0 %v5098
        %v5253 = vpop.f32.mrf.mxu0
        %v5254 = vadd.f32 %v5213, %v5253
        %5255 = vmatmul.f32.gmra.mxu0 %v5106
        %v5256 = vpop.f32.mrf.mxu0
        %v5257 = vadd.f32 %v5216, %v5256
        %5258 = vmatmul.f32.gmra.mxu0 %v5114
        %v5259 = vpop.f32.mrf.mxu0
        %v5260 = vadd.f32 %v5219, %v5259
        %5261 = vmatmul.f32.gmra.mxu0 %v5122
        %v5262 = vpop.f32.mrf.mxu0
        %v5263 = vadd.f32 %v5222, %v5262
        %5264 = vmatmul.f32.gmra.mxu0 %v5130
        %v5265 = vpop.f32.mrf.mxu0
        %v5266 = vadd.f32 %v5225, %v5265
        %5267 = vmatmul.f32.gmra.mxu0 %v5138
        %v5268 = vpop.f32.mrf.mxu0
        %v5269 = vadd.f32 %v5228, %v5268
        %5270 = vmatmul.f32.gmra.mxu0 %v5146
        %v5271 = vpop.f32.mrf.mxu0
        %v5272 = vadd.f32 %v5231, %v5271
        %5273 = vmatmul.f32.gmra.mxu0 %v5154
        %v5274 = vpop.f32.mrf.mxu0
        %v5275 = vadd.f32 %v5234, %v5274
        %5276 = vdwg.mxu0
        %5277 = vmatpush.xpose.msra.mxu0 0.0
        %5278 = vmatpush.xpose.msra.mxu0 0.0
        %5279 = vmatpush.xpose.msra.mxu0 0.0
        %5280 = vmatpush.xpose.msra.mxu0 0.0
        %5281 = vmatpush.xpose.msra.mxu0 0.0
        %5282 = vmatpush.xpose.msra.mxu0 0.0
        %5283 = vmatpush.xpose.msra.mxu0 0.0
        %5284 = vmatpush.xpose.msra.mxu0 0.0
        %5285 = vmatpush.xpose.msra.mxu0 %v722
        %5286 = vmatpush.xpose.msra.mxu0 %v718
        %5287 = vmatpush.xpose.msra.mxu0 %v714
        %5288 = vmatpush.xpose.msra.mxu0 %v710
        %5289 = vmatpush.xpose.msra.mxu0 %v5193
        %5290 = vmatpush.xpose.msra.mxu0 %v5189
        %5291 = vmatpush.xpose.msra.mxu0 %v5185
        %5292 = vmatpush.xpose.msra.mxu0 %v5181
        %5293 = vmatmul.f32.gmra.mxu0 %v5100
        %v5294 = vpop.f32.mrf.mxu0
        %v5295 = vadd.f32 %v5254, %v5294
        %5296 = vmatmul.f32.gmra.mxu0 %v5108
        %v5297 = vpop.f32.mrf.mxu0
        %v5298 = vadd.f32 %v5257, %v5297
        %5299 = vmatmul.f32.gmra.mxu0 %v5116
        %v5300 = vpop.f32.mrf.mxu0
        %v5301 = vadd.f32 %v5260, %v5300
        %5302 = vmatmul.f32.gmra.mxu0 %v5124
        %v5303 = vpop.f32.mrf.mxu0
        %v5304 = vadd.f32 %v5263, %v5303
        %5305 = vmatmul.f32.gmra.mxu0 %v5132
        %v5306 = vpop.f32.mrf.mxu0
        %v5307 = vadd.f32 %v5266, %v5306
        %5308 = vmatmul.f32.gmra.mxu0 %v5140
        %v5309 = vpop.f32.mrf.mxu0
        %v5310 = vadd.f32 %v5269, %v5309
        %5311 = vmatmul.f32.gmra.mxu0 %v5148
        %v5312 = vpop.f32.mrf.mxu0
        %v5313 = vadd.f32 %v5272, %v5312
        %5314 = vmatmul.f32.gmra.mxu0 %v5156
        %v5315 = vpop.f32.mrf.mxu0
        %v5316 = vadd.f32 %v5275, %v5315
        %5317 = vdwg.mxu0
        %5318 = vmatpush.xpose.msra.mxu0 0.0
        %5319 = vmatpush.xpose.msra.mxu0 0.0
        %5320 = vmatpush.xpose.msra.mxu0 0.0
        %5321 = vmatpush.xpose.msra.mxu0 0.0
        %5322 = vmatpush.xpose.msra.mxu0 0.0
        %5323 = vmatpush.xpose.msra.mxu0 0.0
        %5324 = vmatpush.xpose.msra.mxu0 0.0
        %5325 = vmatpush.xpose.msra.mxu0 0.0
        %5326 = vmatpush.xpose.msra.mxu0 %v723
        %5327 = vmatpush.xpose.msra.mxu0 %v719
        %5328 = vmatpush.xpose.msra.mxu0 %v715
        %5329 = vmatpush.xpose.msra.mxu0 %v711
        %5330 = vmatpush.xpose.msra.mxu0 %v5194
        %5331 = vmatpush.xpose.msra.mxu0 %v5190
        %5332 = vmatpush.xpose.msra.mxu0 %v5186
        %5333 = vmatpush.xpose.msra.mxu0 %v5182
        %5334 = vmatmul.f32.gmra.mxu0 %v5102
        %v5335 = vpop.f32.mrf.mxu0
        %v5336 = vadd.f32 %v5295, %v5335
        %5337 = vmatmul.f32.gmra.mxu0 %v5110
        %v5338 = vpop.f32.mrf.mxu0
        %v5339 = vadd.f32 %v5298, %v5338
        %5340 = vmatmul.f32.gmra.mxu0 %v5118
        %v5341 = vpop.f32.mrf.mxu0
        %v5342 = vadd.f32 %v5301, %v5341
        %5343 = vmatmul.f32.gmra.mxu0 %v5126
        %v5344 = vpop.f32.mrf.mxu0
        %v5345 = vadd.f32 %v5304, %v5344
        %5346 = vmatmul.f32.gmra.mxu0 %v5134
        %v5347 = vpop.f32.mrf.mxu0
        %v5348 = vadd.f32 %v5307, %v5347
        %5349 = vmatmul.f32.gmra.mxu0 %v5142
        %v5350 = vpop.f32.mrf.mxu0
        %v5351 = vadd.f32 %v5310, %v5350
        %5352 = vmatmul.f32.gmra.mxu0 %v5150
        %v5353 = vpop.f32.mrf.mxu0
        %v5354 = vadd.f32 %v5313, %v5353
        %5355 = vmatmul.f32.gmra.mxu0 %v5158
        %v5356 = vpop.f32.mrf.mxu0
        %v5357 = vadd.f32 %v5316, %v5356
        %5358 = vdwg.mxu0
        %v5359 = vrcp.pop %v5336
        %v5360 = vrcp.pop %v5339
        %v5361 = vrcp.pop %v5342
        %v5362 = vrcp.pop %v5345
        %v5363 = vrcp.pop %v5348
        %v5364 = vrcp.pop %v5351
        %v5365 = vrcp.pop %v5354
        %v5366 = vrcp.pop %v5357
        %5375 = vrot.lane.b32.xlu0 %v5359, 96
        %v5376 = vpop.permute.xlu0 %5375
        %5377 = vrot.lane.b32.xlu0 %v5360, 96
        %v5378 = vpop.permute.xlu0 %5377
        %5379 = vrot.lane.b32.xlu0 %v5361, 96
        %v5380 = vpop.permute.xlu0 %5379
        %5381 = vrot.lane.b32.xlu0 %v5362, 96
        %v5382 = vpop.permute.xlu0 %5381
        %5383 = vrot.lane.b32.xlu0 %v5363, 96
        %v5384 = vpop.permute.xlu0 %5383
        %5385 = vrot.lane.b32.xlu0 %v5364, 96
        %v5386 = vpop.permute.xlu0 %5385
        %5387 = vrot.lane.b32.xlu0 %v5365, 96
        %v5388 = vpop.permute.xlu0 %5387
        %5389 = vrot.lane.b32.xlu0 %v5366, 96
        %v5390 = vpop.permute.xlu0 %5389
        %v5399 = vmul.f32 %v5336, %v5376
        %v5400 = vmul.f32 %v5339, %v5378
        %v5401 = vmul.f32 %v5342, %v5380
        %v5402 = vmul.f32 %v5345, %v5382
        %v5403 = vmul.f32 %v5348, %v5384
        %v5404 = vmul.f32 %v5351, %v5386
        %v5405 = vmul.f32 %v5354, %v5388
        %v5406 = vmul.f32 %v5357, %v5390
        %v5407 = vperm.slane %v725, 7
        %v5409 = vsel %vm826, %v5399, 0
        %v5412 = vsel %vm826, %v5400, 0
        %v5415 = vsel %vm826, %v5401, 0
        %v5418 = vsel %vm826, %v5402, 0
        %v5421 = vsel %vm826, %v5403, 0
        %v5424 = vsel %vm826, %v5404, 0
        %v5427 = vsel %vm826, %v5405, 0
        %v5430 = vsel %vm826, %v5406, 0
        %5432 = vmatpush.msra.mxu0 0.0
        %5433 = vmatpush.msra.mxu0 0.0
        %5434 = vmatpush.msra.mxu0 0.0
        %5435 = vmatpush.msra.mxu0 0.0
        %5436 = vmatpush.msra.mxu0 0.0
        %5437 = vmatpush.msra.mxu0 0.0
        %5438 = vmatpush.msra.mxu0 0.0
        %5439 = vmatpush.msra.mxu0 0.0
        %5440 = vmatpush.msra.mxu0 0.0
        %5441 = vmatpush.msra.mxu0 0.0
        %5442 = vmatpush.msra.mxu0 0.0
        %5443 = vmatpush.msra.mxu0 0.0
        %5444 = vmatpush.msra.mxu0 %v4588
        %5445 = vmatpush.msra.mxu0 %v4587
        %5446 = vmatpush.msra.mxu0 %v4586
        %5447 = vmatpush.msra.mxu0 %v4585
        %5448 = vmatmul.f32.gmra.mxu0 %v5409
        %v5449 = vpop.f32.mrf.mxu0
        %v5450 = vadd.f32 %v5407, %v5449
        %5451 = vmatmul.f32.gmra.mxu0 %v5412
        %v5452 = vpop.f32.mrf.mxu0
        %v5453 = vadd.f32 %v5407, %v5452
        %5454 = vmatmul.f32.gmra.mxu0 %v5415
        %v5455 = vpop.f32.mrf.mxu0
        %v5456 = vadd.f32 %v5407, %v5455
        %5457 = vmatmul.f32.gmra.mxu0 %v5418
        %v5458 = vpop.f32.mrf.mxu0
        %v5459 = vadd.f32 %v5407, %v5458
        %5460 = vmatmul.f32.gmra.mxu0 %v5421
        %v5461 = vpop.f32.mrf.mxu0
        %v5462 = vadd.f32 %v5407, %v5461
        %5463 = vmatmul.f32.gmra.mxu0 %v5424
        %v5464 = vpop.f32.mrf.mxu0
        %v5465 = vadd.f32 %v5407, %v5464
        %5466 = vmatmul.f32.gmra.mxu0 %v5427
        %v5467 = vpop.f32.mrf.mxu0
        %v5468 = vadd.f32 %v5407, %v5467
        %5469 = vmatmul.f32.gmra.mxu0 %v5430
        %v5470 = vpop.f32.mrf.mxu0
        %v5471 = vadd.f32 %v5407, %v5470
        %5472 = vdwg.mxu0
        %v5473 = vadd.f32 %v4379, %v5450
        %v5474 = vadd.f32 %v4380, %v5453
        %v5475 = vadd.f32 %v4381, %v5456
        %v5476 = vadd.f32 %v4382, %v5459
        %v5477 = vadd.f32 %v4383, %v5462
        %v5478 = vadd.f32 %v4384, %v5465
        %v5479 = vadd.f32 %v4385, %v5468
        %v5480 = vadd.f32 %v4386, %v5471
        %v5481 = vsel %vm826, %v5473, 0.0
        %5482 = vadd.xlane.f32.xlu0 %v5481
        %v5483 = vpop.xlane.xlu0 %5482
        %v5484 = vsel %vm826, %v5474, 0.0
        %5485 = vadd.xlane.f32.xlu0 %v5484
        %v5486 = vpop.xlane.xlu0 %5485
        %v5487 = vsel %vm826, %v5475, 0.0
        %5488 = vadd.xlane.f32.xlu0 %v5487
        %v5489 = vpop.xlane.xlu0 %5488
        %v5490 = vsel %vm826, %v5476, 0.0
        %5491 = vadd.xlane.f32.xlu0 %v5490
        %v5492 = vpop.xlane.xlu0 %5491
        %v5493 = vsel %vm826, %v5477, 0.0
        %5494 = vadd.xlane.f32.xlu0 %v5493
        %v5495 = vpop.xlane.xlu0 %5494
        %v5496 = vsel %vm826, %v5478, 0.0
        %5497 = vadd.xlane.f32.xlu0 %v5496
        %v5498 = vpop.xlane.xlu0 %5497
        %v5499 = vsel %vm826, %v5479, 0.0
        %5500 = vadd.xlane.f32.xlu0 %v5499
        %v5501 = vpop.xlane.xlu0 %5500
        %v5502 = vsel %vm826, %v5480, 0.0
        %5503 = vadd.xlane.f32.xlu0 %v5502
        %v5504 = vpop.xlane.xlu0 %5503
        %v5505 = vmul.f32 %v5483, %v857
        %v5506 = vmul.f32 %v5486, %v857
        %v5507 = vmul.f32 %v5489, %v857
        %v5508 = vmul.f32 %v5492, %v857
        %v5509 = vmul.f32 %v5495, %v857
        %v5510 = vmul.f32 %v5498, %v857
        %v5511 = vmul.f32 %v5501, %v857
        %v5512 = vmul.f32 %v5504, %v857
        %v5513 = vsub.f32 %v5473, %v5505
        %v5514 = vsub.f32 %v5474, %v5506
        %v5515 = vsub.f32 %v5475, %v5507
        %v5516 = vsub.f32 %v5476, %v5508
        %v5517 = vsub.f32 %v5477, %v5509
        %v5518 = vsub.f32 %v5478, %v5510
        %v5519 = vsub.f32 %v5479, %v5511
        %v5520 = vsub.f32 %v5480, %v5512
        %v5521 = vmul.f32 %v5513, %v5513
        %v5522 = vmul.f32 %v5514, %v5514
        %v5523 = vmul.f32 %v5515, %v5515
        %v5524 = vmul.f32 %v5516, %v5516
        %v5525 = vmul.f32 %v5517, %v5517
        %v5526 = vmul.f32 %v5518, %v5518
        %v5527 = vmul.f32 %v5519, %v5519
        %v5528 = vmul.f32 %v5520, %v5520
        %v5529 = vsel %vm826, %v5521, 0.0
        %5530 = vadd.xlane.f32.xlu0 %v5529
        %v5531 = vpop.xlane.xlu0 %5530
        %v5532 = vsel %vm826, %v5522, 0.0
        %5533 = vadd.xlane.f32.xlu0 %v5532
        %v5534 = vpop.xlane.xlu0 %5533
        %v5535 = vsel %vm826, %v5523, 0.0
        %5536 = vadd.xlane.f32.xlu0 %v5535
        %v5537 = vpop.xlane.xlu0 %5536
        %v5538 = vsel %vm826, %v5524, 0.0
        %5539 = vadd.xlane.f32.xlu0 %v5538
        %v5540 = vpop.xlane.xlu0 %5539
        %v5541 = vsel %vm826, %v5525, 0.0
        %5542 = vadd.xlane.f32.xlu0 %v5541
        %v5543 = vpop.xlane.xlu0 %5542
        %v5544 = vsel %vm826, %v5526, 0.0
        %5545 = vadd.xlane.f32.xlu0 %v5544
        %v5546 = vpop.xlane.xlu0 %5545
        %v5547 = vsel %vm826, %v5527, 0.0
        %5548 = vadd.xlane.f32.xlu0 %v5547
        %v5549 = vpop.xlane.xlu0 %5548
        %v5550 = vsel %vm826, %v5528, 0.0
        %5551 = vadd.xlane.f32.xlu0 %v5550
        %v5552 = vpop.xlane.xlu0 %5551
        %v5553 = vmul.f32 %v5531, %v857
        %v5554 = vmul.f32 %v5534, %v857
        %v5555 = vmul.f32 %v5537, %v857
        %v5556 = vmul.f32 %v5540, %v857
        %v5557 = vmul.f32 %v5543, %v857
        %v5558 = vmul.f32 %v5546, %v857
        %v5559 = vmul.f32 %v5549, %v857
        %v5560 = vmul.f32 %v5552, %v857
        %v5561 = vadd.f32 %v5553, 1e-05
        %v5562 = vadd.f32 %v5554, 1e-05
        %v5563 = vadd.f32 %v5555, 1e-05
        %v5564 = vadd.f32 %v5556, 1e-05
        %v5565 = vadd.f32 %v5557, 1e-05
        %v5566 = vadd.f32 %v5558, 1e-05
        %v5567 = vadd.f32 %v5559, 1e-05
        %v5568 = vadd.f32 %v5560, 1e-05
        %v5569 = vrsqrt.pop %v5561
        %v5570 = vmul.f32 %v5569, %v5561
        %v5571 = vmul.f32 %v5570, %v5569
        %v5572 = vmul.f32 0.5, %v5571
        %v5573 = vsub.f32 1.5, %v5572
        %v5574 = vmul.f32 %v5569, %v5573
        %vm5575 = vweird.f32 %v5561
        %vm5576 = vweird.f32 %v5569
        %vm5577 = vmor %vm5575, %vm5576
        %v5578 = vsel %vm5577, %v5569, %v5574
        %v5579 = vrsqrt.pop %v5562
        %v5580 = vmul.f32 %v5579, %v5562
        %v5581 = vmul.f32 %v5580, %v5579
        %v5582 = vmul.f32 0.5, %v5581
        %v5583 = vsub.f32 1.5, %v5582
        %v5584 = vmul.f32 %v5579, %v5583
        %vm5585 = vweird.f32 %v5562
        %vm5586 = vweird.f32 %v5579
        %vm5587 = vmor %vm5585, %vm5586
        %v5588 = vsel %vm5587, %v5579, %v5584
        %v5589 = vrsqrt.pop %v5563
        %v5590 = vmul.f32 %v5589, %v5563
        %v5591 = vmul.f32 %v5590, %v5589
        %v5592 = vmul.f32 0.5, %v5591
        %v5593 = vsub.f32 1.5, %v5592
        %v5594 = vmul.f32 %v5589, %v5593
        %vm5595 = vweird.f32 %v5563
        %vm5596 = vweird.f32 %v5589
        %vm5597 = vmor %vm5595, %vm5596
        %v5598 = vsel %vm5597, %v5589, %v5594
        %v5599 = vrsqrt.pop %v5564
        %v5600 = vmul.f32 %v5599, %v5564
        %v5601 = vmul.f32 %v5600, %v5599
        %v5602 = vmul.f32 0.5, %v5601
        %v5603 = vsub.f32 1.5, %v5602
        %v5604 = vmul.f32 %v5599, %v5603
        %vm5605 = vweird.f32 %v5564
        %vm5606 = vweird.f32 %v5599
        %vm5607 = vmor %vm5605, %vm5606
        %v5608 = vsel %vm5607, %v5599, %v5604
        %v5609 = vrsqrt.pop %v5565
        %v5610 = vmul.f32 %v5609, %v5565
        %v5611 = vmul.f32 %v5610, %v5609
        %v5612 = vmul.f32 0.5, %v5611
        %v5613 = vsub.f32 1.5, %v5612
        %v5614 = vmul.f32 %v5609, %v5613
        %vm5615 = vweird.f32 %v5565
        %vm5616 = vweird.f32 %v5609
        %vm5617 = vmor %vm5615, %vm5616
        %v5618 = vsel %vm5617, %v5609, %v5614
        %v5619 = vrsqrt.pop %v5566
        %v5620 = vmul.f32 %v5619, %v5566
        %v5621 = vmul.f32 %v5620, %v5619
        %v5622 = vmul.f32 0.5, %v5621
        %v5623 = vsub.f32 1.5, %v5622
        %v5624 = vmul.f32 %v5619, %v5623
        %vm5625 = vweird.f32 %v5566
        %vm5626 = vweird.f32 %v5619
        %vm5627 = vmor %vm5625, %vm5626
        %v5628 = vsel %vm5627, %v5619, %v5624
        %v5629 = vrsqrt.pop %v5567
        %v5630 = vmul.f32 %v5629, %v5567
        %v5631 = vmul.f32 %v5630, %v5629
        %v5632 = vmul.f32 0.5, %v5631
        %v5633 = vsub.f32 1.5, %v5632
        %v5634 = vmul.f32 %v5629, %v5633
        %vm5635 = vweird.f32 %v5567
        %vm5636 = vweird.f32 %v5629
        %vm5637 = vmor %vm5635, %vm5636
        %v5638 = vsel %vm5637, %v5629, %v5634
        %v5639 = vrsqrt.pop %v5568
        %v5640 = vmul.f32 %v5639, %v5568
        %v5641 = vmul.f32 %v5640, %v5639
        %v5642 = vmul.f32 0.5, %v5641
        %v5643 = vsub.f32 1.5, %v5642
        %v5644 = vmul.f32 %v5639, %v5643
        %vm5645 = vweird.f32 %v5568
        %vm5646 = vweird.f32 %v5639
        %vm5647 = vmor %vm5645, %vm5646
        %v5648 = vsel %vm5647, %v5639, %v5644
        %v5649 = vmul.f32 %v5513, %v5578
        %v5650 = vmul.f32 %v5514, %v5588
        %v5651 = vmul.f32 %v5515, %v5598
        %v5652 = vmul.f32 %v5516, %v5608
        %v5653 = vmul.f32 %v5517, %v5618
        %v5654 = vmul.f32 %v5518, %v5628
        %v5655 = vmul.f32 %v5519, %v5638
        %v5656 = vmul.f32 %v5520, %v5648
        %v5657 = vperm.slane %v726, 0
        %v5658 = vmul.f32 %v5649, %v5657
        %v5659 = vmul.f32 %v5650, %v5657
        %v5660 = vmul.f32 %v5651, %v5657
        %v5661 = vmul.f32 %v5652, %v5657
        %v5662 = vmul.f32 %v5653, %v5657
        %v5663 = vmul.f32 %v5654, %v5657
        %v5664 = vmul.f32 %v5655, %v5657
        %v5665 = vmul.f32 %v5656, %v5657
        %v5666 = vperm.slane %v726, 1
        %v5667 = vadd.f32 %v5658, %v5666
        %v5668 = vadd.f32 %v5659, %v5666
        %v5669 = vadd.f32 %v5660, %v5666
        %v5670 = vadd.f32 %v5661, %v5666
        %v5671 = vadd.f32 %v5662, %v5666
        %v5672 = vadd.f32 %v5663, %v5666
        %v5673 = vadd.f32 %v5664, %v5666
        %v5674 = vadd.f32 %v5665, %v5666
        %v5675 = vld [vmem:[%s19] sm:$0xff]
        %v5676 = vld [vmem:[%s19 + $0x8] sm:$0xff]
        %v5677 = vld [vmem:[%s19 + $0x10] sm:$0xff]
        %v5678 = vld [vmem:[%s19 + $0x18] sm:$0xff]
        %v5679 = vld [vmem:[%s19 + $0x20] sm:$0xff]
        %v5680 = vld [vmem:[%s19 + $0x28] sm:$0xff]
        %v5681 = vld [vmem:[%s19 + $0x30] sm:$0xff]
        %v5682 = vld [vmem:[%s19 + $0x38] sm:$0xff]
        %v5684 = vperm.slane %v728, 2
        %v5685 = vperm.slane %v728, 6
        %v5688 = vperm.slane %v5684, 2
        %v5689 = vperm.slane %v5685, 2
        %v5691 = vsel %vm826, %v5667, 0
        %v5694 = vsel %vm826, %v5668, 0
        %v5697 = vsel %vm826, %v5669, 0
        %v5700 = vsel %vm826, %v5670, 0
        %v5703 = vsel %vm826, %v5671, 0
        %v5706 = vsel %vm826, %v5672, 0
        %v5709 = vsel %vm826, %v5673, 0
        %v5712 = vsel %vm826, %v5674, 0
        %5714 = vmatpush.msra.mxu0 0.0
        %5715 = vmatpush.msra.mxu0 0.0
        %5716 = vmatpush.msra.mxu0 0.0
        %5717 = vmatpush.msra.mxu0 0.0
        %5718 = vmatpush.msra.mxu0 0.0
        %5719 = vmatpush.msra.mxu0 0.0
        %5720 = vmatpush.msra.mxu0 0.0
        %5721 = vmatpush.msra.mxu0 0.0
        %5722 = vmatpush.msra.mxu0 0.0
        %5723 = vmatpush.msra.mxu0 0.0
        %5724 = vmatpush.msra.mxu0 0.0
        %5725 = vmatpush.msra.mxu0 0.0
        %5726 = vmatpush.msra.mxu0 %v5681
        %5727 = vmatpush.msra.mxu0 %v5679
        %5728 = vmatpush.msra.mxu0 %v5677
        %5729 = vmatpush.msra.mxu0 %v5675
        %5730 = vmatmul.f32.gmra.mxu0 %v5691
        %v5731 = vpop.f32.mrf.mxu0
        %v5732 = vadd.f32 %v5688, %v5731
        %5733 = vmatmul.f32.gmra.mxu0 %v5694
        %v5734 = vpop.f32.mrf.mxu0
        %v5735 = vadd.f32 %v5688, %v5734
        %5736 = vmatmul.f32.gmra.mxu0 %v5697
        %v5737 = vpop.f32.mrf.mxu0
        %v5738 = vadd.f32 %v5688, %v5737
        %5739 = vmatmul.f32.gmra.mxu0 %v5700
        %v5740 = vpop.f32.mrf.mxu0
        %v5741 = vadd.f32 %v5688, %v5740
        %5742 = vmatmul.f32.gmra.mxu0 %v5703
        %v5743 = vpop.f32.mrf.mxu0
        %v5744 = vadd.f32 %v5688, %v5743
        %5745 = vmatmul.f32.gmra.mxu0 %v5706
        %v5746 = vpop.f32.mrf.mxu0
        %v5747 = vadd.f32 %v5688, %v5746
        %5748 = vmatmul.f32.gmra.mxu0 %v5709
        %v5749 = vpop.f32.mrf.mxu0
        %v5750 = vadd.f32 %v5688, %v5749
        %5751 = vmatmul.f32.gmra.mxu0 %v5712
        %v5752 = vpop.f32.mrf.mxu0
        %v5753 = vadd.f32 %v5688, %v5752
        %5754 = vdwg.mxu0
        %5755 = vmatpush.msra.mxu0 0.0
        %5756 = vmatpush.msra.mxu0 0.0
        %5757 = vmatpush.msra.mxu0 0.0
        %5758 = vmatpush.msra.mxu0 0.0
        %5759 = vmatpush.msra.mxu0 0.0
        %5760 = vmatpush.msra.mxu0 0.0
        %5761 = vmatpush.msra.mxu0 0.0
        %5762 = vmatpush.msra.mxu0 0.0
        %5763 = vmatpush.msra.mxu0 0.0
        %5764 = vmatpush.msra.mxu0 0.0
        %5765 = vmatpush.msra.mxu0 0.0
        %5766 = vmatpush.msra.mxu0 0.0
        %5767 = vmatpush.msra.mxu0 %v5682
        %5768 = vmatpush.msra.mxu0 %v5680
        %5769 = vmatpush.msra.mxu0 %v5678
        %5770 = vmatpush.msra.mxu0 %v5676
        %5771 = vmatmul.f32.gmra.mxu0 %v5691
        %v5772 = vpop.f32.mrf.mxu0
        %v5773 = vadd.f32 %v5689, %v5772
        %5774 = vmatmul.f32.gmra.mxu0 %v5694
        %v5775 = vpop.f32.mrf.mxu0
        %v5776 = vadd.f32 %v5689, %v5775
        %5777 = vmatmul.f32.gmra.mxu0 %v5697
        %v5778 = vpop.f32.mrf.mxu0
        %v5779 = vadd.f32 %v5689, %v5778
        %5780 = vmatmul.f32.gmra.mxu0 %v5700
        %v5781 = vpop.f32.mrf.mxu0
        %v5782 = vadd.f32 %v5689, %v5781
        %5783 = vmatmul.f32.gmra.mxu0 %v5703
        %v5784 = vpop.f32.mrf.mxu0
        %v5785 = vadd.f32 %v5689, %v5784
        %5786 = vmatmul.f32.gmra.mxu0 %v5706
        %v5787 = vpop.f32.mrf.mxu0
        %v5788 = vadd.f32 %v5689, %v5787
        %5789 = vmatmul.f32.gmra.mxu0 %v5709
        %v5790 = vpop.f32.mrf.mxu0
        %v5791 = vadd.f32 %v5689, %v5790
        %5792 = vmatmul.f32.gmra.mxu0 %v5712
        %v5793 = vpop.f32.mrf.mxu0
        %v5794 = vadd.f32 %v5689, %v5793
        %5795 = vdwg.mxu0
        %v5796 = vmul.f32 %v5732, 0.5
        %v5797 = vmul.f32 %v5773, 0.5
        %v5798 = vmul.f32 %v5735, 0.5
        %v5799 = vmul.f32 %v5776, 0.5
        %v5800 = vmul.f32 %v5738, 0.5
        %v5801 = vmul.f32 %v5779, 0.5
        %v5802 = vmul.f32 %v5741, 0.5
        %v5803 = vmul.f32 %v5782, 0.5
        %v5804 = vmul.f32 %v5744, 0.5
        %v5805 = vmul.f32 %v5785, 0.5
        %v5806 = vmul.f32 %v5747, 0.5
        %v5807 = vmul.f32 %v5788, 0.5
        %v5808 = vmul.f32 %v5750, 0.5
        %v5809 = vmul.f32 %v5791, 0.5
        %v5810 = vmul.f32 %v5753, 0.5
        %v5811 = vmul.f32 %v5794, 0.5
        %v5812 = vmul.f32 %v5732, 0.70710677
        %v5813 = vmul.f32 %v5773, 0.70710677
        %v5814 = vmul.f32 %v5735, 0.70710677
        %v5815 = vmul.f32 %v5776, 0.70710677
        %v5816 = vmul.f32 %v5738, 0.70710677
        %v5817 = vmul.f32 %v5779, 0.70710677
        %v5818 = vmul.f32 %v5741, 0.70710677
        %v5819 = vmul.f32 %v5782, 0.70710677
        %v5820 = vmul.f32 %v5744, 0.70710677
        %v5821 = vmul.f32 %v5785, 0.70710677
        %v5822 = vmul.f32 %v5747, 0.70710677
        %v5823 = vmul.f32 %v5788, 0.70710677
        %v5824 = vmul.f32 %v5750, 0.70710677
        %v5825 = vmul.f32 %v5791, 0.70710677
        %v5826 = vmul.f32 %v5753, 0.70710677
        %v5827 = vmul.f32 %v5794, 0.70710677
        %v5828 = vmul.f32 %v5812, %v5812
        %v5829 = vmin.f32 16.0, %v5828
        %v5830 = vmul.f32 %v5829, 2.1237322e-06
        %v5831 = vadd.f32 %v5830, 0.00028619796
        %v5832 = vmul.f32 %v5829, %v5831
        %v5833 = vadd.f32 %v5832, 0.0036580483
        %v5834 = vmul.f32 %v5829, %v5833
        %v5835 = vadd.f32 %v5834, 0.05243302
        %v5836 = vmul.f32 %v5829, %v5835
        %v5837 = vadd.f32 %v5836, 0.18741608
        %v5838 = vmul.f32 %v5829, %v5837
        %v5839 = vadd.f32 %v5838, 1.1283791
        %v5840 = vmul.f32 %v5812, %v5839
        %v5841 = vmul.f32 %v5829, 3.8918573e-05
        %v5842 = vadd.f32 %v5841, 0.001143296
        %v5843 = vmul.f32 %v5829, %v5842
        %v5844 = vadd.f32 %v5843, 0.014752088
        %v5845 = vmul.f32 %v5829, %v5844
        %v5846 = vadd.f32 %v5845, 0.112945676
        %v5847 = vmul.f32 %v5829, %v5846
        %v5848 = vadd.f32 %v5847, 0.4994258
        %v5849 = vmul.f32 %v5829, %v5848
        %v5850 = vadd.f32 %v5849, 1.0
        %v5851 = vrcp.pop %v5850
        %v5852 = vmul.f32 %v5850, %v5851
        %v5853 = vsub.f32 1.0, %v5852
        %v5854 = vmul.f32 %v5851, %v5853
        %v5855 = vadd.f32 %v5851, %v5854
        %vm5856 = vweird.f32 %v5850
        %vm5857 = vweird.f32 %v5851
        %vm5858 = vmor %vm5856, %vm5857
        %v5859 = vsel %vm5858, %v5851, %v5855
        %v5860 = vand.u32 2147483647, %v5850
        %vm5861 = vcmp.eq.f32.partialorder %v5860, 8.507059e+37
        %v5862 = vand.u32 %v5850, 2147483648
        %v5863 = vor.u32 1.1754944e-38, %v5862
        %v5864 = vsel %vm5861, %v5863, %v5859
        %v5865 = vmul.f32 %v5840, %v5864
        %v5866 = vmin.f32 %v5865, 1.0
        %v5867 = vmax.f32 %v5866, -1.0
        %v5868 = vmul.f32 %v5813, %v5813
        %v5869 = vmin.f32 16.0, %v5868
        %v5870 = vmul.f32 %v5869, 2.1237322e-06
        %v5871 = vadd.f32 %v5870, 0.00028619796
        %v5872 = vmul.f32 %v5869, %v5871
        %v5873 = vadd.f32 %v5872, 0.0036580483
        %v5874 = vmul.f32 %v5869, %v5873
        %v5875 = vadd.f32 %v5874, 0.05243302
        %v5876 = vmul.f32 %v5869, %v5875
        %v5877 = vadd.f32 %v5876, 0.18741608
        %v5878 = vmul.f32 %v5869, %v5877
        %v5879 = vadd.f32 %v5878, 1.1283791
        %v5880 = vmul.f32 %v5813, %v5879
        %v5881 = vmul.f32 %v5869, 3.8918573e-05
        %v5882 = vadd.f32 %v5881, 0.001143296
        %v5883 = vmul.f32 %v5869, %v5882
        %v5884 = vadd.f32 %v5883, 0.014752088
        %v5885 = vmul.f32 %v5869, %v5884
        %v5886 = vadd.f32 %v5885, 0.112945676
        %v5887 = vmul.f32 %v5869, %v5886
        %v5888 = vadd.f32 %v5887, 0.4994258
        %v5889 = vmul.f32 %v5869, %v5888
        %v5890 = vadd.f32 %v5889, 1.0
        %v5891 = vrcp.pop %v5890
        %v5892 = vmul.f32 %v5890, %v5891
        %v5893 = vsub.f32 1.0, %v5892
        %v5894 = vmul.f32 %v5891, %v5893
        %v5895 = vadd.f32 %v5891, %v5894
        %vm5896 = vweird.f32 %v5890
        %vm5897 = vweird.f32 %v5891
        %vm5898 = vmor %vm5896, %vm5897
        %v5899 = vsel %vm5898, %v5891, %v5895
        %v5900 = vand.u32 2147483647, %v5890
        %vm5901 = vcmp.eq.f32.partialorder %v5900, 8.507059e+37
        %v5902 = vand.u32 %v5890, 2147483648
        %v5903 = vor.u32 1.1754944e-38, %v5902
        %v5904 = vsel %vm5901, %v5903, %v5899
        %v5905 = vmul.f32 %v5880, %v5904
        %v5906 = vmin.f32 %v5905, 1.0
        %v5907 = vmax.f32 %v5906, -1.0
        %v5908 = vmul.f32 %v5814, %v5814
        %v5909 = vmin.f32 16.0, %v5908
        %v5910 = vmul.f32 %v5909, 2.1237322e-06
        %v5911 = vadd.f32 %v5910, 0.00028619796
        %v5912 = vmul.f32 %v5909, %v5911
        %v5913 = vadd.f32 %v5912, 0.0036580483
        %v5914 = vmul.f32 %v5909, %v5913
        %v5915 = vadd.f32 %v5914, 0.05243302
        %v5916 = vmul.f32 %v5909, %v5915
        %v5917 = vadd.f32 %v5916, 0.18741608
        %v5918 = vmul.f32 %v5909, %v5917
        %v5919 = vadd.f32 %v5918, 1.1283791
        %v5920 = vmul.f32 %v5814, %v5919
        %v5921 = vmul.f32 %v5909, 3.8918573e-05
        %v5922 = vadd.f32 %v5921, 0.001143296
        %v5923 = vmul.f32 %v5909, %v5922
        %v5924 = vadd.f32 %v5923, 0.014752088
        %v5925 = vmul.f32 %v5909, %v5924
        %v5926 = vadd.f32 %v5925, 0.112945676
        %v5927 = vmul.f32 %v5909, %v5926
        %v5928 = vadd.f32 %v5927, 0.4994258
        %v5929 = vmul.f32 %v5909, %v5928
        %v5930 = vadd.f32 %v5929, 1.0
        %v5931 = vrcp.pop %v5930
        %v5932 = vmul.f32 %v5930, %v5931
        %v5933 = vsub.f32 1.0, %v5932
        %v5934 = vmul.f32 %v5931, %v5933
        %v5935 = vadd.f32 %v5931, %v5934
        %vm5936 = vweird.f32 %v5930
        %vm5937 = vweird.f32 %v5931
        %vm5938 = vmor %vm5936, %vm5937
        %v5939 = vsel %vm5938, %v5931, %v5935
        %v5940 = vand.u32 2147483647, %v5930
        %vm5941 = vcmp.eq.f32.partialorder %v5940, 8.507059e+37
        %v5942 = vand.u32 %v5930, 2147483648
        %v5943 = vor.u32 1.1754944e-38, %v5942
        %v5944 = vsel %vm5941, %v5943, %v5939
        %v5945 = vmul.f32 %v5920, %v5944
        %v5946 = vmin.f32 %v5945, 1.0
        %v5947 = vmax.f32 %v5946, -1.0
        %v5948 = vmul.f32 %v5815, %v5815
        %v5949 = vmin.f32 16.0, %v5948
        %v5950 = vmul.f32 %v5949, 2.1237322e-06
        %v5951 = vadd.f32 %v5950, 0.00028619796
        %v5952 = vmul.f32 %v5949, %v5951
        %v5953 = vadd.f32 %v5952, 0.0036580483
        %v5954 = vmul.f32 %v5949, %v5953
        %v5955 = vadd.f32 %v5954, 0.05243302
        %v5956 = vmul.f32 %v5949, %v5955
        %v5957 = vadd.f32 %v5956, 0.18741608
        %v5958 = vmul.f32 %v5949, %v5957
        %v5959 = vadd.f32 %v5958, 1.1283791
        %v5960 = vmul.f32 %v5815, %v5959
        %v5961 = vmul.f32 %v5949, 3.8918573e-05
        %v5962 = vadd.f32 %v5961, 0.001143296
        %v5963 = vmul.f32 %v5949, %v5962
        %v5964 = vadd.f32 %v5963, 0.014752088
        %v5965 = vmul.f32 %v5949, %v5964
        %v5966 = vadd.f32 %v5965, 0.112945676
        %v5967 = vmul.f32 %v5949, %v5966
        %v5968 = vadd.f32 %v5967, 0.4994258
        %v5969 = vmul.f32 %v5949, %v5968
        %v5970 = vadd.f32 %v5969, 1.0
        %v5971 = vrcp.pop %v5970
        %v5972 = vmul.f32 %v5970, %v5971
        %v5973 = vsub.f32 1.0, %v5972
        %v5974 = vmul.f32 %v5971, %v5973
        %v5975 = vadd.f32 %v5971, %v5974
        %vm5976 = vweird.f32 %v5970
        %vm5977 = vweird.f32 %v5971
        %vm5978 = vmor %vm5976, %vm5977
        %v5979 = vsel %vm5978, %v5971, %v5975
        %v5980 = vand.u32 2147483647, %v5970
        %vm5981 = vcmp.eq.f32.partialorder %v5980, 8.507059e+37
        %v5982 = vand.u32 %v5970, 2147483648
        %v5983 = vor.u32 1.1754944e-38, %v5982
        %v5984 = vsel %vm5981, %v5983, %v5979
        %v5985 = vmul.f32 %v5960, %v5984
        %v5986 = vmin.f32 %v5985, 1.0
        %v5987 = vmax.f32 %v5986, -1.0
        %v5988 = vmul.f32 %v5816, %v5816
        %v5989 = vmin.f32 16.0, %v5988
        %v5990 = vmul.f32 %v5989, 2.1237322e-06
        %v5991 = vadd.f32 %v5990, 0.00028619796
        %v5992 = vmul.f32 %v5989, %v5991
        %v5993 = vadd.f32 %v5992, 0.0036580483
        %v5994 = vmul.f32 %v5989, %v5993
        %v5995 = vadd.f32 %v5994, 0.05243302
        %v5996 = vmul.f32 %v5989, %v5995
        %v5997 = vadd.f32 %v5996, 0.18741608
        %v5998 = vmul.f32 %v5989, %v5997
        %v5999 = vadd.f32 %v5998, 1.1283791
        %v6000 = vmul.f32 %v5816, %v5999
        %v6001 = vmul.f32 %v5989, 3.8918573e-05
        %v6002 = vadd.f32 %v6001, 0.001143296
        %v6003 = vmul.f32 %v5989, %v6002
        %v6004 = vadd.f32 %v6003, 0.014752088
        %v6005 = vmul.f32 %v5989, %v6004
        %v6006 = vadd.f32 %v6005, 0.112945676
        %v6007 = vmul.f32 %v5989, %v6006
        %v6008 = vadd.f32 %v6007, 0.4994258
        %v6009 = vmul.f32 %v5989, %v6008
        %v6010 = vadd.f32 %v6009, 1.0
        %v6011 = vrcp.pop %v6010
        %v6012 = vmul.f32 %v6010, %v6011
        %v6013 = vsub.f32 1.0, %v6012
        %v6014 = vmul.f32 %v6011, %v6013
        %v6015 = vadd.f32 %v6011, %v6014
        %vm6016 = vweird.f32 %v6010
        %vm6017 = vweird.f32 %v6011
        %vm6018 = vmor %vm6016, %vm6017
        %v6019 = vsel %vm6018, %v6011, %v6015
        %v6020 = vand.u32 2147483647, %v6010
        %vm6021 = vcmp.eq.f32.partialorder %v6020, 8.507059e+37
        %v6022 = vand.u32 %v6010, 2147483648
        %v6023 = vor.u32 1.1754944e-38, %v6022
        %v6024 = vsel %vm6021, %v6023, %v6019
        %v6025 = vmul.f32 %v6000, %v6024
        %v6026 = vmin.f32 %v6025, 1.0
        %v6027 = vmax.f32 %v6026, -1.0
        %v6028 = vmul.f32 %v5817, %v5817
        %v6029 = vmin.f32 16.0, %v6028
        %v6030 = vmul.f32 %v6029, 2.1237322e-06
        %v6031 = vadd.f32 %v6030, 0.00028619796
        %v6032 = vmul.f32 %v6029, %v6031
        %v6033 = vadd.f32 %v6032, 0.0036580483
        %v6034 = vmul.f32 %v6029, %v6033
        %v6035 = vadd.f32 %v6034, 0.05243302
        %v6036 = vmul.f32 %v6029, %v6035
        %v6037 = vadd.f32 %v6036, 0.18741608
        %v6038 = vmul.f32 %v6029, %v6037
        %v6039 = vadd.f32 %v6038, 1.1283791
        %v6040 = vmul.f32 %v5817, %v6039
        %v6041 = vmul.f32 %v6029, 3.8918573e-05
        %v6042 = vadd.f32 %v6041, 0.001143296
        %v6043 = vmul.f32 %v6029, %v6042
        %v6044 = vadd.f32 %v6043, 0.014752088
        %v6045 = vmul.f32 %v6029, %v6044
        %v6046 = vadd.f32 %v6045, 0.112945676
        %v6047 = vmul.f32 %v6029, %v6046
        %v6048 = vadd.f32 %v6047, 0.4994258
        %v6049 = vmul.f32 %v6029, %v6048
        %v6050 = vadd.f32 %v6049, 1.0
        %v6051 = vrcp.pop %v6050
        %v6052 = vmul.f32 %v6050, %v6051
        %v6053 = vsub.f32 1.0, %v6052
        %v6054 = vmul.f32 %v6051, %v6053
        %v6055 = vadd.f32 %v6051, %v6054
        %vm6056 = vweird.f32 %v6050
        %vm6057 = vweird.f32 %v6051
        %vm6058 = vmor %vm6056, %vm6057
        %v6059 = vsel %vm6058, %v6051, %v6055
        %v6060 = vand.u32 2147483647, %v6050
        %vm6061 = vcmp.eq.f32.partialorder %v6060, 8.507059e+37
        %v6062 = vand.u32 %v6050, 2147483648
        %v6063 = vor.u32 1.1754944e-38, %v6062
        %v6064 = vsel %vm6061, %v6063, %v6059
        %v6065 = vmul.f32 %v6040, %v6064
        %v6066 = vmin.f32 %v6065, 1.0
        %v6067 = vmax.f32 %v6066, -1.0
        %v6068 = vmul.f32 %v5818, %v5818
        %v6069 = vmin.f32 16.0, %v6068
        %v6070 = vmul.f32 %v6069, 2.1237322e-06
        %v6071 = vadd.f32 %v6070, 0.00028619796
        %v6072 = vmul.f32 %v6069, %v6071
        %v6073 = vadd.f32 %v6072, 0.0036580483
        %v6074 = vmul.f32 %v6069, %v6073
        %v6075 = vadd.f32 %v6074, 0.05243302
        %v6076 = vmul.f32 %v6069, %v6075
        %v6077 = vadd.f32 %v6076, 0.18741608
        %v6078 = vmul.f32 %v6069, %v6077
        %v6079 = vadd.f32 %v6078, 1.1283791
        %v6080 = vmul.f32 %v5818, %v6079
        %v6081 = vmul.f32 %v6069, 3.8918573e-05
        %v6082 = vadd.f32 %v6081, 0.001143296
        %v6083 = vmul.f32 %v6069, %v6082
        %v6084 = vadd.f32 %v6083, 0.014752088
        %v6085 = vmul.f32 %v6069, %v6084
        %v6086 = vadd.f32 %v6085, 0.112945676
        %v6087 = vmul.f32 %v6069, %v6086
        %v6088 = vadd.f32 %v6087, 0.4994258
        %v6089 = vmul.f32 %v6069, %v6088
        %v6090 = vadd.f32 %v6089, 1.0
        %v6091 = vrcp.pop %v6090
        %v6092 = vmul.f32 %v6090, %v6091
        %v6093 = vsub.f32 1.0, %v6092
        %v6094 = vmul.f32 %v6091, %v6093
        %v6095 = vadd.f32 %v6091, %v6094
        %vm6096 = vweird.f32 %v6090
        %vm6097 = vweird.f32 %v6091
        %vm6098 = vmor %vm6096, %vm6097
        %v6099 = vsel %vm6098, %v6091, %v6095
        %v6100 = vand.u32 2147483647, %v6090
        %vm6101 = vcmp.eq.f32.partialorder %v6100, 8.507059e+37
        %v6102 = vand.u32 %v6090, 2147483648
        %v6103 = vor.u32 1.1754944e-38, %v6102
        %v6104 = vsel %vm6101, %v6103, %v6099
        %v6105 = vmul.f32 %v6080, %v6104
        %v6106 = vmin.f32 %v6105, 1.0
        %v6107 = vmax.f32 %v6106, -1.0
        %v6108 = vmul.f32 %v5819, %v5819
        %v6109 = vmin.f32 16.0, %v6108
        %v6110 = vmul.f32 %v6109, 2.1237322e-06
        %v6111 = vadd.f32 %v6110, 0.00028619796
        %v6112 = vmul.f32 %v6109, %v6111
        %v6113 = vadd.f32 %v6112, 0.0036580483
        %v6114 = vmul.f32 %v6109, %v6113
        %v6115 = vadd.f32 %v6114, 0.05243302
        %v6116 = vmul.f32 %v6109, %v6115
        %v6117 = vadd.f32 %v6116, 0.18741608
        %v6118 = vmul.f32 %v6109, %v6117
        %v6119 = vadd.f32 %v6118, 1.1283791
        %v6120 = vmul.f32 %v5819, %v6119
        %v6121 = vmul.f32 %v6109, 3.8918573e-05
        %v6122 = vadd.f32 %v6121, 0.001143296
        %v6123 = vmul.f32 %v6109, %v6122
        %v6124 = vadd.f32 %v6123, 0.014752088
        %v6125 = vmul.f32 %v6109, %v6124
        %v6126 = vadd.f32 %v6125, 0.112945676
        %v6127 = vmul.f32 %v6109, %v6126
        %v6128 = vadd.f32 %v6127, 0.4994258
        %v6129 = vmul.f32 %v6109, %v6128
        %v6130 = vadd.f32 %v6129, 1.0
        %v6131 = vrcp.pop %v6130
        %v6132 = vmul.f32 %v6130, %v6131
        %v6133 = vsub.f32 1.0, %v6132
        %v6134 = vmul.f32 %v6131, %v6133
        %v6135 = vadd.f32 %v6131, %v6134
        %vm6136 = vweird.f32 %v6130
        %vm6137 = vweird.f32 %v6131
        %vm6138 = vmor %vm6136, %vm6137
        %v6139 = vsel %vm6138, %v6131, %v6135
        %v6140 = vand.u32 2147483647, %v6130
        %vm6141 = vcmp.eq.f32.partialorder %v6140, 8.507059e+37
        %v6142 = vand.u32 %v6130, 2147483648
        %v6143 = vor.u32 1.1754944e-38, %v6142
        %v6144 = vsel %vm6141, %v6143, %v6139
        %v6145 = vmul.f32 %v6120, %v6144
        %v6146 = vmin.f32 %v6145, 1.0
        %v6147 = vmax.f32 %v6146, -1.0
        %v6148 = vmul.f32 %v5820, %v5820
        %v6149 = vmin.f32 16.0, %v6148
        %v6150 = vmul.f32 %v6149, 2.1237322e-06
        %v6151 = vadd.f32 %v6150, 0.00028619796
        %v6152 = vmul.f32 %v6149, %v6151
        %v6153 = vadd.f32 %v6152, 0.0036580483
        %v6154 = vmul.f32 %v6149, %v6153
        %v6155 = vadd.f32 %v6154, 0.05243302
        %v6156 = vmul.f32 %v6149, %v6155
        %v6157 = vadd.f32 %v6156, 0.18741608
        %v6158 = vmul.f32 %v6149, %v6157
        %v6159 = vadd.f32 %v6158, 1.1283791
        %v6160 = vmul.f32 %v5820, %v6159
        %v6161 = vmul.f32 %v6149, 3.8918573e-05
        %v6162 = vadd.f32 %v6161, 0.001143296
        %v6163 = vmul.f32 %v6149, %v6162
        %v6164 = vadd.f32 %v6163, 0.014752088
        %v6165 = vmul.f32 %v6149, %v6164
        %v6166 = vadd.f32 %v6165, 0.112945676
        %v6167 = vmul.f32 %v6149, %v6166
        %v6168 = vadd.f32 %v6167, 0.4994258
        %v6169 = vmul.f32 %v6149, %v6168
        %v6170 = vadd.f32 %v6169, 1.0
        %v6171 = vrcp.pop %v6170
        %v6172 = vmul.f32 %v6170, %v6171
        %v6173 = vsub.f32 1.0, %v6172
        %v6174 = vmul.f32 %v6171, %v6173
        %v6175 = vadd.f32 %v6171, %v6174
        %vm6176 = vweird.f32 %v6170
        %vm6177 = vweird.f32 %v6171
        %vm6178 = vmor %vm6176, %vm6177
        %v6179 = vsel %vm6178, %v6171, %v6175
        %v6180 = vand.u32 2147483647, %v6170
        %vm6181 = vcmp.eq.f32.partialorder %v6180, 8.507059e+37
        %v6182 = vand.u32 %v6170, 2147483648
        %v6183 = vor.u32 1.1754944e-38, %v6182
        %v6184 = vsel %vm6181, %v6183, %v6179
        %v6185 = vmul.f32 %v6160, %v6184
        %v6186 = vmin.f32 %v6185, 1.0
        %v6187 = vmax.f32 %v6186, -1.0
        %v6188 = vmul.f32 %v5821, %v5821
        %v6189 = vmin.f32 16.0, %v6188
        %v6190 = vmul.f32 %v6189, 2.1237322e-06
        %v6191 = vadd.f32 %v6190, 0.00028619796
        %v6192 = vmul.f32 %v6189, %v6191
        %v6193 = vadd.f32 %v6192, 0.0036580483
        %v6194 = vmul.f32 %v6189, %v6193
        %v6195 = vadd.f32 %v6194, 0.05243302
        %v6196 = vmul.f32 %v6189, %v6195
        %v6197 = vadd.f32 %v6196, 0.18741608
        %v6198 = vmul.f32 %v6189, %v6197
        %v6199 = vadd.f32 %v6198, 1.1283791
        %v6200 = vmul.f32 %v5821, %v6199
        %v6201 = vmul.f32 %v6189, 3.8918573e-05
        %v6202 = vadd.f32 %v6201, 0.001143296
        %v6203 = vmul.f32 %v6189, %v6202
        %v6204 = vadd.f32 %v6203, 0.014752088
        %v6205 = vmul.f32 %v6189, %v6204
        %v6206 = vadd.f32 %v6205, 0.112945676
        %v6207 = vmul.f32 %v6189, %v6206
        %v6208 = vadd.f32 %v6207, 0.4994258
        %v6209 = vmul.f32 %v6189, %v6208
        %v6210 = vadd.f32 %v6209, 1.0
        %v6211 = vrcp.pop %v6210
        %v6212 = vmul.f32 %v6210, %v6211
        %v6213 = vsub.f32 1.0, %v6212
        %v6214 = vmul.f32 %v6211, %v6213
        %v6215 = vadd.f32 %v6211, %v6214
        %vm6216 = vweird.f32 %v6210
        %vm6217 = vweird.f32 %v6211
        %vm6218 = vmor %vm6216, %vm6217
        %v6219 = vsel %vm6218, %v6211, %v6215
        %v6220 = vand.u32 2147483647, %v6210
        %vm6221 = vcmp.eq.f32.partialorder %v6220, 8.507059e+37
        %v6222 = vand.u32 %v6210, 2147483648
        %v6223 = vor.u32 1.1754944e-38, %v6222
        %v6224 = vsel %vm6221, %v6223, %v6219
        %v6225 = vmul.f32 %v6200, %v6224
        %v6226 = vmin.f32 %v6225, 1.0
        %v6227 = vmax.f32 %v6226, -1.0
        %v6228 = vmul.f32 %v5822, %v5822
        %v6229 = vmin.f32 16.0, %v6228
        %v6230 = vmul.f32 %v6229, 2.1237322e-06
        %v6231 = vadd.f32 %v6230, 0.00028619796
        %v6232 = vmul.f32 %v6229, %v6231
        %v6233 = vadd.f32 %v6232, 0.0036580483
        %v6234 = vmul.f32 %v6229, %v6233
        %v6235 = vadd.f32 %v6234, 0.05243302
        %v6236 = vmul.f32 %v6229, %v6235
        %v6237 = vadd.f32 %v6236, 0.18741608
        %v6238 = vmul.f32 %v6229, %v6237
        %v6239 = vadd.f32 %v6238, 1.1283791
        %v6240 = vmul.f32 %v5822, %v6239
        %v6241 = vmul.f32 %v6229, 3.8918573e-05
        %v6242 = vadd.f32 %v6241, 0.001143296
        %v6243 = vmul.f32 %v6229, %v6242
        %v6244 = vadd.f32 %v6243, 0.014752088
        %v6245 = vmul.f32 %v6229, %v6244
        %v6246 = vadd.f32 %v6245, 0.112945676
        %v6247 = vmul.f32 %v6229, %v6246
        %v6248 = vadd.f32 %v6247, 0.4994258
        %v6249 = vmul.f32 %v6229, %v6248
        %v6250 = vadd.f32 %v6249, 1.0
        %v6251 = vrcp.pop %v6250
        %v6252 = vmul.f32 %v6250, %v6251
        %v6253 = vsub.f32 1.0, %v6252
        %v6254 = vmul.f32 %v6251, %v6253
        %v6255 = vadd.f32 %v6251, %v6254
        %vm6256 = vweird.f32 %v6250
        %vm6257 = vweird.f32 %v6251
        %vm6258 = vmor %vm6256, %vm6257
        %v6259 = vsel %vm6258, %v6251, %v6255
        %v6260 = vand.u32 2147483647, %v6250
        %vm6261 = vcmp.eq.f32.partialorder %v6260, 8.507059e+37
        %v6262 = vand.u32 %v6250, 2147483648
        %v6263 = vor.u32 1.1754944e-38, %v6262
        %v6264 = vsel %vm6261, %v6263, %v6259
        %v6265 = vmul.f32 %v6240, %v6264
        %v6266 = vmin.f32 %v6265, 1.0
        %v6267 = vmax.f32 %v6266, -1.0
        %v6268 = vmul.f32 %v5823, %v5823
        %v6269 = vmin.f32 16.0, %v6268
        %v6270 = vmul.f32 %v6269, 2.1237322e-06
        %v6271 = vadd.f32 %v6270, 0.00028619796
        %v6272 = vmul.f32 %v6269, %v6271
        %v6273 = vadd.f32 %v6272, 0.0036580483
        %v6274 = vmul.f32 %v6269, %v6273
        %v6275 = vadd.f32 %v6274, 0.05243302
        %v6276 = vmul.f32 %v6269, %v6275
        %v6277 = vadd.f32 %v6276, 0.18741608
        %v6278 = vmul.f32 %v6269, %v6277
        %v6279 = vadd.f32 %v6278, 1.1283791
        %v6280 = vmul.f32 %v5823, %v6279
        %v6281 = vmul.f32 %v6269, 3.8918573e-05
        %v6282 = vadd.f32 %v6281, 0.001143296
        %v6283 = vmul.f32 %v6269, %v6282
        %v6284 = vadd.f32 %v6283, 0.014752088
        %v6285 = vmul.f32 %v6269, %v6284
        %v6286 = vadd.f32 %v6285, 0.112945676
        %v6287 = vmul.f32 %v6269, %v6286
        %v6288 = vadd.f32 %v6287, 0.4994258
        %v6289 = vmul.f32 %v6269, %v6288
        %v6290 = vadd.f32 %v6289, 1.0
        %v6291 = vrcp.pop %v6290
        %v6292 = vmul.f32 %v6290, %v6291
        %v6293 = vsub.f32 1.0, %v6292
        %v6294 = vmul.f32 %v6291, %v6293
        %v6295 = vadd.f32 %v6291, %v6294
        %vm6296 = vweird.f32 %v6290
        %vm6297 = vweird.f32 %v6291
        %vm6298 = vmor %vm6296, %vm6297
        %v6299 = vsel %vm6298, %v6291, %v6295
        %v6300 = vand.u32 2147483647, %v6290
        %vm6301 = vcmp.eq.f32.partialorder %v6300, 8.507059e+37
        %v6302 = vand.u32 %v6290, 2147483648
        %v6303 = vor.u32 1.1754944e-38, %v6302
        %v6304 = vsel %vm6301, %v6303, %v6299
        %v6305 = vmul.f32 %v6280, %v6304
        %v6306 = vmin.f32 %v6305, 1.0
        %v6307 = vmax.f32 %v6306, -1.0
        %v6308 = vmul.f32 %v5824, %v5824
        %v6309 = vmin.f32 16.0, %v6308
        %v6310 = vmul.f32 %v6309, 2.1237322e-06
        %v6311 = vadd.f32 %v6310, 0.00028619796
        %v6312 = vmul.f32 %v6309, %v6311
        %v6313 = vadd.f32 %v6312, 0.0036580483
        %v6314 = vmul.f32 %v6309, %v6313
        %v6315 = vadd.f32 %v6314, 0.05243302
        %v6316 = vmul.f32 %v6309, %v6315
        %v6317 = vadd.f32 %v6316, 0.18741608
        %v6318 = vmul.f32 %v6309, %v6317
        %v6319 = vadd.f32 %v6318, 1.1283791
        %v6320 = vmul.f32 %v5824, %v6319
        %v6321 = vmul.f32 %v6309, 3.8918573e-05
        %v6322 = vadd.f32 %v6321, 0.001143296
        %v6323 = vmul.f32 %v6309, %v6322
        %v6324 = vadd.f32 %v6323, 0.014752088
        %v6325 = vmul.f32 %v6309, %v6324
        %v6326 = vadd.f32 %v6325, 0.112945676
        %v6327 = vmul.f32 %v6309, %v6326
        %v6328 = vadd.f32 %v6327, 0.4994258
        %v6329 = vmul.f32 %v6309, %v6328
        %v6330 = vadd.f32 %v6329, 1.0
        %v6331 = vrcp.pop %v6330
        %v6332 = vmul.f32 %v6330, %v6331
        %v6333 = vsub.f32 1.0, %v6332
        %v6334 = vmul.f32 %v6331, %v6333
        %v6335 = vadd.f32 %v6331, %v6334
        %vm6336 = vweird.f32 %v6330
        %vm6337 = vweird.f32 %v6331
        %vm6338 = vmor %vm6336, %vm6337
        %v6339 = vsel %vm6338, %v6331, %v6335
        %v6340 = vand.u32 2147483647, %v6330
        %vm6341 = vcmp.eq.f32.partialorder %v6340, 8.507059e+37
        %v6342 = vand.u32 %v6330, 2147483648
        %v6343 = vor.u32 1.1754944e-38, %v6342
        %v6344 = vsel %vm6341, %v6343, %v6339
        %v6345 = vmul.f32 %v6320, %v6344
        %v6346 = vmin.f32 %v6345, 1.0
        %v6347 = vmax.f32 %v6346, -1.0
        %v6348 = vmul.f32 %v5825, %v5825
        %v6349 = vmin.f32 16.0, %v6348
        %v6350 = vmul.f32 %v6349, 2.1237322e-06
        %v6351 = vadd.f32 %v6350, 0.00028619796
        %v6352 = vmul.f32 %v6349, %v6351
        %v6353 = vadd.f32 %v6352, 0.0036580483
        %v6354 = vmul.f32 %v6349, %v6353
        %v6355 = vadd.f32 %v6354, 0.05243302
        %v6356 = vmul.f32 %v6349, %v6355
        %v6357 = vadd.f32 %v6356, 0.18741608
        %v6358 = vmul.f32 %v6349, %v6357
        %v6359 = vadd.f32 %v6358, 1.1283791
        %v6360 = vmul.f32 %v5825, %v6359
        %v6361 = vmul.f32 %v6349, 3.8918573e-05
        %v6362 = vadd.f32 %v6361, 0.001143296
        %v6363 = vmul.f32 %v6349, %v6362
        %v6364 = vadd.f32 %v6363, 0.014752088
        %v6365 = vmul.f32 %v6349, %v6364
        %v6366 = vadd.f32 %v6365, 0.112945676
        %v6367 = vmul.f32 %v6349, %v6366
        %v6368 = vadd.f32 %v6367, 0.4994258
        %v6369 = vmul.f32 %v6349, %v6368
        %v6370 = vadd.f32 %v6369, 1.0
        %v6371 = vrcp.pop %v6370
        %v6372 = vmul.f32 %v6370, %v6371
        %v6373 = vsub.f32 1.0, %v6372
        %v6374 = vmul.f32 %v6371, %v6373
        %v6375 = vadd.f32 %v6371, %v6374
        %vm6376 = vweird.f32 %v6370
        %vm6377 = vweird.f32 %v6371
        %vm6378 = vmor %vm6376, %vm6377
        %v6379 = vsel %vm6378, %v6371, %v6375
        %v6380 = vand.u32 2147483647, %v6370
        %vm6381 = vcmp.eq.f32.partialorder %v6380, 8.507059e+37
        %v6382 = vand.u32 %v6370, 2147483648
        %v6383 = vor.u32 1.1754944e-38, %v6382
        %v6384 = vsel %vm6381, %v6383, %v6379
        %v6385 = vmul.f32 %v6360, %v6384
        %v6386 = vmin.f32 %v6385, 1.0
        %v6387 = vmax.f32 %v6386, -1.0
        %v6388 = vmul.f32 %v5826, %v5826
        %v6389 = vmin.f32 16.0, %v6388
        %v6390 = vmul.f32 %v6389, 2.1237322e-06
        %v6391 = vadd.f32 %v6390, 0.00028619796
        %v6392 = vmul.f32 %v6389, %v6391
        %v6393 = vadd.f32 %v6392, 0.0036580483
        %v6394 = vmul.f32 %v6389, %v6393
        %v6395 = vadd.f32 %v6394, 0.05243302
        %v6396 = vmul.f32 %v6389, %v6395
        %v6397 = vadd.f32 %v6396, 0.18741608
        %v6398 = vmul.f32 %v6389, %v6397
        %v6399 = vadd.f32 %v6398, 1.1283791
        %v6400 = vmul.f32 %v5826, %v6399
        %v6401 = vmul.f32 %v6389, 3.8918573e-05
        %v6402 = vadd.f32 %v6401, 0.001143296
        %v6403 = vmul.f32 %v6389, %v6402
        %v6404 = vadd.f32 %v6403, 0.014752088
        %v6405 = vmul.f32 %v6389, %v6404
        %v6406 = vadd.f32 %v6405, 0.112945676
        %v6407 = vmul.f32 %v6389, %v6406
        %v6408 = vadd.f32 %v6407, 0.4994258
        %v6409 = vmul.f32 %v6389, %v6408
        %v6410 = vadd.f32 %v6409, 1.0
        %v6411 = vrcp.pop %v6410
        %v6412 = vmul.f32 %v6410, %v6411
        %v6413 = vsub.f32 1.0, %v6412
        %v6414 = vmul.f32 %v6411, %v6413
        %v6415 = vadd.f32 %v6411, %v6414
        %vm6416 = vweird.f32 %v6410
        %vm6417 = vweird.f32 %v6411
        %vm6418 = vmor %vm6416, %vm6417
        %v6419 = vsel %vm6418, %v6411, %v6415
        %v6420 = vand.u32 2147483647, %v6410
        %vm6421 = vcmp.eq.f32.partialorder %v6420, 8.507059e+37
        %v6422 = vand.u32 %v6410, 2147483648
        %v6423 = vor.u32 1.1754944e-38, %v6422
        %v6424 = vsel %vm6421, %v6423, %v6419
        %v6425 = vmul.f32 %v6400, %v6424
        %v6426 = vmin.f32 %v6425, 1.0
        %v6427 = vmax.f32 %v6426, -1.0
        %v6428 = vmul.f32 %v5827, %v5827
        %v6429 = vmin.f32 16.0, %v6428
        %v6430 = vmul.f32 %v6429, 2.1237322e-06
        %v6431 = vadd.f32 %v6430, 0.00028619796
        %v6432 = vmul.f32 %v6429, %v6431
        %v6433 = vadd.f32 %v6432, 0.0036580483
        %v6434 = vmul.f32 %v6429, %v6433
        %v6435 = vadd.f32 %v6434, 0.05243302
        %v6436 = vmul.f32 %v6429, %v6435
        %v6437 = vadd.f32 %v6436, 0.18741608
        %v6438 = vmul.f32 %v6429, %v6437
        %v6439 = vadd.f32 %v6438, 1.1283791
        %v6440 = vmul.f32 %v5827, %v6439
        %v6441 = vmul.f32 %v6429, 3.8918573e-05
        %v6442 = vadd.f32 %v6441, 0.001143296
        %v6443 = vmul.f32 %v6429, %v6442
        %v6444 = vadd.f32 %v6443, 0.014752088
        %v6445 = vmul.f32 %v6429, %v6444
        %v6446 = vadd.f32 %v6445, 0.112945676
        %v6447 = vmul.f32 %v6429, %v6446
        %v6448 = vadd.f32 %v6447, 0.4994258
        %v6449 = vmul.f32 %v6429, %v6448
        %v6450 = vadd.f32 %v6449, 1.0
        %v6451 = vrcp.pop %v6450
        %v6452 = vmul.f32 %v6450, %v6451
        %v6453 = vsub.f32 1.0, %v6452
        %v6454 = vmul.f32 %v6451, %v6453
        %v6455 = vadd.f32 %v6451, %v6454
        %vm6456 = vweird.f32 %v6450
        %vm6457 = vweird.f32 %v6451
        %vm6458 = vmor %vm6456, %vm6457
        %v6459 = vsel %vm6458, %v6451, %v6455
        %v6460 = vand.u32 2147483647, %v6450
        %vm6461 = vcmp.eq.f32.partialorder %v6460, 8.507059e+37
        %v6462 = vand.u32 %v6450, 2147483648
        %v6463 = vor.u32 1.1754944e-38, %v6462
        %v6464 = vsel %vm6461, %v6463, %v6459
        %v6465 = vmul.f32 %v6440, %v6464
        %v6466 = vmin.f32 %v6465, 1.0
        %v6467 = vmax.f32 %v6466, -1.0
        %v6468 = vadd.f32 %v5867, 1.0
        %v6469 = vadd.f32 %v5907, 1.0
        %v6470 = vadd.f32 %v5947, 1.0
        %v6471 = vadd.f32 %v5987, 1.0
        %v6472 = vadd.f32 %v6027, 1.0
        %v6473 = vadd.f32 %v6067, 1.0
        %v6474 = vadd.f32 %v6107, 1.0
        %v6475 = vadd.f32 %v6147, 1.0
        %v6476 = vadd.f32 %v6187, 1.0
        %v6477 = vadd.f32 %v6227, 1.0
        %v6478 = vadd.f32 %v6267, 1.0
        %v6479 = vadd.f32 %v6307, 1.0
        %v6480 = vadd.f32 %v6347, 1.0
        %v6481 = vadd.f32 %v6387, 1.0
        %v6482 = vadd.f32 %v6427, 1.0
        %v6483 = vadd.f32 %v6467, 1.0
        %v6484 = vmul.f32 %v5796, %v6468
        %v6485 = vmul.f32 %v5797, %v6469
        %v6486 = vmul.f32 %v5798, %v6470
        %v6487 = vmul.f32 %v5799, %v6471
        %v6488 = vmul.f32 %v5800, %v6472
        %v6489 = vmul.f32 %v5801, %v6473
        %v6490 = vmul.f32 %v5802, %v6474
        %v6491 = vmul.f32 %v5803, %v6475
        %v6492 = vmul.f32 %v5804, %v6476
        %v6493 = vmul.f32 %v5805, %v6477
        %v6494 = vmul.f32 %v5806, %v6478
        %v6495 = vmul.f32 %v5807, %v6479
        %v6496 = vmul.f32 %v5808, %v6480
        %v6497 = vmul.f32 %v5809, %v6481
        %v6498 = vmul.f32 %v5810, %v6482
        %v6499 = vmul.f32 %v5811, %v6483
        %v6500 = vld [vmem:[%s20] sm:$0xff]
        %v6501 = vld [vmem:[%s20 + $0x8] sm:$0xff]
        %v6502 = vld [vmem:[%s20 + $0x10] sm:$0xff]
        %v6503 = vld [vmem:[%s20 + $0x18] sm:$0xff]
        %v6504 = vld [vmem:[%s20 + $0x20] sm:$0xff]
        %v6505 = vld [vmem:[%s20 + $0x28] sm:$0xff]
        %v6506 = vld [vmem:[%s20 + $0x30] sm:$0xff]
        %v6507 = vld [vmem:[%s20 + $0x38] sm:$0xff]
        %v6508 = vld [vmem:[%s20 + $0x40] sm:$0xff]
        %v6509 = vld [vmem:[%s20 + $0x48] sm:$0xff]
        %v6510 = vld [vmem:[%s20 + $0x50] sm:$0xff]
        %v6511 = vld [vmem:[%s20 + $0x58] sm:$0xff]
        %v6512 = vld [vmem:[%s20 + $0x60] sm:$0xff]
        %v6513 = vld [vmem:[%s20 + $0x68] sm:$0xff]
        %v6514 = vld [vmem:[%s20 + $0x70] sm:$0xff]
        %v6515 = vld [vmem:[%s20 + $0x78] sm:$0xff]
        %v6516 = vld [vmem:[%s20 + $0x80] sm:$0xff]
        %v6517 = vld [vmem:[%s20 + $0x88] sm:$0xff]
        %v6518 = vld [vmem:[%s20 + $0x90] sm:$0xff]
        %v6519 = vld [vmem:[%s20 + $0x98] sm:$0xff]
        %v6520 = vld [vmem:[%s20 + $0xa0] sm:$0xff]
        %v6521 = vld [vmem:[%s20 + $0xa8] sm:$0xff]
        %v6522 = vld [vmem:[%s20 + $0xb0] sm:$0xff]
        %v6523 = vld [vmem:[%s20 + $0xb8] sm:$0xff]
        %v6524 = vld [vmem:[%s20 + $0xc0] sm:$0xff]
        %v6525 = vld [vmem:[%s20 + $0xc8] sm:$0xff]
        %v6526 = vld [vmem:[%s20 + $0xd0] sm:$0xff]
        %v6527 = vld [vmem:[%s20 + $0xd8] sm:$0xff]
        %v6528 = vld [vmem:[%s20 + $0xe0] sm:$0xff]
        %v6529 = vld [vmem:[%s20 + $0xe8] sm:$0xff]
        %v6530 = vld [vmem:[%s20 + $0xf0] sm:$0xff]
        %v6531 = vld [vmem:[%s20 + $0xf8] sm:$0xff]
        %6532 = vmatpush.msra.mxu0 %v6515
        %6533 = vmatpush.msra.mxu0 %v6514
        %6534 = vmatpush.msra.mxu0 %v6513
        %6535 = vmatpush.msra.mxu0 %v6512
        %6536 = vmatpush.msra.mxu0 %v6511
        %6537 = vmatpush.msra.mxu0 %v6510
        %6538 = vmatpush.msra.mxu0 %v6509
        %6539 = vmatpush.msra.mxu0 %v6508
        %6540 = vmatpush.msra.mxu0 %v6507
        %6541 = vmatpush.msra.mxu0 %v6506
        %6542 = vmatpush.msra.mxu0 %v6505
        %6543 = vmatpush.msra.mxu0 %v6504
        %6544 = vmatpush.msra.mxu0 %v6503
        %6545 = vmatpush.msra.mxu0 %v6502
        %6546 = vmatpush.msra.mxu0 %v6501
        %6547 = vmatpush.msra.mxu0 %v6500
        %6548 = vmatmul.f32.gmra.mxu0 %v6484
        %v6549 = vpop.f32.mrf.mxu0
        %v6550 = vadd.f32 0.0, %v6549
        %6551 = vmatmul.f32.gmra.mxu0 %v6486
        %v6552 = vpop.f32.mrf.mxu0
        %v6553 = vadd.f32 0.0, %v6552
        %6554 = vmatmul.f32.gmra.mxu0 %v6488
        %v6555 = vpop.f32.mrf.mxu0
        %v6556 = vadd.f32 0.0, %v6555
        %6557 = vmatmul.f32.gmra.mxu0 %v6490
        %v6558 = vpop.f32.mrf.mxu0
        %v6559 = vadd.f32 0.0, %v6558
        %6560 = vmatmul.f32.gmra.mxu0 %v6492
        %v6561 = vpop.f32.mrf.mxu0
        %v6562 = vadd.f32 0.0, %v6561
        %6563 = vmatmul.f32.gmra.mxu0 %v6494
        %v6564 = vpop.f32.mrf.mxu0
        %v6565 = vadd.f32 0.0, %v6564
        %6566 = vmatmul.f32.gmra.mxu0 %v6496
        %v6567 = vpop.f32.mrf.mxu0
        %v6568 = vadd.f32 0.0, %v6567
        %6569 = vmatmul.f32.gmra.mxu0 %v6498
        %v6570 = vpop.f32.mrf.mxu0
        %v6571 = vadd.f32 0.0, %v6570
        %6572 = vdwg.mxu0
        %6573 = vmatpush.msra.mxu0 %v6531
        %6574 = vmatpush.msra.mxu0 %v6530
        %6575 = vmatpush.msra.mxu0 %v6529
        %6576 = vmatpush.msra.mxu0 %v6528
        %6577 = vmatpush.msra.mxu0 %v6527
        %6578 = vmatpush.msra.mxu0 %v6526
        %6579 = vmatpush.msra.mxu0 %v6525
        %6580 = vmatpush.msra.mxu0 %v6524
        %6581 = vmatpush.msra.mxu0 %v6523
        %6582 = vmatpush.msra.mxu0 %v6522
        %6583 = vmatpush.msra.mxu0 %v6521
        %6584 = vmatpush.msra.mxu0 %v6520
        %6585 = vmatpush.msra.mxu0 %v6519
        %6586 = vmatpush.msra.mxu0 %v6518
        %6587 = vmatpush.msra.mxu0 %v6517
        %6588 = vmatpush.msra.mxu0 %v6516
        %6589 = vmatmul.f32.gmra.mxu0 %v6485
        %v6590 = vpop.f32.mrf.mxu0
        %v6591 = vadd.f32 %v6550, %v6590
        %6592 = vmatmul.f32.gmra.mxu0 %v6487
        %v6593 = vpop.f32.mrf.mxu0
        %v6594 = vadd.f32 %v6553, %v6593
        %6595 = vmatmul.f32.gmra.mxu0 %v6489
        %v6596 = vpop.f32.mrf.mxu0
        %v6597 = vadd.f32 %v6556, %v6596
        %6598 = vmatmul.f32.gmra.mxu0 %v6491
        %v6599 = vpop.f32.mrf.mxu0
        %v6600 = vadd.f32 %v6559, %v6599
        %6601 = vmatmul.f32.gmra.mxu0 %v6493
        %v6602 = vpop.f32.mrf.mxu0
        %v6603 = vadd.f32 %v6562, %v6602
        %6604 = vmatmul.f32.gmra.mxu0 %v6495
        %v6605 = vpop.f32.mrf.mxu0
        %v6606 = vadd.f32 %v6565, %v6605
        %6607 = vmatmul.f32.gmra.mxu0 %v6497
        %v6608 = vpop.f32.mrf.mxu0
        %v6609 = vadd.f32 %v6568, %v6608
        %6610 = vmatmul.f32.gmra.mxu0 %v6499
        %v6611 = vpop.f32.mrf.mxu0
        %v6612 = vadd.f32 %v6571, %v6611
        %6613 = vdwg.mxu0
        %v6614 = vadd.f32 %v5473, %v6591
        %v6615 = vadd.f32 %v5474, %v6594
        %v6616 = vadd.f32 %v5475, %v6597
        %v6617 = vadd.f32 %v5476, %v6600
        %v6618 = vadd.f32 %v5477, %v6603
        %v6619 = vadd.f32 %v5478, %v6606
        %v6620 = vadd.f32 %v5479, %v6609
        %v6621 = vadd.f32 %v5480, %v6612
        %v6622 = vperm.slane %v726, 2
        %v6623 = vadd.f32 %v6614, %v6622
        %v6624 = vadd.f32 %v6615, %v6622
        %v6625 = vadd.f32 %v6616, %v6622
        %v6626 = vadd.f32 %v6617, %v6622
        %v6627 = vadd.f32 %v6618, %v6622
        %v6628 = vadd.f32 %v6619, %v6622
        %v6629 = vadd.f32 %v6620, %v6622
        %v6630 = vadd.f32 %v6621, %v6622
        %v6631 = vsel %vm826, %v6623, 0.0
        %6632 = vadd.xlane.f32.xlu0 %v6631
        %v6633 = vpop.xlane.xlu0 %6632
        %v6634 = vsel %vm826, %v6624, 0.0
        %6635 = vadd.xlane.f32.xlu0 %v6634
        %v6636 = vpop.xlane.xlu0 %6635
        %v6637 = vsel %vm826, %v6625, 0.0
        %6638 = vadd.xlane.f32.xlu0 %v6637
        %v6639 = vpop.xlane.xlu0 %6638
        %v6640 = vsel %vm826, %v6626, 0.0
        %6641 = vadd.xlane.f32.xlu0 %v6640
        %v6642 = vpop.xlane.xlu0 %6641
        %v6643 = vsel %vm826, %v6627, 0.0
        %6644 = vadd.xlane.f32.xlu0 %v6643
        %v6645 = vpop.xlane.xlu0 %6644
        %v6646 = vsel %vm826, %v6628, 0.0
        %6647 = vadd.xlane.f32.xlu0 %v6646
        %v6648 = vpop.xlane.xlu0 %6647
        %v6649 = vsel %vm826, %v6629, 0.0
        %6650 = vadd.xlane.f32.xlu0 %v6649
        %v6651 = vpop.xlane.xlu0 %6650
        %v6652 = vsel %vm826, %v6630, 0.0
        %6653 = vadd.xlane.f32.xlu0 %v6652
        %v6654 = vpop.xlane.xlu0 %6653
        %v6655 = vmul.f32 %v6633, %v857
        %v6656 = vmul.f32 %v6636, %v857
        %v6657 = vmul.f32 %v6639, %v857
        %v6658 = vmul.f32 %v6642, %v857
        %v6659 = vmul.f32 %v6645, %v857
        %v6660 = vmul.f32 %v6648, %v857
        %v6661 = vmul.f32 %v6651, %v857
        %v6662 = vmul.f32 %v6654, %v857
        %v6663 = vsub.f32 %v6623, %v6655
        %v6664 = vsub.f32 %v6624, %v6656
        %v6665 = vsub.f32 %v6625, %v6657
        %v6666 = vsub.f32 %v6626, %v6658
        %v6667 = vsub.f32 %v6627, %v6659
        %v6668 = vsub.f32 %v6628, %v6660
        %v6669 = vsub.f32 %v6629, %v6661
        %v6670 = vsub.f32 %v6630, %v6662
        %v6671 = vmul.f32 %v6663, %v6663
        %v6672 = vmul.f32 %v6664, %v6664
        %v6673 = vmul.f32 %v6665, %v6665
        %v6674 = vmul.f32 %v6666, %v6666
        %v6675 = vmul.f32 %v6667, %v6667
        %v6676 = vmul.f32 %v6668, %v6668
        %v6677 = vmul.f32 %v6669, %v6669
        %v6678 = vmul.f32 %v6670, %v6670
        %v6679 = vsel %vm826, %v6671, 0.0
        %6680 = vadd.xlane.f32.xlu0 %v6679
        %v6681 = vpop.xlane.xlu0 %6680
        %v6682 = vsel %vm826, %v6672, 0.0
        %6683 = vadd.xlane.f32.xlu0 %v6682
        %v6684 = vpop.xlane.xlu0 %6683
        %v6685 = vsel %vm826, %v6673, 0.0
        %6686 = vadd.xlane.f32.xlu0 %v6685
        %v6687 = vpop.xlane.xlu0 %6686
        %v6688 = vsel %vm826, %v6674, 0.0
        %6689 = vadd.xlane.f32.xlu0 %v6688
        %v6690 = vpop.xlane.xlu0 %6689
        %v6691 = vsel %vm826, %v6675, 0.0
        %6692 = vadd.xlane.f32.xlu0 %v6691
        %v6693 = vpop.xlane.xlu0 %6692
        %v6694 = vsel %vm826, %v6676, 0.0
        %6695 = vadd.xlane.f32.xlu0 %v6694
        %v6696 = vpop.xlane.xlu0 %6695
        %v6697 = vsel %vm826, %v6677, 0.0
        %6698 = vadd.xlane.f32.xlu0 %v6697
        %v6699 = vpop.xlane.xlu0 %6698
        %v6700 = vsel %vm826, %v6678, 0.0
        %6701 = vadd.xlane.f32.xlu0 %v6700
        %v6702 = vpop.xlane.xlu0 %6701
        %v6703 = vmul.f32 %v6681, %v857
        %v6704 = vmul.f32 %v6684, %v857
        %v6705 = vmul.f32 %v6687, %v857
        %v6706 = vmul.f32 %v6690, %v857
        %v6707 = vmul.f32 %v6693, %v857
        %v6708 = vmul.f32 %v6696, %v857
        %v6709 = vmul.f32 %v6699, %v857
        %v6710 = vmul.f32 %v6702, %v857
        %v6711 = vadd.f32 %v6703, 1e-05
        %v6712 = vadd.f32 %v6704, 1e-05
        %v6713 = vadd.f32 %v6705, 1e-05
        %v6714 = vadd.f32 %v6706, 1e-05
        %v6715 = vadd.f32 %v6707, 1e-05
        %v6716 = vadd.f32 %v6708, 1e-05
        %v6717 = vadd.f32 %v6709, 1e-05
        %v6718 = vadd.f32 %v6710, 1e-05
        %v6719 = vrsqrt.pop %v6711
        %v6720 = vmul.f32 %v6719, %v6711
        %v6721 = vmul.f32 %v6720, %v6719
        %v6722 = vmul.f32 0.5, %v6721
        %v6723 = vsub.f32 1.5, %v6722
        %v6724 = vmul.f32 %v6719, %v6723
        %vm6725 = vweird.f32 %v6711
        %vm6726 = vweird.f32 %v6719
        %vm6727 = vmor %vm6725, %vm6726
        %v6728 = vsel %vm6727, %v6719, %v6724
        %v6729 = vrsqrt.pop %v6712
        %v6730 = vmul.f32 %v6729, %v6712
        %v6731 = vmul.f32 %v6730, %v6729
        %v6732 = vmul.f32 0.5, %v6731
        %v6733 = vsub.f32 1.5, %v6732
        %v6734 = vmul.f32 %v6729, %v6733
        %vm6735 = vweird.f32 %v6712
        %vm6736 = vweird.f32 %v6729
        %vm6737 = vmor %vm6735, %vm6736
        %v6738 = vsel %vm6737, %v6729, %v6734
        %v6739 = vrsqrt.pop %v6713
        %v6740 = vmul.f32 %v6739, %v6713
        %v6741 = vmul.f32 %v6740, %v6739
        %v6742 = vmul.f32 0.5, %v6741
        %v6743 = vsub.f32 1.5, %v6742
        %v6744 = vmul.f32 %v6739, %v6743
        %vm6745 = vweird.f32 %v6713
        %vm6746 = vweird.f32 %v6739
        %vm6747 = vmor %vm6745, %vm6746
        %v6748 = vsel %vm6747, %v6739, %v6744
        %v6749 = vrsqrt.pop %v6714
        %v6750 = vmul.f32 %v6749, %v6714
        %v6751 = vmul.f32 %v6750, %v6749
        %v6752 = vmul.f32 0.5, %v6751
        %v6753 = vsub.f32 1.5, %v6752
        %v6754 = vmul.f32 %v6749, %v6753
        %vm6755 = vweird.f32 %v6714
        %vm6756 = vweird.f32 %v6749
        %vm6757 = vmor %vm6755, %vm6756
        %v6758 = vsel %vm6757, %v6749, %v6754
        %v6759 = vrsqrt.pop %v6715
        %v6760 = vmul.f32 %v6759, %v6715
        %v6761 = vmul.f32 %v6760, %v6759
        %v6762 = vmul.f32 0.5, %v6761
        %v6763 = vsub.f32 1.5, %v6762
        %v6764 = vmul.f32 %v6759, %v6763
        %vm6765 = vweird.f32 %v6715
        %vm6766 = vweird.f32 %v6759
        %vm6767 = vmor %vm6765, %vm6766
        %v6768 = vsel %vm6767, %v6759, %v6764
        %v6769 = vrsqrt.pop %v6716
        %v6770 = vmul.f32 %v6769, %v6716
        %v6771 = vmul.f32 %v6770, %v6769
        %v6772 = vmul.f32 0.5, %v6771
        %v6773 = vsub.f32 1.5, %v6772
        %v6774 = vmul.f32 %v6769, %v6773
        %vm6775 = vweird.f32 %v6716
        %vm6776 = vweird.f32 %v6769
        %vm6777 = vmor %vm6775, %vm6776
        %v6778 = vsel %vm6777, %v6769, %v6774
        %v6779 = vrsqrt.pop %v6717
        %v6780 = vmul.f32 %v6779, %v6717
        %v6781 = vmul.f32 %v6780, %v6779
        %v6782 = vmul.f32 0.5, %v6781
        %v6783 = vsub.f32 1.5, %v6782
        %v6784 = vmul.f32 %v6779, %v6783
        %vm6785 = vweird.f32 %v6717
        %vm6786 = vweird.f32 %v6779
        %vm6787 = vmor %vm6785, %vm6786
        %v6788 = vsel %vm6787, %v6779, %v6784
        %v6789 = vrsqrt.pop %v6718
        %v6790 = vmul.f32 %v6789, %v6718
        %v6791 = vmul.f32 %v6790, %v6789
        %v6792 = vmul.f32 0.5, %v6791
        %v6793 = vsub.f32 1.5, %v6792
        %v6794 = vmul.f32 %v6789, %v6793
        %vm6795 = vweird.f32 %v6718
        %vm6796 = vweird.f32 %v6789
        %vm6797 = vmor %vm6795, %vm6796
        %v6798 = vsel %vm6797, %v6789, %v6794
        %v6799 = vmul.f32 %v6663, %v6728
        %v6800 = vmul.f32 %v6664, %v6738
        %v6801 = vmul.f32 %v6665, %v6748
        %v6802 = vmul.f32 %v6666, %v6758
        %v6803 = vmul.f32 %v6667, %v6768
        %v6804 = vmul.f32 %v6668, %v6778
        %v6805 = vmul.f32 %v6669, %v6788
        %v6806 = vmul.f32 %v6670, %v6798
        %v6807 = vperm.slane %v726, 3
        %v6808 = vmul.f32 %v6799, %v6807
        %v6809 = vmul.f32 %v6800, %v6807
        %v6810 = vmul.f32 %v6801, %v6807
        %v6811 = vmul.f32 %v6802, %v6807
        %v6812 = vmul.f32 %v6803, %v6807
        %v6813 = vmul.f32 %v6804, %v6807
        %v6814 = vmul.f32 %v6805, %v6807
        %v6815 = vmul.f32 %v6806, %v6807
        %v6816 = vperm.slane %v726, 4
        %v6817 = vadd.f32 %v6808, %v6816
        %v6818 = vadd.f32 %v6809, %v6816
        %v6819 = vadd.f32 %v6810, %v6816
        %v6820 = vadd.f32 %v6811, %v6816
        %v6821 = vadd.f32 %v6812, %v6816
        %v6822 = vadd.f32 %v6813, %v6816
        %v6823 = vadd.f32 %v6814, %v6816
        %v6824 = vadd.f32 %v6815, %v6816
        %v6825 = vsel %vm826, %v6817, 0.0
        %v6826 = vsel %vm826, %v6818, 0.0
        %v6827 = vadd.f32 %v6825, %v6826
        %v6828 = vsel %vm826, %v6819, 0.0
        %v6829 = vadd.f32 %v6827, %v6828
        %v6830 = vsel %vm826, %v6820, 0.0
        %v6831 = vadd.f32 %v6829, %v6830
        %v6832 = vsel %vm826, %v6821, 0.0
        %v6833 = vadd.f32 %v6831, %v6832
        %v6834 = vsel %vm826, %v6822, 0.0
        %v6835 = vadd.f32 %v6833, %v6834
        %v6836 = vsel %vm826, %v6823, 0.0
        %v6837 = vadd.f32 %v6835, %v6836
        %v6838 = vsel %vm826, %v6824, 0.0
        %v6839 = vadd.f32 %v6837, %v6838
        %v6840 = vrot.slane %v6839, 4
        %v6841 = vadd.f32 %v6839, %v6840
        %v6842 = vrot.slane %v6841, 2
        %v6843 = vadd.f32 %v6841, %v6842
        %v6844 = vrot.slane %v6843, 1
        %v6845 = vadd.f32 %v6843, %v6844
        %v6846 = vrcp.pop 64.0
        %v6847 = vmul.f32 64.0, %v6846
        %v6848 = vsub.f32 1.0, %v6847
        %v6849 = vmul.f32 %v6846, %v6848
        %v6850 = vadd.f32 %v6846, %v6849
        %vm6851 = vweird.f32 %v6846
        %v6852 = vsel %vm6851, %v6846, %v6850
        %v6853 = vmul.f32 %v6845, %v6852
        %v6854 = vld [vmem:[%s21] sm:$0xff]
        %v6855 = vld [vmem:[%s21 + $0x8] sm:$0xff]
        %v6856 = vld [vmem:[%s21 + $0x10] sm:$0xff]
        %v6857 = vld [vmem:[%s21 + $0x18] sm:$0xff]
        %v6858 = vld [vmem:[%s22] sm:$0x1]
        %v6860 = vsel %vm826, %v6853, 0
        %6862 = vmatpush.msra.mxu0 0.0
        %6863 = vmatpush.msra.mxu0 0.0
        %6864 = vmatpush.msra.mxu0 0.0
        %6865 = vmatpush.msra.mxu0 0.0
        %6866 = vmatpush.msra.mxu0 0.0
        %6867 = vmatpush.msra.mxu0 0.0
        %6868 = vmatpush.msra.mxu0 0.0
        %6869 = vmatpush.msra.mxu0 0.0
        %6870 = vmatpush.msra.mxu0 0.0
        %6871 = vmatpush.msra.mxu0 0.0
        %6872 = vmatpush.msra.mxu0 0.0
        %6873 = vmatpush.msra.mxu0 0.0
        %6874 = vmatpush.msra.mxu0 %v6857
        %6875 = vmatpush.msra.mxu0 %v6856
        %6876 = vmatpush.msra.mxu0 %v6855
        %6877 = vmatpush.msra.mxu0 %v6854
        %6878 = vmatmul.f32.gmra.mxu0 %v6860
        %v6879 = vpop.f32.mrf.mxu0
        %v6880 = vadd.f32 %v6858, %v6879
        %6881 = vdwg.mxu0
        %6882 = vst [vmem:[%s702] sm:$0x1] %v6880
        %s6883 = sand.u32 %s533, 1
        %s6884 = scalar_lea.sflag [#allocation3], %s6883
        %s6885 = sand.u32 %s533, 1
        %s6886 = scalar_lea.vmem [#allocation2], %s6885
        // Predicated region
        $region113: #{_lambda_.1} parent=111 // pred_check
          %p6887 = pneg %p543
        $region114: #{_lambda_.1} parent=111 // pred_check_branch
          %6889 = sbr.rel (%p6887) target = $region116
        $region115: #{_lambda_.1} parent=111 // pred_region
          %6891 = vsyncadd %s6884, 0
          %s6892 = scalar_lea.hbm %s23, %s37
          %s6894 = sshll.u32 %s6886, 4
          %s6895 = int_to_ptr.vmem [resolvable:$true] %s6894
          %s6896 = sshll.u32 %s6892, 4
          %s6897 = int_to_ptr.hbm [resolvable:$true] %s6896
          %6899 = dma.vmem_to_hbm [thread:$0]  %s6895, 16, %s6897, %s6884
        $region116: #{_lambda_.1} parent=111 // pred_fallthru
          _
      $region112: #{_lambda_.1} parent=5 // pred_fallthru
        _
      %p6900 = scmp.le.s32.totalorder 2, %s32
      // Predicated region
      $region117: #{_lambda_.1} parent=5 // pred_check
        %p6901 = pneg %p6900
      $region118: #{_lambda_.1} parent=5 // pred_check_branch
        %6903 = sbr.rel (%p6901) target = $region120
      $region119: #{_lambda_.1} parent=5 // pred_region
        %s6904 = ssub.s32 %s32, 2
        // Predicated region
        $region121: #{_lambda_.1} parent=119 // pred_check
          %p6905 = pneg %p549
        $region122: #{_lambda_.1} parent=119 // pred_check_branch
          %6907 = sbr.rel (%p6905) target = $region124
        $region123: #{_lambda_.1} parent=119 // pred_region
          %s6908 = sand.u32 %s534, 1
          %s6909 = scalar_lea.sflag [#allocation3], %s6908
          %s6910 = sand.u32 %s534, 1
          %s6911 = scalar_lea.vmem [#allocation2], %s6910
          %6913 = dma.done %s6909, 16
        $region124: #{_lambda_.1} parent=119 // pred_fallthru
          _
      $region120: #{_lambda_.1} parent=5 // pred_fallthru
        _
    $region6: #{_lambda_.1} parent=1 // loop_footer
      %s36 = sadd.s32 1, %s32
    $region7: #{_lambda_.1} parent=1 // loop_footer_branch
      %31 = sbr.rel target = $region3
    $region8: #{_lambda_.1} parent=1 // loop_exit
      _
    %6914 = vsyncpa [#allocation3], 1
    %s6915 = scalar_lea.sflag [#allocation3], 1
    %6916 = vsyncpa %s6915, 1

</llo_original>
